<compile_context>
chip_gen: v7x
topology: tpu7x:2x2x1
jax: 0.10.0
libtpu: 0.0.40
codegen_flags: <defaults>
</compile_context>

<pallas_src>
import jax
import jax.numpy as jnp
from jax.experimental import pallas as pl
from jax.experimental.pallas import tpu as pltpu

H = 64        # hidden_units (module default)
NH = 4        # nhead
HD = H // NH  # head dim = 16
DFF = 2048    # nn.TransformerEncoderLayer default dim_feedforward
NLAYERS = 2
LN_EPS = 1e-5


def _layernorm(x, g, b):
    mu = jnp.mean(x, axis=-1, keepdims=True)
    var = jnp.mean(jnp.square(x - mu), axis=-1, keepdims=True)
    return (x - mu) * jax.lax.rsqrt(var + LN_EPS) * g + b


def sasrec_kernel(x_ref, mask_ref, ng_ref, nb_ref,
                  wqkv_ref, bqkv_ref, wo_ref, bo_ref,
                  ln1g_ref, ln1b_ref, ln2g_ref, ln2b_ref,
                  w1_ref, b1_ref, w2_ref, b2_ref,
                  out_ref):
    tb, s, h = x_ref.shape
    rows = tb * s
    bh = NH * tb
    bf16 = jnp.bfloat16

    # feat_proj + positional add already folded into x by the wrapper.
    x = x_ref[...].reshape(rows, h)                     # (rows, H) f32
    # input LayerNorm (self.norm); dropout is identity at inference
    x = _layernorm(x, ng_ref[...], nb_ref[...])

    # Additive key-padding mask, materialized ONCE for all heads / layers.
    mask_b = jnp.broadcast_to(
        jnp.concatenate([mask_ref[...]] * NH, axis=0),  # (NH*tb, 1, S)
        (bh, s, s))

    for l in range(NLAYERS):
        # ---- fused QKV projection: one (rows,H)x(H,3H) MXU matmul (N=192) ----
        xb = x.astype(bf16)
        qkv = jnp.dot(xb, wqkv_ref[l],
                      preferred_element_type=jnp.float32) + bqkv_ref[l]

        # Head-batched attention: stack heads into the einsum batch dim so the
        # score / context matmuls and softmax are emitted once per layer.
        # Softmax scale 1/sqrt(HD) is pre-folded into Wq / bq by the wrapper.
        def split_heads(base):
            hs = jnp.concatenate(
                [qkv[:, base + hh * HD: base + (hh + 1) * HD]
                 for hh in range(NH)], axis=0)          # (NH*rows, HD)
            return hs.reshape(bh, s, HD).astype(bf16)

        q = split_heads(0)
        k = split_heads(H)
        v = split_heads(2 * H)

        sc = jnp.einsum("bqd,bkd->bqk", q, k,
                        preferred_element_type=jnp.float32)    # (bh, S, S) f32
        sc = sc + mask_b
        sc = sc - jnp.max(sc, axis=-1, keepdims=True)
        pw = jnp.exp(sc)
        pw = pw / jnp.sum(pw, axis=-1, keepdims=True)          # exact softmax
        ctx = jnp.einsum("bqk,bkd->bqd", pw.astype(bf16), v,
                         preferred_element_type=jnp.float32)   # (bh, S, HD)

        # Concat heads back to (rows, H) and run ONE (rows,H)x(H,H) out-proj
        # (replaces 4 accumulating K=16 matmuls).
        ctx = ctx.reshape(NH, rows, HD)
        ctx = jnp.concatenate([ctx[hh] for hh in range(NH)], axis=-1)
        attn = jnp.dot(ctx.astype(bf16), wo_ref[l],
                       preferred_element_type=jnp.float32) + bo_ref[l]
        x = _layernorm(x + attn, ln1g_ref[l], ln1b_ref[l])

        # ---- feed-forward (ReLU), dim_feedforward = 2048 ----
        xb = x.astype(bf16)
        hmid = jnp.dot(xb, w1_ref[l],
                       preferred_element_type=jnp.float32) + b1_ref[l]
        hmid = jnp.maximum(hmid, 0.0).astype(bf16)
        ffn = jnp.dot(hmid, w2_ref[l],
                      preferred_element_type=jnp.float32) + b2_ref[l]
        x = _layernorm(x + ffn, ln2g_ref[l], ln2b_ref[l])

    # Lane-dense output block (S*H is a multiple of 128) -> dense writeback DMA
    # instead of 64-lane masked partial stores.  Sequence positions are packed
    # along lanes with a static concat (cheap, guaranteed to lower).
    xo = x.reshape(tb, s, h)
    out_ref[...] = jnp.concatenate(
        [xo[:, si, :] for si in range(s)], axis=-1).astype(out_ref.dtype)


def sasrec_forward(x_sum, feat, mask_add, pos, p, rows_target=512):
    """x_sum: (B,S,H) summed item+meta embeddings; feat: (B,S,3);
    mask_add: (B,1,S) additive key-padding mask (0 / -1e30); pos: (S,H)."""
    B, S, _ = x_sum.shape

    # Hoist feat_proj + positional add out of the kernel (XLA fuses them into
    # the embedding-gather epilogue); avoids an (S,3) lane-padded tile.
    x_in = (x_sum
            + jnp.einsum("bsf,fh->bsh", feat, p["feat_W"])
            + p["feat_b"] + pos).astype(jnp.float32)
    mask_add = mask_add.astype(jnp.float32)

    # Batch tile: target rows = tb*S ~= 512 (fills the MXU M dim, amortizes the
    # ~0.35us/grid-step overhead).  No forced 2-way split for tiny B (v5e/v6e
    # are single-TC); on v7x grid>1 appears only once B*S > rows_target, i.e.
    # >=512 rows per core, and rows<=512 keeps VMEM well under the 64 MiB cap.
    if B * S <= rows_target:
        tb = B
    else:
        tb = min(B, max(8, (rows_target // S) // 8 * 8))   # 8-aligned sublanes
    Bp = ((B + tb - 1) // tb) * tb
    if Bp != B:
        # Padded rows run unmasked attention on zero inputs; sliced off below.
        x_in = jnp.pad(x_in, ((0, Bp - B), (0, 0), (0, 0)))
        mask_add = jnp.pad(mask_add, ((0, Bp - B), (0, 0), (0, 0)))

    # Weight prep: fuse Wq|Wk|Wv into one (H,3H) projection per layer and fold
    # the 1/sqrt(HD) softmax scale into the Q columns / bias (exact: 0.25 is a
    # power of two).  Matmul weights bf16, biases / LN params f32.
    bf16 = jnp.bfloat16
    scale = 1.0 / (HD ** 0.5)
    wqkv = jnp.concatenate([p["Wq"] * scale, p["Wk"], p["Wv"]], axis=-1).astype(bf16)
    bqkv = jnp.concatenate([p["bq"] * scale, p["bk"], p["bv"]],
                           axis=-1).astype(jnp.float32)
    wo = p["Wo"].astype(bf16)
    w1 = p["W1"].astype(bf16)
    w2 = p["W2"].astype(bf16)

    def full(a):
        shp = a.shape
        return pl.BlockSpec(shp, lambda *_: (0,) * len(shp))

    in_specs = [
        pl.BlockSpec((tb, S, H), lambda b: (b, 0, 0)),   # x (feat/pos folded in)
        pl.BlockSpec((tb, 1, S), lambda b: (b, 0, 0)),   # additive padding mask
        full(p["norm_g"]), full(p["norm_b"]),            # input norm g, b
        full(wqkv), full(bqkv),                          # fused QKV (bf16) + bias
        full(wo), full(p["bo"]),                         # out-proj
        full(p["ln1_g"]), full(p["ln1_b"]),              # ln1 g, b
        full(p["ln2_g"]), full(p["ln2_b"]),              # ln2 g, b
        full(w1), full(p["b1"]), full(w2), full(p["b2"]),  # FFN
    ]
    # TODO(synk): weight blocks stay default double-buffered; pl.Buffered(1)
    # single-buffering (v7x VMEM headroom) skipped to avoid lowering risk.

    out = pl.pallas_call(
        sasrec_kernel,
        out_shape=jax.ShapeDtypeStruct((Bp, S * H), jnp.float32),  # lane-dense
        grid=(Bp // tb,),
        in_specs=in_specs,
        out_specs=pl.BlockSpec((tb, S * H), lambda b: (b, 0)),
        compiler_params=pltpu.CompilerParams(
            dimension_semantics=("parallel",),
            vmem_limit_bytes=48 * 1024 * 1024),
    )(x_in, mask_add,
      p["norm_g"], p["norm_b"],
      wqkv, bqkv, wo, p["bo"],
      p["ln1_g"], p["ln1_b"], p["ln2_g"], p["ln2_b"],
      w1, p["b1"], w2, p["b2"])
    # Un-pack the lane-dense slab back to (B, S, H) (XLA-side layout plumbing).
    return out.reshape(Bp, S, H)[:B]


def reference(x_sum, feat, mask_add, pos, p):
    """Pure-JAX mirror of the forward math for a correctness check."""
    def ln(x, g, b):
        mu = jnp.mean(x, -1, keepdims=True)
        var = jnp.mean(jnp.square(x - mu), -1, keepdims=True)
        return (x - mu) * jax.lax.rsqrt(var + LN_EPS) * g + b

    x = x_sum + jnp.einsum("bsf,fh->bsh", feat, p["feat_W"]) + p["feat_b"] + pos
    x = ln(x, p["norm_g"], p["norm_b"])
    scale = 1.0 / (HD ** 0.5)
    for l in range(NLAYERS):
        q = jnp.einsum("bsh,hk->bsk", x, p["Wq"][l]) + p["bq"][l]
        k = jnp.einsum("bsh,hk->bsk", x, p["Wk"][l]) + p["bk"][l]
        v = jnp.einsum("bsh,hk->bsk", x, p["Wv"][l]) + p["bv"][l]
        heads = []
        for h in range(NH):
            qh = q[..., h * HD:(h + 1) * HD]
            kh = k[..., h * HD:(h + 1) * HD]
            vh = v[..., h * HD:(h + 1) * HD]
            s = jnp.einsum("bqd,bkd->bqk", qh, kh) * scale + mask_add
            pw = jax.nn.softmax(s, axis=-1)
            heads.append(jnp.einsum("bqk,bkd->bqd", pw, vh))
        attn = jnp.concatenate(heads, -1)
        attn = jnp.einsum("bsh,hk->bsk", attn, p["Wo"][l]) + p["bo"][l]
        x = ln(x + attn, p["ln1_g"][l], p["ln1_b"][l])
        hmid = jax.nn.relu(jnp.einsum("bsh,hf->bsf", x, p["W1"][l]) + p["b1"][l])
        ffn = jnp.einsum("bsf,fh->bsh", hmid, p["W2"][l]) + p["b2"][l]
        x = ln(x + ffn, p["ln2_g"][l], p["ln2_b"][l])
    return x


if __name__ == "__main__":
    B, S = 2, 8
    n_items = 20
    max_len = 50
    n_token_dict = {"cat": 5, "brand": 6, "form": 4, "skin": 3,
                    "age": 4, "brand_detail": 7, "style": 5}

    keys = iter(jax.random.split(jax.random.PRNGKey(0), 64))

    def nrm(shape, scale=0.02):
        return jax.random.normal(next(keys), shape, jnp.float32) * scale

    # --- deterministic parameter init (shapes per module __init__) ---
    item_emb = nrm((n_items, H)).at[0].set(0.0)          # padding_idx=0
    meta_embs = {k: nrm((v, H)).at[0].set(0.0) for k, v in n_token_dict.items()}
    pos_emb = nrm((max_len, H))

    params = dict(
        feat_W=nrm((3, H)), feat_b=nrm((1, H)),
        norm_g=jnp.ones((1, H), jnp.float32), norm_b=jnp.zeros((1, H), jnp.float32),
        Wq=nrm((NLAYERS, H, H)), Wk=nrm((NLAYERS, H, H)), Wv=nrm((NLAYERS, H, H)),
        bq=nrm((NLAYERS, 1, H)), bk=nrm((NLAYERS, 1, H)), bv=nrm((NLAYERS, 1, H)),
        Wo=nrm((NLAYERS, H, H)), bo=nrm((NLAYERS, 1, H)),
        ln1_g=jnp.ones((NLAYERS, 1, H), jnp.float32),
        ln1_b=jnp.zeros((NLAYERS, 1, H), jnp.float32),
        ln2_g=jnp.ones((NLAYERS, 1, H), jnp.float32),
        ln2_b=jnp.zeros((NLAYERS, 1, H), jnp.float32),
        W1=nrm((NLAYERS, H, DFF)), b1=nrm((NLAYERS, 1, DFF)),
        W2=nrm((NLAYERS, DFF, H)), b2=nrm((NLAYERS, 1, H)),
    )

    # --- example inputs ---
    item_seq = jax.random.randint(next(keys), (B, S), 1, n_items)
    item_seq = item_seq.at[:, :2].set(0)     # leading padding tokens
    meta_seqs = [jax.random.randint(next(keys), (B, S), 0, v)
                 for v in n_token_dict.values()]
    feat_seq = jax.random.normal(next(keys), (B, S, 3), jnp.float32)

    # --- glue: embedding gathers + padding mask (plain JAX) ---
    # TODO(synk): dynamic embedding gather kept outside the kernel (no clean
    # rectangular BlockSpec for index-dependent table rows at this tiny size).
    x_sum = item_emb[item_seq]
    for k_, m_ in zip(n_token_dict.keys(), meta_seqs):
        x_sum = x_sum + meta_embs[k_][m_]
    mask_add = jnp.where(item_seq == 0, -1e30, 0.0).astype(jnp.float32)[:, None, :]
    pos = pos_emb[:S]

    out = sasrec_forward(x_sum, feat_seq, mask_add, pos, params)
    out = jax.block_until_ready(out)

    ref = reference(x_sum, feat_seq, mask_add, pos, params)
    assert out.shape == (B, S, H)
    assert bool(jnp.all(jnp.isfinite(out)))
    assert bool(jnp.allclose(out, ref, atol=2e-2, rtol=2e-2)), (
        float(jnp.max(jnp.abs(out - ref))))
    print("KERNEL_OK")
</pallas_src>

<mosaic_0001>
module attributes {stable_mosaic.version = 11 : i64} {
  func.func @sasrec_kernel(%arg0: i32, %arg1: memref<2x8x64xf32, #tpu.memory_space<vmem>>, %arg2: memref<2x1x8xf32, #tpu.memory_space<vmem>>, %arg3: memref<1x64xf32, #tpu.memory_space<vmem>>, %arg4: memref<1x64xf32, #tpu.memory_space<vmem>>, %arg5: memref<2x64x192xbf16, #tpu.memory_space<vmem>>, %arg6: memref<2x1x192xf32, #tpu.memory_space<vmem>>, %arg7: memref<2x64x64xbf16, #tpu.memory_space<vmem>>, %arg8: memref<2x1x64xf32, #tpu.memory_space<vmem>>, %arg9: memref<2x1x64xf32, #tpu.memory_space<vmem>>, %arg10: memref<2x1x64xf32, #tpu.memory_space<vmem>>, %arg11: memref<2x1x64xf32, #tpu.memory_space<vmem>>, %arg12: memref<2x1x64xf32, #tpu.memory_space<vmem>>, %arg13: memref<2x64x2048xbf16, #tpu.memory_space<vmem>>, %arg14: memref<2x1x2048xf32, #tpu.memory_space<vmem>>, %arg15: memref<2x2048x64xbf16, #tpu.memory_space<vmem>>, %arg16: memref<2x1x64xf32, #tpu.memory_space<vmem>>, %arg17: memref<2x512xf32, #tpu.memory_space<vmem>>) attributes {dimension_semantics = [#tpu.dimension_semantics<parallel>], iteration_bounds = array<i64: 1>, scalar_prefetch = 0 : i64, scratch_operands = 0 : i64, tpu.core_type = #tpu.core_type<tc>, window_params = [{transform_indices = @transform_0, window_bounds = array<i64: 2, 8, 64>}, {transform_indices = @transform_1, window_bounds = array<i64: 2, 1, 8>}, {pipeline_mode = #tpu.pipeline_mode<synchronous>, transform_indices = @transform_2, window_bounds = array<i64: 1, 64>}, {pipeline_mode = #tpu.pipeline_mode<synchronous>, transform_indices = @transform_3, window_bounds = array<i64: 1, 64>}, {pipeline_mode = #tpu.pipeline_mode<synchronous>, transform_indices = @transform_4, window_bounds = array<i64: 2, 64, 192>}, {pipeline_mode = #tpu.pipeline_mode<synchronous>, transform_indices = @transform_5, window_bounds = array<i64: 2, 1, 192>}, {pipeline_mode = #tpu.pipeline_mode<synchronous>, transform_indices = @transform_6, window_bounds = array<i64: 2, 64, 64>}, {pipeline_mode = #tpu.pipeline_mode<synchronous>, transform_indices = @transform_7, window_bounds = array<i64: 2, 1, 64>}, {pipeline_mode = #tpu.pipeline_mode<synchronous>, transform_indices = @transform_8, window_bounds = array<i64: 2, 1, 64>}, {pipeline_mode = #tpu.pipeline_mode<synchronous>, transform_indices = @transform_9, window_bounds = array<i64: 2, 1, 64>}, {pipeline_mode = #tpu.pipeline_mode<synchronous>, transform_indices = @transform_10, window_bounds = array<i64: 2, 1, 64>}, {pipeline_mode = #tpu.pipeline_mode<synchronous>, transform_indices = @transform_11, window_bounds = array<i64: 2, 1, 64>}, {pipeline_mode = #tpu.pipeline_mode<synchronous>, transform_indices = @transform_12, window_bounds = array<i64: 2, 64, 2048>}, {pipeline_mode = #tpu.pipeline_mode<synchronous>, transform_indices = @transform_13, window_bounds = array<i64: 2, 1, 2048>}, {pipeline_mode = #tpu.pipeline_mode<synchronous>, transform_indices = @transform_14, window_bounds = array<i64: 2, 2048, 64>}, {pipeline_mode = #tpu.pipeline_mode<synchronous>, transform_indices = @transform_15, window_bounds = array<i64: 2, 1, 64>}, {transform_indices = @transform_16, window_bounds = array<i64: 2, 512>}]} {
    %c0 = arith.constant 0 : index
    %c0_0 = arith.constant 0 : index
    %c0_1 = arith.constant 0 : index
    %0 = vector.load %arg1[%c0, %c0_0, %c0_1] : memref<2x8x64xf32, #tpu.memory_space<vmem>>, vector<2x8x64xf32>
    %1 = vector.shape_cast %0 : vector<2x8x64xf32> to vector<16x64xf32>
    %c0_2 = arith.constant 0 : index
    %c0_3 = arith.constant 0 : index
    %2 = vector.load %arg3[%c0_2, %c0_3] : memref<1x64xf32, #tpu.memory_space<vmem>>, vector<1x64xf32>
    %c0_4 = arith.constant 0 : index
    %c0_5 = arith.constant 0 : index
    %3 = vector.load %arg4[%c0_4, %c0_5] : memref<1x64xf32, #tpu.memory_space<vmem>>, vector<1x64xf32>
    %cst = arith.constant dense<0.000000e+00> : vector<16xf32>
    %4 = vector.multi_reduction <add>, %1, %cst [1] : vector<16x64xf32> to vector<16xf32>
    %5 = vector.shape_cast %4 : vector<16xf32> to vector<16x1xf32>
    %cst_6 = arith.constant 6.400000e+01 : f32
    %6 = vector.broadcast %cst_6 : f32 to vector<16x1xf32>
    %7 = arith.divf %5, %6 : vector<16x1xf32>
    %8 = vector.broadcast %7 : vector<16x1xf32> to vector<16x64xf32>
    %9 = arith.subf %1, %8 : vector<16x64xf32>
    %10 = arith.mulf %9, %9 : vector<16x64xf32>
    %cst_7 = arith.constant dense<0.000000e+00> : vector<16xf32>
    %11 = vector.multi_reduction <add>, %10, %cst_7 [1] : vector<16x64xf32> to vector<16xf32>
    %12 = vector.shape_cast %11 : vector<16xf32> to vector<16x1xf32>
    %cst_8 = arith.constant 6.400000e+01 : f32
    %13 = vector.broadcast %cst_8 : f32 to vector<16x1xf32>
    %14 = arith.divf %12, %13 : vector<16x1xf32>
    %15 = vector.broadcast %7 : vector<16x1xf32> to vector<16x64xf32>
    %16 = arith.subf %1, %15 : vector<16x64xf32>
    %cst_9 = arith.constant 9.99999974E-6 : f32
    %17 = vector.broadcast %cst_9 : f32 to vector<16x1xf32>
    %18 = arith.addf %14, %17 : vector<16x1xf32>
    %19 = math.rsqrt %18 : vector<16x1xf32>
    %20 = vector.broadcast %19 : vector<16x1xf32> to vector<16x64xf32>
    %21 = arith.mulf %16, %20 : vector<16x64xf32>
    %22 = vector.broadcast %2 : vector<1x64xf32> to vector<16x64xf32>
    %23 = arith.mulf %21, %22 : vector<16x64xf32>
    %24 = vector.broadcast %3 : vector<1x64xf32> to vector<16x64xf32>
    %25 = arith.addf %23, %24 : vector<16x64xf32>
    %c0_10 = arith.constant 0 : index
    %c0_11 = arith.constant 0 : index
    %c0_12 = arith.constant 0 : index
    %26 = vector.load %arg2[%c0_10, %c0_11, %c0_12] : memref<2x1x8xf32, #tpu.memory_space<vmem>>, vector<2x1x8xf32>
    %27 = tpu.concatenate %26, %26, %26, %26 in 0 : vector<2x1x8xf32>, vector<2x1x8xf32>, vector<2x1x8xf32>, vector<2x1x8xf32> -> vector<8x1x8xf32>
    %28 = vector.shape_cast %27 : vector<8x1x8xf32> to vector<8x1x8xf32>
    %29 = vector.broadcast %28 : vector<8x1x8xf32> to vector<8x8x8xf32>
    %30 = arith.truncf %25 : vector<16x64xf32> to vector<16x64xbf16>
    %c0_13 = arith.constant 0 : index
    %c0_14 = arith.constant 0 : index
    %c0_15 = arith.constant 0 : index
    %31 = vector.load %arg5[%c0_13, %c0_14, %c0_15] : memref<2x64x192xbf16, #tpu.memory_space<vmem>>, vector<1x64x192xbf16>
    %32 = vector.shape_cast %31 : vector<1x64x192xbf16> to vector<64x192xbf16>
    %cst_16 = arith.constant dense<0.000000e+00> : vector<16x192xf32>
    %33 = tpu.matmul %30, %32, %cst_16 {dimension_numbers = #tpu.dot_dimension_numbers<[1], [0], [0], [1], [0, 0, 1, 1], [], []>} : vector<16x64xbf16>, vector<64x192xbf16>, vector<16x192xf32> -> vector<16x192xf32>
    %c0_17 = arith.constant 0 : index
    %c0_18 = arith.constant 0 : index
    %c0_19 = arith.constant 0 : index
    %34 = vector.load %arg6[%c0_17, %c0_18, %c0_19] : memref<2x1x192xf32, #tpu.memory_space<vmem>>, vector<1x1x192xf32>
    %35 = vector.shape_cast %34 : vector<1x1x192xf32> to vector<1x192xf32>
    %36 = vector.broadcast %35 : vector<1x192xf32> to vector<16x192xf32>
    %37 = arith.addf %33, %36 : vector<16x192xf32>
    %38 = vector.extract_strided_slice %37 {offsets = [0, 0], sizes = [16, 16], strides = [1, 1]} : vector<16x192xf32> to vector<16x16xf32>
    %39 = vector.extract_strided_slice %37 {offsets = [0, 16], sizes = [16, 16], strides = [1, 1]} : vector<16x192xf32> to vector<16x16xf32>
    %40 = vector.extract_strided_slice %37 {offsets = [0, 32], sizes = [16, 16], strides = [1, 1]} : vector<16x192xf32> to vector<16x16xf32>
    %41 = vector.extract_strided_slice %37 {offsets = [0, 48], sizes = [16, 16], strides = [1, 1]} : vector<16x192xf32> to vector<16x16xf32>
    %42 = tpu.concatenate %38, %39, %40, %41 in 0 : vector<16x16xf32>, vector<16x16xf32>, vector<16x16xf32>, vector<16x16xf32> -> vector<64x16xf32>
    %43 = vector.shape_cast %42 : vector<64x16xf32> to vector<8x8x16xf32>
    %44 = arith.truncf %43 : vector<8x8x16xf32> to vector<8x8x16xbf16>
    %45 = vector.extract_strided_slice %37 {offsets = [0, 64], sizes = [16, 16], strides = [1, 1]} : vector<16x192xf32> to vector<16x16xf32>
    %46 = vector.extract_strided_slice %37 {offsets = [0, 80], sizes = [16, 16], strides = [1, 1]} : vector<16x192xf32> to vector<16x16xf32>
    %47 = vector.extract_strided_slice %37 {offsets = [0, 96], sizes = [16, 16], strides = [1, 1]} : vector<16x192xf32> to vector<16x16xf32>
    %48 = vector.extract_strided_slice %37 {offsets = [0, 112], sizes = [16, 16], strides = [1, 1]} : vector<16x192xf32> to vector<16x16xf32>
    %49 = tpu.concatenate %45, %46, %47, %48 in 0 : vector<16x16xf32>, vector<16x16xf32>, vector<16x16xf32>, vector<16x16xf32> -> vector<64x16xf32>
    %50 = vector.shape_cast %49 : vector<64x16xf32> to vector<8x8x16xf32>
    %51 = arith.truncf %50 : vector<8x8x16xf32> to vector<8x8x16xbf16>
    %52 = vector.extract_strided_slice %37 {offsets = [0, 128], sizes = [16, 16], strides = [1, 1]} : vector<16x192xf32> to vector<16x16xf32>
    %53 = vector.extract_strided_slice %37 {offsets = [0, 144], sizes = [16, 16], strides = [1, 1]} : vector<16x192xf32> to vector<16x16xf32>
    %54 = vector.extract_strided_slice %37 {offsets = [0, 160], sizes = [16, 16], strides = [1, 1]} : vector<16x192xf32> to vector<16x16xf32>
    %55 = vector.extract_strided_slice %37 {offsets = [0, 176], sizes = [16, 16], strides = [1, 1]} : vector<16x192xf32> to vector<16x16xf32>
    %56 = tpu.concatenate %52, %53, %54, %55 in 0 : vector<16x16xf32>, vector<16x16xf32>, vector<16x16xf32>, vector<16x16xf32> -> vector<64x16xf32>
    %57 = vector.shape_cast %56 : vector<64x16xf32> to vector<8x8x16xf32>
    %58 = arith.truncf %57 : vector<8x8x16xf32> to vector<8x8x16xbf16>
    "tpu.trace_start"() <{level = 10 : i32, message = "bqd,bkd->bqk"}> : () -> ()
    %cst_20 = arith.constant dense<0.000000e+00> : vector<8x8x8xf32>
    %59 = tpu.matmul %44, %51, %cst_20 {dimension_numbers = #tpu.dot_dimension_numbers<[2], [2], [1], [1], [0, 0, 0, 1, 1, 1], [0], [0]>} : vector<8x8x16xbf16>, vector<8x8x16xbf16>, vector<8x8x8xf32> -> vector<8x8x8xf32>
    "tpu.trace_stop"() : () -> ()
    %60 = arith.addf %59, %29 : vector<8x8x8xf32>
    %cst_21 = arith.constant dense<0xFF800000> : vector<8x8xf32>
    %61 = vector.multi_reduction <maximumf>, %60, %cst_21 [2] : vector<8x8x8xf32> to vector<8x8xf32>
    %62 = vector.shape_cast %61 : vector<8x8xf32> to vector<8x8x1xf32>
    %63 = vector.broadcast %62 : vector<8x8x1xf32> to vector<8x8x8xf32>
    %64 = arith.subf %60, %63 : vector<8x8x8xf32>
    %65 = math.exp %64 : vector<8x8x8xf32>
    %cst_22 = arith.constant dense<0.000000e+00> : vector<8x8xf32>
    %66 = vector.multi_reduction <add>, %65, %cst_22 [2] : vector<8x8x8xf32> to vector<8x8xf32>
    %67 = vector.shape_cast %66 : vector<8x8xf32> to vector<8x8x1xf32>
    %68 = vector.broadcast %67 : vector<8x8x1xf32> to vector<8x8x8xf32>
    %69 = arith.divf %65, %68 : vector<8x8x8xf32>
    %70 = arith.truncf %69 : vector<8x8x8xf32> to vector<8x8x8xbf16>
    "tpu.trace_start"() <{level = 10 : i32, message = "bqk,bkd->bqd"}> : () -> ()
    %cst_23 = arith.constant dense<0.000000e+00> : vector<8x8x16xf32>
    %71 = tpu.matmul %70, %58, %cst_23 {dimension_numbers = #tpu.dot_dimension_numbers<[2], [1], [1], [2], [0, 0, 0, 1, 1, 2], [0], [0]>} : vector<8x8x8xbf16>, vector<8x8x16xbf16>, vector<8x8x16xf32> -> vector<8x8x16xf32>
    "tpu.trace_stop"() : () -> ()
    %72 = vector.shape_cast %71 : vector<8x8x16xf32> to vector<4x16x16xf32>
    %73 = vector.extract_strided_slice %72 {offsets = [0, 0, 0], sizes = [1, 16, 16], strides = [1, 1, 1]} : vector<4x16x16xf32> to vector<1x16x16xf32>
    %74 = vector.shape_cast %73 : vector<1x16x16xf32> to vector<16x16xf32>
    %75 = vector.extract_strided_slice %72 {offsets = [1, 0, 0], sizes = [1, 16, 16], strides = [1, 1, 1]} : vector<4x16x16xf32> to vector<1x16x16xf32>
    %76 = vector.shape_cast %75 : vector<1x16x16xf32> to vector<16x16xf32>
    %77 = vector.extract_strided_slice %72 {offsets = [2, 0, 0], sizes = [1, 16, 16], strides = [1, 1, 1]} : vector<4x16x16xf32> to vector<1x16x16xf32>
    %78 = vector.shape_cast %77 : vector<1x16x16xf32> to vector<16x16xf32>
    %79 = vector.extract_strided_slice %72 {offsets = [3, 0, 0], sizes = [1, 16, 16], strides = [1, 1, 1]} : vector<4x16x16xf32> to vector<1x16x16xf32>
    %80 = vector.shape_cast %79 : vector<1x16x16xf32> to vector<16x16xf32>
    %81 = tpu.concatenate %74, %76, %78, %80 in 1 : vector<16x16xf32>, vector<16x16xf32>, vector<16x16xf32>, vector<16x16xf32> -> vector<16x64xf32>
    %82 = arith.truncf %81 : vector<16x64xf32> to vector<16x64xbf16>
    %c0_24 = arith.constant 0 : index
    %c0_25 = arith.constant 0 : index
    %c0_26 = arith.constant 0 : index
    %83 = vector.load %arg7[%c0_24, %c0_25, %c0_26] : memref<2x64x64xbf16, #tpu.memory_space<vmem>>, vector<1x64x64xbf16>
    %84 = vector.shape_cast %83 : vector<1x64x64xbf16> to vector<64x64xbf16>
    %cst_27 = arith.constant dense<0.000000e+00> : vector<16x64xf32>
    %85 = tpu.matmul %82, %84, %cst_27 {dimension_numbers = #tpu.dot_dimension_numbers<[1], [0], [0], [1], [0, 0, 1, 1], [], []>} : vector<16x64xbf16>, vector<64x64xbf16>, vector<16x64xf32> -> vector<16x64xf32>
    %c0_28 = arith.constant 0 : index
    %c0_29 = arith.constant 0 : index
    %c0_30 = arith.constant 0 : index
    %86 = vector.load %arg8[%c0_28, %c0_29, %c0_30] : memref<2x1x64xf32, #tpu.memory_space<vmem>>, vector<1x1x64xf32>
    %87 = vector.shape_cast %86 : vector<1x1x64xf32> to vector<1x64xf32>
    %88 = vector.broadcast %87 : vector<1x64xf32> to vector<16x64xf32>
    %89 = arith.addf %85, %88 : vector<16x64xf32>
    %90 = arith.addf %25, %89 : vector<16x64xf32>
    %c0_31 = arith.constant 0 : index
    %c0_32 = arith.constant 0 : index
    %c0_33 = arith.constant 0 : index
    %91 = vector.load %arg9[%c0_31, %c0_32, %c0_33] : memref<2x1x64xf32, #tpu.memory_space<vmem>>, vector<1x1x64xf32>
    %92 = vector.shape_cast %91 : vector<1x1x64xf32> to vector<1x64xf32>
    %c0_34 = arith.constant 0 : index
    %c0_35 = arith.constant 0 : index
    %c0_36 = arith.constant 0 : index
    %93 = vector.load %arg10[%c0_34, %c0_35, %c0_36] : memref<2x1x64xf32, #tpu.memory_space<vmem>>, vector<1x1x64xf32>
    %94 = vector.shape_cast %93 : vector<1x1x64xf32> to vector<1x64xf32>
    %cst_37 = arith.constant dense<0.000000e+00> : vector<16xf32>
    %95 = vector.multi_reduction <add>, %90, %cst_37 [1] : vector<16x64xf32> to vector<16xf32>
    %96 = vector.shape_cast %95 : vector<16xf32> to vector<16x1xf32>
    %cst_38 = arith.constant 6.400000e+01 : f32
    %97 = vector.broadcast %cst_38 : f32 to vector<16x1xf32>
    %98 = arith.divf %96, %97 : vector<16x1xf32>
    %99 = vector.broadcast %98 : vector<16x1xf32> to vector<16x64xf32>
    %100 = arith.subf %90, %99 : vector<16x64xf32>
    %101 = arith.mulf %100, %100 : vector<16x64xf32>
    %cst_39 = arith.constant dense<0.000000e+00> : vector<16xf32>
    %102 = vector.multi_reduction <add>, %101, %cst_39 [1] : vector<16x64xf32> to vector<16xf32>
    %103 = vector.shape_cast %102 : vector<16xf32> to vector<16x1xf32>
    %cst_40 = arith.constant 6.400000e+01 : f32
    %104 = vector.broadcast %cst_40 : f32 to vector<16x1xf32>
    %105 = arith.divf %103, %104 : vector<16x1xf32>
    %106 = vector.broadcast %98 : vector<16x1xf32> to vector<16x64xf32>
    %107 = arith.subf %90, %106 : vector<16x64xf32>
    %cst_41 = arith.constant 9.99999974E-6 : f32
    %108 = vector.broadcast %cst_41 : f32 to vector<16x1xf32>
    %109 = arith.addf %105, %108 : vector<16x1xf32>
    %110 = math.rsqrt %109 : vector<16x1xf32>
    %111 = vector.broadcast %110 : vector<16x1xf32> to vector<16x64xf32>
    %112 = arith.mulf %107, %111 : vector<16x64xf32>
    %113 = vector.broadcast %92 : vector<1x64xf32> to vector<16x64xf32>
    %114 = arith.mulf %112, %113 : vector<16x64xf32>
    %115 = vector.broadcast %94 : vector<1x64xf32> to vector<16x64xf32>
    %116 = arith.addf %114, %115 : vector<16x64xf32>
    %117 = arith.truncf %116 : vector<16x64xf32> to vector<16x64xbf16>
    %c0_42 = arith.constant 0 : index
    %c0_43 = arith.constant 0 : index
    %c0_44 = arith.constant 0 : index
    %118 = vector.load %arg13[%c0_42, %c0_43, %c0_44] : memref<2x64x2048xbf16, #tpu.memory_space<vmem>>, vector<1x64x2048xbf16>
    %119 = vector.shape_cast %118 : vector<1x64x2048xbf16> to vector<64x2048xbf16>
    %cst_45 = arith.constant dense<0.000000e+00> : vector<16x2048xf32>
    %120 = tpu.matmul %117, %119, %cst_45 {dimension_numbers = #tpu.dot_dimension_numbers<[1], [0], [0], [1], [0, 0, 1, 1], [], []>} : vector<16x64xbf16>, vector<64x2048xbf16>, vector<16x2048xf32> -> vector<16x2048xf32>
    %c0_46 = arith.constant 0 : index
    %c0_47 = arith.constant 0 : index
    %c0_48 = arith.constant 0 : index
    %121 = vector.load %arg14[%c0_46, %c0_47, %c0_48] : memref<2x1x2048xf32, #tpu.memory_space<vmem>>, vector<1x1x2048xf32>
    %122 = vector.shape_cast %121 : vector<1x1x2048xf32> to vector<1x2048xf32>
    %123 = vector.broadcast %122 : vector<1x2048xf32> to vector<16x2048xf32>
    %124 = arith.addf %120, %123 : vector<16x2048xf32>
    %cst_49 = arith.constant 0.000000e+00 : f32
    %125 = vector.broadcast %cst_49 : f32 to vector<16x2048xf32>
    %126 = arith.maximumf %124, %125 : vector<16x2048xf32>
    %127 = arith.truncf %126 : vector<16x2048xf32> to vector<16x2048xbf16>
    %c0_50 = arith.constant 0 : index
    %c0_51 = arith.constant 0 : index
    %c0_52 = arith.constant 0 : index
    %128 = vector.load %arg15[%c0_50, %c0_51, %c0_52] : memref<2x2048x64xbf16, #tpu.memory_space<vmem>>, vector<1x2048x64xbf16>
    %129 = vector.shape_cast %128 : vector<1x2048x64xbf16> to vector<2048x64xbf16>
    %cst_53 = arith.constant dense<0.000000e+00> : vector<16x64xf32>
    %130 = tpu.matmul %127, %129, %cst_53 {dimension_numbers = #tpu.dot_dimension_numbers<[1], [0], [0], [1], [0, 0, 1, 1], [], []>} : vector<16x2048xbf16>, vector<2048x64xbf16>, vector<16x64xf32> -> vector<16x64xf32>
    %c0_54 = arith.constant 0 : index
    %c0_55 = arith.constant 0 : index
    %c0_56 = arith.constant 0 : index
    %131 = vector.load %arg16[%c0_54, %c0_55, %c0_56] : memref<2x1x64xf32, #tpu.memory_space<vmem>>, vector<1x1x64xf32>
    %132 = vector.shape_cast %131 : vector<1x1x64xf32> to vector<1x64xf32>
    %133 = vector.broadcast %132 : vector<1x64xf32> to vector<16x64xf32>
    %134 = arith.addf %130, %133 : vector<16x64xf32>
    %135 = arith.addf %116, %134 : vector<16x64xf32>
    %c0_57 = arith.constant 0 : index
    %c0_58 = arith.constant 0 : index
    %c0_59 = arith.constant 0 : index
    %136 = vector.load %arg11[%c0_57, %c0_58, %c0_59] : memref<2x1x64xf32, #tpu.memory_space<vmem>>, vector<1x1x64xf32>
    %137 = vector.shape_cast %136 : vector<1x1x64xf32> to vector<1x64xf32>
    %c0_60 = arith.constant 0 : index
    %c0_61 = arith.constant 0 : index
    %c0_62 = arith.constant 0 : index
    %138 = vector.load %arg12[%c0_60, %c0_61, %c0_62] : memref<2x1x64xf32, #tpu.memory_space<vmem>>, vector<1x1x64xf32>
    %139 = vector.shape_cast %138 : vector<1x1x64xf32> to vector<1x64xf32>
    %cst_63 = arith.constant dense<0.000000e+00> : vector<16xf32>
    %140 = vector.multi_reduction <add>, %135, %cst_63 [1] : vector<16x64xf32> to vector<16xf32>
    %141 = vector.shape_cast %140 : vector<16xf32> to vector<16x1xf32>
    %cst_64 = arith.constant 6.400000e+01 : f32
    %142 = vector.broadcast %cst_64 : f32 to vector<16x1xf32>
    %143 = arith.divf %141, %142 : vector<16x1xf32>
    %144 = vector.broadcast %143 : vector<16x1xf32> to vector<16x64xf32>
    %145 = arith.subf %135, %144 : vector<16x64xf32>
    %146 = arith.mulf %145, %145 : vector<16x64xf32>
    %cst_65 = arith.constant dense<0.000000e+00> : vector<16xf32>
    %147 = vector.multi_reduction <add>, %146, %cst_65 [1] : vector<16x64xf32> to vector<16xf32>
    %148 = vector.shape_cast %147 : vector<16xf32> to vector<16x1xf32>
    %cst_66 = arith.constant 6.400000e+01 : f32
    %149 = vector.broadcast %cst_66 : f32 to vector<16x1xf32>
    %150 = arith.divf %148, %149 : vector<16x1xf32>
    %151 = vector.broadcast %143 : vector<16x1xf32> to vector<16x64xf32>
    %152 = arith.subf %135, %151 : vector<16x64xf32>
    %cst_67 = arith.constant 9.99999974E-6 : f32
    %153 = vector.broadcast %cst_67 : f32 to vector<16x1xf32>
    %154 = arith.addf %150, %153 : vector<16x1xf32>
    %155 = math.rsqrt %154 : vector<16x1xf32>
    %156 = vector.broadcast %155 : vector<16x1xf32> to vector<16x64xf32>
    %157 = arith.mulf %152, %156 : vector<16x64xf32>
    %158 = vector.broadcast %137 : vector<1x64xf32> to vector<16x64xf32>
    %159 = arith.mulf %157, %158 : vector<16x64xf32>
    %160 = vector.broadcast %139 : vector<1x64xf32> to vector<16x64xf32>
    %161 = arith.addf %159, %160 : vector<16x64xf32>
    %162 = arith.truncf %161 : vector<16x64xf32> to vector<16x64xbf16>
    %c1 = arith.constant 1 : index
    %c0_68 = arith.constant 0 : index
    %c0_69 = arith.constant 0 : index
    %163 = vector.load %arg5[%c1, %c0_68, %c0_69] : memref<2x64x192xbf16, #tpu.memory_space<vmem>>, vector<1x64x192xbf16>
    %164 = vector.shape_cast %163 : vector<1x64x192xbf16> to vector<64x192xbf16>
    %cst_70 = arith.constant dense<0.000000e+00> : vector<16x192xf32>
    %165 = tpu.matmul %162, %164, %cst_70 {dimension_numbers = #tpu.dot_dimension_numbers<[1], [0], [0], [1], [0, 0, 1, 1], [], []>} : vector<16x64xbf16>, vector<64x192xbf16>, vector<16x192xf32> -> vector<16x192xf32>
    %c1_71 = arith.constant 1 : index
    %c0_72 = arith.constant 0 : index
    %c0_73 = arith.constant 0 : index
    %166 = vector.load %arg6[%c1_71, %c0_72, %c0_73] : memref<2x1x192xf32, #tpu.memory_space<vmem>>, vector<1x1x192xf32>
    %167 = vector.shape_cast %166 : vector<1x1x192xf32> to vector<1x192xf32>
    %168 = vector.broadcast %167 : vector<1x192xf32> to vector<16x192xf32>
    %169 = arith.addf %165, %168 : vector<16x192xf32>
    %170 = vector.extract_strided_slice %169 {offsets = [0, 0], sizes = [16, 16], strides = [1, 1]} : vector<16x192xf32> to vector<16x16xf32>
    %171 = vector.extract_strided_slice %169 {offsets = [0, 16], sizes = [16, 16], strides = [1, 1]} : vector<16x192xf32> to vector<16x16xf32>
    %172 = vector.extract_strided_slice %169 {offsets = [0, 32], sizes = [16, 16], strides = [1, 1]} : vector<16x192xf32> to vector<16x16xf32>
    %173 = vector.extract_strided_slice %169 {offsets = [0, 48], sizes = [16, 16], strides = [1, 1]} : vector<16x192xf32> to vector<16x16xf32>
    %174 = tpu.concatenate %170, %171, %172, %173 in 0 : vector<16x16xf32>, vector<16x16xf32>, vector<16x16xf32>, vector<16x16xf32> -> vector<64x16xf32>
    %175 = vector.shape_cast %174 : vector<64x16xf32> to vector<8x8x16xf32>
    %176 = arith.truncf %175 : vector<8x8x16xf32> to vector<8x8x16xbf16>
    %177 = vector.extract_strided_slice %169 {offsets = [0, 64], sizes = [16, 16], strides = [1, 1]} : vector<16x192xf32> to vector<16x16xf32>
    %178 = vector.extract_strided_slice %169 {offsets = [0, 80], sizes = [16, 16], strides = [1, 1]} : vector<16x192xf32> to vector<16x16xf32>
    %179 = vector.extract_strided_slice %169 {offsets = [0, 96], sizes = [16, 16], strides = [1, 1]} : vector<16x192xf32> to vector<16x16xf32>
    %180 = vector.extract_strided_slice %169 {offsets = [0, 112], sizes = [16, 16], strides = [1, 1]} : vector<16x192xf32> to vector<16x16xf32>
    %181 = tpu.concatenate %177, %178, %179, %180 in 0 : vector<16x16xf32>, vector<16x16xf32>, vector<16x16xf32>, vector<16x16xf32> -> vector<64x16xf32>
    %182 = vector.shape_cast %181 : vector<64x16xf32> to vector<8x8x16xf32>
    %183 = arith.truncf %182 : vector<8x8x16xf32> to vector<8x8x16xbf16>
    %184 = vector.extract_strided_slice %169 {offsets = [0, 128], sizes = [16, 16], strides = [1, 1]} : vector<16x192xf32> to vector<16x16xf32>
    %185 = vector.extract_strided_slice %169 {offsets = [0, 144], sizes = [16, 16], strides = [1, 1]} : vector<16x192xf32> to vector<16x16xf32>
    %186 = vector.extract_strided_slice %169 {offsets = [0, 160], sizes = [16, 16], strides = [1, 1]} : vector<16x192xf32> to vector<16x16xf32>
    %187 = vector.extract_strided_slice %169 {offsets = [0, 176], sizes = [16, 16], strides = [1, 1]} : vector<16x192xf32> to vector<16x16xf32>
    %188 = tpu.concatenate %184, %185, %186, %187 in 0 : vector<16x16xf32>, vector<16x16xf32>, vector<16x16xf32>, vector<16x16xf32> -> vector<64x16xf32>
    %189 = vector.shape_cast %188 : vector<64x16xf32> to vector<8x8x16xf32>
    %190 = arith.truncf %189 : vector<8x8x16xf32> to vector<8x8x16xbf16>
    "tpu.trace_start"() <{level = 10 : i32, message = "bqd,bkd->bqk"}> : () -> ()
    %cst_74 = arith.constant dense<0.000000e+00> : vector<8x8x8xf32>
    %191 = tpu.matmul %176, %183, %cst_74 {dimension_numbers = #tpu.dot_dimension_numbers<[2], [2], [1], [1], [0, 0, 0, 1, 1, 1], [0], [0]>} : vector<8x8x16xbf16>, vector<8x8x16xbf16>, vector<8x8x8xf32> -> vector<8x8x8xf32>
    "tpu.trace_stop"() : () -> ()
    %192 = arith.addf %191, %29 : vector<8x8x8xf32>
    %cst_75 = arith.constant dense<0xFF800000> : vector<8x8xf32>
    %193 = vector.multi_reduction <maximumf>, %192, %cst_75 [2] : vector<8x8x8xf32> to vector<8x8xf32>
    %194 = vector.shape_cast %193 : vector<8x8xf32> to vector<8x8x1xf32>
    %195 = vector.broadcast %194 : vector<8x8x1xf32> to vector<8x8x8xf32>
    %196 = arith.subf %192, %195 : vector<8x8x8xf32>
    %197 = math.exp %196 : vector<8x8x8xf32>
    %cst_76 = arith.constant dense<0.000000e+00> : vector<8x8xf32>
    %198 = vector.multi_reduction <add>, %197, %cst_76 [2] : vector<8x8x8xf32> to vector<8x8xf32>
    %199 = vector.shape_cast %198 : vector<8x8xf32> to vector<8x8x1xf32>
    %200 = vector.broadcast %199 : vector<8x8x1xf32> to vector<8x8x8xf32>
    %201 = arith.divf %197, %200 : vector<8x8x8xf32>
    %202 = arith.truncf %201 : vector<8x8x8xf32> to vector<8x8x8xbf16>
    "tpu.trace_start"() <{level = 10 : i32, message = "bqk,bkd->bqd"}> : () -> ()
    %cst_77 = arith.constant dense<0.000000e+00> : vector<8x8x16xf32>
    %203 = tpu.matmul %202, %190, %cst_77 {dimension_numbers = #tpu.dot_dimension_numbers<[2], [1], [1], [2], [0, 0, 0, 1, 1, 2], [0], [0]>} : vector<8x8x8xbf16>, vector<8x8x16xbf16>, vector<8x8x16xf32> -> vector<8x8x16xf32>
    "tpu.trace_stop"() : () -> ()
    %204 = vector.shape_cast %203 : vector<8x8x16xf32> to vector<4x16x16xf32>
    %205 = vector.extract_strided_slice %204 {offsets = [0, 0, 0], sizes = [1, 16, 16], strides = [1, 1, 1]} : vector<4x16x16xf32> to vector<1x16x16xf32>
    %206 = vector.shape_cast %205 : vector<1x16x16xf32> to vector<16x16xf32>
    %207 = vector.extract_strided_slice %204 {offsets = [1, 0, 0], sizes = [1, 16, 16], strides = [1, 1, 1]} : vector<4x16x16xf32> to vector<1x16x16xf32>
    %208 = vector.shape_cast %207 : vector<1x16x16xf32> to vector<16x16xf32>
    %209 = vector.extract_strided_slice %204 {offsets = [2, 0, 0], sizes = [1, 16, 16], strides = [1, 1, 1]} : vector<4x16x16xf32> to vector<1x16x16xf32>
    %210 = vector.shape_cast %209 : vector<1x16x16xf32> to vector<16x16xf32>
    %211 = vector.extract_strided_slice %204 {offsets = [3, 0, 0], sizes = [1, 16, 16], strides = [1, 1, 1]} : vector<4x16x16xf32> to vector<1x16x16xf32>
    %212 = vector.shape_cast %211 : vector<1x16x16xf32> to vector<16x16xf32>
    %213 = tpu.concatenate %206, %208, %210, %212 in 1 : vector<16x16xf32>, vector<16x16xf32>, vector<16x16xf32>, vector<16x16xf32> -> vector<16x64xf32>
    %214 = arith.truncf %213 : vector<16x64xf32> to vector<16x64xbf16>
    %c1_78 = arith.constant 1 : index
    %c0_79 = arith.constant 0 : index
    %c0_80 = arith.constant 0 : index
    %215 = vector.load %arg7[%c1_78, %c0_79, %c0_80] : memref<2x64x64xbf16, #tpu.memory_space<vmem>>, vector<1x64x64xbf16>
    %216 = vector.shape_cast %215 : vector<1x64x64xbf16> to vector<64x64xbf16>
    %cst_81 = arith.constant dense<0.000000e+00> : vector<16x64xf32>
    %217 = tpu.matmul %214, %216, %cst_81 {dimension_numbers = #tpu.dot_dimension_numbers<[1], [0], [0], [1], [0, 0, 1, 1], [], []>} : vector<16x64xbf16>, vector<64x64xbf16>, vector<16x64xf32> -> vector<16x64xf32>
    %c1_82 = arith.constant 1 : index
    %c0_83 = arith.constant 0 : index
    %c0_84 = arith.constant 0 : index
    %218 = vector.load %arg8[%c1_82, %c0_83, %c0_84] : memref<2x1x64xf32, #tpu.memory_space<vmem>>, vector<1x1x64xf32>
    %219 = vector.shape_cast %218 : vector<1x1x64xf32> to vector<1x64xf32>
    %220 = vector.broadcast %219 : vector<1x64xf32> to vector<16x64xf32>
    %221 = arith.addf %217, %220 : vector<16x64xf32>
    %222 = arith.addf %161, %221 : vector<16x64xf32>
    %c1_85 = arith.constant 1 : index
    %c0_86 = arith.constant 0 : index
    %c0_87 = arith.constant 0 : index
    %223 = vector.load %arg9[%c1_85, %c0_86, %c0_87] : memref<2x1x64xf32, #tpu.memory_space<vmem>>, vector<1x1x64xf32>
    %224 = vector.shape_cast %223 : vector<1x1x64xf32> to vector<1x64xf32>
    %c1_88 = arith.constant 1 : index
    %c0_89 = arith.constant 0 : index
    %c0_90 = arith.constant 0 : index
    %225 = vector.load %arg10[%c1_88, %c0_89, %c0_90] : memref<2x1x64xf32, #tpu.memory_space<vmem>>, vector<1x1x64xf32>
    %226 = vector.shape_cast %225 : vector<1x1x64xf32> to vector<1x64xf32>
    %cst_91 = arith.constant dense<0.000000e+00> : vector<16xf32>
    %227 = vector.multi_reduction <add>, %222, %cst_91 [1] : vector<16x64xf32> to vector<16xf32>
    %228 = vector.shape_cast %227 : vector<16xf32> to vector<16x1xf32>
    %cst_92 = arith.constant 6.400000e+01 : f32
    %229 = vector.broadcast %cst_92 : f32 to vector<16x1xf32>
    %230 = arith.divf %228, %229 : vector<16x1xf32>
    %231 = vector.broadcast %230 : vector<16x1xf32> to vector<16x64xf32>
    %232 = arith.subf %222, %231 : vector<16x64xf32>
    %233 = arith.mulf %232, %232 : vector<16x64xf32>
    %cst_93 = arith.constant dense<0.000000e+00> : vector<16xf32>
    %234 = vector.multi_reduction <add>, %233, %cst_93 [1] : vector<16x64xf32> to vector<16xf32>
    %235 = vector.shape_cast %234 : vector<16xf32> to vector<16x1xf32>
    %cst_94 = arith.constant 6.400000e+01 : f32
    %236 = vector.broadcast %cst_94 : f32 to vector<16x1xf32>
    %237 = arith.divf %235, %236 : vector<16x1xf32>
    %238 = vector.broadcast %230 : vector<16x1xf32> to vector<16x64xf32>
    %239 = arith.subf %222, %238 : vector<16x64xf32>
    %cst_95 = arith.constant 9.99999974E-6 : f32
    %240 = vector.broadcast %cst_95 : f32 to vector<16x1xf32>
    %241 = arith.addf %237, %240 : vector<16x1xf32>
    %242 = math.rsqrt %241 : vector<16x1xf32>
    %243 = vector.broadcast %242 : vector<16x1xf32> to vector<16x64xf32>
    %244 = arith.mulf %239, %243 : vector<16x64xf32>
    %245 = vector.broadcast %224 : vector<1x64xf32> to vector<16x64xf32>
    %246 = arith.mulf %244, %245 : vector<16x64xf32>
    %247 = vector.broadcast %226 : vector<1x64xf32> to vector<16x64xf32>
    %248 = arith.addf %246, %247 : vector<16x64xf32>
    %249 = arith.truncf %248 : vector<16x64xf32> to vector<16x64xbf16>
    %c1_96 = arith.constant 1 : index
    %c0_97 = arith.constant 0 : index
    %c0_98 = arith.constant 0 : index
    %250 = vector.load %arg13[%c1_96, %c0_97, %c0_98] : memref<2x64x2048xbf16, #tpu.memory_space<vmem>>, vector<1x64x2048xbf16>
    %251 = vector.shape_cast %250 : vector<1x64x2048xbf16> to vector<64x2048xbf16>
    %cst_99 = arith.constant dense<0.000000e+00> : vector<16x2048xf32>
    %252 = tpu.matmul %249, %251, %cst_99 {dimension_numbers = #tpu.dot_dimension_numbers<[1], [0], [0], [1], [0, 0, 1, 1], [], []>} : vector<16x64xbf16>, vector<64x2048xbf16>, vector<16x2048xf32> -> vector<16x2048xf32>
    %c1_100 = arith.constant 1 : index
    %c0_101 = arith.constant 0 : index
    %c0_102 = arith.constant 0 : index
    %253 = vector.load %arg14[%c1_100, %c0_101, %c0_102] : memref<2x1x2048xf32, #tpu.memory_space<vmem>>, vector<1x1x2048xf32>
    %254 = vector.shape_cast %253 : vector<1x1x2048xf32> to vector<1x2048xf32>
    %255 = vector.broadcast %254 : vector<1x2048xf32> to vector<16x2048xf32>
    %256 = arith.addf %252, %255 : vector<16x2048xf32>
    %cst_103 = arith.constant 0.000000e+00 : f32
    %257 = vector.broadcast %cst_103 : f32 to vector<16x2048xf32>
    %258 = arith.maximumf %256, %257 : vector<16x2048xf32>
    %259 = arith.truncf %258 : vector<16x2048xf32> to vector<16x2048xbf16>
    %c1_104 = arith.constant 1 : index
    %c0_105 = arith.constant 0 : index
    %c0_106 = arith.constant 0 : index
    %260 = vector.load %arg15[%c1_104, %c0_105, %c0_106] : memref<2x2048x64xbf16, #tpu.memory_space<vmem>>, vector<1x2048x64xbf16>
    %261 = vector.shape_cast %260 : vector<1x2048x64xbf16> to vector<2048x64xbf16>
    %cst_107 = arith.constant dense<0.000000e+00> : vector<16x64xf32>
    %262 = tpu.matmul %259, %261, %cst_107 {dimension_numbers = #tpu.dot_dimension_numbers<[1], [0], [0], [1], [0, 0, 1, 1], [], []>} : vector<16x2048xbf16>, vector<2048x64xbf16>, vector<16x64xf32> -> vector<16x64xf32>
    %c1_108 = arith.constant 1 : index
    %c0_109 = arith.constant 0 : index
    %c0_110 = arith.constant 0 : index
    %263 = vector.load %arg16[%c1_108, %c0_109, %c0_110] : memref<2x1x64xf32, #tpu.memory_space<vmem>>, vector<1x1x64xf32>
    %264 = vector.shape_cast %263 : vector<1x1x64xf32> to vector<1x64xf32>
    %265 = vector.broadcast %264 : vector<1x64xf32> to vector<16x64xf32>
    %266 = arith.addf %262, %265 : vector<16x64xf32>
    %267 = arith.addf %248, %266 : vector<16x64xf32>
    %c1_111 = arith.constant 1 : index
    %c0_112 = arith.constant 0 : index
    %c0_113 = arith.constant 0 : index
    %268 = vector.load %arg11[%c1_111, %c0_112, %c0_113] : memref<2x1x64xf32, #tpu.memory_space<vmem>>, vector<1x1x64xf32>
    %269 = vector.shape_cast %268 : vector<1x1x64xf32> to vector<1x64xf32>
    %c1_114 = arith.constant 1 : index
    %c0_115 = arith.constant 0 : index
    %c0_116 = arith.constant 0 : index
    %270 = vector.load %arg12[%c1_114, %c0_115, %c0_116] : memref<2x1x64xf32, #tpu.memory_space<vmem>>, vector<1x1x64xf32>
    %271 = vector.shape_cast %270 : vector<1x1x64xf32> to vector<1x64xf32>
    %cst_117 = arith.constant dense<0.000000e+00> : vector<16xf32>
    %272 = vector.multi_reduction <add>, %267, %cst_117 [1] : vector<16x64xf32> to vector<16xf32>
    %273 = vector.shape_cast %272 : vector<16xf32> to vector<16x1xf32>
    %cst_118 = arith.constant 6.400000e+01 : f32
    %274 = vector.broadcast %cst_118 : f32 to vector<16x1xf32>
    %275 = arith.divf %273, %274 : vector<16x1xf32>
    %276 = vector.broadcast %275 : vector<16x1xf32> to vector<16x64xf32>
    %277 = arith.subf %267, %276 : vector<16x64xf32>
    %278 = arith.mulf %277, %277 : vector<16x64xf32>
    %cst_119 = arith.constant dense<0.000000e+00> : vector<16xf32>
    %279 = vector.multi_reduction <add>, %278, %cst_119 [1] : vector<16x64xf32> to vector<16xf32>
    %280 = vector.shape_cast %279 : vector<16xf32> to vector<16x1xf32>
    %cst_120 = arith.constant 6.400000e+01 : f32
    %281 = vector.broadcast %cst_120 : f32 to vector<16x1xf32>
    %282 = arith.divf %280, %281 : vector<16x1xf32>
    %283 = vector.broadcast %275 : vector<16x1xf32> to vector<16x64xf32>
    %284 = arith.subf %267, %283 : vector<16x64xf32>
    %cst_121 = arith.constant 9.99999974E-6 : f32
    %285 = vector.broadcast %cst_121 : f32 to vector<16x1xf32>
    %286 = arith.addf %282, %285 : vector<16x1xf32>
    %287 = math.rsqrt %286 : vector<16x1xf32>
    %288 = vector.broadcast %287 : vector<16x1xf32> to vector<16x64xf32>
    %289 = arith.mulf %284, %288 : vector<16x64xf32>
    %290 = vector.broadcast %269 : vector<1x64xf32> to vector<16x64xf32>
    %291 = arith.mulf %289, %290 : vector<16x64xf32>
    %292 = vector.broadcast %271 : vector<1x64xf32> to vector<16x64xf32>
    %293 = arith.addf %291, %292 : vector<16x64xf32>
    %294 = vector.shape_cast %293 : vector<16x64xf32> to vector<2x8x64xf32>
    %295 = vector.extract_strided_slice %294 {offsets = [0, 0, 0], sizes = [2, 1, 64], strides = [1, 1, 1]} : vector<2x8x64xf32> to vector<2x1x64xf32>
    %296 = vector.shape_cast %295 : vector<2x1x64xf32> to vector<2x64xf32>
    %297 = vector.extract_strided_slice %294 {offsets = [0, 1, 0], sizes = [2, 1, 64], strides = [1, 1, 1]} : vector<2x8x64xf32> to vector<2x1x64xf32>
    %298 = vector.shape_cast %297 : vector<2x1x64xf32> to vector<2x64xf32>
    %299 = vector.extract_strided_slice %294 {offsets = [0, 2, 0], sizes = [2, 1, 64], strides = [1, 1, 1]} : vector<2x8x64xf32> to vector<2x1x64xf32>
    %300 = vector.shape_cast %299 : vector<2x1x64xf32> to vector<2x64xf32>
    %301 = vector.extract_strided_slice %294 {offsets = [0, 3, 0], sizes = [2, 1, 64], strides = [1, 1, 1]} : vector<2x8x64xf32> to vector<2x1x64xf32>
    %302 = vector.shape_cast %301 : vector<2x1x64xf32> to vector<2x64xf32>
    %303 = vector.extract_strided_slice %294 {offsets = [0, 4, 0], sizes = [2, 1, 64], strides = [1, 1, 1]} : vector<2x8x64xf32> to vector<2x1x64xf32>
    %304 = vector.shape_cast %303 : vector<2x1x64xf32> to vector<2x64xf32>
    %305 = vector.extract_strided_slice %294 {offsets = [0, 5, 0], sizes = [2, 1, 64], strides = [1, 1, 1]} : vector<2x8x64xf32> to vector<2x1x64xf32>
    %306 = vector.shape_cast %305 : vector<2x1x64xf32> to vector<2x64xf32>
    %307 = vector.extract_strided_slice %294 {offsets = [0, 6, 0], sizes = [2, 1, 64], strides = [1, 1, 1]} : vector<2x8x64xf32> to vector<2x1x64xf32>
    %308 = vector.shape_cast %307 : vector<2x1x64xf32> to vector<2x64xf32>
    %309 = vector.extract_strided_slice %294 {offsets = [0, 7, 0], sizes = [2, 1, 64], strides = [1, 1, 1]} : vector<2x8x64xf32> to vector<2x1x64xf32>
    %310 = vector.shape_cast %309 : vector<2x1x64xf32> to vector<2x64xf32>
    %311 = tpu.concatenate %296, %298, %300, %302, %304, %306, %308, %310 in 1 : vector<2x64xf32>, vector<2x64xf32>, vector<2x64xf32>, vector<2x64xf32>, vector<2x64xf32>, vector<2x64xf32>, vector<2x64xf32>, vector<2x64xf32> -> vector<2x512xf32>
    %c0_122 = arith.constant 0 : index
    %c0_123 = arith.constant 0 : index
    %312 = vector.load %arg17[%c0_122, %c0_123] : memref<2x512xf32, #tpu.memory_space<vmem>>, vector<2x512xf32>
    tpu.vector_store %arg17[%c0_122, %c0_123], %311 {strides = array<i32>} : memref<2x512xf32, #tpu.memory_space<vmem>>, vector<2x512xf32>,
    return
  }
  func.func @transform_0(%arg0: i32) -> (i32, i32, i32) {
    %c0_i32 = arith.constant 0 : i32
    %c0_i32_0 = arith.constant 0 : i32
    %c0_i32_1 = arith.constant 0 : i32
    return %arg0, %c0_i32, %c0_i32_0 : i32, i32, i32
  }
  func.func @transform_1(%arg0: i32) -> (i32, i32, i32) {
    %c0_i32 = arith.constant 0 : i32
    %c0_i32_0 = arith.constant 0 : i32
    %c0_i32_1 = arith.constant 0 : i32
    return %arg0, %c0_i32, %c0_i32_0 : i32, i32, i32
  }
  func.func @transform_2(%arg0: i32) -> (i32, i32) {
    %c0_i32 = arith.constant 0 : i32
    %c0_i32_0 = arith.constant 0 : i32
    %c0_i32_1 = arith.constant 0 : i32
    return %c0_i32, %c0_i32_0 : i32, i32
  }
  func.func @transform_3(%arg0: i32) -> (i32, i32) {
    %c0_i32 = arith.constant 0 : i32
    %c0_i32_0 = arith.constant 0 : i32
    %c0_i32_1 = arith.constant 0 : i32
    return %c0_i32, %c0_i32_0 : i32, i32
  }
  func.func @transform_4(%arg0: i32) -> (i32, i32, i32) {
    %c0_i32 = arith.constant 0 : i32
    %c0_i32_0 = arith.constant 0 : i32
    %c0_i32_1 = arith.constant 0 : i32
    %c0_i32_2 = arith.constant 0 : i32
    return %c0_i32, %c0_i32_0, %c0_i32_1 : i32, i32, i32
  }
  func.func @transform_5(%arg0: i32) -> (i32, i32, i32) {
    %c0_i32 = arith.constant 0 : i32
    %c0_i32_0 = arith.constant 0 : i32
    %c0_i32_1 = arith.constant 0 : i32
    %c0_i32_2 = arith.constant 0 : i32
    return %c0_i32, %c0_i32_0, %c0_i32_1 : i32, i32, i32
  }
  func.func @transform_6(%arg0: i32) -> (i32, i32, i32) {
    %c0_i32 = arith.constant 0 : i32
    %c0_i32_0 = arith.constant 0 : i32
    %c0_i32_1 = arith.constant 0 : i32
    %c0_i32_2 = arith.constant 0 : i32
    return %c0_i32, %c0_i32_0, %c0_i32_1 : i32, i32, i32
  }
  func.func @transform_7(%arg0: i32) -> (i32, i32, i32) {
    %c0_i32 = arith.constant 0 : i32
    %c0_i32_0 = arith.constant 0 : i32
    %c0_i32_1 = arith.constant 0 : i32
    %c0_i32_2 = arith.constant 0 : i32
    return %c0_i32, %c0_i32_0, %c0_i32_1 : i32, i32, i32
  }
  func.func @transform_8(%arg0: i32) -> (i32, i32, i32) {
    %c0_i32 = arith.constant 0 : i32
    %c0_i32_0 = arith.constant 0 : i32
    %c0_i32_1 = arith.constant 0 : i32
    %c0_i32_2 = arith.constant 0 : i32
    return %c0_i32, %c0_i32_0, %c0_i32_1 : i32, i32, i32
  }
  func.func @transform_9(%arg0: i32) -> (i32, i32, i32) {
    %c0_i32 = arith.constant 0 : i32
    %c0_i32_0 = arith.constant 0 : i32
    %c0_i32_1 = arith.constant 0 : i32
    %c0_i32_2 = arith.constant 0 : i32
    return %c0_i32, %c0_i32_0, %c0_i32_1 : i32, i32, i32
  }
  func.func @transform_10(%arg0: i32) -> (i32, i32, i32) {
    %c0_i32 = arith.constant 0 : i32
    %c0_i32_0 = arith.constant 0 : i32
    %c0_i32_1 = arith.constant 0 : i32
    %c0_i32_2 = arith.constant 0 : i32
    return %c0_i32, %c0_i32_0, %c0_i32_1 : i32, i32, i32
  }
  func.func @transform_11(%arg0: i32) -> (i32, i32, i32) {
    %c0_i32 = arith.constant 0 : i32
    %c0_i32_0 = arith.constant 0 : i32
    %c0_i32_1 = arith.constant 0 : i32
    %c0_i32_2 = arith.constant 0 : i32
    return %c0_i32, %c0_i32_0, %c0_i32_1 : i32, i32, i32
  }
  func.func @transform_12(%arg0: i32) -> (i32, i32, i32) {
    %c0_i32 = arith.constant 0 : i32
    %c0_i32_0 = arith.constant 0 : i32
    %c0_i32_1 = arith.constant 0 : i32
    %c0_i32_2 = arith.constant 0 : i32
    return %c0_i32, %c0_i32_0, %c0_i32_1 : i32, i32, i32
  }
  func.func @transform_13(%arg0: i32) -> (i32, i32, i32) {
    %c0_i32 = arith.constant 0 : i32
    %c0_i32_0 = arith.constant 0 : i32
    %c0_i32_1 = arith.constant 0 : i32
    %c0_i32_2 = arith.constant 0 : i32
    return %c0_i32, %c0_i32_0, %c0_i32_1 : i32, i32, i32
  }
  func.func @transform_14(%arg0: i32) -> (i32, i32, i32) {
    %c0_i32 = arith.constant 0 : i32
    %c0_i32_0 = arith.constant 0 : i32
    %c0_i32_1 = arith.constant 0 : i32
    %c0_i32_2 = arith.constant 0 : i32
    return %c0_i32, %c0_i32_0, %c0_i32_1 : i32, i32, i32
  }
  func.func @transform_15(%arg0: i32) -> (i32, i32, i32) {
    %c0_i32 = arith.constant 0 : i32
    %c0_i32_0 = arith.constant 0 : i32
    %c0_i32_1 = arith.constant 0 : i32
    %c0_i32_2 = arith.constant 0 : i32
    return %c0_i32, %c0_i32_0, %c0_i32_1 : i32, i32, i32
  }
  func.func @transform_16(%arg0: i32) -> (i32, i32) {
    %c0_i32 = arith.constant 0 : i32
    %c0_i32_0 = arith.constant 0 : i32
    return %arg0, %c0_i32 : i32, i32
  }
}

</mosaic_0001>

<llo_original>
// kernel: tpu_custom_call.1
$region0: #{tpu_custom_call.1}
  #allocation0 [shape = 'u32[]', space=smem, size = 0x4, offset = 0x4, fixed_abs, tag = 'smem constant byte address 0x4 - core index']
  #allocation1 [shape = 'u32[144,128]{1,0:T(1,128)}', space=vmem, size = 0x12000, scoped, tag = 'internal scratch']
  %s0 = inlined_call_operand.vmem [shape: f32[2,8,64], index: 0, kind: input, shape index: {}]
  %s1 = inlined_call_operand.vmem [shape: f32[2,1,8], index: 1, kind: input, shape index: {}]
  %s2 = inlined_call_operand.vmem [shape: f32[1,64], index: 2, kind: input, shape index: {}]
  %s3 = inlined_call_operand.vmem [shape: f32[1,64], index: 3, kind: input, shape index: {}]
  %s4 = inlined_call_operand.vmem [shape: bf16[2,64,192], index: 4, kind: input, shape index: {}]
  %s5 = inlined_call_operand.vmem [shape: f32[2,1,192], index: 5, kind: input, shape index: {}]
  %s6 = inlined_call_operand.vmem [shape: bf16[2,64,64], index: 6, kind: input, shape index: {}]
  %s7 = inlined_call_operand.vmem [shape: f32[2,1,64], index: 7, kind: input, shape index: {}]
  %s8 = inlined_call_operand.vmem [shape: f32[2,1,64], index: 8, kind: input, shape index: {}]
  %s9 = inlined_call_operand.vmem [shape: f32[2,1,64], index: 9, kind: input, shape index: {}]
  %s10 = inlined_call_operand.vmem [shape: f32[2,1,64], index: 10, kind: input, shape index: {}]
  %s11 = inlined_call_operand.vmem [shape: f32[2,1,64], index: 11, kind: input, shape index: {}]
  %s12 = inlined_call_operand.vmem [shape: bf16[2,64,2048], index: 12, kind: input, shape index: {}]
  %s13 = inlined_call_operand.vmem [shape: f32[2,1,2048], index: 13, kind: input, shape index: {}]
  %s14 = inlined_call_operand.vmem [shape: bf16[2,2048,64], index: 14, kind: input, shape index: {}]
  %s15 = inlined_call_operand.vmem [shape: f32[2,1,64], index: 15, kind: input, shape index: {}]
  %s16 = inlined_call_operand.hbm [shape: f32[2,512], index: 16, kind: output, shape index: {}]
  %s17 = sld [smem:[#allocation0]]
  $region74: #{tpu_custom_call.1} parent=0
    _
  %s19 = ssub.s32 1, %s17
  %s20 = scalar_select 0, %s19, %s17
  $region1: #{tpu_custom_call.1} parent=0
    #allocation2 [shape = 'u8[4096]{0}', space=vmem, size = 0x1000, scoped, tag = 'output window, operand 0, single buffered']
    #allocation3 [shape = 's32[1]{0}', space=sflag, size = 0x4, scoped, tag = 'scoped memory for tpu_custom_call.1']
    %21 = vsyncpa [#allocation3], 0
    // Predicated region
    $region2: #{tpu_custom_call.1} parent=1 // pred_check
      _
    $region3: #{tpu_custom_call.1} parent=1 // pred_check_branch
      %23 = sbr.rel (0) target = $region5
    $region4: #{tpu_custom_call.1} parent=1 // pred_region
      _
    $region5: #{tpu_custom_call.1} parent=1 // pred_fallthru
      _
    // Predicated region
    $region6: #{tpu_custom_call.1} parent=1 // pred_check
      _
    $region7: #{tpu_custom_call.1} parent=1 // pred_check_branch
      %25 = sbr.rel (0) target = $region9
    $region8: #{tpu_custom_call.1} parent=1 // pred_region
      _
    $region9: #{tpu_custom_call.1} parent=1 // pred_fallthru
      _
    // Predicated region
    $region10: #{tpu_custom_call.1} parent=1 // pred_check
      _
    $region11: #{tpu_custom_call.1} parent=1 // pred_check_branch
      %27 = sbr.rel (0) target = $region13
    $region12: #{tpu_custom_call.1} parent=1 // pred_region
      _
    $region13: #{tpu_custom_call.1} parent=1 // pred_fallthru
      _
    // Predicated region
    $region14: #{tpu_custom_call.1} parent=1 // pred_check
      _
    $region15: #{tpu_custom_call.1} parent=1 // pred_check_branch
      %29 = sbr.rel (0) target = $region17
    $region16: #{tpu_custom_call.1} parent=1 // pred_region
      _
    $region17: #{tpu_custom_call.1} parent=1 // pred_fallthru
      _
    // Predicated region
    $region18: #{tpu_custom_call.1} parent=1 // pred_check
      _
    $region19: #{tpu_custom_call.1} parent=1 // pred_check_branch
      %31 = sbr.rel (0) target = $region21
    $region20: #{tpu_custom_call.1} parent=1 // pred_region
      _
    $region21: #{tpu_custom_call.1} parent=1 // pred_fallthru
      _
    // Predicated region
    $region22: #{tpu_custom_call.1} parent=1 // pred_check
      _
    $region23: #{tpu_custom_call.1} parent=1 // pred_check_branch
      %33 = sbr.rel (0) target = $region25
    $region24: #{tpu_custom_call.1} parent=1 // pred_region
      _
    $region25: #{tpu_custom_call.1} parent=1 // pred_fallthru
      _
    // Predicated region
    $region26: #{tpu_custom_call.1} parent=1 // pred_check
      _
    $region27: #{tpu_custom_call.1} parent=1 // pred_check_branch
      %35 = sbr.rel (0) target = $region29
    $region28: #{tpu_custom_call.1} parent=1 // pred_region
      _
    $region29: #{tpu_custom_call.1} parent=1 // pred_fallthru
      _
    // Predicated region
    $region30: #{tpu_custom_call.1} parent=1 // pred_check
      _
    $region31: #{tpu_custom_call.1} parent=1 // pred_check_branch
      %37 = sbr.rel (0) target = $region33
    $region32: #{tpu_custom_call.1} parent=1 // pred_region
      _
    $region33: #{tpu_custom_call.1} parent=1 // pred_fallthru
      _
    // Predicated region
    $region34: #{tpu_custom_call.1} parent=1 // pred_check
      _
    $region35: #{tpu_custom_call.1} parent=1 // pred_check_branch
      %39 = sbr.rel (0) target = $region37
    $region36: #{tpu_custom_call.1} parent=1 // pred_region
      _
    $region37: #{tpu_custom_call.1} parent=1 // pred_fallthru
      _
    // Predicated region
    $region38: #{tpu_custom_call.1} parent=1 // pred_check
      _
    $region39: #{tpu_custom_call.1} parent=1 // pred_check_branch
      %41 = sbr.rel (0) target = $region41
    $region40: #{tpu_custom_call.1} parent=1 // pred_region
      _
    $region41: #{tpu_custom_call.1} parent=1 // pred_fallthru
      _
    // Predicated region
    $region42: #{tpu_custom_call.1} parent=1 // pred_check
      _
    $region43: #{tpu_custom_call.1} parent=1 // pred_check_branch
      %43 = sbr.rel (0) target = $region45
    $region44: #{tpu_custom_call.1} parent=1 // pred_region
      _
    $region45: #{tpu_custom_call.1} parent=1 // pred_fallthru
      _
    // Predicated region
    $region46: #{tpu_custom_call.1} parent=1 // pred_check
      _
    $region47: #{tpu_custom_call.1} parent=1 // pred_check_branch
      %45 = sbr.rel (0) target = $region49
    $region48: #{tpu_custom_call.1} parent=1 // pred_region
      _
    $region49: #{tpu_custom_call.1} parent=1 // pred_fallthru
      _
    // Predicated region
    $region50: #{tpu_custom_call.1} parent=1 // pred_check
      _
    $region51: #{tpu_custom_call.1} parent=1 // pred_check_branch
      %47 = sbr.rel (0) target = $region53
    $region52: #{tpu_custom_call.1} parent=1 // pred_region
      _
    $region53: #{tpu_custom_call.1} parent=1 // pred_fallthru
      _
    // Predicated region
    $region54: #{tpu_custom_call.1} parent=1 // pred_check
      _
    $region55: #{tpu_custom_call.1} parent=1 // pred_check_branch
      %49 = sbr.rel (0) target = $region57
    $region56: #{tpu_custom_call.1} parent=1 // pred_region
      _
    $region57: #{tpu_custom_call.1} parent=1 // pred_fallthru
      _
    // Predicated region
    $region58: #{tpu_custom_call.1} parent=1 // pred_check
      _
    $region59: #{tpu_custom_call.1} parent=1 // pred_check_branch
      %51 = sbr.rel (0) target = $region61
    $region60: #{tpu_custom_call.1} parent=1 // pred_region
      _
    $region61: #{tpu_custom_call.1} parent=1 // pred_fallthru
      _
    // Predicated region
    $region62: #{tpu_custom_call.1} parent=1 // pred_check
      _
    $region63: #{tpu_custom_call.1} parent=1 // pred_check_branch
      %53 = sbr.rel (0) target = $region65
    $region64: #{tpu_custom_call.1} parent=1 // pred_region
      _
    $region65: #{tpu_custom_call.1} parent=1 // pred_fallthru
      _
    %v55 = vld [vmem:[%s0] sm:$0xff]
    %v56 = vld [vmem:[%s0 + $0x8] sm:$0xff]
    %v57 = vld [vmem:[%s2] sm:$0x1]
    %v58 = vld [vmem:[%s3] sm:$0x1]
    %vm59 = vcmask 523264
    %v60 = vsel %vm59, %v55, 0.0
    %61 = vadd.xlane.f32.xlu0 %v60
    %v62 = vpop.xlane.xlu0 %61
    %v63 = vsel %vm59, %v56, 0.0
    %64 = vadd.xlane.f32.xlu0 %v63
    %v65 = vpop.xlane.xlu0 %64
    %v66 = vrcp.pop 64.0
    %v67 = vmul.f32 %v62, %v66
    %v68 = vmul.f32 %v65, %v66
    %v69 = vsub.f32 %v55, %v67
    %v70 = vsub.f32 %v56, %v68
    %v71 = vmul.f32 %v69, %v69
    %v72 = vmul.f32 %v70, %v70
    %v73 = vsel %vm59, %v71, 0.0
    %74 = vadd.xlane.f32.xlu0 %v73
    %v75 = vpop.xlane.xlu0 %74
    %v76 = vsel %vm59, %v72, 0.0
    %77 = vadd.xlane.f32.xlu0 %v76
    %v78 = vpop.xlane.xlu0 %77
    %v79 = vmul.f32 %v75, %v66
    %v80 = vmul.f32 %v78, %v66
    %v81 = vadd.f32 %v79, 1e-05
    %v82 = vadd.f32 %v80, 1e-05
    %v83 = vrsqrt.pop %v81
    %v84 = vrsqrt.pop %v82
    %v85 = vmul.f32 %v69, %v83
    %v86 = vmul.f32 %v70, %v84
    %v88 = vlaneseq
    %v89 = vshrl.u32 %v88, 7
    %v90 = vsub.s32 0, %v89
    %v91 = vrot.slane %v57, %v90
    %v93 = vmul.f32 %v85, %v91
    %v94 = vmul.f32 %v86, %v91
    %v96 = vlaneseq
    %v97 = vshrl.u32 %v96, 7
    %v98 = vsub.s32 0, %v97
    %v99 = vrot.slane %v58, %v98
    %v101 = vadd.f32 %v93, %v99
    %v102 = vadd.f32 %v94, %v99
    %v103 = vld [vmem:[%s1] sm:$0x1]
    %v104 = vld [vmem:[%s1 + $0x1] sm:$0x1]
    %v107 = vlaneseq
    %v108 = vshrl.u32 %v107, 7
    %v109 = vsub.s32 0, %v108
    %v110 = vrot.slane %v103, %v109
    %v111 = vlaneseq
    %v112 = vshrl.u32 %v111, 7
    %v113 = vsub.s32 0, %v112
    %v114 = vrot.slane %v104, %v113
    %v117 = vpack.c.bf16 %v102, %v101
    %v118 = vld [vmem:[%s4] sm:$0xff]
    %v119 = vld [vmem:[%s4 + $0x8] sm:$0xff]
    %v120 = vld [vmem:[%s4 + $0x10] sm:$0xff]
    %v121 = vld [vmem:[%s4 + $0x18] sm:$0xff]
    %v122 = vld [vmem:[%s4 + $0x20] sm:$0xff]
    %v123 = vld [vmem:[%s4 + $0x28] sm:$0xff]
    %v124 = vld [vmem:[%s4 + $0x30] sm:$0xff]
    %v125 = vld [vmem:[%s4 + $0x38] sm:$0xff]
    %v126 = vld [vmem:[%s5] sm:$0x3]
    %v128 = vlaneseq
    %v129 = vshrl.u32 %v128, 7
    %v130 = vsub.s32 0, %v129
    %v131 = vrot.slane %v126, %v130
    %v132 = vlaneseq
    %v133 = vshrl.u32 %v132, 7
    %v134 = vsub.s32 1, %v133
    %v135 = vrot.slane %v126, %v134
    %v146 = vunpack.c.l.b16 %v118
    %v147 = vunpack.c.h.b16 %v118
    %v148 = vunpack.c.l.b16 %v119
    %v149 = vunpack.c.h.b16 %v119
    %v150 = vunpack.c.l.b16 %v120
    %v151 = vunpack.c.h.b16 %v120
    %v152 = vunpack.c.l.b16 %v121
    %v153 = vunpack.c.h.b16 %v121
    %v154 = vunpack.c.l.b16 %v122
    %v155 = vunpack.c.h.b16 %v122
    %v156 = vunpack.c.l.b16 %v123
    %v157 = vunpack.c.h.b16 %v123
    %v158 = vunpack.c.l.b16 %v124
    %v159 = vunpack.c.h.b16 %v124
    %v160 = vunpack.c.l.b16 %v125
    %v161 = vunpack.c.h.b16 %v125
    %v162 = vpack.c.b16 %v148, %v146
    %v163 = vpack.c.b16 %v149, %v147
    %v164 = vpack.c.b16 %v152, %v150
    %v165 = vpack.c.b16 %v153, %v151
    %v166 = vpack.c.b16 %v156, %v154
    %v167 = vpack.c.b16 %v157, %v155
    %v168 = vpack.c.b16 %v160, %v158
    %v169 = vpack.c.b16 %v161, %v159
    %v179 = vsel %vm59, %v117, 0
    %181 = vmatprep.subr.bf16.mxu0 %v163
    %182 = vmatpush1.bf16.msra.mxu0 %v162
    %183 = vmatprep.subr.bf16.mxu0 %v165
    %184 = vmatpush1.bf16.msra.mxu0 %v164
    %185 = vmatprep.subr.bf16.mxu0 %v167
    %186 = vmatpush1.bf16.msra.mxu0 %v166
    %187 = vmatprep.subr.bf16.mxu0 %v169
    %188 = vmatpush1.bf16.msra.mxu0 %v168
    %189 = vmatprep.subr.bf16.mxu0 0
    %190 = vmatpush1.bf16.msra.mxu0 0
    %191 = vmatprep.subr.bf16.mxu0 0
    %192 = vmatpush1.bf16.msra.mxu0 0
    %193 = vmatprep.subr.bf16.mxu0 0
    %194 = vmatpush1.bf16.msra.mxu0 0
    %195 = vmatprep.subr.bf16.mxu0 0
    %196 = vmatpush1.bf16.msra.mxu0 0
    %197 = vmatprep.subr.bf16.mxu0 0
    %198 = vmatpush1.bf16.msra.mxu0 0
    %199 = vmatprep.subr.bf16.mxu0 0
    %200 = vmatpush1.bf16.msra.mxu0 0
    %201 = vmatprep.subr.bf16.mxu0 0
    %202 = vmatpush1.bf16.msra.mxu0 0
    %203 = vmatprep.subr.bf16.mxu0 0
    %204 = vmatpush1.bf16.msra.mxu0 0
    %205 = vmatprep.subr.bf16.mxu0 0
    %206 = vmatpush1.bf16.msra.mxu0 0
    %207 = vmatprep.subr.bf16.mxu0 0
    %208 = vmatpush1.bf16.msra.mxu0 0
    %209 = vmatprep.subr.bf16.mxu0 0
    %210 = vmatpush1.bf16.msra.mxu0 0
    %211 = vmatprep.subr.bf16.mxu0 0
    %212 = vmatpush1.bf16.msra.mxu0 0
    %213 = vmatprep.mubr.bf16.mxu0 0
    %214 = vmatmul.mubr.bf16.gmra.mrb[0].mxu0 %v179
    %v215 = vpop.f32.mrb[0].mxu0
    %v216 = vadd.f32 %v131, %v215
    %v217 = vpop.f32.mrb[0].mxu0
    %v218 = vadd.f32 %v135, %v217
    %v219 = vpop.f32.mrb[0].mxu0
    %v220 = vadd.f32 %v131, %v219
    %v221 = vpop.f32.mrb[0].mxu0
    %v222 = vadd.f32 %v135, %v221
    %223 = vdwg.mxu0
    %226 = vrot.lane.b32.xlu0 %v216, 112
    %v227 = vpop.permute.xlu0 %226
    %228 = vrot.lane.b32.xlu0 %v220, 112
    %v229 = vpop.permute.xlu0 %228
    %232 = vrot.lane.b32.xlu0 %v216, 96
    %v233 = vpop.permute.xlu0 %232
    %234 = vrot.lane.b32.xlu0 %v220, 96
    %v235 = vpop.permute.xlu0 %234
    %238 = vrot.lane.b32.xlu0 %v216, 80
    %v239 = vpop.permute.xlu0 %238
    %240 = vrot.lane.b32.xlu0 %v220, 80
    %v241 = vpop.permute.xlu0 %240
    %v244 = vpack.c.bf16 %v216, %v216
    %v245 = vpack.c.bf16 %v220, %v220
    %v246 = vpack.c.bf16 %v227, %v227
    %v247 = vpack.c.bf16 %v229, %v229
    %v248 = vpack.c.bf16 %v233, %v233
    %v249 = vpack.c.bf16 %v235, %v235
    %v250 = vpack.c.bf16 %v239, %v239
    %v251 = vpack.c.bf16 %v241, %v241
    %254 = vrot.lane.b32.xlu0 %v218, 112
    %v255 = vpop.permute.xlu0 %254
    %256 = vrot.lane.b32.xlu0 %v222, 112
    %v257 = vpop.permute.xlu0 %256
    %260 = vrot.lane.b32.xlu0 %v218, 96
    %v261 = vpop.permute.xlu0 %260
    %262 = vrot.lane.b32.xlu0 %v222, 96
    %v263 = vpop.permute.xlu0 %262
    %266 = vrot.lane.b32.xlu0 %v218, 80
    %v267 = vpop.permute.xlu0 %266
    %268 = vrot.lane.b32.xlu0 %v222, 80
    %v269 = vpop.permute.xlu0 %268
    %v272 = vpack.c.bf16 %v218, %v218
    %v273 = vpack.c.bf16 %v222, %v222
    %v274 = vpack.c.bf16 %v255, %v255
    %v275 = vpack.c.bf16 %v257, %v257
    %v276 = vpack.c.bf16 %v261, %v261
    %v277 = vpack.c.bf16 %v263, %v263
    %v278 = vpack.c.bf16 %v267, %v267
    %v279 = vpack.c.bf16 %v269, %v269
    %281 = vrot.lane.b32.xlu0 %v244, 64
    %v282 = vpop.permute.xlu0 %281
    %vm283 = vcmask 130048
    %v285 = vsel %vm283, %v244, 0
    %v288 = vsel %vm283, %v282, 0
    %290 = vmatprep.subr.bf16.mxu0 0
    %291 = vmatpush1.bf16.xpose.msra.mxu0 %v288
    %292 = vmatprep.subr.bf16.mxu0 0
    %293 = vmatpush1.bf16.xpose.msra.mxu0 0
    %294 = vmatprep.subr.bf16.mxu0 0
    %295 = vmatpush1.bf16.xpose.msra.mxu0 0
    %296 = vmatprep.subr.bf16.mxu0 0
    %297 = vmatpush1.bf16.xpose.msra.mxu0 0
    %298 = vmatprep.subr.bf16.mxu0 0
    %299 = vmatpush1.bf16.xpose.msra.mxu0 0
    %300 = vmatprep.subr.bf16.mxu0 0
    %301 = vmatpush1.bf16.xpose.msra.mxu0 0
    %302 = vmatprep.subr.bf16.mxu0 0
    %303 = vmatpush1.bf16.xpose.msra.mxu0 0
    %304 = vmatprep.subr.bf16.mxu0 0
    %305 = vmatpush1.bf16.xpose.msra.mxu0 0
    %306 = vmatprep.subr.bf16.mxu0 0
    %307 = vmatpush1.bf16.xpose.msra.mxu0 0
    %308 = vmatprep.subr.bf16.mxu0 0
    %309 = vmatpush1.bf16.xpose.msra.mxu0 0
    %310 = vmatprep.subr.bf16.mxu0 0
    %311 = vmatpush1.bf16.xpose.msra.mxu0 0
    %312 = vmatprep.subr.bf16.mxu0 0
    %313 = vmatpush1.bf16.xpose.msra.mxu0 0
    %314 = vmatprep.subr.bf16.mxu0 0
    %315 = vmatpush1.bf16.xpose.msra.mxu0 0
    %316 = vmatprep.subr.bf16.mxu0 0
    %317 = vmatpush1.bf16.xpose.msra.mxu0 0
    %318 = vmatprep.subr.bf16.mxu0 0
    %319 = vmatpush1.bf16.xpose.msra.mxu0 0
    %320 = vmatprep.subr.bf16.mxu0 0
    %321 = vmatpush1.bf16.xpose.msra.mxu0 0
    %322 = vmatprep.mubr.bf16.mxu0 0
    %323 = vmatmul.mubr.bf16.gmra.mrb[0].mxu0 %v285
    %v324 = vpop.f32.mrb[0].mxu0
    %v325 = vadd.f32 %v110, %v324
    %v326 = vpop.f32.mrb[0].mxu0
    %v327 = vpop.f32.mrb[0].mxu0
    %v328 = vpop.f32.mrb[0].mxu0
    %329 = vdwg.mxu0
    %331 = vrot.lane.b32.xlu0 %v245, 64
    %v332 = vpop.permute.xlu0 %331
    %v334 = vsel %vm283, %v245, 0
    %v337 = vsel %vm283, %v332, 0
    %339 = vmatprep.subr.bf16.mxu0 0
    %340 = vmatpush1.bf16.xpose.msra.mxu0 %v337
    %341 = vmatprep.subr.bf16.mxu0 0
    %342 = vmatpush1.bf16.xpose.msra.mxu0 0
    %343 = vmatprep.subr.bf16.mxu0 0
    %344 = vmatpush1.bf16.xpose.msra.mxu0 0
    %345 = vmatprep.subr.bf16.mxu0 0
    %346 = vmatpush1.bf16.xpose.msra.mxu0 0
    %347 = vmatprep.subr.bf16.mxu0 0
    %348 = vmatpush1.bf16.xpose.msra.mxu0 0
    %349 = vmatprep.subr.bf16.mxu0 0
    %350 = vmatpush1.bf16.xpose.msra.mxu0 0
    %351 = vmatprep.subr.bf16.mxu0 0
    %352 = vmatpush1.bf16.xpose.msra.mxu0 0
    %353 = vmatprep.subr.bf16.mxu0 0
    %354 = vmatpush1.bf16.xpose.msra.mxu0 0
    %355 = vmatprep.subr.bf16.mxu0 0
    %356 = vmatpush1.bf16.xpose.msra.mxu0 0
    %357 = vmatprep.subr.bf16.mxu0 0
    %358 = vmatpush1.bf16.xpose.msra.mxu0 0
    %359 = vmatprep.subr.bf16.mxu0 0
    %360 = vmatpush1.bf16.xpose.msra.mxu0 0
    %361 = vmatprep.subr.bf16.mxu0 0
    %362 = vmatpush1.bf16.xpose.msra.mxu0 0
    %363 = vmatprep.subr.bf16.mxu0 0
    %364 = vmatpush1.bf16.xpose.msra.mxu0 0
    %365 = vmatprep.subr.bf16.mxu0 0
    %366 = vmatpush1.bf16.xpose.msra.mxu0 0
    %367 = vmatprep.subr.bf16.mxu0 0
    %368 = vmatpush1.bf16.xpose.msra.mxu0 0
    %369 = vmatprep.subr.bf16.mxu0 0
    %370 = vmatpush1.bf16.xpose.msra.mxu0 0
    %371 = vmatprep.mubr.bf16.mxu0 0
    %372 = vmatmul.mubr.bf16.gmra.mrb[0].mxu0 %v334
    %v373 = vpop.f32.mrb[0].mxu0
    %v374 = vadd.f32 %v114, %v373
    %v375 = vpop.f32.mrb[0].mxu0
    %v376 = vpop.f32.mrb[0].mxu0
    %v377 = vpop.f32.mrb[0].mxu0
    %378 = vdwg.mxu0
    %380 = vrot.lane.b32.xlu0 %v246, 64
    %v381 = vpop.permute.xlu0 %380
    %v383 = vsel %vm283, %v246, 0
    %v386 = vsel %vm283, %v381, 0
    %388 = vmatprep.subr.bf16.mxu0 0
    %389 = vmatpush1.bf16.xpose.msra.mxu0 %v386
    %390 = vmatprep.subr.bf16.mxu0 0
    %391 = vmatpush1.bf16.xpose.msra.mxu0 0
    %392 = vmatprep.subr.bf16.mxu0 0
    %393 = vmatpush1.bf16.xpose.msra.mxu0 0
    %394 = vmatprep.subr.bf16.mxu0 0
    %395 = vmatpush1.bf16.xpose.msra.mxu0 0
    %396 = vmatprep.subr.bf16.mxu0 0
    %397 = vmatpush1.bf16.xpose.msra.mxu0 0
    %398 = vmatprep.subr.bf16.mxu0 0
    %399 = vmatpush1.bf16.xpose.msra.mxu0 0
    %400 = vmatprep.subr.bf16.mxu0 0
    %401 = vmatpush1.bf16.xpose.msra.mxu0 0
    %402 = vmatprep.subr.bf16.mxu0 0
    %403 = vmatpush1.bf16.xpose.msra.mxu0 0
    %404 = vmatprep.subr.bf16.mxu0 0
    %405 = vmatpush1.bf16.xpose.msra.mxu0 0
    %406 = vmatprep.subr.bf16.mxu0 0
    %407 = vmatpush1.bf16.xpose.msra.mxu0 0
    %408 = vmatprep.subr.bf16.mxu0 0
    %409 = vmatpush1.bf16.xpose.msra.mxu0 0
    %410 = vmatprep.subr.bf16.mxu0 0
    %411 = vmatpush1.bf16.xpose.msra.mxu0 0
    %412 = vmatprep.subr.bf16.mxu0 0
    %413 = vmatpush1.bf16.xpose.msra.mxu0 0
    %414 = vmatprep.subr.bf16.mxu0 0
    %415 = vmatpush1.bf16.xpose.msra.mxu0 0
    %416 = vmatprep.subr.bf16.mxu0 0
    %417 = vmatpush1.bf16.xpose.msra.mxu0 0
    %418 = vmatprep.subr.bf16.mxu0 0
    %419 = vmatpush1.bf16.xpose.msra.mxu0 0
    %420 = vmatprep.mubr.bf16.mxu0 0
    %421 = vmatmul.mubr.bf16.gmra.mrb[0].mxu0 %v383
    %v422 = vpop.f32.mrb[0].mxu0
    %v423 = vadd.f32 %v110, %v422
    %v424 = vpop.f32.mrb[0].mxu0
    %v425 = vpop.f32.mrb[0].mxu0
    %v426 = vpop.f32.mrb[0].mxu0
    %427 = vdwg.mxu0
    %429 = vrot.lane.b32.xlu0 %v247, 64
    %v430 = vpop.permute.xlu0 %429
    %v432 = vsel %vm283, %v247, 0
    %v435 = vsel %vm283, %v430, 0
    %437 = vmatprep.subr.bf16.mxu0 0
    %438 = vmatpush1.bf16.xpose.msra.mxu0 %v435
    %439 = vmatprep.subr.bf16.mxu0 0
    %440 = vmatpush1.bf16.xpose.msra.mxu0 0
    %441 = vmatprep.subr.bf16.mxu0 0
    %442 = vmatpush1.bf16.xpose.msra.mxu0 0
    %443 = vmatprep.subr.bf16.mxu0 0
    %444 = vmatpush1.bf16.xpose.msra.mxu0 0
    %445 = vmatprep.subr.bf16.mxu0 0
    %446 = vmatpush1.bf16.xpose.msra.mxu0 0
    %447 = vmatprep.subr.bf16.mxu0 0
    %448 = vmatpush1.bf16.xpose.msra.mxu0 0
    %449 = vmatprep.subr.bf16.mxu0 0
    %450 = vmatpush1.bf16.xpose.msra.mxu0 0
    %451 = vmatprep.subr.bf16.mxu0 0
    %452 = vmatpush1.bf16.xpose.msra.mxu0 0
    %453 = vmatprep.subr.bf16.mxu0 0
    %454 = vmatpush1.bf16.xpose.msra.mxu0 0
    %455 = vmatprep.subr.bf16.mxu0 0
    %456 = vmatpush1.bf16.xpose.msra.mxu0 0
    %457 = vmatprep.subr.bf16.mxu0 0
    %458 = vmatpush1.bf16.xpose.msra.mxu0 0
    %459 = vmatprep.subr.bf16.mxu0 0
    %460 = vmatpush1.bf16.xpose.msra.mxu0 0
    %461 = vmatprep.subr.bf16.mxu0 0
    %462 = vmatpush1.bf16.xpose.msra.mxu0 0
    %463 = vmatprep.subr.bf16.mxu0 0
    %464 = vmatpush1.bf16.xpose.msra.mxu0 0
    %465 = vmatprep.subr.bf16.mxu0 0
    %466 = vmatpush1.bf16.xpose.msra.mxu0 0
    %467 = vmatprep.subr.bf16.mxu0 0
    %468 = vmatpush1.bf16.xpose.msra.mxu0 0
    %469 = vmatprep.mubr.bf16.mxu0 0
    %470 = vmatmul.mubr.bf16.gmra.mrb[0].mxu0 %v432
    %v471 = vpop.f32.mrb[0].mxu0
    %v472 = vadd.f32 %v114, %v471
    %v473 = vpop.f32.mrb[0].mxu0
    %v474 = vpop.f32.mrb[0].mxu0
    %v475 = vpop.f32.mrb[0].mxu0
    %476 = vdwg.mxu0
    %478 = vrot.lane.b32.xlu0 %v248, 64
    %v479 = vpop.permute.xlu0 %478
    %v481 = vsel %vm283, %v248, 0
    %v484 = vsel %vm283, %v479, 0
    %486 = vmatprep.subr.bf16.mxu0 0
    %487 = vmatpush1.bf16.xpose.msra.mxu0 %v484
    %488 = vmatprep.subr.bf16.mxu0 0
    %489 = vmatpush1.bf16.xpose.msra.mxu0 0
    %490 = vmatprep.subr.bf16.mxu0 0
    %491 = vmatpush1.bf16.xpose.msra.mxu0 0
    %492 = vmatprep.subr.bf16.mxu0 0
    %493 = vmatpush1.bf16.xpose.msra.mxu0 0
    %494 = vmatprep.subr.bf16.mxu0 0
    %495 = vmatpush1.bf16.xpose.msra.mxu0 0
    %496 = vmatprep.subr.bf16.mxu0 0
    %497 = vmatpush1.bf16.xpose.msra.mxu0 0
    %498 = vmatprep.subr.bf16.mxu0 0
    %499 = vmatpush1.bf16.xpose.msra.mxu0 0
    %500 = vmatprep.subr.bf16.mxu0 0
    %501 = vmatpush1.bf16.xpose.msra.mxu0 0
    %502 = vmatprep.subr.bf16.mxu0 0
    %503 = vmatpush1.bf16.xpose.msra.mxu0 0
    %504 = vmatprep.subr.bf16.mxu0 0
    %505 = vmatpush1.bf16.xpose.msra.mxu0 0
    %506 = vmatprep.subr.bf16.mxu0 0
    %507 = vmatpush1.bf16.xpose.msra.mxu0 0
    %508 = vmatprep.subr.bf16.mxu0 0
    %509 = vmatpush1.bf16.xpose.msra.mxu0 0
    %510 = vmatprep.subr.bf16.mxu0 0
    %511 = vmatpush1.bf16.xpose.msra.mxu0 0
    %512 = vmatprep.subr.bf16.mxu0 0
    %513 = vmatpush1.bf16.xpose.msra.mxu0 0
    %514 = vmatprep.subr.bf16.mxu0 0
    %515 = vmatpush1.bf16.xpose.msra.mxu0 0
    %516 = vmatprep.subr.bf16.mxu0 0
    %517 = vmatpush1.bf16.xpose.msra.mxu0 0
    %518 = vmatprep.mubr.bf16.mxu0 0
    %519 = vmatmul.mubr.bf16.gmra.mrb[0].mxu0 %v481
    %v520 = vpop.f32.mrb[0].mxu0
    %v521 = vadd.f32 %v110, %v520
    %v522 = vpop.f32.mrb[0].mxu0
    %v523 = vpop.f32.mrb[0].mxu0
    %v524 = vpop.f32.mrb[0].mxu0
    %525 = vdwg.mxu0
    %527 = vrot.lane.b32.xlu0 %v249, 64
    %v528 = vpop.permute.xlu0 %527
    %v530 = vsel %vm283, %v249, 0
    %v533 = vsel %vm283, %v528, 0
    %535 = vmatprep.subr.bf16.mxu0 0
    %536 = vmatpush1.bf16.xpose.msra.mxu0 %v533
    %537 = vmatprep.subr.bf16.mxu0 0
    %538 = vmatpush1.bf16.xpose.msra.mxu0 0
    %539 = vmatprep.subr.bf16.mxu0 0
    %540 = vmatpush1.bf16.xpose.msra.mxu0 0
    %541 = vmatprep.subr.bf16.mxu0 0
    %542 = vmatpush1.bf16.xpose.msra.mxu0 0
    %543 = vmatprep.subr.bf16.mxu0 0
    %544 = vmatpush1.bf16.xpose.msra.mxu0 0
    %545 = vmatprep.subr.bf16.mxu0 0
    %546 = vmatpush1.bf16.xpose.msra.mxu0 0
    %547 = vmatprep.subr.bf16.mxu0 0
    %548 = vmatpush1.bf16.xpose.msra.mxu0 0
    %549 = vmatprep.subr.bf16.mxu0 0
    %550 = vmatpush1.bf16.xpose.msra.mxu0 0
    %551 = vmatprep.subr.bf16.mxu0 0
    %552 = vmatpush1.bf16.xpose.msra.mxu0 0
    %553 = vmatprep.subr.bf16.mxu0 0
    %554 = vmatpush1.bf16.xpose.msra.mxu0 0
    %555 = vmatprep.subr.bf16.mxu0 0
    %556 = vmatpush1.bf16.xpose.msra.mxu0 0
    %557 = vmatprep.subr.bf16.mxu0 0
    %558 = vmatpush1.bf16.xpose.msra.mxu0 0
    %559 = vmatprep.subr.bf16.mxu0 0
    %560 = vmatpush1.bf16.xpose.msra.mxu0 0
    %561 = vmatprep.subr.bf16.mxu0 0
    %562 = vmatpush1.bf16.xpose.msra.mxu0 0
    %563 = vmatprep.subr.bf16.mxu0 0
    %564 = vmatpush1.bf16.xpose.msra.mxu0 0
    %565 = vmatprep.subr.bf16.mxu0 0
    %566 = vmatpush1.bf16.xpose.msra.mxu0 0
    %567 = vmatprep.mubr.bf16.mxu0 0
    %568 = vmatmul.mubr.bf16.gmra.mrb[0].mxu0 %v530
    %v569 = vpop.f32.mrb[0].mxu0
    %v570 = vadd.f32 %v114, %v569
    %v571 = vpop.f32.mrb[0].mxu0
    %v572 = vpop.f32.mrb[0].mxu0
    %v573 = vpop.f32.mrb[0].mxu0
    %574 = vdwg.mxu0
    %576 = vrot.lane.b32.xlu0 %v250, 64
    %v577 = vpop.permute.xlu0 %576
    %v579 = vsel %vm283, %v250, 0
    %v582 = vsel %vm283, %v577, 0
    %584 = vmatprep.subr.bf16.mxu0 0
    %585 = vmatpush1.bf16.xpose.msra.mxu0 %v582
    %586 = vmatprep.subr.bf16.mxu0 0
    %587 = vmatpush1.bf16.xpose.msra.mxu0 0
    %588 = vmatprep.subr.bf16.mxu0 0
    %589 = vmatpush1.bf16.xpose.msra.mxu0 0
    %590 = vmatprep.subr.bf16.mxu0 0
    %591 = vmatpush1.bf16.xpose.msra.mxu0 0
    %592 = vmatprep.subr.bf16.mxu0 0
    %593 = vmatpush1.bf16.xpose.msra.mxu0 0
    %594 = vmatprep.subr.bf16.mxu0 0
    %595 = vmatpush1.bf16.xpose.msra.mxu0 0
    %596 = vmatprep.subr.bf16.mxu0 0
    %597 = vmatpush1.bf16.xpose.msra.mxu0 0
    %598 = vmatprep.subr.bf16.mxu0 0
    %599 = vmatpush1.bf16.xpose.msra.mxu0 0
    %600 = vmatprep.subr.bf16.mxu0 0
    %601 = vmatpush1.bf16.xpose.msra.mxu0 0
    %602 = vmatprep.subr.bf16.mxu0 0
    %603 = vmatpush1.bf16.xpose.msra.mxu0 0
    %604 = vmatprep.subr.bf16.mxu0 0
    %605 = vmatpush1.bf16.xpose.msra.mxu0 0
    %606 = vmatprep.subr.bf16.mxu0 0
    %607 = vmatpush1.bf16.xpose.msra.mxu0 0
    %608 = vmatprep.subr.bf16.mxu0 0
    %609 = vmatpush1.bf16.xpose.msra.mxu0 0
    %610 = vmatprep.subr.bf16.mxu0 0
    %611 = vmatpush1.bf16.xpose.msra.mxu0 0
    %612 = vmatprep.subr.bf16.mxu0 0
    %613 = vmatpush1.bf16.xpose.msra.mxu0 0
    %614 = vmatprep.subr.bf16.mxu0 0
    %615 = vmatpush1.bf16.xpose.msra.mxu0 0
    %616 = vmatprep.mubr.bf16.mxu0 0
    %617 = vmatmul.mubr.bf16.gmra.mrb[0].mxu0 %v579
    %v618 = vpop.f32.mrb[0].mxu0
    %v619 = vadd.f32 %v110, %v618
    %v620 = vpop.f32.mrb[0].mxu0
    %v621 = vpop.f32.mrb[0].mxu0
    %v622 = vpop.f32.mrb[0].mxu0
    %623 = vdwg.mxu0
    %625 = vrot.lane.b32.xlu0 %v251, 64
    %v626 = vpop.permute.xlu0 %625
    %v628 = vsel %vm283, %v251, 0
    %v631 = vsel %vm283, %v626, 0
    %633 = vmatprep.subr.bf16.mxu0 0
    %634 = vmatpush1.bf16.xpose.msra.mxu0 %v631
    %635 = vmatprep.subr.bf16.mxu0 0
    %636 = vmatpush1.bf16.xpose.msra.mxu0 0
    %637 = vmatprep.subr.bf16.mxu0 0
    %638 = vmatpush1.bf16.xpose.msra.mxu0 0
    %639 = vmatprep.subr.bf16.mxu0 0
    %640 = vmatpush1.bf16.xpose.msra.mxu0 0
    %641 = vmatprep.subr.bf16.mxu0 0
    %642 = vmatpush1.bf16.xpose.msra.mxu0 0
    %643 = vmatprep.subr.bf16.mxu0 0
    %644 = vmatpush1.bf16.xpose.msra.mxu0 0
    %645 = vmatprep.subr.bf16.mxu0 0
    %646 = vmatpush1.bf16.xpose.msra.mxu0 0
    %647 = vmatprep.subr.bf16.mxu0 0
    %648 = vmatpush1.bf16.xpose.msra.mxu0 0
    %649 = vmatprep.subr.bf16.mxu0 0
    %650 = vmatpush1.bf16.xpose.msra.mxu0 0
    %651 = vmatprep.subr.bf16.mxu0 0
    %652 = vmatpush1.bf16.xpose.msra.mxu0 0
    %653 = vmatprep.subr.bf16.mxu0 0
    %654 = vmatpush1.bf16.xpose.msra.mxu0 0
    %655 = vmatprep.subr.bf16.mxu0 0
    %656 = vmatpush1.bf16.xpose.msra.mxu0 0
    %657 = vmatprep.subr.bf16.mxu0 0
    %658 = vmatpush1.bf16.xpose.msra.mxu0 0
    %659 = vmatprep.subr.bf16.mxu0 0
    %660 = vmatpush1.bf16.xpose.msra.mxu0 0
    %661 = vmatprep.subr.bf16.mxu0 0
    %662 = vmatpush1.bf16.xpose.msra.mxu0 0
    %663 = vmatprep.subr.bf16.mxu0 0
    %664 = vmatpush1.bf16.xpose.msra.mxu0 0
    %665 = vmatprep.mubr.bf16.mxu0 0
    %666 = vmatmul.mubr.bf16.gmra.mrb[0].mxu0 %v628
    %v667 = vpop.f32.mrb[0].mxu0
    %v668 = vadd.f32 %v114, %v667
    %v669 = vpop.f32.mrb[0].mxu0
    %v670 = vpop.f32.mrb[0].mxu0
    %v671 = vpop.f32.mrb[0].mxu0
    %672 = vdwg.mxu0
    %vm673 = vcmask 64512
    %v674 = vsel %vm673, %v325, -inf
    %675 = vmax.xlane.f32.xlu0 %v674
    %v676 = vpop.xlane.xlu0 %675
    %v677 = vsel %vm673, %v374, -inf
    %678 = vmax.xlane.f32.xlu0 %v677
    %v679 = vpop.xlane.xlu0 %678
    %v680 = vsel %vm673, %v423, -inf
    %681 = vmax.xlane.f32.xlu0 %v680
    %v682 = vpop.xlane.xlu0 %681
    %v683 = vsel %vm673, %v472, -inf
    %684 = vmax.xlane.f32.xlu0 %v683
    %v685 = vpop.xlane.xlu0 %684
    %v686 = vsel %vm673, %v521, -inf
    %687 = vmax.xlane.f32.xlu0 %v686
    %v688 = vpop.xlane.xlu0 %687
    %v689 = vsel %vm673, %v570, -inf
    %690 = vmax.xlane.f32.xlu0 %v689
    %v691 = vpop.xlane.xlu0 %690
    %v692 = vsel %vm673, %v619, -inf
    %693 = vmax.xlane.f32.xlu0 %v692
    %v694 = vpop.xlane.xlu0 %693
    %v695 = vsel %vm673, %v668, -inf
    %696 = vmax.xlane.f32.xlu0 %v695
    %v697 = vpop.xlane.xlu0 %696
    %v698 = vsub.f32 %v325, %v676
    %v699 = vsub.f32 %v374, %v679
    %v700 = vsub.f32 %v423, %v682
    %v701 = vsub.f32 %v472, %v685
    %v702 = vsub.f32 %v521, %v688
    %v703 = vsub.f32 %v570, %v691
    %v704 = vsub.f32 %v619, %v694
    %v705 = vsub.f32 %v668, %v697
    %v706 = vmul.f32 %v698, 1.442695
    %v707 = vpow.pop %v706
    %v708 = vmul.f32 %v699, 1.442695
    %v709 = vpow.pop %v708
    %v710 = vmul.f32 %v700, 1.442695
    %v711 = vpow.pop %v710
    %v712 = vmul.f32 %v701, 1.442695
    %v713 = vpow.pop %v712
    %v714 = vmul.f32 %v702, 1.442695
    %v715 = vpow.pop %v714
    %v716 = vmul.f32 %v703, 1.442695
    %v717 = vpow.pop %v716
    %v718 = vmul.f32 %v704, 1.442695
    %v719 = vpow.pop %v718
    %v720 = vmul.f32 %v705, 1.442695
    %v721 = vpow.pop %v720
    %v722 = vsel %vm673, %v707, 0.0
    %723 = vadd.xlane.f32.xlu0 %v722
    %v724 = vpop.xlane.xlu0 %723
    %v725 = vsel %vm673, %v709, 0.0
    %726 = vadd.xlane.f32.xlu0 %v725
    %v727 = vpop.xlane.xlu0 %726
    %v728 = vsel %vm673, %v711, 0.0
    %729 = vadd.xlane.f32.xlu0 %v728
    %v730 = vpop.xlane.xlu0 %729
    %v731 = vsel %vm673, %v713, 0.0
    %732 = vadd.xlane.f32.xlu0 %v731
    %v733 = vpop.xlane.xlu0 %732
    %v734 = vsel %vm673, %v715, 0.0
    %735 = vadd.xlane.f32.xlu0 %v734
    %v736 = vpop.xlane.xlu0 %735
    %v737 = vsel %vm673, %v717, 0.0
    %738 = vadd.xlane.f32.xlu0 %v737
    %v739 = vpop.xlane.xlu0 %738
    %v740 = vsel %vm673, %v719, 0.0
    %741 = vadd.xlane.f32.xlu0 %v740
    %v742 = vpop.xlane.xlu0 %741
    %v743 = vsel %vm673, %v721, 0.0
    %744 = vadd.xlane.f32.xlu0 %v743
    %v745 = vpop.xlane.xlu0 %744
    %v746 = vrcp.pop %v724
    %v747 = vmul.f32 %v707, %v746
    %v748 = vrcp.pop %v727
    %v749 = vmul.f32 %v709, %v748
    %v750 = vrcp.pop %v730
    %v751 = vmul.f32 %v711, %v750
    %v752 = vrcp.pop %v733
    %v753 = vmul.f32 %v713, %v752
    %v754 = vrcp.pop %v736
    %v755 = vmul.f32 %v715, %v754
    %v756 = vrcp.pop %v739
    %v757 = vmul.f32 %v717, %v756
    %v758 = vrcp.pop %v742
    %v759 = vmul.f32 %v719, %v758
    %v760 = vrcp.pop %v745
    %v761 = vmul.f32 %v721, %v760
    %v762 = vpack.c.bf16 %v747, %v747
    %v763 = vpack.c.bf16 %v749, %v749
    %v764 = vpack.c.bf16 %v751, %v751
    %v765 = vpack.c.bf16 %v753, %v753
    %v766 = vpack.c.bf16 %v755, %v755
    %v767 = vpack.c.bf16 %v757, %v757
    %v768 = vpack.c.bf16 %v759, %v759
    %v769 = vpack.c.bf16 %v761, %v761
    %v771 = vsel %vm673, %v762, 0
    %vm773 = vcmask 1043456
    %v775 = vsel %vm773, %v272, 0
    %777 = vmatprep.subr.bf16.mxu0 0
    %778 = vmatpush1.bf16.msra.mxu0 %v775
    %779 = vmatprep.subr.bf16.mxu0 0
    %780 = vmatpush1.bf16.msra.mxu0 0
    %781 = vmatprep.subr.bf16.mxu0 0
    %782 = vmatpush1.bf16.msra.mxu0 0
    %783 = vmatprep.subr.bf16.mxu0 0
    %784 = vmatpush1.bf16.msra.mxu0 0
    %785 = vmatprep.subr.bf16.mxu0 0
    %786 = vmatpush1.bf16.msra.mxu0 0
    %787 = vmatprep.subr.bf16.mxu0 0
    %788 = vmatpush1.bf16.msra.mxu0 0
    %789 = vmatprep.subr.bf16.mxu0 0
    %790 = vmatpush1.bf16.msra.mxu0 0
    %791 = vmatprep.subr.bf16.mxu0 0
    %792 = vmatpush1.bf16.msra.mxu0 0
    %793 = vmatprep.subr.bf16.mxu0 0
    %794 = vmatpush1.bf16.msra.mxu0 0
    %795 = vmatprep.subr.bf16.mxu0 0
    %796 = vmatpush1.bf16.msra.mxu0 0
    %797 = vmatprep.subr.bf16.mxu0 0
    %798 = vmatpush1.bf16.msra.mxu0 0
    %799 = vmatprep.subr.bf16.mxu0 0
    %800 = vmatpush1.bf16.msra.mxu0 0
    %801 = vmatprep.subr.bf16.mxu0 0
    %802 = vmatpush1.bf16.msra.mxu0 0
    %803 = vmatprep.subr.bf16.mxu0 0
    %804 = vmatpush1.bf16.msra.mxu0 0
    %805 = vmatprep.subr.bf16.mxu0 0
    %806 = vmatpush1.bf16.msra.mxu0 0
    %807 = vmatprep.subr.bf16.mxu0 0
    %808 = vmatpush1.bf16.msra.mxu0 0
    %809 = vmatprep.mubr.bf16.mxu0 0
    %810 = vmatmul.mubr.bf16.gmra.mrb[0].mxu0 %v771
    %v811 = vpop.f32.mrb[0].mxu0
    %v812 = vadd.f32 0.0, %v811
    %v813 = vpop.f32.mrb[0].mxu0
    %v814 = vpop.f32.mrb[0].mxu0
    %v815 = vpop.f32.mrb[0].mxu0
    %816 = vdwg.mxu0
    %v818 = vsel %vm673, %v763, 0
    %v821 = vsel %vm773, %v273, 0
    %823 = vmatprep.subr.bf16.mxu0 0
    %824 = vmatpush1.bf16.msra.mxu0 %v821
    %825 = vmatprep.subr.bf16.mxu0 0
    %826 = vmatpush1.bf16.msra.mxu0 0
    %827 = vmatprep.subr.bf16.mxu0 0
    %828 = vmatpush1.bf16.msra.mxu0 0
    %829 = vmatprep.subr.bf16.mxu0 0
    %830 = vmatpush1.bf16.msra.mxu0 0
    %831 = vmatprep.subr.bf16.mxu0 0
    %832 = vmatpush1.bf16.msra.mxu0 0
    %833 = vmatprep.subr.bf16.mxu0 0
    %834 = vmatpush1.bf16.msra.mxu0 0
    %835 = vmatprep.subr.bf16.mxu0 0
    %836 = vmatpush1.bf16.msra.mxu0 0
    %837 = vmatprep.subr.bf16.mxu0 0
    %838 = vmatpush1.bf16.msra.mxu0 0
    %839 = vmatprep.subr.bf16.mxu0 0
    %840 = vmatpush1.bf16.msra.mxu0 0
    %841 = vmatprep.subr.bf16.mxu0 0
    %842 = vmatpush1.bf16.msra.mxu0 0
    %843 = vmatprep.subr.bf16.mxu0 0
    %844 = vmatpush1.bf16.msra.mxu0 0
    %845 = vmatprep.subr.bf16.mxu0 0
    %846 = vmatpush1.bf16.msra.mxu0 0
    %847 = vmatprep.subr.bf16.mxu0 0
    %848 = vmatpush1.bf16.msra.mxu0 0
    %849 = vmatprep.subr.bf16.mxu0 0
    %850 = vmatpush1.bf16.msra.mxu0 0
    %851 = vmatprep.subr.bf16.mxu0 0
    %852 = vmatpush1.bf16.msra.mxu0 0
    %853 = vmatprep.subr.bf16.mxu0 0
    %854 = vmatpush1.bf16.msra.mxu0 0
    %855 = vmatprep.mubr.bf16.mxu0 0
    %856 = vmatmul.mubr.bf16.gmra.mrb[0].mxu0 %v818
    %v857 = vpop.f32.mrb[0].mxu0
    %v858 = vadd.f32 0.0, %v857
    %v859 = vpop.f32.mrb[0].mxu0
    %v860 = vpop.f32.mrb[0].mxu0
    %v861 = vpop.f32.mrb[0].mxu0
    %862 = vdwg.mxu0
    %v864 = vsel %vm673, %v764, 0
    %v867 = vsel %vm773, %v274, 0
    %869 = vmatprep.subr.bf16.mxu0 0
    %870 = vmatpush1.bf16.msra.mxu0 %v867
    %871 = vmatprep.subr.bf16.mxu0 0
    %872 = vmatpush1.bf16.msra.mxu0 0
    %873 = vmatprep.subr.bf16.mxu0 0
    %874 = vmatpush1.bf16.msra.mxu0 0
    %875 = vmatprep.subr.bf16.mxu0 0
    %876 = vmatpush1.bf16.msra.mxu0 0
    %877 = vmatprep.subr.bf16.mxu0 0
    %878 = vmatpush1.bf16.msra.mxu0 0
    %879 = vmatprep.subr.bf16.mxu0 0
    %880 = vmatpush1.bf16.msra.mxu0 0
    %881 = vmatprep.subr.bf16.mxu0 0
    %882 = vmatpush1.bf16.msra.mxu0 0
    %883 = vmatprep.subr.bf16.mxu0 0
    %884 = vmatpush1.bf16.msra.mxu0 0
    %885 = vmatprep.subr.bf16.mxu0 0
    %886 = vmatpush1.bf16.msra.mxu0 0
    %887 = vmatprep.subr.bf16.mxu0 0
    %888 = vmatpush1.bf16.msra.mxu0 0
    %889 = vmatprep.subr.bf16.mxu0 0
    %890 = vmatpush1.bf16.msra.mxu0 0
    %891 = vmatprep.subr.bf16.mxu0 0
    %892 = vmatpush1.bf16.msra.mxu0 0
    %893 = vmatprep.subr.bf16.mxu0 0
    %894 = vmatpush1.bf16.msra.mxu0 0
    %895 = vmatprep.subr.bf16.mxu0 0
    %896 = vmatpush1.bf16.msra.mxu0 0
    %897 = vmatprep.subr.bf16.mxu0 0
    %898 = vmatpush1.bf16.msra.mxu0 0
    %899 = vmatprep.subr.bf16.mxu0 0
    %900 = vmatpush1.bf16.msra.mxu0 0
    %901 = vmatprep.mubr.bf16.mxu0 0
    %902 = vmatmul.mubr.bf16.gmra.mrb[0].mxu0 %v864
    %v903 = vpop.f32.mrb[0].mxu0
    %v904 = vadd.f32 0.0, %v903
    %v905 = vpop.f32.mrb[0].mxu0
    %v906 = vpop.f32.mrb[0].mxu0
    %v907 = vpop.f32.mrb[0].mxu0
    %908 = vdwg.mxu0
    %v910 = vsel %vm673, %v765, 0
    %v913 = vsel %vm773, %v275, 0
    %915 = vmatprep.subr.bf16.mxu0 0
    %916 = vmatpush1.bf16.msra.mxu0 %v913
    %917 = vmatprep.subr.bf16.mxu0 0
    %918 = vmatpush1.bf16.msra.mxu0 0
    %919 = vmatprep.subr.bf16.mxu0 0
    %920 = vmatpush1.bf16.msra.mxu0 0
    %921 = vmatprep.subr.bf16.mxu0 0
    %922 = vmatpush1.bf16.msra.mxu0 0
    %923 = vmatprep.subr.bf16.mxu0 0
    %924 = vmatpush1.bf16.msra.mxu0 0
    %925 = vmatprep.subr.bf16.mxu0 0
    %926 = vmatpush1.bf16.msra.mxu0 0
    %927 = vmatprep.subr.bf16.mxu0 0
    %928 = vmatpush1.bf16.msra.mxu0 0
    %929 = vmatprep.subr.bf16.mxu0 0
    %930 = vmatpush1.bf16.msra.mxu0 0
    %931 = vmatprep.subr.bf16.mxu0 0
    %932 = vmatpush1.bf16.msra.mxu0 0
    %933 = vmatprep.subr.bf16.mxu0 0
    %934 = vmatpush1.bf16.msra.mxu0 0
    %935 = vmatprep.subr.bf16.mxu0 0
    %936 = vmatpush1.bf16.msra.mxu0 0
    %937 = vmatprep.subr.bf16.mxu0 0
    %938 = vmatpush1.bf16.msra.mxu0 0
    %939 = vmatprep.subr.bf16.mxu0 0
    %940 = vmatpush1.bf16.msra.mxu0 0
    %941 = vmatprep.subr.bf16.mxu0 0
    %942 = vmatpush1.bf16.msra.mxu0 0
    %943 = vmatprep.subr.bf16.mxu0 0
    %944 = vmatpush1.bf16.msra.mxu0 0
    %945 = vmatprep.subr.bf16.mxu0 0
    %946 = vmatpush1.bf16.msra.mxu0 0
    %947 = vmatprep.mubr.bf16.mxu0 0
    %948 = vmatmul.mubr.bf16.gmra.mrb[0].mxu0 %v910
    %v949 = vpop.f32.mrb[0].mxu0
    %v950 = vadd.f32 0.0, %v949
    %v951 = vpop.f32.mrb[0].mxu0
    %v952 = vpop.f32.mrb[0].mxu0
    %v953 = vpop.f32.mrb[0].mxu0
    %954 = vdwg.mxu0
    %v956 = vsel %vm673, %v766, 0
    %v959 = vsel %vm773, %v276, 0
    %961 = vmatprep.subr.bf16.mxu0 0
    %962 = vmatpush1.bf16.msra.mxu0 %v959
    %963 = vmatprep.subr.bf16.mxu0 0
    %964 = vmatpush1.bf16.msra.mxu0 0
    %965 = vmatprep.subr.bf16.mxu0 0
    %966 = vmatpush1.bf16.msra.mxu0 0
    %967 = vmatprep.subr.bf16.mxu0 0
    %968 = vmatpush1.bf16.msra.mxu0 0
    %969 = vmatprep.subr.bf16.mxu0 0
    %970 = vmatpush1.bf16.msra.mxu0 0
    %971 = vmatprep.subr.bf16.mxu0 0
    %972 = vmatpush1.bf16.msra.mxu0 0
    %973 = vmatprep.subr.bf16.mxu0 0
    %974 = vmatpush1.bf16.msra.mxu0 0
    %975 = vmatprep.subr.bf16.mxu0 0
    %976 = vmatpush1.bf16.msra.mxu0 0
    %977 = vmatprep.subr.bf16.mxu0 0
    %978 = vmatpush1.bf16.msra.mxu0 0
    %979 = vmatprep.subr.bf16.mxu0 0
    %980 = vmatpush1.bf16.msra.mxu0 0
    %981 = vmatprep.subr.bf16.mxu0 0
    %982 = vmatpush1.bf16.msra.mxu0 0
    %983 = vmatprep.subr.bf16.mxu0 0
    %984 = vmatpush1.bf16.msra.mxu0 0
    %985 = vmatprep.subr.bf16.mxu0 0
    %986 = vmatpush1.bf16.msra.mxu0 0
    %987 = vmatprep.subr.bf16.mxu0 0
    %988 = vmatpush1.bf16.msra.mxu0 0
    %989 = vmatprep.subr.bf16.mxu0 0
    %990 = vmatpush1.bf16.msra.mxu0 0
    %991 = vmatprep.subr.bf16.mxu0 0
    %992 = vmatpush1.bf16.msra.mxu0 0
    %993 = vmatprep.mubr.bf16.mxu0 0
    %994 = vmatmul.mubr.bf16.gmra.mrb[0].mxu0 %v956
    %v995 = vpop.f32.mrb[0].mxu0
    %v996 = vadd.f32 0.0, %v995
    %v997 = vpop.f32.mrb[0].mxu0
    %v998 = vpop.f32.mrb[0].mxu0
    %v999 = vpop.f32.mrb[0].mxu0
    %1000 = vdwg.mxu0
    %v1002 = vsel %vm673, %v767, 0
    %v1005 = vsel %vm773, %v277, 0
    %1007 = vmatprep.subr.bf16.mxu0 0
    %1008 = vmatpush1.bf16.msra.mxu0 %v1005
    %1009 = vmatprep.subr.bf16.mxu0 0
    %1010 = vmatpush1.bf16.msra.mxu0 0
    %1011 = vmatprep.subr.bf16.mxu0 0
    %1012 = vmatpush1.bf16.msra.mxu0 0
    %1013 = vmatprep.subr.bf16.mxu0 0
    %1014 = vmatpush1.bf16.msra.mxu0 0
    %1015 = vmatprep.subr.bf16.mxu0 0
    %1016 = vmatpush1.bf16.msra.mxu0 0
    %1017 = vmatprep.subr.bf16.mxu0 0
    %1018 = vmatpush1.bf16.msra.mxu0 0
    %1019 = vmatprep.subr.bf16.mxu0 0
    %1020 = vmatpush1.bf16.msra.mxu0 0
    %1021 = vmatprep.subr.bf16.mxu0 0
    %1022 = vmatpush1.bf16.msra.mxu0 0
    %1023 = vmatprep.subr.bf16.mxu0 0
    %1024 = vmatpush1.bf16.msra.mxu0 0
    %1025 = vmatprep.subr.bf16.mxu0 0
    %1026 = vmatpush1.bf16.msra.mxu0 0
    %1027 = vmatprep.subr.bf16.mxu0 0
    %1028 = vmatpush1.bf16.msra.mxu0 0
    %1029 = vmatprep.subr.bf16.mxu0 0
    %1030 = vmatpush1.bf16.msra.mxu0 0
    %1031 = vmatprep.subr.bf16.mxu0 0
    %1032 = vmatpush1.bf16.msra.mxu0 0
    %1033 = vmatprep.subr.bf16.mxu0 0
    %1034 = vmatpush1.bf16.msra.mxu0 0
    %1035 = vmatprep.subr.bf16.mxu0 0
    %1036 = vmatpush1.bf16.msra.mxu0 0
    %1037 = vmatprep.subr.bf16.mxu0 0
    %1038 = vmatpush1.bf16.msra.mxu0 0
    %1039 = vmatprep.mubr.bf16.mxu0 0
    %1040 = vmatmul.mubr.bf16.gmra.mrb[0].mxu0 %v1002
    %v1041 = vpop.f32.mrb[0].mxu0
    %v1042 = vadd.f32 0.0, %v1041
    %v1043 = vpop.f32.mrb[0].mxu0
    %v1044 = vpop.f32.mrb[0].mxu0
    %v1045 = vpop.f32.mrb[0].mxu0
    %1046 = vdwg.mxu0
    %v1048 = vsel %vm673, %v768, 0
    %v1051 = vsel %vm773, %v278, 0
    %1053 = vmatprep.subr.bf16.mxu0 0
    %1054 = vmatpush1.bf16.msra.mxu0 %v1051
    %1055 = vmatprep.subr.bf16.mxu0 0
    %1056 = vmatpush1.bf16.msra.mxu0 0
    %1057 = vmatprep.subr.bf16.mxu0 0
    %1058 = vmatpush1.bf16.msra.mxu0 0
    %1059 = vmatprep.subr.bf16.mxu0 0
    %1060 = vmatpush1.bf16.msra.mxu0 0
    %1061 = vmatprep.subr.bf16.mxu0 0
    %1062 = vmatpush1.bf16.msra.mxu0 0
    %1063 = vmatprep.subr.bf16.mxu0 0
    %1064 = vmatpush1.bf16.msra.mxu0 0
    %1065 = vmatprep.subr.bf16.mxu0 0
    %1066 = vmatpush1.bf16.msra.mxu0 0
    %1067 = vmatprep.subr.bf16.mxu0 0
    %1068 = vmatpush1.bf16.msra.mxu0 0
    %1069 = vmatprep.subr.bf16.mxu0 0
    %1070 = vmatpush1.bf16.msra.mxu0 0
    %1071 = vmatprep.subr.bf16.mxu0 0
    %1072 = vmatpush1.bf16.msra.mxu0 0
    %1073 = vmatprep.subr.bf16.mxu0 0
    %1074 = vmatpush1.bf16.msra.mxu0 0
    %1075 = vmatprep.subr.bf16.mxu0 0
    %1076 = vmatpush1.bf16.msra.mxu0 0
    %1077 = vmatprep.subr.bf16.mxu0 0
    %1078 = vmatpush1.bf16.msra.mxu0 0
    %1079 = vmatprep.subr.bf16.mxu0 0
    %1080 = vmatpush1.bf16.msra.mxu0 0
    %1081 = vmatprep.subr.bf16.mxu0 0
    %1082 = vmatpush1.bf16.msra.mxu0 0
    %1083 = vmatprep.subr.bf16.mxu0 0
    %1084 = vmatpush1.bf16.msra.mxu0 0
    %1085 = vmatprep.mubr.bf16.mxu0 0
    %1086 = vmatmul.mubr.bf16.gmra.mrb[0].mxu0 %v1048
    %v1087 = vpop.f32.mrb[0].mxu0
    %v1088 = vadd.f32 0.0, %v1087
    %v1089 = vpop.f32.mrb[0].mxu0
    %v1090 = vpop.f32.mrb[0].mxu0
    %v1091 = vpop.f32.mrb[0].mxu0
    %1092 = vdwg.mxu0
    %v1094 = vsel %vm673, %v769, 0
    %v1097 = vsel %vm773, %v279, 0
    %1099 = vmatprep.subr.bf16.mxu0 0
    %1100 = vmatpush1.bf16.msra.mxu0 %v1097
    %1101 = vmatprep.subr.bf16.mxu0 0
    %1102 = vmatpush1.bf16.msra.mxu0 0
    %1103 = vmatprep.subr.bf16.mxu0 0
    %1104 = vmatpush1.bf16.msra.mxu0 0
    %1105 = vmatprep.subr.bf16.mxu0 0
    %1106 = vmatpush1.bf16.msra.mxu0 0
    %1107 = vmatprep.subr.bf16.mxu0 0
    %1108 = vmatpush1.bf16.msra.mxu0 0
    %1109 = vmatprep.subr.bf16.mxu0 0
    %1110 = vmatpush1.bf16.msra.mxu0 0
    %1111 = vmatprep.subr.bf16.mxu0 0
    %1112 = vmatpush1.bf16.msra.mxu0 0
    %1113 = vmatprep.subr.bf16.mxu0 0
    %1114 = vmatpush1.bf16.msra.mxu0 0
    %1115 = vmatprep.subr.bf16.mxu0 0
    %1116 = vmatpush1.bf16.msra.mxu0 0
    %1117 = vmatprep.subr.bf16.mxu0 0
    %1118 = vmatpush1.bf16.msra.mxu0 0
    %1119 = vmatprep.subr.bf16.mxu0 0
    %1120 = vmatpush1.bf16.msra.mxu0 0
    %1121 = vmatprep.subr.bf16.mxu0 0
    %1122 = vmatpush1.bf16.msra.mxu0 0
    %1123 = vmatprep.subr.bf16.mxu0 0
    %1124 = vmatpush1.bf16.msra.mxu0 0
    %1125 = vmatprep.subr.bf16.mxu0 0
    %1126 = vmatpush1.bf16.msra.mxu0 0
    %1127 = vmatprep.subr.bf16.mxu0 0
    %1128 = vmatpush1.bf16.msra.mxu0 0
    %1129 = vmatprep.subr.bf16.mxu0 0
    %1130 = vmatpush1.bf16.msra.mxu0 0
    %1131 = vmatprep.mubr.bf16.mxu0 0
    %1132 = vmatmul.mubr.bf16.gmra.mrb[0].mxu0 %v1094
    %v1133 = vpop.f32.mrb[0].mxu0
    %v1134 = vadd.f32 0.0, %v1133
    %v1135 = vpop.f32.mrb[0].mxu0
    %v1136 = vpop.f32.mrb[0].mxu0
    %v1137 = vpop.f32.mrb[0].mxu0
    %1138 = vdwg.mxu0
    %1141 = vrot.lane.b32.xlu0 %v904, 16
    %v1142 = vpop.permute.xlu0 %1141
    %1143 = vrot.lane.b32.xlu0 %v950, 16
    %v1144 = vpop.permute.xlu0 %1143
    %1149 = vrot.lane.b32.xlu0 %v996, 32
    %v1150 = vpop.permute.xlu0 %1149
    %1151 = vrot.lane.b32.xlu0 %v1042, 32
    %v1152 = vpop.permute.xlu0 %1151
    %1157 = vrot.lane.b32.xlu0 %v1088, 48
    %v1158 = vpop.permute.xlu0 %1157
    %1159 = vrot.lane.b32.xlu0 %v1134, 48
    %v1160 = vpop.permute.xlu0 %1159
    %v1163 = vsel %vm283, %v812, %v1142
    %v1164 = vsel %vm283, %v858, %v1144
    %vm1165 = vcmask 261120
    %v1166 = vsel %vm1165, %v1163, %v1150
    %v1167 = vsel %vm1165, %v1164, %v1152
    %vm1168 = vcmask 392192
    %v1169 = vsel %vm1168, %v1166, %v1158
    %v1170 = vsel %vm1168, %v1167, %v1160
    %v1171 = vpack.c.bf16 %v1170, %v1169
    %v1172 = vld [vmem:[%s6] sm:$0xf]
    %v1173 = vld [vmem:[%s6 + $0x4] sm:$0xf]
    %v1174 = vld [vmem:[%s6 + $0x8] sm:$0xf]
    %v1175 = vld [vmem:[%s6 + $0xc] sm:$0xf]
    %v1176 = vld [vmem:[%s6 + $0x10] sm:$0xf]
    %v1177 = vld [vmem:[%s6 + $0x14] sm:$0xf]
    %v1178 = vld [vmem:[%s6 + $0x18] sm:$0xf]
    %v1179 = vld [vmem:[%s6 + $0x1c] sm:$0xf]
    %v1180 = vld [vmem:[%s7] sm:$0x1]
    %v1182 = vlaneseq
    %v1183 = vshrl.u32 %v1182, 7
    %v1184 = vsub.s32 0, %v1183
    %v1185 = vrot.slane %v1180, %v1184
    %v1195 = vunpack.c.l.b16 %v1172
    %v1196 = vunpack.c.l.b16 %v1173
    %v1197 = vunpack.c.l.b16 %v1174
    %v1198 = vunpack.c.l.b16 %v1175
    %v1199 = vunpack.c.l.b16 %v1176
    %v1200 = vunpack.c.l.b16 %v1177
    %v1201 = vunpack.c.l.b16 %v1178
    %v1202 = vunpack.c.l.b16 %v1179
    %v1203 = vpack.c.b16 %v1196, %v1195
    %v1204 = vpack.c.b16 %v1198, %v1197
    %v1205 = vpack.c.b16 %v1200, %v1199
    %v1206 = vpack.c.b16 %v1202, %v1201
    %v1212 = vsel %vm59, %v1171, 0
    %1214 = vmatprep.subr.bf16.mxu0 0
    %1215 = vmatpush1.bf16.msra.mxu0 %v1203
    %1216 = vmatprep.subr.bf16.mxu0 0
    %1217 = vmatpush1.bf16.msra.mxu0 %v1204
    %1218 = vmatprep.subr.bf16.mxu0 0
    %1219 = vmatpush1.bf16.msra.mxu0 %v1205
    %1220 = vmatprep.subr.bf16.mxu0 0
    %1221 = vmatpush1.bf16.msra.mxu0 %v1206
    %1222 = vmatprep.subr.bf16.mxu0 0
    %1223 = vmatpush1.bf16.msra.mxu0 0
    %1224 = vmatprep.subr.bf16.mxu0 0
    %1225 = vmatpush1.bf16.msra.mxu0 0
    %1226 = vmatprep.subr.bf16.mxu0 0
    %1227 = vmatpush1.bf16.msra.mxu0 0
    %1228 = vmatprep.subr.bf16.mxu0 0
    %1229 = vmatpush1.bf16.msra.mxu0 0
    %1230 = vmatprep.subr.bf16.mxu0 0
    %1231 = vmatpush1.bf16.msra.mxu0 0
    %1232 = vmatprep.subr.bf16.mxu0 0
    %1233 = vmatpush1.bf16.msra.mxu0 0
    %1234 = vmatprep.subr.bf16.mxu0 0
    %1235 = vmatpush1.bf16.msra.mxu0 0
    %1236 = vmatprep.subr.bf16.mxu0 0
    %1237 = vmatpush1.bf16.msra.mxu0 0
    %1238 = vmatprep.subr.bf16.mxu0 0
    %1239 = vmatpush1.bf16.msra.mxu0 0
    %1240 = vmatprep.subr.bf16.mxu0 0
    %1241 = vmatpush1.bf16.msra.mxu0 0
    %1242 = vmatprep.subr.bf16.mxu0 0
    %1243 = vmatpush1.bf16.msra.mxu0 0
    %1244 = vmatprep.subr.bf16.mxu0 0
    %1245 = vmatpush1.bf16.msra.mxu0 0
    %1246 = vmatprep.mubr.bf16.mxu0 0
    %1247 = vmatmul.mubr.bf16.gmra.mrb[0].mxu0 %v1212
    %v1248 = vpop.f32.mrb[0].mxu0
    %v1249 = vadd.f32 %v1185, %v1248
    %v1250 = vpop.f32.mrb[0].mxu0
    %v1251 = vpop.f32.mrb[0].mxu0
    %v1252 = vadd.f32 %v1185, %v1251
    %v1253 = vpop.f32.mrb[0].mxu0
    %1254 = vdwg.mxu0
    %v1255 = vadd.f32 %v101, %v1249
    %v1256 = vadd.f32 %v102, %v1252
    %v1257 = vld [vmem:[%s8] sm:$0x1]
    %v1258 = vld [vmem:[%s9] sm:$0x1]
    %v1259 = vsel %vm59, %v1255, 0.0
    %1260 = vadd.xlane.f32.xlu0 %v1259
    %v1261 = vpop.xlane.xlu0 %1260
    %v1262 = vsel %vm59, %v1256, 0.0
    %1263 = vadd.xlane.f32.xlu0 %v1262
    %v1264 = vpop.xlane.xlu0 %1263
    %v1265 = vmul.f32 %v1261, %v66
    %v1266 = vmul.f32 %v1264, %v66
    %v1267 = vsub.f32 %v1255, %v1265
    %v1268 = vsub.f32 %v1256, %v1266
    %v1269 = vmul.f32 %v1267, %v1267
    %v1270 = vmul.f32 %v1268, %v1268
    %v1271 = vsel %vm59, %v1269, 0.0
    %1272 = vadd.xlane.f32.xlu0 %v1271
    %v1273 = vpop.xlane.xlu0 %1272
    %v1274 = vsel %vm59, %v1270, 0.0
    %1275 = vadd.xlane.f32.xlu0 %v1274
    %v1276 = vpop.xlane.xlu0 %1275
    %v1277 = vmul.f32 %v1273, %v66
    %v1278 = vmul.f32 %v1276, %v66
    %v1279 = vadd.f32 %v1277, 1e-05
    %v1280 = vadd.f32 %v1278, 1e-05
    %v1281 = vrsqrt.pop %v1279
    %v1282 = vrsqrt.pop %v1280
    %v1283 = vmul.f32 %v1267, %v1281
    %v1284 = vmul.f32 %v1268, %v1282
    %v1286 = vlaneseq
    %v1287 = vshrl.u32 %v1286, 7
    %v1288 = vsub.s32 0, %v1287
    %v1289 = vrot.slane %v1257, %v1288
    %v1291 = vmul.f32 %v1283, %v1289
    %v1292 = vmul.f32 %v1284, %v1289
    %v1294 = vlaneseq
    %v1295 = vshrl.u32 %v1294, 7
    %v1296 = vsub.s32 0, %v1295
    %v1297 = vrot.slane %v1258, %v1296
    %v1299 = vadd.f32 %v1291, %v1297
    %v1300 = vadd.f32 %v1292, %v1297
    %v1301 = vpack.c.bf16 %v1300, %v1299
    %v1302 = vld [vmem:[%s12] sm:$0xff]
    %v1303 = vld [vmem:[%s12 + $0x8] sm:$0xff]
    %v1304 = vld [vmem:[%s12 + $0x10] sm:$0xff]
    %v1305 = vld [vmem:[%s12 + $0x18] sm:$0xff]
    %v1306 = vld [vmem:[%s12 + $0x20] sm:$0xff]
    %v1307 = vld [vmem:[%s12 + $0x28] sm:$0xff]
    %v1308 = vld [vmem:[%s12 + $0x30] sm:$0xff]
    %v1309 = vld [vmem:[%s12 + $0x38] sm:$0xff]
    %v1310 = vld [vmem:[%s12 + $0x40] sm:$0xff]
    %v1311 = vld [vmem:[%s12 + $0x48] sm:$0xff]
    %v1312 = vld [vmem:[%s12 + $0x50] sm:$0xff]
    %v1313 = vld [vmem:[%s12 + $0x58] sm:$0xff]
    %v1314 = vld [vmem:[%s12 + $0x60] sm:$0xff]
    %v1315 = vld [vmem:[%s12 + $0x68] sm:$0xff]
    %v1316 = vld [vmem:[%s12 + $0x70] sm:$0xff]
    %v1317 = vld [vmem:[%s12 + $0x78] sm:$0xff]
    %v1318 = vld [vmem:[%s12 + $0x80] sm:$0xff]
    %v1319 = vld [vmem:[%s12 + $0x88] sm:$0xff]
    %v1320 = vld [vmem:[%s12 + $0x90] sm:$0xff]
    %v1321 = vld [vmem:[%s12 + $0x98] sm:$0xff]
    %v1322 = vld [vmem:[%s12 + $0xa0] sm:$0xff]
    %v1323 = vld [vmem:[%s12 + $0xa8] sm:$0xff]
    %v1324 = vld [vmem:[%s12 + $0xb0] sm:$0xff]
    %v1325 = vld [vmem:[%s12 + $0xb8] sm:$0xff]
    %v1326 = vld [vmem:[%s12 + $0xc0] sm:$0xff]
    %v1327 = vld [vmem:[%s12 + $0xc8] sm:$0xff]
    %v1328 = vld [vmem:[%s12 + $0xd0] sm:$0xff]
    %v1329 = vld [vmem:[%s12 + $0xd8] sm:$0xff]
    %v1330 = vld [vmem:[%s12 + $0xe0] sm:$0xff]
    %v1331 = vld [vmem:[%s12 + $0xe8] sm:$0xff]
    %v1332 = vld [vmem:[%s12 + $0xf0] sm:$0xff]
    %v1333 = vld [vmem:[%s12 + $0xf8] sm:$0xff]
    %v1334 = vld [vmem:[%s12 + $0x100] sm:$0xff]
    %v1335 = vld [vmem:[%s12 + $0x108] sm:$0xff]
    %v1336 = vld [vmem:[%s12 + $0x110] sm:$0xff]
    %v1337 = vld [vmem:[%s12 + $0x118] sm:$0xff]
    %v1338 = vld [vmem:[%s12 + $0x120] sm:$0xff]
    %v1339 = vld [vmem:[%s12 + $0x128] sm:$0xff]
    %v1340 = vld [vmem:[%s12 + $0x130] sm:$0xff]
    %v1341 = vld [vmem:[%s12 + $0x138] sm:$0xff]
    %v1342 = vld [vmem:[%s12 + $0x140] sm:$0xff]
    %v1343 = vld [vmem:[%s12 + $0x148] sm:$0xff]
    %v1344 = vld [vmem:[%s12 + $0x150] sm:$0xff]
    %v1345 = vld [vmem:[%s12 + $0x158] sm:$0xff]
    %v1346 = vld [vmem:[%s12 + $0x160] sm:$0xff]
    %v1347 = vld [vmem:[%s12 + $0x168] sm:$0xff]
    %v1348 = vld [vmem:[%s12 + $0x170] sm:$0xff]
    %v1349 = vld [vmem:[%s12 + $0x178] sm:$0xff]
    %v1350 = vld [vmem:[%s12 + $0x180] sm:$0xff]
    %v1351 = vld [vmem:[%s12 + $0x188] sm:$0xff]
    %v1352 = vld [vmem:[%s12 + $0x190] sm:$0xff]
    %v1353 = vld [vmem:[%s12 + $0x198] sm:$0xff]
    %v1354 = vld [vmem:[%s12 + $0x1a0] sm:$0xff]
    %v1355 = vld [vmem:[%s12 + $0x1a8] sm:$0xff]
    %v1356 = vld [vmem:[%s12 + $0x1b0] sm:$0xff]
    %v1357 = vld [vmem:[%s12 + $0x1b8] sm:$0xff]
    %v1358 = vld [vmem:[%s12 + $0x1c0] sm:$0xff]
    %v1359 = vld [vmem:[%s12 + $0x1c8] sm:$0xff]
    %v1360 = vld [vmem:[%s12 + $0x1d0] sm:$0xff]
    %v1361 = vld [vmem:[%s12 + $0x1d8] sm:$0xff]
    %v1362 = vld [vmem:[%s12 + $0x1e0] sm:$0xff]
    %v1363 = vld [vmem:[%s12 + $0x1e8] sm:$0xff]
    %v1364 = vld [vmem:[%s12 + $0x1f0] sm:$0xff]
    %v1365 = vld [vmem:[%s12 + $0x1f8] sm:$0xff]
    %v1366 = vld [vmem:[%s13] sm:$0xff]
    %v1367 = vld [vmem:[%s13 + $0x8] sm:$0xff]
    %v1370 = vlaneseq
    %v1371 = vshrl.u32 %v1370, 7
    %v1372 = vsub.s32 0, %v1371
    %v1373 = vrot.slane %v1366, %v1372
    %v1374 = vlaneseq
    %v1375 = vshrl.u32 %v1374, 7
    %v1376 = vsub.s32 1, %v1375
    %v1377 = vrot.slane %v1366, %v1376
    %v1378 = vlaneseq
    %v1379 = vshrl.u32 %v1378, 7
    %v1380 = vsub.s32 2, %v1379
    %v1381 = vrot.slane %v1366, %v1380
    %v1382 = vlaneseq
    %v1383 = vshrl.u32 %v1382, 7
    %v1384 = vsub.s32 3, %v1383
    %v1385 = vrot.slane %v1366, %v1384
    %v1386 = vlaneseq
    %v1387 = vshrl.u32 %v1386, 7
    %v1388 = vsub.s32 4, %v1387
    %v1389 = vrot.slane %v1366, %v1388
    %v1390 = vlaneseq
    %v1391 = vshrl.u32 %v1390, 7
    %v1392 = vsub.s32 5, %v1391
    %v1393 = vrot.slane %v1366, %v1392
    %v1394 = vlaneseq
    %v1395 = vshrl.u32 %v1394, 7
    %v1396 = vsub.s32 6, %v1395
    %v1397 = vrot.slane %v1366, %v1396
    %v1398 = vlaneseq
    %v1399 = vshrl.u32 %v1398, 7
    %v1400 = vsub.s32 7, %v1399
    %v1401 = vrot.slane %v1366, %v1400
    %v1402 = vlaneseq
    %v1403 = vshrl.u32 %v1402, 7
    %v1404 = vsub.s32 0, %v1403
    %v1405 = vrot.slane %v1367, %v1404
    %v1406 = vlaneseq
    %v1407 = vshrl.u32 %v1406, 7
    %v1408 = vsub.s32 1, %v1407
    %v1409 = vrot.slane %v1367, %v1408
    %v1410 = vlaneseq
    %v1411 = vshrl.u32 %v1410, 7
    %v1412 = vsub.s32 2, %v1411
    %v1413 = vrot.slane %v1367, %v1412
    %v1414 = vlaneseq
    %v1415 = vshrl.u32 %v1414, 7
    %v1416 = vsub.s32 3, %v1415
    %v1417 = vrot.slane %v1367, %v1416
    %v1418 = vlaneseq
    %v1419 = vshrl.u32 %v1418, 7
    %v1420 = vsub.s32 4, %v1419
    %v1421 = vrot.slane %v1367, %v1420
    %v1422 = vlaneseq
    %v1423 = vshrl.u32 %v1422, 7
    %v1424 = vsub.s32 5, %v1423
    %v1425 = vrot.slane %v1367, %v1424
    %v1426 = vlaneseq
    %v1427 = vshrl.u32 %v1426, 7
    %v1428 = vsub.s32 6, %v1427
    %v1429 = vrot.slane %v1367, %v1428
    %v1430 = vlaneseq
    %v1431 = vshrl.u32 %v1430, 7
    %v1432 = vsub.s32 7, %v1431
    %v1433 = vrot.slane %v1367, %v1432
    %v1514 = vunpack.c.l.b16 %v1302
    %v1515 = vunpack.c.h.b16 %v1302
    %v1516 = vunpack.c.l.b16 %v1303
    %v1517 = vunpack.c.h.b16 %v1303
    %v1518 = vunpack.c.l.b16 %v1304
    %v1519 = vunpack.c.h.b16 %v1304
    %v1520 = vunpack.c.l.b16 %v1305
    %v1521 = vunpack.c.h.b16 %v1305
    %v1522 = vunpack.c.l.b16 %v1306
    %v1523 = vunpack.c.h.b16 %v1306
    %v1524 = vunpack.c.l.b16 %v1307
    %v1525 = vunpack.c.h.b16 %v1307
    %v1526 = vunpack.c.l.b16 %v1308
    %v1527 = vunpack.c.h.b16 %v1308
    %v1528 = vunpack.c.l.b16 %v1309
    %v1529 = vunpack.c.h.b16 %v1309
    %v1530 = vunpack.c.l.b16 %v1310
    %v1531 = vunpack.c.h.b16 %v1310
    %v1532 = vunpack.c.l.b16 %v1311
    %v1533 = vunpack.c.h.b16 %v1311
    %v1534 = vunpack.c.l.b16 %v1312
    %v1535 = vunpack.c.h.b16 %v1312
    %v1536 = vunpack.c.l.b16 %v1313
    %v1537 = vunpack.c.h.b16 %v1313
    %v1538 = vunpack.c.l.b16 %v1314
    %v1539 = vunpack.c.h.b16 %v1314
    %v1540 = vunpack.c.l.b16 %v1315
    %v1541 = vunpack.c.h.b16 %v1315
    %v1542 = vunpack.c.l.b16 %v1316
    %v1543 = vunpack.c.h.b16 %v1316
    %v1544 = vunpack.c.l.b16 %v1317
    %v1545 = vunpack.c.h.b16 %v1317
    %v1546 = vunpack.c.l.b16 %v1318
    %v1547 = vunpack.c.h.b16 %v1318
    %v1548 = vunpack.c.l.b16 %v1319
    %v1549 = vunpack.c.h.b16 %v1319
    %v1550 = vunpack.c.l.b16 %v1320
    %v1551 = vunpack.c.h.b16 %v1320
    %v1552 = vunpack.c.l.b16 %v1321
    %v1553 = vunpack.c.h.b16 %v1321
    %v1554 = vunpack.c.l.b16 %v1322
    %v1555 = vunpack.c.h.b16 %v1322
    %v1556 = vunpack.c.l.b16 %v1323
    %v1557 = vunpack.c.h.b16 %v1323
    %v1558 = vunpack.c.l.b16 %v1324
    %v1559 = vunpack.c.h.b16 %v1324
    %v1560 = vunpack.c.l.b16 %v1325
    %v1561 = vunpack.c.h.b16 %v1325
    %v1562 = vunpack.c.l.b16 %v1326
    %v1563 = vunpack.c.h.b16 %v1326
    %v1564 = vunpack.c.l.b16 %v1327
    %v1565 = vunpack.c.h.b16 %v1327
    %v1566 = vunpack.c.l.b16 %v1328
    %v1567 = vunpack.c.h.b16 %v1328
    %v1568 = vunpack.c.l.b16 %v1329
    %v1569 = vunpack.c.h.b16 %v1329
    %v1570 = vunpack.c.l.b16 %v1330
    %v1571 = vunpack.c.h.b16 %v1330
    %v1572 = vunpack.c.l.b16 %v1331
    %v1573 = vunpack.c.h.b16 %v1331
    %v1574 = vunpack.c.l.b16 %v1332
    %v1575 = vunpack.c.h.b16 %v1332
    %v1576 = vunpack.c.l.b16 %v1333
    %v1577 = vunpack.c.h.b16 %v1333
    %v1578 = vunpack.c.l.b16 %v1334
    %v1579 = vunpack.c.h.b16 %v1334
    %v1580 = vunpack.c.l.b16 %v1335
    %v1581 = vunpack.c.h.b16 %v1335
    %v1582 = vunpack.c.l.b16 %v1336
    %v1583 = vunpack.c.h.b16 %v1336
    %v1584 = vunpack.c.l.b16 %v1337
    %v1585 = vunpack.c.h.b16 %v1337
    %v1586 = vunpack.c.l.b16 %v1338
    %v1587 = vunpack.c.h.b16 %v1338
    %v1588 = vunpack.c.l.b16 %v1339
    %v1589 = vunpack.c.h.b16 %v1339
    %v1590 = vunpack.c.l.b16 %v1340
    %v1591 = vunpack.c.h.b16 %v1340
    %v1592 = vunpack.c.l.b16 %v1341
    %v1593 = vunpack.c.h.b16 %v1341
    %v1594 = vunpack.c.l.b16 %v1342
    %v1595 = vunpack.c.h.b16 %v1342
    %v1596 = vunpack.c.l.b16 %v1343
    %v1597 = vunpack.c.h.b16 %v1343
    %v1598 = vunpack.c.l.b16 %v1344
    %v1599 = vunpack.c.h.b16 %v1344
    %v1600 = vunpack.c.l.b16 %v1345
    %v1601 = vunpack.c.h.b16 %v1345
    %v1602 = vunpack.c.l.b16 %v1346
    %v1603 = vunpack.c.h.b16 %v1346
    %v1604 = vunpack.c.l.b16 %v1347
    %v1605 = vunpack.c.h.b16 %v1347
    %v1606 = vunpack.c.l.b16 %v1348
    %v1607 = vunpack.c.h.b16 %v1348
    %v1608 = vunpack.c.l.b16 %v1349
    %v1609 = vunpack.c.h.b16 %v1349
    %v1610 = vunpack.c.l.b16 %v1350
    %v1611 = vunpack.c.h.b16 %v1350
    %v1612 = vunpack.c.l.b16 %v1351
    %v1613 = vunpack.c.h.b16 %v1351
    %v1614 = vunpack.c.l.b16 %v1352
    %v1615 = vunpack.c.h.b16 %v1352
    %v1616 = vunpack.c.l.b16 %v1353
    %v1617 = vunpack.c.h.b16 %v1353
    %v1618 = vunpack.c.l.b16 %v1354
    %v1619 = vunpack.c.h.b16 %v1354
    %v1620 = vunpack.c.l.b16 %v1355
    %v1621 = vunpack.c.h.b16 %v1355
    %v1622 = vunpack.c.l.b16 %v1356
    %v1623 = vunpack.c.h.b16 %v1356
    %v1624 = vunpack.c.l.b16 %v1357
    %v1625 = vunpack.c.h.b16 %v1357
    %v1626 = vunpack.c.l.b16 %v1358
    %v1627 = vunpack.c.h.b16 %v1358
    %v1628 = vunpack.c.l.b16 %v1359
    %v1629 = vunpack.c.h.b16 %v1359
    %v1630 = vunpack.c.l.b16 %v1360
    %v1631 = vunpack.c.h.b16 %v1360
    %v1632 = vunpack.c.l.b16 %v1361
    %v1633 = vunpack.c.h.b16 %v1361
    %v1634 = vunpack.c.l.b16 %v1362
    %v1635 = vunpack.c.h.b16 %v1362
    %v1636 = vunpack.c.l.b16 %v1363
    %v1637 = vunpack.c.h.b16 %v1363
    %v1638 = vunpack.c.l.b16 %v1364
    %v1639 = vunpack.c.h.b16 %v1364
    %v1640 = vunpack.c.l.b16 %v1365
    %v1641 = vunpack.c.h.b16 %v1365
    %v1642 = vpack.c.b16 %v1530, %v1514
    %v1643 = vpack.c.b16 %v1531, %v1515
    %v1644 = vpack.c.b16 %v1532, %v1516
    %v1645 = vpack.c.b16 %v1533, %v1517
    %v1646 = vpack.c.b16 %v1534, %v1518
    %v1647 = vpack.c.b16 %v1535, %v1519
    %v1648 = vpack.c.b16 %v1536, %v1520
    %v1649 = vpack.c.b16 %v1537, %v1521
    %v1650 = vpack.c.b16 %v1538, %v1522
    %v1651 = vpack.c.b16 %v1539, %v1523
    %v1652 = vpack.c.b16 %v1540, %v1524
    %v1653 = vpack.c.b16 %v1541, %v1525
    %v1654 = vpack.c.b16 %v1542, %v1526
    %v1655 = vpack.c.b16 %v1543, %v1527
    %v1656 = vpack.c.b16 %v1544, %v1528
    %v1657 = vpack.c.b16 %v1545, %v1529
    %v1658 = vpack.c.b16 %v1562, %v1546
    %v1659 = vpack.c.b16 %v1563, %v1547
    %v1660 = vpack.c.b16 %v1564, %v1548
    %v1661 = vpack.c.b16 %v1565, %v1549
    %v1662 = vpack.c.b16 %v1566, %v1550
    %v1663 = vpack.c.b16 %v1567, %v1551
    %v1664 = vpack.c.b16 %v1568, %v1552
    %v1665 = vpack.c.b16 %v1569, %v1553
    %v1666 = vpack.c.b16 %v1570, %v1554
    %v1667 = vpack.c.b16 %v1571, %v1555
    %v1668 = vpack.c.b16 %v1572, %v1556
    %v1669 = vpack.c.b16 %v1573, %v1557
    %v1670 = vpack.c.b16 %v1574, %v1558
    %v1671 = vpack.c.b16 %v1575, %v1559
    %v1672 = vpack.c.b16 %v1576, %v1560
    %v1673 = vpack.c.b16 %v1577, %v1561
    %v1674 = vpack.c.b16 %v1594, %v1578
    %v1675 = vpack.c.b16 %v1595, %v1579
    %v1676 = vpack.c.b16 %v1596, %v1580
    %v1677 = vpack.c.b16 %v1597, %v1581
    %v1678 = vpack.c.b16 %v1598, %v1582
    %v1679 = vpack.c.b16 %v1599, %v1583
    %v1680 = vpack.c.b16 %v1600, %v1584
    %v1681 = vpack.c.b16 %v1601, %v1585
    %v1682 = vpack.c.b16 %v1602, %v1586
    %v1683 = vpack.c.b16 %v1603, %v1587
    %v1684 = vpack.c.b16 %v1604, %v1588
    %v1685 = vpack.c.b16 %v1605, %v1589
    %v1686 = vpack.c.b16 %v1606, %v1590
    %v1687 = vpack.c.b16 %v1607, %v1591
    %v1688 = vpack.c.b16 %v1608, %v1592
    %v1689 = vpack.c.b16 %v1609, %v1593
    %v1690 = vpack.c.b16 %v1626, %v1610
    %v1691 = vpack.c.b16 %v1627, %v1611
    %v1692 = vpack.c.b16 %v1628, %v1612
    %v1693 = vpack.c.b16 %v1629, %v1613
    %v1694 = vpack.c.b16 %v1630, %v1614
    %v1695 = vpack.c.b16 %v1631, %v1615
    %v1696 = vpack.c.b16 %v1632, %v1616
    %v1697 = vpack.c.b16 %v1633, %v1617
    %v1698 = vpack.c.b16 %v1634, %v1618
    %v1699 = vpack.c.b16 %v1635, %v1619
    %v1700 = vpack.c.b16 %v1636, %v1620
    %v1701 = vpack.c.b16 %v1637, %v1621
    %v1702 = vpack.c.b16 %v1638, %v1622
    %v1703 = vpack.c.b16 %v1639, %v1623
    %v1704 = vpack.c.b16 %v1640, %v1624
    %v1705 = vpack.c.b16 %v1641, %v1625
    %v1771 = vsel %vm59, %v1301, 0
    %1773 = vmatprep.subr.bf16.mxu0 %v1643
    %1774 = vmatpush1.bf16.msra.mxu0 %v1642
    %1775 = vmatprep.subr.bf16.mxu0 %v1659
    %1776 = vmatpush1.bf16.msra.mxu0 %v1658
    %1777 = vmatprep.subr.bf16.mxu0 %v1675
    %1778 = vmatpush1.bf16.msra.mxu0 %v1674
    %1779 = vmatprep.subr.bf16.mxu0 %v1691
    %1780 = vmatpush1.bf16.msra.mxu0 %v1690
    %1781 = vmatprep.subr.bf16.mxu0 0
    %1782 = vmatpush1.bf16.msra.mxu0 0
    %1783 = vmatprep.subr.bf16.mxu0 0
    %1784 = vmatpush1.bf16.msra.mxu0 0
    %1785 = vmatprep.subr.bf16.mxu0 0
    %1786 = vmatpush1.bf16.msra.mxu0 0
    %1787 = vmatprep.subr.bf16.mxu0 0
    %1788 = vmatpush1.bf16.msra.mxu0 0
    %1789 = vmatprep.subr.bf16.mxu0 0
    %1790 = vmatpush1.bf16.msra.mxu0 0
    %1791 = vmatprep.subr.bf16.mxu0 0
    %1792 = vmatpush1.bf16.msra.mxu0 0
    %1793 = vmatprep.subr.bf16.mxu0 0
    %1794 = vmatpush1.bf16.msra.mxu0 0
    %1795 = vmatprep.subr.bf16.mxu0 0
    %1796 = vmatpush1.bf16.msra.mxu0 0
    %1797 = vmatprep.subr.bf16.mxu0 0
    %1798 = vmatpush1.bf16.msra.mxu0 0
    %1799 = vmatprep.subr.bf16.mxu0 0
    %1800 = vmatpush1.bf16.msra.mxu0 0
    %1801 = vmatprep.subr.bf16.mxu0 0
    %1802 = vmatpush1.bf16.msra.mxu0 0
    %1803 = vmatprep.subr.bf16.mxu0 0
    %1804 = vmatpush1.bf16.msra.mxu0 0
    %1805 = vmatprep.mubr.bf16.mxu0 0
    %1806 = vmatmul.mubr.bf16.gmra.mrb[0].mxu0 %v1771
    %v1807 = vpop.f32.mrb[0].mxu0
    %v1808 = vadd.f32 %v1373, %v1807
    %v1809 = vpop.f32.mrb[0].mxu0
    %v1810 = vadd.f32 %v1377, %v1809
    %v1811 = vpop.f32.mrb[0].mxu0
    %v1812 = vadd.f32 %v1373, %v1811
    %v1813 = vpop.f32.mrb[0].mxu0
    %v1814 = vadd.f32 %v1377, %v1813
    %1815 = vdwg.mxu0
    %1816 = vmatprep.subr.bf16.mxu0 %v1645
    %1817 = vmatpush1.bf16.msra.mxu0 %v1644
    %1818 = vmatprep.subr.bf16.mxu0 %v1661
    %1819 = vmatpush1.bf16.msra.mxu0 %v1660
    %1820 = vmatprep.subr.bf16.mxu0 %v1677
    %1821 = vmatpush1.bf16.msra.mxu0 %v1676
    %1822 = vmatprep.subr.bf16.mxu0 %v1693
    %1823 = vmatpush1.bf16.msra.mxu0 %v1692
    %1824 = vmatprep.subr.bf16.mxu0 0
    %1825 = vmatpush1.bf16.msra.mxu0 0
    %1826 = vmatprep.subr.bf16.mxu0 0
    %1827 = vmatpush1.bf16.msra.mxu0 0
    %1828 = vmatprep.subr.bf16.mxu0 0
    %1829 = vmatpush1.bf16.msra.mxu0 0
    %1830 = vmatprep.subr.bf16.mxu0 0
    %1831 = vmatpush1.bf16.msra.mxu0 0
    %1832 = vmatprep.subr.bf16.mxu0 0
    %1833 = vmatpush1.bf16.msra.mxu0 0
    %1834 = vmatprep.subr.bf16.mxu0 0
    %1835 = vmatpush1.bf16.msra.mxu0 0
    %1836 = vmatprep.subr.bf16.mxu0 0
    %1837 = vmatpush1.bf16.msra.mxu0 0
    %1838 = vmatprep.subr.bf16.mxu0 0
    %1839 = vmatpush1.bf16.msra.mxu0 0
    %1840 = vmatprep.subr.bf16.mxu0 0
    %1841 = vmatpush1.bf16.msra.mxu0 0
    %1842 = vmatprep.subr.bf16.mxu0 0
    %1843 = vmatpush1.bf16.msra.mxu0 0
    %1844 = vmatprep.subr.bf16.mxu0 0
    %1845 = vmatpush1.bf16.msra.mxu0 0
    %1846 = vmatprep.subr.bf16.mxu0 0
    %1847 = vmatpush1.bf16.msra.mxu0 0
    %1848 = vmatprep.mubr.bf16.mxu0 0
    %1849 = vmatmul.mubr.bf16.gmra.mrb[0].mxu0 %v1771
    %v1850 = vpop.f32.mrb[0].mxu0
    %v1851 = vadd.f32 %v1381, %v1850
    %v1852 = vpop.f32.mrb[0].mxu0
    %v1853 = vadd.f32 %v1385, %v1852
    %v1854 = vpop.f32.mrb[0].mxu0
    %v1855 = vadd.f32 %v1381, %v1854
    %v1856 = vpop.f32.mrb[0].mxu0
    %v1857 = vadd.f32 %v1385, %v1856
    %1858 = vdwg.mxu0
    %1859 = vmatprep.subr.bf16.mxu0 %v1647
    %1860 = vmatpush1.bf16.msra.mxu0 %v1646
    %1861 = vmatprep.subr.bf16.mxu0 %v1663
    %1862 = vmatpush1.bf16.msra.mxu0 %v1662
    %1863 = vmatprep.subr.bf16.mxu0 %v1679
    %1864 = vmatpush1.bf16.msra.mxu0 %v1678
    %1865 = vmatprep.subr.bf16.mxu0 %v1695
    %1866 = vmatpush1.bf16.msra.mxu0 %v1694
    %1867 = vmatprep.subr.bf16.mxu0 0
    %1868 = vmatpush1.bf16.msra.mxu0 0
    %1869 = vmatprep.subr.bf16.mxu0 0
    %1870 = vmatpush1.bf16.msra.mxu0 0
    %1871 = vmatprep.subr.bf16.mxu0 0
    %1872 = vmatpush1.bf16.msra.mxu0 0
    %1873 = vmatprep.subr.bf16.mxu0 0
    %1874 = vmatpush1.bf16.msra.mxu0 0
    %1875 = vmatprep.subr.bf16.mxu0 0
    %1876 = vmatpush1.bf16.msra.mxu0 0
    %1877 = vmatprep.subr.bf16.mxu0 0
    %1878 = vmatpush1.bf16.msra.mxu0 0
    %1879 = vmatprep.subr.bf16.mxu0 0
    %1880 = vmatpush1.bf16.msra.mxu0 0
    %1881 = vmatprep.subr.bf16.mxu0 0
    %1882 = vmatpush1.bf16.msra.mxu0 0
    %1883 = vmatprep.subr.bf16.mxu0 0
    %1884 = vmatpush1.bf16.msra.mxu0 0
    %1885 = vmatprep.subr.bf16.mxu0 0
    %1886 = vmatpush1.bf16.msra.mxu0 0
    %1887 = vmatprep.subr.bf16.mxu0 0
    %1888 = vmatpush1.bf16.msra.mxu0 0
    %1889 = vmatprep.subr.bf16.mxu0 0
    %1890 = vmatpush1.bf16.msra.mxu0 0
    %1891 = vmatprep.mubr.bf16.mxu0 0
    %1892 = vmatmul.mubr.bf16.gmra.mrb[0].mxu0 %v1771
    %v1893 = vpop.f32.mrb[0].mxu0
    %v1894 = vadd.f32 %v1389, %v1893
    %v1895 = vpop.f32.mrb[0].mxu0
    %v1896 = vadd.f32 %v1393, %v1895
    %v1897 = vpop.f32.mrb[0].mxu0
    %v1898 = vadd.f32 %v1389, %v1897
    %v1899 = vpop.f32.mrb[0].mxu0
    %v1900 = vadd.f32 %v1393, %v1899
    %1901 = vdwg.mxu0
    %1902 = vmatprep.subr.bf16.mxu0 %v1649
    %1903 = vmatpush1.bf16.msra.mxu0 %v1648
    %1904 = vmatprep.subr.bf16.mxu0 %v1665
    %1905 = vmatpush1.bf16.msra.mxu0 %v1664
    %1906 = vmatprep.subr.bf16.mxu0 %v1681
    %1907 = vmatpush1.bf16.msra.mxu0 %v1680
    %1908 = vmatprep.subr.bf16.mxu0 %v1697
    %1909 = vmatpush1.bf16.msra.mxu0 %v1696
    %1910 = vmatprep.subr.bf16.mxu0 0
    %1911 = vmatpush1.bf16.msra.mxu0 0
    %1912 = vmatprep.subr.bf16.mxu0 0
    %1913 = vmatpush1.bf16.msra.mxu0 0
    %1914 = vmatprep.subr.bf16.mxu0 0
    %1915 = vmatpush1.bf16.msra.mxu0 0
    %1916 = vmatprep.subr.bf16.mxu0 0
    %1917 = vmatpush1.bf16.msra.mxu0 0
    %1918 = vmatprep.subr.bf16.mxu0 0
    %1919 = vmatpush1.bf16.msra.mxu0 0
    %1920 = vmatprep.subr.bf16.mxu0 0
    %1921 = vmatpush1.bf16.msra.mxu0 0
    %1922 = vmatprep.subr.bf16.mxu0 0
    %1923 = vmatpush1.bf16.msra.mxu0 0
    %1924 = vmatprep.subr.bf16.mxu0 0
    %1925 = vmatpush1.bf16.msra.mxu0 0
    %1926 = vmatprep.subr.bf16.mxu0 0
    %1927 = vmatpush1.bf16.msra.mxu0 0
    %1928 = vmatprep.subr.bf16.mxu0 0
    %1929 = vmatpush1.bf16.msra.mxu0 0
    %1930 = vmatprep.subr.bf16.mxu0 0
    %1931 = vmatpush1.bf16.msra.mxu0 0
    %1932 = vmatprep.subr.bf16.mxu0 0
    %1933 = vmatpush1.bf16.msra.mxu0 0
    %1934 = vmatprep.mubr.bf16.mxu0 0
    %1935 = vmatmul.mubr.bf16.gmra.mrb[0].mxu0 %v1771
    %v1936 = vpop.f32.mrb[0].mxu0
    %v1937 = vadd.f32 %v1397, %v1936
    %v1938 = vpop.f32.mrb[0].mxu0
    %v1939 = vadd.f32 %v1401, %v1938
    %v1940 = vpop.f32.mrb[0].mxu0
    %v1941 = vadd.f32 %v1397, %v1940
    %v1942 = vpop.f32.mrb[0].mxu0
    %v1943 = vadd.f32 %v1401, %v1942
    %1944 = vdwg.mxu0
    %1945 = vmatprep.subr.bf16.mxu0 %v1651
    %1946 = vmatpush1.bf16.msra.mxu0 %v1650
    %1947 = vmatprep.subr.bf16.mxu0 %v1667
    %1948 = vmatpush1.bf16.msra.mxu0 %v1666
    %1949 = vmatprep.subr.bf16.mxu0 %v1683
    %1950 = vmatpush1.bf16.msra.mxu0 %v1682
    %1951 = vmatprep.subr.bf16.mxu0 %v1699
    %1952 = vmatpush1.bf16.msra.mxu0 %v1698
    %1953 = vmatprep.subr.bf16.mxu0 0
    %1954 = vmatpush1.bf16.msra.mxu0 0
    %1955 = vmatprep.subr.bf16.mxu0 0
    %1956 = vmatpush1.bf16.msra.mxu0 0
    %1957 = vmatprep.subr.bf16.mxu0 0
    %1958 = vmatpush1.bf16.msra.mxu0 0
    %1959 = vmatprep.subr.bf16.mxu0 0
    %1960 = vmatpush1.bf16.msra.mxu0 0
    %1961 = vmatprep.subr.bf16.mxu0 0
    %1962 = vmatpush1.bf16.msra.mxu0 0
    %1963 = vmatprep.subr.bf16.mxu0 0
    %1964 = vmatpush1.bf16.msra.mxu0 0
    %1965 = vmatprep.subr.bf16.mxu0 0
    %1966 = vmatpush1.bf16.msra.mxu0 0
    %1967 = vmatprep.subr.bf16.mxu0 0
    %1968 = vmatpush1.bf16.msra.mxu0 0
    %1969 = vmatprep.subr.bf16.mxu0 0
    %1970 = vmatpush1.bf16.msra.mxu0 0
    %1971 = vmatprep.subr.bf16.mxu0 0
    %1972 = vmatpush1.bf16.msra.mxu0 0
    %1973 = vmatprep.subr.bf16.mxu0 0
    %1974 = vmatpush1.bf16.msra.mxu0 0
    %1975 = vmatprep.subr.bf16.mxu0 0
    %1976 = vmatpush1.bf16.msra.mxu0 0
    %1977 = vmatprep.mubr.bf16.mxu0 0
    %1978 = vmatmul.mubr.bf16.gmra.mrb[0].mxu0 %v1771
    %v1979 = vpop.f32.mrb[0].mxu0
    %v1980 = vadd.f32 %v1405, %v1979
    %v1981 = vpop.f32.mrb[0].mxu0
    %v1982 = vadd.f32 %v1409, %v1981
    %v1983 = vpop.f32.mrb[0].mxu0
    %v1984 = vadd.f32 %v1405, %v1983
    %v1985 = vpop.f32.mrb[0].mxu0
    %v1986 = vadd.f32 %v1409, %v1985
    %1987 = vdwg.mxu0
    %1988 = vmatprep.subr.bf16.mxu0 %v1653
    %1989 = vmatpush1.bf16.msra.mxu0 %v1652
    %1990 = vmatprep.subr.bf16.mxu0 %v1669
    %1991 = vmatpush1.bf16.msra.mxu0 %v1668
    %1992 = vmatprep.subr.bf16.mxu0 %v1685
    %1993 = vmatpush1.bf16.msra.mxu0 %v1684
    %1994 = vmatprep.subr.bf16.mxu0 %v1701
    %1995 = vmatpush1.bf16.msra.mxu0 %v1700
    %1996 = vmatprep.subr.bf16.mxu0 0
    %1997 = vmatpush1.bf16.msra.mxu0 0
    %1998 = vmatprep.subr.bf16.mxu0 0
    %1999 = vmatpush1.bf16.msra.mxu0 0
    %2000 = vmatprep.subr.bf16.mxu0 0
    %2001 = vmatpush1.bf16.msra.mxu0 0
    %2002 = vmatprep.subr.bf16.mxu0 0
    %2003 = vmatpush1.bf16.msra.mxu0 0
    %2004 = vmatprep.subr.bf16.mxu0 0
    %2005 = vmatpush1.bf16.msra.mxu0 0
    %2006 = vmatprep.subr.bf16.mxu0 0
    %2007 = vmatpush1.bf16.msra.mxu0 0
    %2008 = vmatprep.subr.bf16.mxu0 0
    %2009 = vmatpush1.bf16.msra.mxu0 0
    %2010 = vmatprep.subr.bf16.mxu0 0
    %2011 = vmatpush1.bf16.msra.mxu0 0
    %2012 = vmatprep.subr.bf16.mxu0 0
    %2013 = vmatpush1.bf16.msra.mxu0 0
    %2014 = vmatprep.subr.bf16.mxu0 0
    %2015 = vmatpush1.bf16.msra.mxu0 0
    %2016 = vmatprep.subr.bf16.mxu0 0
    %2017 = vmatpush1.bf16.msra.mxu0 0
    %2018 = vmatprep.subr.bf16.mxu0 0
    %2019 = vmatpush1.bf16.msra.mxu0 0
    %2020 = vmatprep.mubr.bf16.mxu0 0
    %2021 = vmatmul.mubr.bf16.gmra.mrb[0].mxu0 %v1771
    %v2022 = vpop.f32.mrb[0].mxu0
    %v2023 = vadd.f32 %v1413, %v2022
    %v2024 = vpop.f32.mrb[0].mxu0
    %v2025 = vadd.f32 %v1417, %v2024
    %v2026 = vpop.f32.mrb[0].mxu0
    %v2027 = vadd.f32 %v1413, %v2026
    %v2028 = vpop.f32.mrb[0].mxu0
    %v2029 = vadd.f32 %v1417, %v2028
    %2030 = vdwg.mxu0
    %2031 = vmatprep.subr.bf16.mxu0 %v1655
    %2032 = vmatpush1.bf16.msra.mxu0 %v1654
    %2033 = vmatprep.subr.bf16.mxu0 %v1671
    %2034 = vmatpush1.bf16.msra.mxu0 %v1670
    %2035 = vmatprep.subr.bf16.mxu0 %v1687
    %2036 = vmatpush1.bf16.msra.mxu0 %v1686
    %2037 = vmatprep.subr.bf16.mxu0 %v1703
    %2038 = vmatpush1.bf16.msra.mxu0 %v1702
    %2039 = vmatprep.subr.bf16.mxu0 0
    %2040 = vmatpush1.bf16.msra.mxu0 0
    %2041 = vmatprep.subr.bf16.mxu0 0
    %2042 = vmatpush1.bf16.msra.mxu0 0
    %2043 = vmatprep.subr.bf16.mxu0 0
    %2044 = vmatpush1.bf16.msra.mxu0 0
    %2045 = vmatprep.subr.bf16.mxu0 0
    %2046 = vmatpush1.bf16.msra.mxu0 0
    %2047 = vmatprep.subr.bf16.mxu0 0
    %2048 = vmatpush1.bf16.msra.mxu0 0
    %2049 = vmatprep.subr.bf16.mxu0 0
    %2050 = vmatpush1.bf16.msra.mxu0 0
    %2051 = vmatprep.subr.bf16.mxu0 0
    %2052 = vmatpush1.bf16.msra.mxu0 0
    %2053 = vmatprep.subr.bf16.mxu0 0
    %2054 = vmatpush1.bf16.msra.mxu0 0
    %2055 = vmatprep.subr.bf16.mxu0 0
    %2056 = vmatpush1.bf16.msra.mxu0 0
    %2057 = vmatprep.subr.bf16.mxu0 0
    %2058 = vmatpush1.bf16.msra.mxu0 0
    %2059 = vmatprep.subr.bf16.mxu0 0
    %2060 = vmatpush1.bf16.msra.mxu0 0
    %2061 = vmatprep.subr.bf16.mxu0 0
    %2062 = vmatpush1.bf16.msra.mxu0 0
    %2063 = vmatprep.mubr.bf16.mxu0 0
    %2064 = vmatmul.mubr.bf16.gmra.mrb[0].mxu0 %v1771
    %v2065 = vpop.f32.mrb[0].mxu0
    %v2066 = vadd.f32 %v1421, %v2065
    %v2067 = vpop.f32.mrb[0].mxu0
    %v2068 = vadd.f32 %v1425, %v2067
    %v2069 = vpop.f32.mrb[0].mxu0
    %v2070 = vadd.f32 %v1421, %v2069
    %v2071 = vpop.f32.mrb[0].mxu0
    %v2072 = vadd.f32 %v1425, %v2071
    %2073 = vdwg.mxu0
    %2074 = vmatprep.subr.bf16.mxu0 %v1657
    %2075 = vmatpush1.bf16.msra.mxu0 %v1656
    %2076 = vmatprep.subr.bf16.mxu0 %v1673
    %2077 = vmatpush1.bf16.msra.mxu0 %v1672
    %2078 = vmatprep.subr.bf16.mxu0 %v1689
    %2079 = vmatpush1.bf16.msra.mxu0 %v1688
    %2080 = vmatprep.subr.bf16.mxu0 %v1705
    %2081 = vmatpush1.bf16.msra.mxu0 %v1704
    %2082 = vmatprep.subr.bf16.mxu0 0
    %2083 = vmatpush1.bf16.msra.mxu0 0
    %2084 = vmatprep.subr.bf16.mxu0 0
    %2085 = vmatpush1.bf16.msra.mxu0 0
    %2086 = vmatprep.subr.bf16.mxu0 0
    %2087 = vmatpush1.bf16.msra.mxu0 0
    %2088 = vmatprep.subr.bf16.mxu0 0
    %2089 = vmatpush1.bf16.msra.mxu0 0
    %2090 = vmatprep.subr.bf16.mxu0 0
    %2091 = vmatpush1.bf16.msra.mxu0 0
    %2092 = vmatprep.subr.bf16.mxu0 0
    %2093 = vmatpush1.bf16.msra.mxu0 0
    %2094 = vmatprep.subr.bf16.mxu0 0
    %2095 = vmatpush1.bf16.msra.mxu0 0
    %2096 = vmatprep.subr.bf16.mxu0 0
    %2097 = vmatpush1.bf16.msra.mxu0 0
    %2098 = vmatprep.subr.bf16.mxu0 0
    %2099 = vmatpush1.bf16.msra.mxu0 0
    %2100 = vmatprep.subr.bf16.mxu0 0
    %2101 = vmatpush1.bf16.msra.mxu0 0
    %2102 = vmatprep.subr.bf16.mxu0 0
    %2103 = vmatpush1.bf16.msra.mxu0 0
    %2104 = vmatprep.subr.bf16.mxu0 0
    %2105 = vmatpush1.bf16.msra.mxu0 0
    %2106 = vmatprep.mubr.bf16.mxu0 0
    %2107 = vmatmul.mubr.bf16.gmra.mrb[0].mxu0 %v1771
    %v2108 = vpop.f32.mrb[0].mxu0
    %v2109 = vadd.f32 %v1429, %v2108
    %v2110 = vpop.f32.mrb[0].mxu0
    %v2111 = vadd.f32 %v1433, %v2110
    %v2112 = vpop.f32.mrb[0].mxu0
    %v2113 = vadd.f32 %v1429, %v2112
    %v2114 = vpop.f32.mrb[0].mxu0
    %v2115 = vadd.f32 %v1433, %v2114
    %2116 = vdwg.mxu0
    %v2117 = vmax.f32 %v1808, 0.0
    %v2118 = vmax.f32 %v1810, 0.0
    %v2119 = vmax.f32 %v1851, 0.0
    %v2120 = vmax.f32 %v1853, 0.0
    %v2121 = vmax.f32 %v1894, 0.0
    %v2122 = vmax.f32 %v1896, 0.0
    %v2123 = vmax.f32 %v1937, 0.0
    %v2124 = vmax.f32 %v1939, 0.0
    %v2125 = vmax.f32 %v1980, 0.0
    %v2126 = vmax.f32 %v1982, 0.0
    %v2127 = vmax.f32 %v2023, 0.0
    %v2128 = vmax.f32 %v2025, 0.0
    %v2129 = vmax.f32 %v2066, 0.0
    %v2130 = vmax.f32 %v2068, 0.0
    %v2131 = vmax.f32 %v2109, 0.0
    %v2132 = vmax.f32 %v2111, 0.0
    %v2133 = vmax.f32 %v1812, 0.0
    %v2134 = vmax.f32 %v1814, 0.0
    %v2135 = vmax.f32 %v1855, 0.0
    %v2136 = vmax.f32 %v1857, 0.0
    %v2137 = vmax.f32 %v1898, 0.0
    %v2138 = vmax.f32 %v1900, 0.0
    %v2139 = vmax.f32 %v1941, 0.0
    %v2140 = vmax.f32 %v1943, 0.0
    %v2141 = vmax.f32 %v1984, 0.0
    %v2142 = vmax.f32 %v1986, 0.0
    %v2143 = vmax.f32 %v2027, 0.0
    %v2144 = vmax.f32 %v2029, 0.0
    %v2145 = vmax.f32 %v2070, 0.0
    %v2146 = vmax.f32 %v2072, 0.0
    %v2147 = vmax.f32 %v2113, 0.0
    %v2148 = vmax.f32 %v2115, 0.0
    %v2149 = vpack.c.bf16 %v2133, %v2117
    %v2150 = vpack.c.bf16 %v2134, %v2118
    %v2151 = vpack.c.bf16 %v2135, %v2119
    %v2152 = vpack.c.bf16 %v2136, %v2120
    %v2153 = vpack.c.bf16 %v2137, %v2121
    %v2154 = vpack.c.bf16 %v2138, %v2122
    %v2155 = vpack.c.bf16 %v2139, %v2123
    %v2156 = vpack.c.bf16 %v2140, %v2124
    %v2157 = vpack.c.bf16 %v2141, %v2125
    %v2158 = vpack.c.bf16 %v2142, %v2126
    %v2159 = vpack.c.bf16 %v2143, %v2127
    %v2160 = vpack.c.bf16 %v2144, %v2128
    %v2161 = vpack.c.bf16 %v2145, %v2129
    %v2162 = vpack.c.bf16 %v2146, %v2130
    %v2163 = vpack.c.bf16 %v2147, %v2131
    %v2164 = vpack.c.bf16 %v2148, %v2132
    %v2165 = vld [vmem:[%s14] sm:$0xf]
    %v2166 = vld [vmem:[%s14 + $0x4] sm:$0xf]
    %v2167 = vld [vmem:[%s14 + $0x8] sm:$0xf]
    %v2168 = vld [vmem:[%s14 + $0xc] sm:$0xf]
    %v2169 = vld [vmem:[%s14 + $0x10] sm:$0xf]
    %v2170 = vld [vmem:[%s14 + $0x14] sm:$0xf]
    %v2171 = vld [vmem:[%s14 + $0x18] sm:$0xf]
    %v2172 = vld [vmem:[%s14 + $0x1c] sm:$0xf]
    %v2173 = vld [vmem:[%s14 + $0x20] sm:$0xf]
    %v2174 = vld [vmem:[%s14 + $0x24] sm:$0xf]
    %v2175 = vld [vmem:[%s14 + $0x28] sm:$0xf]
    %v2176 = vld [vmem:[%s14 + $0x2c] sm:$0xf]
    %v2177 = vld [vmem:[%s14 + $0x30] sm:$0xf]
    %v2178 = vld [vmem:[%s14 + $0x34] sm:$0xf]
    %v2179 = vld [vmem:[%s14 + $0x38] sm:$0xf]
    %v2180 = vld [vmem:[%s14 + $0x3c] sm:$0xf]
    %v2181 = vld [vmem:[%s14 + $0x40] sm:$0xf]
    %v2182 = vld [vmem:[%s14 + $0x44] sm:$0xf]
    %v2183 = vld [vmem:[%s14 + $0x48] sm:$0xf]
    %v2184 = vld [vmem:[%s14 + $0x4c] sm:$0xf]
    %v2185 = vld [vmem:[%s14 + $0x50] sm:$0xf]
    %v2186 = vld [vmem:[%s14 + $0x54] sm:$0xf]
    %v2187 = vld [vmem:[%s14 + $0x58] sm:$0xf]
    %v2188 = vld [vmem:[%s14 + $0x5c] sm:$0xf]
    %v2189 = vld [vmem:[%s14 + $0x60] sm:$0xf]
    %v2190 = vld [vmem:[%s14 + $0x64] sm:$0xf]
    %v2191 = vld [vmem:[%s14 + $0x68] sm:$0xf]
    %v2192 = vld [vmem:[%s14 + $0x6c] sm:$0xf]
    %v2193 = vld [vmem:[%s14 + $0x70] sm:$0xf]
    %v2194 = vld [vmem:[%s14 + $0x74] sm:$0xf]
    %v2195 = vld [vmem:[%s14 + $0x78] sm:$0xf]
    %v2196 = vld [vmem:[%s14 + $0x7c] sm:$0xf]
    %v2197 = vld [vmem:[%s14 + $0x80] sm:$0xf]
    %v2198 = vld [vmem:[%s14 + $0x84] sm:$0xf]
    %v2199 = vld [vmem:[%s14 + $0x88] sm:$0xf]
    %v2200 = vld [vmem:[%s14 + $0x8c] sm:$0xf]
    %v2201 = vld [vmem:[%s14 + $0x90] sm:$0xf]
    %v2202 = vld [vmem:[%s14 + $0x94] sm:$0xf]
    %v2203 = vld [vmem:[%s14 + $0x98] sm:$0xf]
    %v2204 = vld [vmem:[%s14 + $0x9c] sm:$0xf]
    %v2205 = vld [vmem:[%s14 + $0xa0] sm:$0xf]
    %v2206 = vld [vmem:[%s14 + $0xa4] sm:$0xf]
    %v2207 = vld [vmem:[%s14 + $0xa8] sm:$0xf]
    %v2208 = vld [vmem:[%s14 + $0xac] sm:$0xf]
    %v2209 = vld [vmem:[%s14 + $0xb0] sm:$0xf]
    %v2210 = vld [vmem:[%s14 + $0xb4] sm:$0xf]
    %v2211 = vld [vmem:[%s14 + $0xb8] sm:$0xf]
    %v2212 = vld [vmem:[%s14 + $0xbc] sm:$0xf]
    %v2213 = vld [vmem:[%s14 + $0xc0] sm:$0xf]
    %v2214 = vld [vmem:[%s14 + $0xc4] sm:$0xf]
    %v2215 = vld [vmem:[%s14 + $0xc8] sm:$0xf]
    %v2216 = vld [vmem:[%s14 + $0xcc] sm:$0xf]
    %v2217 = vld [vmem:[%s14 + $0xd0] sm:$0xf]
    %v2218 = vld [vmem:[%s14 + $0xd4] sm:$0xf]
    %v2219 = vld [vmem:[%s14 + $0xd8] sm:$0xf]
    %v2220 = vld [vmem:[%s14 + $0xdc] sm:$0xf]
    %v2221 = vld [vmem:[%s14 + $0xe0] sm:$0xf]
    %v2222 = vld [vmem:[%s14 + $0xe4] sm:$0xf]
    %v2223 = vld [vmem:[%s14 + $0xe8] sm:$0xf]
    %v2224 = vld [vmem:[%s14 + $0xec] sm:$0xf]
    %v2225 = vld [vmem:[%s14 + $0xf0] sm:$0xf]
    %v2226 = vld [vmem:[%s14 + $0xf4] sm:$0xf]
    %v2227 = vld [vmem:[%s14 + $0xf8] sm:$0xf]
    %v2228 = vld [vmem:[%s14 + $0xfc] sm:$0xf]
    %v2229 = vld [vmem:[%s14 + $0x100] sm:$0xf]
    %v2230 = vld [vmem:[%s14 + $0x104] sm:$0xf]
    %v2231 = vld [vmem:[%s14 + $0x108] sm:$0xf]
    %v2232 = vld [vmem:[%s14 + $0x10c] sm:$0xf]
    %v2233 = vld [vmem:[%s14 + $0x110] sm:$0xf]
    %v2234 = vld [vmem:[%s14 + $0x114] sm:$0xf]
    %v2235 = vld [vmem:[%s14 + $0x118] sm:$0xf]
    %v2236 = vld [vmem:[%s14 + $0x11c] sm:$0xf]
    %v2237 = vld [vmem:[%s14 + $0x120] sm:$0xf]
    %v2238 = vld [vmem:[%s14 + $0x124] sm:$0xf]
    %v2239 = vld [vmem:[%s14 + $0x128] sm:$0xf]
    %v2240 = vld [vmem:[%s14 + $0x12c] sm:$0xf]
    %v2241 = vld [vmem:[%s14 + $0x130] sm:$0xf]
    %v2242 = vld [vmem:[%s14 + $0x134] sm:$0xf]
    %v2243 = vld [vmem:[%s14 + $0x138] sm:$0xf]
    %v2244 = vld [vmem:[%s14 + $0x13c] sm:$0xf]
    %v2245 = vld [vmem:[%s14 + $0x140] sm:$0xf]
    %v2246 = vld [vmem:[%s14 + $0x144] sm:$0xf]
    %v2247 = vld [vmem:[%s14 + $0x148] sm:$0xf]
    %v2248 = vld [vmem:[%s14 + $0x14c] sm:$0xf]
    %v2249 = vld [vmem:[%s14 + $0x150] sm:$0xf]
    %v2250 = vld [vmem:[%s14 + $0x154] sm:$0xf]
    %v2251 = vld [vmem:[%s14 + $0x158] sm:$0xf]
    %v2252 = vld [vmem:[%s14 + $0x15c] sm:$0xf]
    %v2253 = vld [vmem:[%s14 + $0x160] sm:$0xf]
    %v2254 = vld [vmem:[%s14 + $0x164] sm:$0xf]
    %v2255 = vld [vmem:[%s14 + $0x168] sm:$0xf]
    %v2256 = vld [vmem:[%s14 + $0x16c] sm:$0xf]
    %v2257 = vld [vmem:[%s14 + $0x170] sm:$0xf]
    %v2258 = vld [vmem:[%s14 + $0x174] sm:$0xf]
    %v2259 = vld [vmem:[%s14 + $0x178] sm:$0xf]
    %v2260 = vld [vmem:[%s14 + $0x17c] sm:$0xf]
    %v2261 = vld [vmem:[%s14 + $0x180] sm:$0xf]
    %v2262 = vld [vmem:[%s14 + $0x184] sm:$0xf]
    %v2263 = vld [vmem:[%s14 + $0x188] sm:$0xf]
    %v2264 = vld [vmem:[%s14 + $0x18c] sm:$0xf]
    %v2265 = vld [vmem:[%s14 + $0x190] sm:$0xf]
    %v2266 = vld [vmem:[%s14 + $0x194] sm:$0xf]
    %v2267 = vld [vmem:[%s14 + $0x198] sm:$0xf]
    %v2268 = vld [vmem:[%s14 + $0x19c] sm:$0xf]
    %v2269 = vld [vmem:[%s14 + $0x1a0] sm:$0xf]
    %v2270 = vld [vmem:[%s14 + $0x1a4] sm:$0xf]
    %v2271 = vld [vmem:[%s14 + $0x1a8] sm:$0xf]
    %v2272 = vld [vmem:[%s14 + $0x1ac] sm:$0xf]
    %v2273 = vld [vmem:[%s14 + $0x1b0] sm:$0xf]
    %v2274 = vld [vmem:[%s14 + $0x1b4] sm:$0xf]
    %v2275 = vld [vmem:[%s14 + $0x1b8] sm:$0xf]
    %v2276 = vld [vmem:[%s14 + $0x1bc] sm:$0xf]
    %v2277 = vld [vmem:[%s14 + $0x1c0] sm:$0xf]
    %v2278 = vld [vmem:[%s14 + $0x1c4] sm:$0xf]
    %v2279 = vld [vmem:[%s14 + $0x1c8] sm:$0xf]
    %v2280 = vld [vmem:[%s14 + $0x1cc] sm:$0xf]
    %v2281 = vld [vmem:[%s14 + $0x1d0] sm:$0xf]
    %v2282 = vld [vmem:[%s14 + $0x1d4] sm:$0xf]
    %v2283 = vld [vmem:[%s14 + $0x1d8] sm:$0xf]
    %v2284 = vld [vmem:[%s14 + $0x1dc] sm:$0xf]
    %v2285 = vld [vmem:[%s14 + $0x1e0] sm:$0xf]
    %v2286 = vld [vmem:[%s14 + $0x1e4] sm:$0xf]
    %v2287 = vld [vmem:[%s14 + $0x1e8] sm:$0xf]
    %v2288 = vld [vmem:[%s14 + $0x1ec] sm:$0xf]
    %v2289 = vld [vmem:[%s14 + $0x1f0] sm:$0xf]
    %v2290 = vld [vmem:[%s14 + $0x1f4] sm:$0xf]
    %v2291 = vld [vmem:[%s14 + $0x1f8] sm:$0xf]
    %v2292 = vld [vmem:[%s14 + $0x1fc] sm:$0xf]
    %v2293 = vld [vmem:[%s14 + $0x200] sm:$0xf]
    %v2294 = vld [vmem:[%s14 + $0x204] sm:$0xf]
    %v2295 = vld [vmem:[%s14 + $0x208] sm:$0xf]
    %v2296 = vld [vmem:[%s14 + $0x20c] sm:$0xf]
    %v2297 = vld [vmem:[%s14 + $0x210] sm:$0xf]
    %v2298 = vld [vmem:[%s14 + $0x214] sm:$0xf]
    %v2299 = vld [vmem:[%s14 + $0x218] sm:$0xf]
    %v2300 = vld [vmem:[%s14 + $0x21c] sm:$0xf]
    %v2301 = vld [vmem:[%s14 + $0x220] sm:$0xf]
    %v2302 = vld [vmem:[%s14 + $0x224] sm:$0xf]
    %v2303 = vld [vmem:[%s14 + $0x228] sm:$0xf]
    %v2304 = vld [vmem:[%s14 + $0x22c] sm:$0xf]
    %v2305 = vld [vmem:[%s14 + $0x230] sm:$0xf]
    %v2306 = vld [vmem:[%s14 + $0x234] sm:$0xf]
    %v2307 = vld [vmem:[%s14 + $0x238] sm:$0xf]
    %v2308 = vld [vmem:[%s14 + $0x23c] sm:$0xf]
    %v2309 = vld [vmem:[%s14 + $0x240] sm:$0xf]
    %v2310 = vld [vmem:[%s14 + $0x244] sm:$0xf]
    %v2311 = vld [vmem:[%s14 + $0x248] sm:$0xf]
    %v2312 = vld [vmem:[%s14 + $0x24c] sm:$0xf]
    %v2313 = vld [vmem:[%s14 + $0x250] sm:$0xf]
    %v2314 = vld [vmem:[%s14 + $0x254] sm:$0xf]
    %v2315 = vld [vmem:[%s14 + $0x258] sm:$0xf]
    %v2316 = vld [vmem:[%s14 + $0x25c] sm:$0xf]
    %v2317 = vld [vmem:[%s14 + $0x260] sm:$0xf]
    %v2318 = vld [vmem:[%s14 + $0x264] sm:$0xf]
    %v2319 = vld [vmem:[%s14 + $0x268] sm:$0xf]
    %v2320 = vld [vmem:[%s14 + $0x26c] sm:$0xf]
    %v2321 = vld [vmem:[%s14 + $0x270] sm:$0xf]
    %v2322 = vld [vmem:[%s14 + $0x274] sm:$0xf]
    %v2323 = vld [vmem:[%s14 + $0x278] sm:$0xf]
    %v2324 = vld [vmem:[%s14 + $0x27c] sm:$0xf]
    %v2325 = vld [vmem:[%s14 + $0x280] sm:$0xf]
    %v2326 = vld [vmem:[%s14 + $0x284] sm:$0xf]
    %v2327 = vld [vmem:[%s14 + $0x288] sm:$0xf]
    %v2328 = vld [vmem:[%s14 + $0x28c] sm:$0xf]
    %v2329 = vld [vmem:[%s14 + $0x290] sm:$0xf]
    %v2330 = vld [vmem:[%s14 + $0x294] sm:$0xf]
    %v2331 = vld [vmem:[%s14 + $0x298] sm:$0xf]
    %v2332 = vld [vmem:[%s14 + $0x29c] sm:$0xf]
    %v2333 = vld [vmem:[%s14 + $0x2a0] sm:$0xf]
    %v2334 = vld [vmem:[%s14 + $0x2a4] sm:$0xf]
    %v2335 = vld [vmem:[%s14 + $0x2a8] sm:$0xf]
    %v2336 = vld [vmem:[%s14 + $0x2ac] sm:$0xf]
    %v2337 = vld [vmem:[%s14 + $0x2b0] sm:$0xf]
    %v2338 = vld [vmem:[%s14 + $0x2b4] sm:$0xf]
    %v2339 = vld [vmem:[%s14 + $0x2b8] sm:$0xf]
    %v2340 = vld [vmem:[%s14 + $0x2bc] sm:$0xf]
    %v2341 = vld [vmem:[%s14 + $0x2c0] sm:$0xf]
    %v2342 = vld [vmem:[%s14 + $0x2c4] sm:$0xf]
    %v2343 = vld [vmem:[%s14 + $0x2c8] sm:$0xf]
    %v2344 = vld [vmem:[%s14 + $0x2cc] sm:$0xf]
    %v2345 = vld [vmem:[%s14 + $0x2d0] sm:$0xf]
    %v2346 = vld [vmem:[%s14 + $0x2d4] sm:$0xf]
    %v2347 = vld [vmem:[%s14 + $0x2d8] sm:$0xf]
    %v2348 = vld [vmem:[%s14 + $0x2dc] sm:$0xf]
    %v2349 = vld [vmem:[%s14 + $0x2e0] sm:$0xf]
    %v2350 = vld [vmem:[%s14 + $0x2e4] sm:$0xf]
    %v2351 = vld [vmem:[%s14 + $0x2e8] sm:$0xf]
    %v2352 = vld [vmem:[%s14 + $0x2ec] sm:$0xf]
    %v2353 = vld [vmem:[%s14 + $0x2f0] sm:$0xf]
    %v2354 = vld [vmem:[%s14 + $0x2f4] sm:$0xf]
    %v2355 = vld [vmem:[%s14 + $0x2f8] sm:$0xf]
    %v2356 = vld [vmem:[%s14 + $0x2fc] sm:$0xf]
    %v2357 = vld [vmem:[%s14 + $0x300] sm:$0xf]
    %v2358 = vld [vmem:[%s14 + $0x304] sm:$0xf]
    %v2359 = vld [vmem:[%s14 + $0x308] sm:$0xf]
    %v2360 = vld [vmem:[%s14 + $0x30c] sm:$0xf]
    %v2361 = vld [vmem:[%s14 + $0x310] sm:$0xf]
    %v2362 = vld [vmem:[%s14 + $0x314] sm:$0xf]
    %v2363 = vld [vmem:[%s14 + $0x318] sm:$0xf]
    %v2364 = vld [vmem:[%s14 + $0x31c] sm:$0xf]
    %v2365 = vld [vmem:[%s14 + $0x320] sm:$0xf]
    %v2366 = vld [vmem:[%s14 + $0x324] sm:$0xf]
    %v2367 = vld [vmem:[%s14 + $0x328] sm:$0xf]
    %v2368 = vld [vmem:[%s14 + $0x32c] sm:$0xf]
    %v2369 = vld [vmem:[%s14 + $0x330] sm:$0xf]
    %v2370 = vld [vmem:[%s14 + $0x334] sm:$0xf]
    %v2371 = vld [vmem:[%s14 + $0x338] sm:$0xf]
    %v2372 = vld [vmem:[%s14 + $0x33c] sm:$0xf]
    %v2373 = vld [vmem:[%s14 + $0x340] sm:$0xf]
    %v2374 = vld [vmem:[%s14 + $0x344] sm:$0xf]
    %v2375 = vld [vmem:[%s14 + $0x348] sm:$0xf]
    %v2376 = vld [vmem:[%s14 + $0x34c] sm:$0xf]
    %v2377 = vld [vmem:[%s14 + $0x350] sm:$0xf]
    %v2378 = vld [vmem:[%s14 + $0x354] sm:$0xf]
    %v2379 = vld [vmem:[%s14 + $0x358] sm:$0xf]
    %v2380 = vld [vmem:[%s14 + $0x35c] sm:$0xf]
    %v2381 = vld [vmem:[%s14 + $0x360] sm:$0xf]
    %v2382 = vld [vmem:[%s14 + $0x364] sm:$0xf]
    %v2383 = vld [vmem:[%s14 + $0x368] sm:$0xf]
    %v2384 = vld [vmem:[%s14 + $0x36c] sm:$0xf]
    %v2385 = vld [vmem:[%s14 + $0x370] sm:$0xf]
    %v2386 = vld [vmem:[%s14 + $0x374] sm:$0xf]
    %v2387 = vld [vmem:[%s14 + $0x378] sm:$0xf]
    %v2388 = vld [vmem:[%s14 + $0x37c] sm:$0xf]
    %v2389 = vld [vmem:[%s14 + $0x380] sm:$0xf]
    %v2390 = vld [vmem:[%s14 + $0x384] sm:$0xf]
    %v2391 = vld [vmem:[%s14 + $0x388] sm:$0xf]
    %v2392 = vld [vmem:[%s14 + $0x38c] sm:$0xf]
    %v2393 = vld [vmem:[%s14 + $0x390] sm:$0xf]
    %v2394 = vld [vmem:[%s14 + $0x394] sm:$0xf]
    %v2395 = vld [vmem:[%s14 + $0x398] sm:$0xf]
    %v2396 = vld [vmem:[%s14 + $0x39c] sm:$0xf]
    %v2397 = vld [vmem:[%s14 + $0x3a0] sm:$0xf]
    %v2398 = vld [vmem:[%s14 + $0x3a4] sm:$0xf]
    %v2399 = vld [vmem:[%s14 + $0x3a8] sm:$0xf]
    %v2400 = vld [vmem:[%s14 + $0x3ac] sm:$0xf]
    %v2401 = vld [vmem:[%s14 + $0x3b0] sm:$0xf]
    %v2402 = vld [vmem:[%s14 + $0x3b4] sm:$0xf]
    %v2403 = vld [vmem:[%s14 + $0x3b8] sm:$0xf]
    %v2404 = vld [vmem:[%s14 + $0x3bc] sm:$0xf]
    %v2405 = vld [vmem:[%s14 + $0x3c0] sm:$0xf]
    %v2406 = vld [vmem:[%s14 + $0x3c4] sm:$0xf]
    %v2407 = vld [vmem:[%s14 + $0x3c8] sm:$0xf]
    %v2408 = vld [vmem:[%s14 + $0x3cc] sm:$0xf]
    %v2409 = vld [vmem:[%s14 + $0x3d0] sm:$0xf]
    %v2410 = vld [vmem:[%s14 + $0x3d4] sm:$0xf]
    %v2411 = vld [vmem:[%s14 + $0x3d8] sm:$0xf]
    %v2412 = vld [vmem:[%s14 + $0x3dc] sm:$0xf]
    %v2413 = vld [vmem:[%s14 + $0x3e0] sm:$0xf]
    %v2414 = vld [vmem:[%s14 + $0x3e4] sm:$0xf]
    %v2415 = vld [vmem:[%s14 + $0x3e8] sm:$0xf]
    %v2416 = vld [vmem:[%s14 + $0x3ec] sm:$0xf]
    %v2417 = vld [vmem:[%s14 + $0x3f0] sm:$0xf]
    %v2418 = vld [vmem:[%s14 + $0x3f4] sm:$0xf]
    %v2419 = vld [vmem:[%s14 + $0x3f8] sm:$0xf]
    %v2420 = vld [vmem:[%s14 + $0x3fc] sm:$0xf]
    %v2421 = vld [vmem:[%s15] sm:$0x1]
    %v2423 = vlaneseq
    %v2424 = vshrl.u32 %v2423, 7
    %v2425 = vsub.s32 0, %v2424
    %v2426 = vrot.slane %v2421, %v2425
    %v2684 = vunpack.c.l.b16 %v2165
    %v2685 = vunpack.c.l.b16 %v2166
    %v2686 = vunpack.c.l.b16 %v2167
    %v2687 = vunpack.c.l.b16 %v2168
    %v2688 = vunpack.c.l.b16 %v2169
    %v2689 = vunpack.c.l.b16 %v2170
    %v2690 = vunpack.c.l.b16 %v2171
    %v2691 = vunpack.c.l.b16 %v2172
    %v2692 = vunpack.c.l.b16 %v2173
    %v2693 = vunpack.c.l.b16 %v2174
    %v2694 = vunpack.c.l.b16 %v2175
    %v2695 = vunpack.c.l.b16 %v2176
    %v2696 = vunpack.c.l.b16 %v2177
    %v2697 = vunpack.c.l.b16 %v2178
    %v2698 = vunpack.c.l.b16 %v2179
    %v2699 = vunpack.c.l.b16 %v2180
    %v2700 = vunpack.c.l.b16 %v2181
    %v2701 = vunpack.c.l.b16 %v2182
    %v2702 = vunpack.c.l.b16 %v2183
    %v2703 = vunpack.c.l.b16 %v2184
    %v2704 = vunpack.c.l.b16 %v2185
    %v2705 = vunpack.c.l.b16 %v2186
    %v2706 = vunpack.c.l.b16 %v2187
    %v2707 = vunpack.c.l.b16 %v2188
    %v2708 = vunpack.c.l.b16 %v2189
    %v2709 = vunpack.c.l.b16 %v2190
    %v2710 = vunpack.c.l.b16 %v2191
    %v2711 = vunpack.c.l.b16 %v2192
    %v2712 = vunpack.c.l.b16 %v2193
    %v2713 = vunpack.c.l.b16 %v2194
    %v2714 = vunpack.c.l.b16 %v2195
    %v2715 = vunpack.c.l.b16 %v2196
    %v2716 = vunpack.c.l.b16 %v2197
    %v2717 = vunpack.c.l.b16 %v2198
    %v2718 = vunpack.c.l.b16 %v2199
    %v2719 = vunpack.c.l.b16 %v2200
    %v2720 = vunpack.c.l.b16 %v2201
    %v2721 = vunpack.c.l.b16 %v2202
    %v2722 = vunpack.c.l.b16 %v2203
    %v2723 = vunpack.c.l.b16 %v2204
    %v2724 = vunpack.c.l.b16 %v2205
    %v2725 = vunpack.c.l.b16 %v2206
    %v2726 = vunpack.c.l.b16 %v2207
    %v2727 = vunpack.c.l.b16 %v2208
    %v2728 = vunpack.c.l.b16 %v2209
    %v2729 = vunpack.c.l.b16 %v2210
    %v2730 = vunpack.c.l.b16 %v2211
    %v2731 = vunpack.c.l.b16 %v2212
    %v2732 = vunpack.c.l.b16 %v2213
    %v2733 = vunpack.c.l.b16 %v2214
    %v2734 = vunpack.c.l.b16 %v2215
    %v2735 = vunpack.c.l.b16 %v2216
    %v2736 = vunpack.c.l.b16 %v2217
    %v2737 = vunpack.c.l.b16 %v2218
    %v2738 = vunpack.c.l.b16 %v2219
    %v2739 = vunpack.c.l.b16 %v2220
    %v2740 = vunpack.c.l.b16 %v2221
    %v2741 = vunpack.c.l.b16 %v2222
    %v2742 = vunpack.c.l.b16 %v2223
    %v2743 = vunpack.c.l.b16 %v2224
    %v2744 = vunpack.c.l.b16 %v2225
    %v2745 = vunpack.c.l.b16 %v2226
    %v2746 = vunpack.c.l.b16 %v2227
    %v2747 = vunpack.c.l.b16 %v2228
    %v2748 = vunpack.c.l.b16 %v2229
    %v2749 = vunpack.c.l.b16 %v2230
    %v2750 = vunpack.c.l.b16 %v2231
    %v2751 = vunpack.c.l.b16 %v2232
    %v2752 = vunpack.c.l.b16 %v2233
    %v2753 = vunpack.c.l.b16 %v2234
    %v2754 = vunpack.c.l.b16 %v2235
    %v2755 = vunpack.c.l.b16 %v2236
    %v2756 = vunpack.c.l.b16 %v2237
    %v2757 = vunpack.c.l.b16 %v2238
    %v2758 = vunpack.c.l.b16 %v2239
    %v2759 = vunpack.c.l.b16 %v2240
    %v2760 = vunpack.c.l.b16 %v2241
    %v2761 = vunpack.c.l.b16 %v2242
    %v2762 = vunpack.c.l.b16 %v2243
    %v2763 = vunpack.c.l.b16 %v2244
    %v2764 = vunpack.c.l.b16 %v2245
    %v2765 = vunpack.c.l.b16 %v2246
    %v2766 = vunpack.c.l.b16 %v2247
    %v2767 = vunpack.c.l.b16 %v2248
    %v2768 = vunpack.c.l.b16 %v2249
    %v2769 = vunpack.c.l.b16 %v2250
    %v2770 = vunpack.c.l.b16 %v2251
    %v2771 = vunpack.c.l.b16 %v2252
    %v2772 = vunpack.c.l.b16 %v2253
    %v2773 = vunpack.c.l.b16 %v2254
    %v2774 = vunpack.c.l.b16 %v2255
    %v2775 = vunpack.c.l.b16 %v2256
    %v2776 = vunpack.c.l.b16 %v2257
    %v2777 = vunpack.c.l.b16 %v2258
    %v2778 = vunpack.c.l.b16 %v2259
    %v2779 = vunpack.c.l.b16 %v2260
    %v2780 = vunpack.c.l.b16 %v2261
    %v2781 = vunpack.c.l.b16 %v2262
    %v2782 = vunpack.c.l.b16 %v2263
    %v2783 = vunpack.c.l.b16 %v2264
    %v2784 = vunpack.c.l.b16 %v2265
    %v2785 = vunpack.c.l.b16 %v2266
    %v2786 = vunpack.c.l.b16 %v2267
    %v2787 = vunpack.c.l.b16 %v2268
    %v2788 = vunpack.c.l.b16 %v2269
    %v2789 = vunpack.c.l.b16 %v2270
    %v2790 = vunpack.c.l.b16 %v2271
    %v2791 = vunpack.c.l.b16 %v2272
    %v2792 = vunpack.c.l.b16 %v2273
    %v2793 = vunpack.c.l.b16 %v2274
    %v2794 = vunpack.c.l.b16 %v2275
    %v2795 = vunpack.c.l.b16 %v2276
    %v2796 = vunpack.c.l.b16 %v2277
    %v2797 = vunpack.c.l.b16 %v2278
    %v2798 = vunpack.c.l.b16 %v2279
    %v2799 = vunpack.c.l.b16 %v2280
    %v2800 = vunpack.c.l.b16 %v2281
    %v2801 = vunpack.c.l.b16 %v2282
    %v2802 = vunpack.c.l.b16 %v2283
    %v2803 = vunpack.c.l.b16 %v2284
    %v2804 = vunpack.c.l.b16 %v2285
    %v2805 = vunpack.c.l.b16 %v2286
    %v2806 = vunpack.c.l.b16 %v2287
    %v2807 = vunpack.c.l.b16 %v2288
    %v2808 = vunpack.c.l.b16 %v2289
    %v2809 = vunpack.c.l.b16 %v2290
    %v2810 = vunpack.c.l.b16 %v2291
    %v2811 = vunpack.c.l.b16 %v2292
    %v2812 = vunpack.c.l.b16 %v2293
    %v2813 = vunpack.c.l.b16 %v2294
    %v2814 = vunpack.c.l.b16 %v2295
    %v2815 = vunpack.c.l.b16 %v2296
    %v2816 = vunpack.c.l.b16 %v2297
    %v2817 = vunpack.c.l.b16 %v2298
    %v2818 = vunpack.c.l.b16 %v2299
    %v2819 = vunpack.c.l.b16 %v2300
    %v2820 = vunpack.c.l.b16 %v2301
    %v2821 = vunpack.c.l.b16 %v2302
    %v2822 = vunpack.c.l.b16 %v2303
    %v2823 = vunpack.c.l.b16 %v2304
    %v2824 = vunpack.c.l.b16 %v2305
    %v2825 = vunpack.c.l.b16 %v2306
    %v2826 = vunpack.c.l.b16 %v2307
    %v2827 = vunpack.c.l.b16 %v2308
    %v2828 = vunpack.c.l.b16 %v2309
    %v2829 = vunpack.c.l.b16 %v2310
    %v2830 = vunpack.c.l.b16 %v2311
    %v2831 = vunpack.c.l.b16 %v2312
    %v2832 = vunpack.c.l.b16 %v2313
    %v2833 = vunpack.c.l.b16 %v2314
    %v2834 = vunpack.c.l.b16 %v2315
    %v2835 = vunpack.c.l.b16 %v2316
    %v2836 = vunpack.c.l.b16 %v2317
    %v2837 = vunpack.c.l.b16 %v2318
    %v2838 = vunpack.c.l.b16 %v2319
    %v2839 = vunpack.c.l.b16 %v2320
    %v2840 = vunpack.c.l.b16 %v2321
    %v2841 = vunpack.c.l.b16 %v2322
    %v2842 = vunpack.c.l.b16 %v2323
    %v2843 = vunpack.c.l.b16 %v2324
    %v2844 = vunpack.c.l.b16 %v2325
    %v2845 = vunpack.c.l.b16 %v2326
    %v2846 = vunpack.c.l.b16 %v2327
    %v2847 = vunpack.c.l.b16 %v2328
    %v2848 = vunpack.c.l.b16 %v2329
    %v2849 = vunpack.c.l.b16 %v2330
    %v2850 = vunpack.c.l.b16 %v2331
    %v2851 = vunpack.c.l.b16 %v2332
    %v2852 = vunpack.c.l.b16 %v2333
    %v2853 = vunpack.c.l.b16 %v2334
    %v2854 = vunpack.c.l.b16 %v2335
    %v2855 = vunpack.c.l.b16 %v2336
    %v2856 = vunpack.c.l.b16 %v2337
    %v2857 = vunpack.c.l.b16 %v2338
    %v2858 = vunpack.c.l.b16 %v2339
    %v2859 = vunpack.c.l.b16 %v2340
    %v2860 = vunpack.c.l.b16 %v2341
    %v2861 = vunpack.c.l.b16 %v2342
    %v2862 = vunpack.c.l.b16 %v2343
    %v2863 = vunpack.c.l.b16 %v2344
    %v2864 = vunpack.c.l.b16 %v2345
    %v2865 = vunpack.c.l.b16 %v2346
    %v2866 = vunpack.c.l.b16 %v2347
    %v2867 = vunpack.c.l.b16 %v2348
    %v2868 = vunpack.c.l.b16 %v2349
    %v2869 = vunpack.c.l.b16 %v2350
    %v2870 = vunpack.c.l.b16 %v2351
    %v2871 = vunpack.c.l.b16 %v2352
    %v2872 = vunpack.c.l.b16 %v2353
    %v2873 = vunpack.c.l.b16 %v2354
    %v2874 = vunpack.c.l.b16 %v2355
    %v2875 = vunpack.c.l.b16 %v2356
    %v2876 = vunpack.c.l.b16 %v2357
    %v2877 = vunpack.c.l.b16 %v2358
    %v2878 = vunpack.c.l.b16 %v2359
    %v2879 = vunpack.c.l.b16 %v2360
    %v2880 = vunpack.c.l.b16 %v2361
    %v2881 = vunpack.c.l.b16 %v2362
    %v2882 = vunpack.c.l.b16 %v2363
    %v2883 = vunpack.c.l.b16 %v2364
    %v2884 = vunpack.c.l.b16 %v2365
    %v2885 = vunpack.c.l.b16 %v2366
    %v2886 = vunpack.c.l.b16 %v2367
    %v2887 = vunpack.c.l.b16 %v2368
    %v2888 = vunpack.c.l.b16 %v2369
    %v2889 = vunpack.c.l.b16 %v2370
    %v2890 = vunpack.c.l.b16 %v2371
    %v2891 = vunpack.c.l.b16 %v2372
    %v2892 = vunpack.c.l.b16 %v2373
    %v2893 = vunpack.c.l.b16 %v2374
    %v2894 = vunpack.c.l.b16 %v2375
    %v2895 = vunpack.c.l.b16 %v2376
    %v2896 = vunpack.c.l.b16 %v2377
    %v2897 = vunpack.c.l.b16 %v2378
    %v2898 = vunpack.c.l.b16 %v2379
    %v2899 = vunpack.c.l.b16 %v2380
    %v2900 = vunpack.c.l.b16 %v2381
    %v2901 = vunpack.c.l.b16 %v2382
    %v2902 = vunpack.c.l.b16 %v2383
    %v2903 = vunpack.c.l.b16 %v2384
    %v2904 = vunpack.c.l.b16 %v2385
    %v2905 = vunpack.c.l.b16 %v2386
    %v2906 = vunpack.c.l.b16 %v2387
    %v2907 = vunpack.c.l.b16 %v2388
    %v2908 = vunpack.c.l.b16 %v2389
    %v2909 = vunpack.c.l.b16 %v2390
    %v2910 = vunpack.c.l.b16 %v2391
    %v2911 = vunpack.c.l.b16 %v2392
    %v2912 = vunpack.c.l.b16 %v2393
    %v2913 = vunpack.c.l.b16 %v2394
    %v2914 = vunpack.c.l.b16 %v2395
    %v2915 = vunpack.c.l.b16 %v2396
    %v2916 = vunpack.c.l.b16 %v2397
    %v2917 = vunpack.c.l.b16 %v2398
    %v2918 = vunpack.c.l.b16 %v2399
    %v2919 = vunpack.c.l.b16 %v2400
    %v2920 = vunpack.c.l.b16 %v2401
    %v2921 = vunpack.c.l.b16 %v2402
    %v2922 = vunpack.c.l.b16 %v2403
    %v2923 = vunpack.c.l.b16 %v2404
    %v2924 = vunpack.c.l.b16 %v2405
    %v2925 = vunpack.c.l.b16 %v2406
    %v2926 = vunpack.c.l.b16 %v2407
    %v2927 = vunpack.c.l.b16 %v2408
    %v2928 = vunpack.c.l.b16 %v2409
    %v2929 = vunpack.c.l.b16 %v2410
    %v2930 = vunpack.c.l.b16 %v2411
    %v2931 = vunpack.c.l.b16 %v2412
    %v2932 = vunpack.c.l.b16 %v2413
    %v2933 = vunpack.c.l.b16 %v2414
    %v2934 = vunpack.c.l.b16 %v2415
    %v2935 = vunpack.c.l.b16 %v2416
    %v2936 = vunpack.c.l.b16 %v2417
    %v2937 = vunpack.c.l.b16 %v2418
    %v2938 = vunpack.c.l.b16 %v2419
    %v2939 = vunpack.c.l.b16 %v2420
    %v2940 = vpack.c.b16 %v2685, %v2684
    %v2941 = vpack.c.b16 %v2687, %v2686
    %v2942 = vpack.c.b16 %v2689, %v2688
    %v2943 = vpack.c.b16 %v2691, %v2690
    %v2944 = vpack.c.b16 %v2693, %v2692
    %v2945 = vpack.c.b16 %v2695, %v2694
    %v2946 = vpack.c.b16 %v2697, %v2696
    %v2947 = vpack.c.b16 %v2699, %v2698
    %v2948 = vpack.c.b16 %v2701, %v2700
    %v2949 = vpack.c.b16 %v2703, %v2702
    %v2950 = vpack.c.b16 %v2705, %v2704
    %v2951 = vpack.c.b16 %v2707, %v2706
    %v2952 = vpack.c.b16 %v2709, %v2708
    %v2953 = vpack.c.b16 %v2711, %v2710
    %v2954 = vpack.c.b16 %v2713, %v2712
    %v2955 = vpack.c.b16 %v2715, %v2714
    %v2956 = vpack.c.b16 %v2717, %v2716
    %v2957 = vpack.c.b16 %v2719, %v2718
    %v2958 = vpack.c.b16 %v2721, %v2720
    %v2959 = vpack.c.b16 %v2723, %v2722
    %v2960 = vpack.c.b16 %v2725, %v2724
    %v2961 = vpack.c.b16 %v2727, %v2726
    %v2962 = vpack.c.b16 %v2729, %v2728
    %v2963 = vpack.c.b16 %v2731, %v2730
    %v2964 = vpack.c.b16 %v2733, %v2732
    %v2965 = vpack.c.b16 %v2735, %v2734
    %v2966 = vpack.c.b16 %v2737, %v2736
    %v2967 = vpack.c.b16 %v2739, %v2738
    %v2968 = vpack.c.b16 %v2741, %v2740
    %v2969 = vpack.c.b16 %v2743, %v2742
    %v2970 = vpack.c.b16 %v2745, %v2744
    %v2971 = vpack.c.b16 %v2747, %v2746
    %v2972 = vpack.c.b16 %v2749, %v2748
    %v2973 = vpack.c.b16 %v2751, %v2750
    %v2974 = vpack.c.b16 %v2753, %v2752
    %v2975 = vpack.c.b16 %v2755, %v2754
    %v2976 = vpack.c.b16 %v2757, %v2756
    %v2977 = vpack.c.b16 %v2759, %v2758
    %v2978 = vpack.c.b16 %v2761, %v2760
    %v2979 = vpack.c.b16 %v2763, %v2762
    %v2980 = vpack.c.b16 %v2765, %v2764
    %v2981 = vpack.c.b16 %v2767, %v2766
    %v2982 = vpack.c.b16 %v2769, %v2768
    %v2983 = vpack.c.b16 %v2771, %v2770
    %v2984 = vpack.c.b16 %v2773, %v2772
    %v2985 = vpack.c.b16 %v2775, %v2774
    %v2986 = vpack.c.b16 %v2777, %v2776
    %v2987 = vpack.c.b16 %v2779, %v2778
    %v2988 = vpack.c.b16 %v2781, %v2780
    %v2989 = vpack.c.b16 %v2783, %v2782
    %v2990 = vpack.c.b16 %v2785, %v2784
    %v2991 = vpack.c.b16 %v2787, %v2786
    %v2992 = vpack.c.b16 %v2789, %v2788
    %v2993 = vpack.c.b16 %v2791, %v2790
    %v2994 = vpack.c.b16 %v2793, %v2792
    %v2995 = vpack.c.b16 %v2795, %v2794
    %v2996 = vpack.c.b16 %v2797, %v2796
    %v2997 = vpack.c.b16 %v2799, %v2798
    %v2998 = vpack.c.b16 %v2801, %v2800
    %v2999 = vpack.c.b16 %v2803, %v2802
    %v3000 = vpack.c.b16 %v2805, %v2804
    %v3001 = vpack.c.b16 %v2807, %v2806
    %v3002 = vpack.c.b16 %v2809, %v2808
    %v3003 = vpack.c.b16 %v2811, %v2810
    %v3004 = vpack.c.b16 %v2813, %v2812
    %v3005 = vpack.c.b16 %v2815, %v2814
    %v3006 = vpack.c.b16 %v2817, %v2816
    %v3007 = vpack.c.b16 %v2819, %v2818
    %v3008 = vpack.c.b16 %v2821, %v2820
    %v3009 = vpack.c.b16 %v2823, %v2822
    %v3010 = vpack.c.b16 %v2825, %v2824
    %v3011 = vpack.c.b16 %v2827, %v2826
    %v3012 = vpack.c.b16 %v2829, %v2828
    %v3013 = vpack.c.b16 %v2831, %v2830
    %v3014 = vpack.c.b16 %v2833, %v2832
    %v3015 = vpack.c.b16 %v2835, %v2834
    %v3016 = vpack.c.b16 %v2837, %v2836
    %v3017 = vpack.c.b16 %v2839, %v2838
    %v3018 = vpack.c.b16 %v2841, %v2840
    %v3019 = vpack.c.b16 %v2843, %v2842
    %v3020 = vpack.c.b16 %v2845, %v2844
    %v3021 = vpack.c.b16 %v2847, %v2846
    %v3022 = vpack.c.b16 %v2849, %v2848
    %v3023 = vpack.c.b16 %v2851, %v2850
    %v3024 = vpack.c.b16 %v2853, %v2852
    %v3025 = vpack.c.b16 %v2855, %v2854
    %v3026 = vpack.c.b16 %v2857, %v2856
    %v3027 = vpack.c.b16 %v2859, %v2858
    %v3028 = vpack.c.b16 %v2861, %v2860
    %v3029 = vpack.c.b16 %v2863, %v2862
    %v3030 = vpack.c.b16 %v2865, %v2864
    %v3031 = vpack.c.b16 %v2867, %v2866
    %v3032 = vpack.c.b16 %v2869, %v2868
    %v3033 = vpack.c.b16 %v2871, %v2870
    %v3034 = vpack.c.b16 %v2873, %v2872
    %v3035 = vpack.c.b16 %v2875, %v2874
    %v3036 = vpack.c.b16 %v2877, %v2876
    %v3037 = vpack.c.b16 %v2879, %v2878
    %v3038 = vpack.c.b16 %v2881, %v2880
    %v3039 = vpack.c.b16 %v2883, %v2882
    %v3040 = vpack.c.b16 %v2885, %v2884
    %v3041 = vpack.c.b16 %v2887, %v2886
    %v3042 = vpack.c.b16 %v2889, %v2888
    %v3043 = vpack.c.b16 %v2891, %v2890
    %v3044 = vpack.c.b16 %v2893, %v2892
    %v3045 = vpack.c.b16 %v2895, %v2894
    %v3046 = vpack.c.b16 %v2897, %v2896
    %v3047 = vpack.c.b16 %v2899, %v2898
    %v3048 = vpack.c.b16 %v2901, %v2900
    %v3049 = vpack.c.b16 %v2903, %v2902
    %v3050 = vpack.c.b16 %v2905, %v2904
    %v3051 = vpack.c.b16 %v2907, %v2906
    %v3052 = vpack.c.b16 %v2909, %v2908
    %v3053 = vpack.c.b16 %v2911, %v2910
    %v3054 = vpack.c.b16 %v2913, %v2912
    %v3055 = vpack.c.b16 %v2915, %v2914
    %v3056 = vpack.c.b16 %v2917, %v2916
    %v3057 = vpack.c.b16 %v2919, %v2918
    %v3058 = vpack.c.b16 %v2921, %v2920
    %v3059 = vpack.c.b16 %v2923, %v2922
    %v3060 = vpack.c.b16 %v2925, %v2924
    %v3061 = vpack.c.b16 %v2927, %v2926
    %v3062 = vpack.c.b16 %v2929, %v2928
    %v3063 = vpack.c.b16 %v2931, %v2930
    %v3064 = vpack.c.b16 %v2933, %v2932
    %v3065 = vpack.c.b16 %v2935, %v2934
    %v3066 = vpack.c.b16 %v2937, %v2936
    %v3067 = vpack.c.b16 %v2939, %v2938
    %3196 = vmatprep.subr.bf16.mxu0 0
    %3197 = vmatpush1.bf16.msra.mxu0 %v2940
    %3198 = vmatprep.subr.bf16.mxu0 0
    %3199 = vmatpush1.bf16.msra.mxu0 %v2941
    %3200 = vmatprep.subr.bf16.mxu0 0
    %3201 = vmatpush1.bf16.msra.mxu0 %v2942
    %3202 = vmatprep.subr.bf16.mxu0 0
    %3203 = vmatpush1.bf16.msra.mxu0 %v2943
    %3204 = vmatprep.subr.bf16.mxu0 0
    %3205 = vmatpush1.bf16.msra.mxu0 %v2944
    %3206 = vmatprep.subr.bf16.mxu0 0
    %3207 = vmatpush1.bf16.msra.mxu0 %v2945
    %3208 = vmatprep.subr.bf16.mxu0 0
    %3209 = vmatpush1.bf16.msra.mxu0 %v2946
    %3210 = vmatprep.subr.bf16.mxu0 0
    %3211 = vmatpush1.bf16.msra.mxu0 %v2947
    %3212 = vmatprep.subr.bf16.mxu0 0
    %3213 = vmatpush1.bf16.msra.mxu0 %v2948
    %3214 = vmatprep.subr.bf16.mxu0 0
    %3215 = vmatpush1.bf16.msra.mxu0 %v2949
    %3216 = vmatprep.subr.bf16.mxu0 0
    %3217 = vmatpush1.bf16.msra.mxu0 %v2950
    %3218 = vmatprep.subr.bf16.mxu0 0
    %3219 = vmatpush1.bf16.msra.mxu0 %v2951
    %3220 = vmatprep.subr.bf16.mxu0 0
    %3221 = vmatpush1.bf16.msra.mxu0 %v2952
    %3222 = vmatprep.subr.bf16.mxu0 0
    %3223 = vmatpush1.bf16.msra.mxu0 %v2953
    %3224 = vmatprep.subr.bf16.mxu0 0
    %3225 = vmatpush1.bf16.msra.mxu0 %v2954
    %3226 = vmatprep.subr.bf16.mxu0 0
    %3227 = vmatpush1.bf16.msra.mxu0 %v2955
    %3228 = vmatprep.mubr.bf16.mxu0 %v2150
    %3229 = vmatmul.mubr.bf16.gmra.mrb[0].mxu0 %v2149
    %v3230 = vpop.f32.mrb[0].mxu0
    %v3231 = vadd.f32 %v2426, %v3230
    %v3232 = vpop.f32.mrb[0].mxu0
    %v3233 = vpop.f32.mrb[0].mxu0
    %v3234 = vadd.f32 %v2426, %v3233
    %v3235 = vpop.f32.mrb[0].mxu0
    %3236 = vdwg.mxu0
    %3237 = vmatprep.subr.bf16.mxu0 0
    %3238 = vmatpush1.bf16.msra.mxu0 %v2956
    %3239 = vmatprep.subr.bf16.mxu0 0
    %3240 = vmatpush1.bf16.msra.mxu0 %v2957
    %3241 = vmatprep.subr.bf16.mxu0 0
    %3242 = vmatpush1.bf16.msra.mxu0 %v2958
    %3243 = vmatprep.subr.bf16.mxu0 0
    %3244 = vmatpush1.bf16.msra.mxu0 %v2959
    %3245 = vmatprep.subr.bf16.mxu0 0
    %3246 = vmatpush1.bf16.msra.mxu0 %v2960
    %3247 = vmatprep.subr.bf16.mxu0 0
    %3248 = vmatpush1.bf16.msra.mxu0 %v2961
    %3249 = vmatprep.subr.bf16.mxu0 0
    %3250 = vmatpush1.bf16.msra.mxu0 %v2962
    %3251 = vmatprep.subr.bf16.mxu0 0
    %3252 = vmatpush1.bf16.msra.mxu0 %v2963
    %3253 = vmatprep.subr.bf16.mxu0 0
    %3254 = vmatpush1.bf16.msra.mxu0 %v2964
    %3255 = vmatprep.subr.bf16.mxu0 0
    %3256 = vmatpush1.bf16.msra.mxu0 %v2965
    %3257 = vmatprep.subr.bf16.mxu0 0
    %3258 = vmatpush1.bf16.msra.mxu0 %v2966
    %3259 = vmatprep.subr.bf16.mxu0 0
    %3260 = vmatpush1.bf16.msra.mxu0 %v2967
    %3261 = vmatprep.subr.bf16.mxu0 0
    %3262 = vmatpush1.bf16.msra.mxu0 %v2968
    %3263 = vmatprep.subr.bf16.mxu0 0
    %3264 = vmatpush1.bf16.msra.mxu0 %v2969
    %3265 = vmatprep.subr.bf16.mxu0 0
    %3266 = vmatpush1.bf16.msra.mxu0 %v2970
    %3267 = vmatprep.subr.bf16.mxu0 0
    %3268 = vmatpush1.bf16.msra.mxu0 %v2971
    %3269 = vmatprep.mubr.bf16.mxu0 %v2152
    %3270 = vmatmul.mubr.bf16.gmra.mrb[0].mxu0 %v2151
    %v3271 = vpop.f32.mrb[0].mxu0
    %v3272 = vadd.f32 %v3231, %v3271
    %v3273 = vpop.f32.mrb[0].mxu0
    %v3274 = vpop.f32.mrb[0].mxu0
    %v3275 = vadd.f32 %v3234, %v3274
    %v3276 = vpop.f32.mrb[0].mxu0
    %3277 = vdwg.mxu0
    %3278 = vmatprep.subr.bf16.mxu0 0
    %3279 = vmatpush1.bf16.msra.mxu0 %v2972
    %3280 = vmatprep.subr.bf16.mxu0 0
    %3281 = vmatpush1.bf16.msra.mxu0 %v2973
    %3282 = vmatprep.subr.bf16.mxu0 0
    %3283 = vmatpush1.bf16.msra.mxu0 %v2974
    %3284 = vmatprep.subr.bf16.mxu0 0
    %3285 = vmatpush1.bf16.msra.mxu0 %v2975
    %3286 = vmatprep.subr.bf16.mxu0 0
    %3287 = vmatpush1.bf16.msra.mxu0 %v2976
    %3288 = vmatprep.subr.bf16.mxu0 0
    %3289 = vmatpush1.bf16.msra.mxu0 %v2977
    %3290 = vmatprep.subr.bf16.mxu0 0
    %3291 = vmatpush1.bf16.msra.mxu0 %v2978
    %3292 = vmatprep.subr.bf16.mxu0 0
    %3293 = vmatpush1.bf16.msra.mxu0 %v2979
    %3294 = vmatprep.subr.bf16.mxu0 0
    %3295 = vmatpush1.bf16.msra.mxu0 %v2980
    %3296 = vmatprep.subr.bf16.mxu0 0
    %3297 = vmatpush1.bf16.msra.mxu0 %v2981
    %3298 = vmatprep.subr.bf16.mxu0 0
    %3299 = vmatpush1.bf16.msra.mxu0 %v2982
    %3300 = vmatprep.subr.bf16.mxu0 0
    %3301 = vmatpush1.bf16.msra.mxu0 %v2983
    %3302 = vmatprep.subr.bf16.mxu0 0
    %3303 = vmatpush1.bf16.msra.mxu0 %v2984
    %3304 = vmatprep.subr.bf16.mxu0 0
    %3305 = vmatpush1.bf16.msra.mxu0 %v2985
    %3306 = vmatprep.subr.bf16.mxu0 0
    %3307 = vmatpush1.bf16.msra.mxu0 %v2986
    %3308 = vmatprep.subr.bf16.mxu0 0
    %3309 = vmatpush1.bf16.msra.mxu0 %v2987
    %3310 = vmatprep.mubr.bf16.mxu0 %v2154
    %3311 = vmatmul.mubr.bf16.gmra.mrb[0].mxu0 %v2153
    %v3312 = vpop.f32.mrb[0].mxu0
    %v3313 = vadd.f32 %v3272, %v3312
    %v3314 = vpop.f32.mrb[0].mxu0
    %v3315 = vpop.f32.mrb[0].mxu0
    %v3316 = vadd.f32 %v3275, %v3315
    %v3317 = vpop.f32.mrb[0].mxu0
    %3318 = vdwg.mxu0
    %3319 = vmatprep.subr.bf16.mxu0 0
    %3320 = vmatpush1.bf16.msra.mxu0 %v2988
    %3321 = vmatprep.subr.bf16.mxu0 0
    %3322 = vmatpush1.bf16.msra.mxu0 %v2989
    %3323 = vmatprep.subr.bf16.mxu0 0
    %3324 = vmatpush1.bf16.msra.mxu0 %v2990
    %3325 = vmatprep.subr.bf16.mxu0 0
    %3326 = vmatpush1.bf16.msra.mxu0 %v2991
    %3327 = vmatprep.subr.bf16.mxu0 0
    %3328 = vmatpush1.bf16.msra.mxu0 %v2992
    %3329 = vmatprep.subr.bf16.mxu0 0
    %3330 = vmatpush1.bf16.msra.mxu0 %v2993
    %3331 = vmatprep.subr.bf16.mxu0 0
    %3332 = vmatpush1.bf16.msra.mxu0 %v2994
    %3333 = vmatprep.subr.bf16.mxu0 0
    %3334 = vmatpush1.bf16.msra.mxu0 %v2995
    %3335 = vmatprep.subr.bf16.mxu0 0
    %3336 = vmatpush1.bf16.msra.mxu0 %v2996
    %3337 = vmatprep.subr.bf16.mxu0 0
    %3338 = vmatpush1.bf16.msra.mxu0 %v2997
    %3339 = vmatprep.subr.bf16.mxu0 0
    %3340 = vmatpush1.bf16.msra.mxu0 %v2998
    %3341 = vmatprep.subr.bf16.mxu0 0
    %3342 = vmatpush1.bf16.msra.mxu0 %v2999
    %3343 = vmatprep.subr.bf16.mxu0 0
    %3344 = vmatpush1.bf16.msra.mxu0 %v3000
    %3345 = vmatprep.subr.bf16.mxu0 0
    %3346 = vmatpush1.bf16.msra.mxu0 %v3001
    %3347 = vmatprep.subr.bf16.mxu0 0
    %3348 = vmatpush1.bf16.msra.mxu0 %v3002
    %3349 = vmatprep.subr.bf16.mxu0 0
    %3350 = vmatpush1.bf16.msra.mxu0 %v3003
    %3351 = vmatprep.mubr.bf16.mxu0 %v2156
    %3352 = vmatmul.mubr.bf16.gmra.mrb[0].mxu0 %v2155
    %v3353 = vpop.f32.mrb[0].mxu0
    %v3354 = vadd.f32 %v3313, %v3353
    %v3355 = vpop.f32.mrb[0].mxu0
    %v3356 = vpop.f32.mrb[0].mxu0
    %v3357 = vadd.f32 %v3316, %v3356
    %v3358 = vpop.f32.mrb[0].mxu0
    %3359 = vdwg.mxu0
    %3360 = vmatprep.subr.bf16.mxu0 0
    %3361 = vmatpush1.bf16.msra.mxu0 %v3004
    %3362 = vmatprep.subr.bf16.mxu0 0
    %3363 = vmatpush1.bf16.msra.mxu0 %v3005
    %3364 = vmatprep.subr.bf16.mxu0 0
    %3365 = vmatpush1.bf16.msra.mxu0 %v3006
    %3366 = vmatprep.subr.bf16.mxu0 0
    %3367 = vmatpush1.bf16.msra.mxu0 %v3007
    %3368 = vmatprep.subr.bf16.mxu0 0
    %3369 = vmatpush1.bf16.msra.mxu0 %v3008
    %3370 = vmatprep.subr.bf16.mxu0 0
    %3371 = vmatpush1.bf16.msra.mxu0 %v3009
    %3372 = vmatprep.subr.bf16.mxu0 0
    %3373 = vmatpush1.bf16.msra.mxu0 %v3010
    %3374 = vmatprep.subr.bf16.mxu0 0
    %3375 = vmatpush1.bf16.msra.mxu0 %v3011
    %3376 = vmatprep.subr.bf16.mxu0 0
    %3377 = vmatpush1.bf16.msra.mxu0 %v3012
    %3378 = vmatprep.subr.bf16.mxu0 0
    %3379 = vmatpush1.bf16.msra.mxu0 %v3013
    %3380 = vmatprep.subr.bf16.mxu0 0
    %3381 = vmatpush1.bf16.msra.mxu0 %v3014
    %3382 = vmatprep.subr.bf16.mxu0 0
    %3383 = vmatpush1.bf16.msra.mxu0 %v3015
    %3384 = vmatprep.subr.bf16.mxu0 0
    %3385 = vmatpush1.bf16.msra.mxu0 %v3016
    %3386 = vmatprep.subr.bf16.mxu0 0
    %3387 = vmatpush1.bf16.msra.mxu0 %v3017
    %3388 = vmatprep.subr.bf16.mxu0 0
    %3389 = vmatpush1.bf16.msra.mxu0 %v3018
    %3390 = vmatprep.subr.bf16.mxu0 0
    %3391 = vmatpush1.bf16.msra.mxu0 %v3019
    %3392 = vmatprep.mubr.bf16.mxu0 %v2158
    %3393 = vmatmul.mubr.bf16.gmra.mrb[0].mxu0 %v2157
    %v3394 = vpop.f32.mrb[0].mxu0
    %v3395 = vadd.f32 %v3354, %v3394
    %v3396 = vpop.f32.mrb[0].mxu0
    %v3397 = vpop.f32.mrb[0].mxu0
    %v3398 = vadd.f32 %v3357, %v3397
    %v3399 = vpop.f32.mrb[0].mxu0
    %3400 = vdwg.mxu0
    %3401 = vmatprep.subr.bf16.mxu0 0
    %3402 = vmatpush1.bf16.msra.mxu0 %v3020
    %3403 = vmatprep.subr.bf16.mxu0 0
    %3404 = vmatpush1.bf16.msra.mxu0 %v3021
    %3405 = vmatprep.subr.bf16.mxu0 0
    %3406 = vmatpush1.bf16.msra.mxu0 %v3022
    %3407 = vmatprep.subr.bf16.mxu0 0
    %3408 = vmatpush1.bf16.msra.mxu0 %v3023
    %3409 = vmatprep.subr.bf16.mxu0 0
    %3410 = vmatpush1.bf16.msra.mxu0 %v3024
    %3411 = vmatprep.subr.bf16.mxu0 0
    %3412 = vmatpush1.bf16.msra.mxu0 %v3025
    %3413 = vmatprep.subr.bf16.mxu0 0
    %3414 = vmatpush1.bf16.msra.mxu0 %v3026
    %3415 = vmatprep.subr.bf16.mxu0 0
    %3416 = vmatpush1.bf16.msra.mxu0 %v3027
    %3417 = vmatprep.subr.bf16.mxu0 0
    %3418 = vmatpush1.bf16.msra.mxu0 %v3028
    %3419 = vmatprep.subr.bf16.mxu0 0
    %3420 = vmatpush1.bf16.msra.mxu0 %v3029
    %3421 = vmatprep.subr.bf16.mxu0 0
    %3422 = vmatpush1.bf16.msra.mxu0 %v3030
    %3423 = vmatprep.subr.bf16.mxu0 0
    %3424 = vmatpush1.bf16.msra.mxu0 %v3031
    %3425 = vmatprep.subr.bf16.mxu0 0
    %3426 = vmatpush1.bf16.msra.mxu0 %v3032
    %3427 = vmatprep.subr.bf16.mxu0 0
    %3428 = vmatpush1.bf16.msra.mxu0 %v3033
    %3429 = vmatprep.subr.bf16.mxu0 0
    %3430 = vmatpush1.bf16.msra.mxu0 %v3034
    %3431 = vmatprep.subr.bf16.mxu0 0
    %3432 = vmatpush1.bf16.msra.mxu0 %v3035
    %3433 = vmatprep.mubr.bf16.mxu0 %v2160
    %3434 = vmatmul.mubr.bf16.gmra.mrb[0].mxu0 %v2159
    %v3435 = vpop.f32.mrb[0].mxu0
    %v3436 = vadd.f32 %v3395, %v3435
    %v3437 = vpop.f32.mrb[0].mxu0
    %v3438 = vpop.f32.mrb[0].mxu0
    %v3439 = vadd.f32 %v3398, %v3438
    %v3440 = vpop.f32.mrb[0].mxu0
    %3441 = vdwg.mxu0
    %3442 = vmatprep.subr.bf16.mxu0 0
    %3443 = vmatpush1.bf16.msra.mxu0 %v3036
    %3444 = vmatprep.subr.bf16.mxu0 0
    %3445 = vmatpush1.bf16.msra.mxu0 %v3037
    %3446 = vmatprep.subr.bf16.mxu0 0
    %3447 = vmatpush1.bf16.msra.mxu0 %v3038
    %3448 = vmatprep.subr.bf16.mxu0 0
    %3449 = vmatpush1.bf16.msra.mxu0 %v3039
    %3450 = vmatprep.subr.bf16.mxu0 0
    %3451 = vmatpush1.bf16.msra.mxu0 %v3040
    %3452 = vmatprep.subr.bf16.mxu0 0
    %3453 = vmatpush1.bf16.msra.mxu0 %v3041
    %3454 = vmatprep.subr.bf16.mxu0 0
    %3455 = vmatpush1.bf16.msra.mxu0 %v3042
    %3456 = vmatprep.subr.bf16.mxu0 0
    %3457 = vmatpush1.bf16.msra.mxu0 %v3043
    %3458 = vmatprep.subr.bf16.mxu0 0
    %3459 = vmatpush1.bf16.msra.mxu0 %v3044
    %3460 = vmatprep.subr.bf16.mxu0 0
    %3461 = vmatpush1.bf16.msra.mxu0 %v3045
    %3462 = vmatprep.subr.bf16.mxu0 0
    %3463 = vmatpush1.bf16.msra.mxu0 %v3046
    %3464 = vmatprep.subr.bf16.mxu0 0
    %3465 = vmatpush1.bf16.msra.mxu0 %v3047
    %3466 = vmatprep.subr.bf16.mxu0 0
    %3467 = vmatpush1.bf16.msra.mxu0 %v3048
    %3468 = vmatprep.subr.bf16.mxu0 0
    %3469 = vmatpush1.bf16.msra.mxu0 %v3049
    %3470 = vmatprep.subr.bf16.mxu0 0
    %3471 = vmatpush1.bf16.msra.mxu0 %v3050
    %3472 = vmatprep.subr.bf16.mxu0 0
    %3473 = vmatpush1.bf16.msra.mxu0 %v3051
    %3474 = vmatprep.mubr.bf16.mxu0 %v2162
    %3475 = vmatmul.mubr.bf16.gmra.mrb[0].mxu0 %v2161
    %v3476 = vpop.f32.mrb[0].mxu0
    %v3477 = vadd.f32 %v3436, %v3476
    %v3478 = vpop.f32.mrb[0].mxu0
    %v3479 = vpop.f32.mrb[0].mxu0
    %v3480 = vadd.f32 %v3439, %v3479
    %v3481 = vpop.f32.mrb[0].mxu0
    %3482 = vdwg.mxu0
    %3483 = vmatprep.subr.bf16.mxu0 0
    %3484 = vmatpush1.bf16.msra.mxu0 %v3052
    %3485 = vmatprep.subr.bf16.mxu0 0
    %3486 = vmatpush1.bf16.msra.mxu0 %v3053
    %3487 = vmatprep.subr.bf16.mxu0 0
    %3488 = vmatpush1.bf16.msra.mxu0 %v3054
    %3489 = vmatprep.subr.bf16.mxu0 0
    %3490 = vmatpush1.bf16.msra.mxu0 %v3055
    %3491 = vmatprep.subr.bf16.mxu0 0
    %3492 = vmatpush1.bf16.msra.mxu0 %v3056
    %3493 = vmatprep.subr.bf16.mxu0 0
    %3494 = vmatpush1.bf16.msra.mxu0 %v3057
    %3495 = vmatprep.subr.bf16.mxu0 0
    %3496 = vmatpush1.bf16.msra.mxu0 %v3058
    %3497 = vmatprep.subr.bf16.mxu0 0
    %3498 = vmatpush1.bf16.msra.mxu0 %v3059
    %3499 = vmatprep.subr.bf16.mxu0 0
    %3500 = vmatpush1.bf16.msra.mxu0 %v3060
    %3501 = vmatprep.subr.bf16.mxu0 0
    %3502 = vmatpush1.bf16.msra.mxu0 %v3061
    %3503 = vmatprep.subr.bf16.mxu0 0
    %3504 = vmatpush1.bf16.msra.mxu0 %v3062
    %3505 = vmatprep.subr.bf16.mxu0 0
    %3506 = vmatpush1.bf16.msra.mxu0 %v3063
    %3507 = vmatprep.subr.bf16.mxu0 0
    %3508 = vmatpush1.bf16.msra.mxu0 %v3064
    %3509 = vmatprep.subr.bf16.mxu0 0
    %3510 = vmatpush1.bf16.msra.mxu0 %v3065
    %3511 = vmatprep.subr.bf16.mxu0 0
    %3512 = vmatpush1.bf16.msra.mxu0 %v3066
    %3513 = vmatprep.subr.bf16.mxu0 0
    %3514 = vmatpush1.bf16.msra.mxu0 %v3067
    %3515 = vmatprep.mubr.bf16.mxu0 %v2164
    %3516 = vmatmul.mubr.bf16.gmra.mrb[0].mxu0 %v2163
    %v3517 = vpop.f32.mrb[0].mxu0
    %v3518 = vadd.f32 %v3477, %v3517
    %v3519 = vpop.f32.mrb[0].mxu0
    %v3520 = vpop.f32.mrb[0].mxu0
    %v3521 = vadd.f32 %v3480, %v3520
    %v3522 = vpop.f32.mrb[0].mxu0
    %3523 = vdwg.mxu0
    %v3524 = vadd.f32 %v1299, %v3518
    %v3525 = vadd.f32 %v1300, %v3521
    %v3526 = vld [vmem:[%s10] sm:$0x1]
    %v3527 = vld [vmem:[%s11] sm:$0x1]
    %v3528 = vsel %vm59, %v3524, 0.0
    %3529 = vadd.xlane.f32.xlu0 %v3528
    %v3530 = vpop.xlane.xlu0 %3529
    %v3531 = vsel %vm59, %v3525, 0.0
    %3532 = vadd.xlane.f32.xlu0 %v3531
    %v3533 = vpop.xlane.xlu0 %3532
    %v3534 = vmul.f32 %v3530, %v66
    %v3535 = vmul.f32 %v3533, %v66
    %v3536 = vsub.f32 %v3524, %v3534
    %v3537 = vsub.f32 %v3525, %v3535
    %v3538 = vmul.f32 %v3536, %v3536
    %v3539 = vmul.f32 %v3537, %v3537
    %v3540 = vsel %vm59, %v3538, 0.0
    %3541 = vadd.xlane.f32.xlu0 %v3540
    %v3542 = vpop.xlane.xlu0 %3541
    %v3543 = vsel %vm59, %v3539, 0.0
    %3544 = vadd.xlane.f32.xlu0 %v3543
    %v3545 = vpop.xlane.xlu0 %3544
    %v3546 = vmul.f32 %v3542, %v66
    %v3547 = vmul.f32 %v3545, %v66
    %v3548 = vadd.f32 %v3546, 1e-05
    %v3549 = vadd.f32 %v3547, 1e-05
    %v3550 = vrsqrt.pop %v3548
    %v3551 = vrsqrt.pop %v3549
    %v3552 = vmul.f32 %v3536, %v3550
    %v3553 = vmul.f32 %v3537, %v3551
    %v3555 = vlaneseq
    %v3556 = vshrl.u32 %v3555, 7
    %v3557 = vsub.s32 0, %v3556
    %v3558 = vrot.slane %v3526, %v3557
    %v3560 = vmul.f32 %v3552, %v3558
    %v3561 = vmul.f32 %v3553, %v3558
    %v3563 = vlaneseq
    %v3564 = vshrl.u32 %v3563, 7
    %v3565 = vsub.s32 0, %v3564
    %v3566 = vrot.slane %v3527, %v3565
    %v3568 = vadd.f32 %v3560, %v3566
    %v3569 = vadd.f32 %v3561, %v3566
    %v3570 = vpack.c.bf16 %v3569, %v3568
    %s3571 = scalar_lea.vmem %s4, 64
    %v3572 = vld [vmem:[%s3571] sm:$0xff]
    %v3573 = vld [vmem:[%s3571 + $0x8] sm:$0xff]
    %v3574 = vld [vmem:[%s3571 + $0x10] sm:$0xff]
    %v3575 = vld [vmem:[%s3571 + $0x18] sm:$0xff]
    %v3576 = vld [vmem:[%s3571 + $0x20] sm:$0xff]
    %v3577 = vld [vmem:[%s3571 + $0x28] sm:$0xff]
    %v3578 = vld [vmem:[%s3571 + $0x30] sm:$0xff]
    %v3579 = vld [vmem:[%s3571 + $0x38] sm:$0xff]
    %s3580 = scalar_lea.vmem %s5, 2
    %v3581 = vld [vmem:[%s3580] sm:$0x3]
    %v3583 = vlaneseq
    %v3584 = vshrl.u32 %v3583, 7
    %v3585 = vsub.s32 0, %v3584
    %v3586 = vrot.slane %v3581, %v3585
    %v3587 = vlaneseq
    %v3588 = vshrl.u32 %v3587, 7
    %v3589 = vsub.s32 1, %v3588
    %v3590 = vrot.slane %v3581, %v3589
    %v3601 = vunpack.c.l.b16 %v3572
    %v3602 = vunpack.c.h.b16 %v3572
    %v3603 = vunpack.c.l.b16 %v3573
    %v3604 = vunpack.c.h.b16 %v3573
    %v3605 = vunpack.c.l.b16 %v3574
    %v3606 = vunpack.c.h.b16 %v3574
    %v3607 = vunpack.c.l.b16 %v3575
    %v3608 = vunpack.c.h.b16 %v3575
    %v3609 = vunpack.c.l.b16 %v3576
    %v3610 = vunpack.c.h.b16 %v3576
    %v3611 = vunpack.c.l.b16 %v3577
    %v3612 = vunpack.c.h.b16 %v3577
    %v3613 = vunpack.c.l.b16 %v3578
    %v3614 = vunpack.c.h.b16 %v3578
    %v3615 = vunpack.c.l.b16 %v3579
    %v3616 = vunpack.c.h.b16 %v3579
    %v3617 = vpack.c.b16 %v3603, %v3601
    %v3618 = vpack.c.b16 %v3604, %v3602
    %v3619 = vpack.c.b16 %v3607, %v3605
    %v3620 = vpack.c.b16 %v3608, %v3606
    %v3621 = vpack.c.b16 %v3611, %v3609
    %v3622 = vpack.c.b16 %v3612, %v3610
    %v3623 = vpack.c.b16 %v3615, %v3613
    %v3624 = vpack.c.b16 %v3616, %v3614
    %v3634 = vsel %vm59, %v3570, 0
    %3636 = vmatprep.subr.bf16.mxu0 %v3618
    %3637 = vmatpush1.bf16.msra.mxu0 %v3617
    %3638 = vmatprep.subr.bf16.mxu0 %v3620
    %3639 = vmatpush1.bf16.msra.mxu0 %v3619
    %3640 = vmatprep.subr.bf16.mxu0 %v3622
    %3641 = vmatpush1.bf16.msra.mxu0 %v3621
    %3642 = vmatprep.subr.bf16.mxu0 %v3624
    %3643 = vmatpush1.bf16.msra.mxu0 %v3623
    %3644 = vmatprep.subr.bf16.mxu0 0
    %3645 = vmatpush1.bf16.msra.mxu0 0
    %3646 = vmatprep.subr.bf16.mxu0 0
    %3647 = vmatpush1.bf16.msra.mxu0 0
    %3648 = vmatprep.subr.bf16.mxu0 0
    %3649 = vmatpush1.bf16.msra.mxu0 0
    %3650 = vmatprep.subr.bf16.mxu0 0
    %3651 = vmatpush1.bf16.msra.mxu0 0
    %3652 = vmatprep.subr.bf16.mxu0 0
    %3653 = vmatpush1.bf16.msra.mxu0 0
    %3654 = vmatprep.subr.bf16.mxu0 0
    %3655 = vmatpush1.bf16.msra.mxu0 0
    %3656 = vmatprep.subr.bf16.mxu0 0
    %3657 = vmatpush1.bf16.msra.mxu0 0
    %3658 = vmatprep.subr.bf16.mxu0 0
    %3659 = vmatpush1.bf16.msra.mxu0 0
    %3660 = vmatprep.subr.bf16.mxu0 0
    %3661 = vmatpush1.bf16.msra.mxu0 0
    %3662 = vmatprep.subr.bf16.mxu0 0
    %3663 = vmatpush1.bf16.msra.mxu0 0
    %3664 = vmatprep.subr.bf16.mxu0 0
    %3665 = vmatpush1.bf16.msra.mxu0 0
    %3666 = vmatprep.subr.bf16.mxu0 0
    %3667 = vmatpush1.bf16.msra.mxu0 0
    %3668 = vmatprep.mubr.bf16.mxu0 0
    %3669 = vmatmul.mubr.bf16.gmra.mrb[0].mxu0 %v3634
    %v3670 = vpop.f32.mrb[0].mxu0
    %v3671 = vadd.f32 %v3586, %v3670
    %v3672 = vpop.f32.mrb[0].mxu0
    %v3673 = vadd.f32 %v3590, %v3672
    %v3674 = vpop.f32.mrb[0].mxu0
    %v3675 = vadd.f32 %v3586, %v3674
    %v3676 = vpop.f32.mrb[0].mxu0
    %v3677 = vadd.f32 %v3590, %v3676
    %3678 = vdwg.mxu0
    %3681 = vrot.lane.b32.xlu0 %v3671, 112
    %v3682 = vpop.permute.xlu0 %3681
    %3683 = vrot.lane.b32.xlu0 %v3675, 112
    %v3684 = vpop.permute.xlu0 %3683
    %3687 = vrot.lane.b32.xlu0 %v3671, 96
    %v3688 = vpop.permute.xlu0 %3687
    %3689 = vrot.lane.b32.xlu0 %v3675, 96
    %v3690 = vpop.permute.xlu0 %3689
    %3693 = vrot.lane.b32.xlu0 %v3671, 80
    %v3694 = vpop.permute.xlu0 %3693
    %3695 = vrot.lane.b32.xlu0 %v3675, 80
    %v3696 = vpop.permute.xlu0 %3695
    %v3699 = vpack.c.bf16 %v3671, %v3671
    %v3700 = vpack.c.bf16 %v3675, %v3675
    %v3701 = vpack.c.bf16 %v3682, %v3682
    %v3702 = vpack.c.bf16 %v3684, %v3684
    %v3703 = vpack.c.bf16 %v3688, %v3688
    %v3704 = vpack.c.bf16 %v3690, %v3690
    %v3705 = vpack.c.bf16 %v3694, %v3694
    %v3706 = vpack.c.bf16 %v3696, %v3696
    %3709 = vrot.lane.b32.xlu0 %v3673, 112
    %v3710 = vpop.permute.xlu0 %3709
    %3711 = vrot.lane.b32.xlu0 %v3677, 112
    %v3712 = vpop.permute.xlu0 %3711
    %3715 = vrot.lane.b32.xlu0 %v3673, 96
    %v3716 = vpop.permute.xlu0 %3715
    %3717 = vrot.lane.b32.xlu0 %v3677, 96
    %v3718 = vpop.permute.xlu0 %3717
    %3721 = vrot.lane.b32.xlu0 %v3673, 80
    %v3722 = vpop.permute.xlu0 %3721
    %3723 = vrot.lane.b32.xlu0 %v3677, 80
    %v3724 = vpop.permute.xlu0 %3723
    %v3727 = vpack.c.bf16 %v3673, %v3673
    %v3728 = vpack.c.bf16 %v3677, %v3677
    %v3729 = vpack.c.bf16 %v3710, %v3710
    %v3730 = vpack.c.bf16 %v3712, %v3712
    %v3731 = vpack.c.bf16 %v3716, %v3716
    %v3732 = vpack.c.bf16 %v3718, %v3718
    %v3733 = vpack.c.bf16 %v3722, %v3722
    %v3734 = vpack.c.bf16 %v3724, %v3724
    %3736 = vrot.lane.b32.xlu0 %v3699, 64
    %v3737 = vpop.permute.xlu0 %3736
    %v3739 = vsel %vm283, %v3699, 0
    %v3742 = vsel %vm283, %v3737, 0
    %3744 = vmatprep.subr.bf16.mxu0 0
    %3745 = vmatpush1.bf16.xpose.msra.mxu0 %v3742
    %3746 = vmatprep.subr.bf16.mxu0 0
    %3747 = vmatpush1.bf16.xpose.msra.mxu0 0
    %3748 = vmatprep.subr.bf16.mxu0 0
    %3749 = vmatpush1.bf16.xpose.msra.mxu0 0
    %3750 = vmatprep.subr.bf16.mxu0 0
    %3751 = vmatpush1.bf16.xpose.msra.mxu0 0
    %3752 = vmatprep.subr.bf16.mxu0 0
    %3753 = vmatpush1.bf16.xpose.msra.mxu0 0
    %3754 = vmatprep.subr.bf16.mxu0 0
    %3755 = vmatpush1.bf16.xpose.msra.mxu0 0
    %3756 = vmatprep.subr.bf16.mxu0 0
    %3757 = vmatpush1.bf16.xpose.msra.mxu0 0
    %3758 = vmatprep.subr.bf16.mxu0 0
    %3759 = vmatpush1.bf16.xpose.msra.mxu0 0
    %3760 = vmatprep.subr.bf16.mxu0 0
    %3761 = vmatpush1.bf16.xpose.msra.mxu0 0
    %3762 = vmatprep.subr.bf16.mxu0 0
    %3763 = vmatpush1.bf16.xpose.msra.mxu0 0
    %3764 = vmatprep.subr.bf16.mxu0 0
    %3765 = vmatpush1.bf16.xpose.msra.mxu0 0
    %3766 = vmatprep.subr.bf16.mxu0 0
    %3767 = vmatpush1.bf16.xpose.msra.mxu0 0
    %3768 = vmatprep.subr.bf16.mxu0 0
    %3769 = vmatpush1.bf16.xpose.msra.mxu0 0
    %3770 = vmatprep.subr.bf16.mxu0 0
    %3771 = vmatpush1.bf16.xpose.msra.mxu0 0
    %3772 = vmatprep.subr.bf16.mxu0 0
    %3773 = vmatpush1.bf16.xpose.msra.mxu0 0
    %3774 = vmatprep.subr.bf16.mxu0 0
    %3775 = vmatpush1.bf16.xpose.msra.mxu0 0
    %3776 = vmatprep.mubr.bf16.mxu0 0
    %3777 = vmatmul.mubr.bf16.gmra.mrb[0].mxu0 %v3739
    %v3778 = vpop.f32.mrb[0].mxu0
    %v3779 = vadd.f32 %v110, %v3778
    %v3780 = vpop.f32.mrb[0].mxu0
    %v3781 = vpop.f32.mrb[0].mxu0
    %v3782 = vpop.f32.mrb[0].mxu0
    %3783 = vdwg.mxu0
    %3785 = vrot.lane.b32.xlu0 %v3700, 64
    %v3786 = vpop.permute.xlu0 %3785
    %v3788 = vsel %vm283, %v3700, 0
    %v3791 = vsel %vm283, %v3786, 0
    %3793 = vmatprep.subr.bf16.mxu0 0
    %3794 = vmatpush1.bf16.xpose.msra.mxu0 %v3791
    %3795 = vmatprep.subr.bf16.mxu0 0
    %3796 = vmatpush1.bf16.xpose.msra.mxu0 0
    %3797 = vmatprep.subr.bf16.mxu0 0
    %3798 = vmatpush1.bf16.xpose.msra.mxu0 0
    %3799 = vmatprep.subr.bf16.mxu0 0
    %3800 = vmatpush1.bf16.xpose.msra.mxu0 0
    %3801 = vmatprep.subr.bf16.mxu0 0
    %3802 = vmatpush1.bf16.xpose.msra.mxu0 0
    %3803 = vmatprep.subr.bf16.mxu0 0
    %3804 = vmatpush1.bf16.xpose.msra.mxu0 0
    %3805 = vmatprep.subr.bf16.mxu0 0
    %3806 = vmatpush1.bf16.xpose.msra.mxu0 0
    %3807 = vmatprep.subr.bf16.mxu0 0
    %3808 = vmatpush1.bf16.xpose.msra.mxu0 0
    %3809 = vmatprep.subr.bf16.mxu0 0
    %3810 = vmatpush1.bf16.xpose.msra.mxu0 0
    %3811 = vmatprep.subr.bf16.mxu0 0
    %3812 = vmatpush1.bf16.xpose.msra.mxu0 0
    %3813 = vmatprep.subr.bf16.mxu0 0
    %3814 = vmatpush1.bf16.xpose.msra.mxu0 0
    %3815 = vmatprep.subr.bf16.mxu0 0
    %3816 = vmatpush1.bf16.xpose.msra.mxu0 0
    %3817 = vmatprep.subr.bf16.mxu0 0
    %3818 = vmatpush1.bf16.xpose.msra.mxu0 0
    %3819 = vmatprep.subr.bf16.mxu0 0
    %3820 = vmatpush1.bf16.xpose.msra.mxu0 0
    %3821 = vmatprep.subr.bf16.mxu0 0
    %3822 = vmatpush1.bf16.xpose.msra.mxu0 0
    %3823 = vmatprep.subr.bf16.mxu0 0
    %3824 = vmatpush1.bf16.xpose.msra.mxu0 0
    %3825 = vmatprep.mubr.bf16.mxu0 0
    %3826 = vmatmul.mubr.bf16.gmra.mrb[0].mxu0 %v3788
    %v3827 = vpop.f32.mrb[0].mxu0
    %v3828 = vadd.f32 %v114, %v3827
    %v3829 = vpop.f32.mrb[0].mxu0
    %v3830 = vpop.f32.mrb[0].mxu0
    %v3831 = vpop.f32.mrb[0].mxu0
    %3832 = vdwg.mxu0
    %3834 = vrot.lane.b32.xlu0 %v3701, 64
    %v3835 = vpop.permute.xlu0 %3834
    %v3837 = vsel %vm283, %v3701, 0
    %v3840 = vsel %vm283, %v3835, 0
    %3842 = vmatprep.subr.bf16.mxu0 0
    %3843 = vmatpush1.bf16.xpose.msra.mxu0 %v3840
    %3844 = vmatprep.subr.bf16.mxu0 0
    %3845 = vmatpush1.bf16.xpose.msra.mxu0 0
    %3846 = vmatprep.subr.bf16.mxu0 0
    %3847 = vmatpush1.bf16.xpose.msra.mxu0 0
    %3848 = vmatprep.subr.bf16.mxu0 0
    %3849 = vmatpush1.bf16.xpose.msra.mxu0 0
    %3850 = vmatprep.subr.bf16.mxu0 0
    %3851 = vmatpush1.bf16.xpose.msra.mxu0 0
    %3852 = vmatprep.subr.bf16.mxu0 0
    %3853 = vmatpush1.bf16.xpose.msra.mxu0 0
    %3854 = vmatprep.subr.bf16.mxu0 0
    %3855 = vmatpush1.bf16.xpose.msra.mxu0 0
    %3856 = vmatprep.subr.bf16.mxu0 0
    %3857 = vmatpush1.bf16.xpose.msra.mxu0 0
    %3858 = vmatprep.subr.bf16.mxu0 0
    %3859 = vmatpush1.bf16.xpose.msra.mxu0 0
    %3860 = vmatprep.subr.bf16.mxu0 0
    %3861 = vmatpush1.bf16.xpose.msra.mxu0 0
    %3862 = vmatprep.subr.bf16.mxu0 0
    %3863 = vmatpush1.bf16.xpose.msra.mxu0 0
    %3864 = vmatprep.subr.bf16.mxu0 0
    %3865 = vmatpush1.bf16.xpose.msra.mxu0 0
    %3866 = vmatprep.subr.bf16.mxu0 0
    %3867 = vmatpush1.bf16.xpose.msra.mxu0 0
    %3868 = vmatprep.subr.bf16.mxu0 0
    %3869 = vmatpush1.bf16.xpose.msra.mxu0 0
    %3870 = vmatprep.subr.bf16.mxu0 0
    %3871 = vmatpush1.bf16.xpose.msra.mxu0 0
    %3872 = vmatprep.subr.bf16.mxu0 0
    %3873 = vmatpush1.bf16.xpose.msra.mxu0 0
    %3874 = vmatprep.mubr.bf16.mxu0 0
    %3875 = vmatmul.mubr.bf16.gmra.mrb[0].mxu0 %v3837
    %v3876 = vpop.f32.mrb[0].mxu0
    %v3877 = vadd.f32 %v110, %v3876
    %v3878 = vpop.f32.mrb[0].mxu0
    %v3879 = vpop.f32.mrb[0].mxu0
    %v3880 = vpop.f32.mrb[0].mxu0
    %3881 = vdwg.mxu0
    %3883 = vrot.lane.b32.xlu0 %v3702, 64
    %v3884 = vpop.permute.xlu0 %3883
    %v3886 = vsel %vm283, %v3702, 0
    %v3889 = vsel %vm283, %v3884, 0
    %3891 = vmatprep.subr.bf16.mxu0 0
    %3892 = vmatpush1.bf16.xpose.msra.mxu0 %v3889
    %3893 = vmatprep.subr.bf16.mxu0 0
    %3894 = vmatpush1.bf16.xpose.msra.mxu0 0
    %3895 = vmatprep.subr.bf16.mxu0 0
    %3896 = vmatpush1.bf16.xpose.msra.mxu0 0
    %3897 = vmatprep.subr.bf16.mxu0 0
    %3898 = vmatpush1.bf16.xpose.msra.mxu0 0
    %3899 = vmatprep.subr.bf16.mxu0 0
    %3900 = vmatpush1.bf16.xpose.msra.mxu0 0
    %3901 = vmatprep.subr.bf16.mxu0 0
    %3902 = vmatpush1.bf16.xpose.msra.mxu0 0
    %3903 = vmatprep.subr.bf16.mxu0 0
    %3904 = vmatpush1.bf16.xpose.msra.mxu0 0
    %3905 = vmatprep.subr.bf16.mxu0 0
    %3906 = vmatpush1.bf16.xpose.msra.mxu0 0
    %3907 = vmatprep.subr.bf16.mxu0 0
    %3908 = vmatpush1.bf16.xpose.msra.mxu0 0
    %3909 = vmatprep.subr.bf16.mxu0 0
    %3910 = vmatpush1.bf16.xpose.msra.mxu0 0
    %3911 = vmatprep.subr.bf16.mxu0 0
    %3912 = vmatpush1.bf16.xpose.msra.mxu0 0
    %3913 = vmatprep.subr.bf16.mxu0 0
    %3914 = vmatpush1.bf16.xpose.msra.mxu0 0
    %3915 = vmatprep.subr.bf16.mxu0 0
    %3916 = vmatpush1.bf16.xpose.msra.mxu0 0
    %3917 = vmatprep.subr.bf16.mxu0 0
    %3918 = vmatpush1.bf16.xpose.msra.mxu0 0
    %3919 = vmatprep.subr.bf16.mxu0 0
    %3920 = vmatpush1.bf16.xpose.msra.mxu0 0
    %3921 = vmatprep.subr.bf16.mxu0 0
    %3922 = vmatpush1.bf16.xpose.msra.mxu0 0
    %3923 = vmatprep.mubr.bf16.mxu0 0
    %3924 = vmatmul.mubr.bf16.gmra.mrb[0].mxu0 %v3886
    %v3925 = vpop.f32.mrb[0].mxu0
    %v3926 = vadd.f32 %v114, %v3925
    %v3927 = vpop.f32.mrb[0].mxu0
    %v3928 = vpop.f32.mrb[0].mxu0
    %v3929 = vpop.f32.mrb[0].mxu0
    %3930 = vdwg.mxu0
    %3932 = vrot.lane.b32.xlu0 %v3703, 64
    %v3933 = vpop.permute.xlu0 %3932
    %v3935 = vsel %vm283, %v3703, 0
    %v3938 = vsel %vm283, %v3933, 0
    %3940 = vmatprep.subr.bf16.mxu0 0
    %3941 = vmatpush1.bf16.xpose.msra.mxu0 %v3938
    %3942 = vmatprep.subr.bf16.mxu0 0
    %3943 = vmatpush1.bf16.xpose.msra.mxu0 0
    %3944 = vmatprep.subr.bf16.mxu0 0
    %3945 = vmatpush1.bf16.xpose.msra.mxu0 0
    %3946 = vmatprep.subr.bf16.mxu0 0
    %3947 = vmatpush1.bf16.xpose.msra.mxu0 0
    %3948 = vmatprep.subr.bf16.mxu0 0
    %3949 = vmatpush1.bf16.xpose.msra.mxu0 0
    %3950 = vmatprep.subr.bf16.mxu0 0
    %3951 = vmatpush1.bf16.xpose.msra.mxu0 0
    %3952 = vmatprep.subr.bf16.mxu0 0
    %3953 = vmatpush1.bf16.xpose.msra.mxu0 0
    %3954 = vmatprep.subr.bf16.mxu0 0
    %3955 = vmatpush1.bf16.xpose.msra.mxu0 0
    %3956 = vmatprep.subr.bf16.mxu0 0
    %3957 = vmatpush1.bf16.xpose.msra.mxu0 0
    %3958 = vmatprep.subr.bf16.mxu0 0
    %3959 = vmatpush1.bf16.xpose.msra.mxu0 0
    %3960 = vmatprep.subr.bf16.mxu0 0
    %3961 = vmatpush1.bf16.xpose.msra.mxu0 0
    %3962 = vmatprep.subr.bf16.mxu0 0
    %3963 = vmatpush1.bf16.xpose.msra.mxu0 0
    %3964 = vmatprep.subr.bf16.mxu0 0
    %3965 = vmatpush1.bf16.xpose.msra.mxu0 0
    %3966 = vmatprep.subr.bf16.mxu0 0
    %3967 = vmatpush1.bf16.xpose.msra.mxu0 0
    %3968 = vmatprep.subr.bf16.mxu0 0
    %3969 = vmatpush1.bf16.xpose.msra.mxu0 0
    %3970 = vmatprep.subr.bf16.mxu0 0
    %3971 = vmatpush1.bf16.xpose.msra.mxu0 0
    %3972 = vmatprep.mubr.bf16.mxu0 0
    %3973 = vmatmul.mubr.bf16.gmra.mrb[0].mxu0 %v3935
    %v3974 = vpop.f32.mrb[0].mxu0
    %v3975 = vadd.f32 %v110, %v3974
    %v3976 = vpop.f32.mrb[0].mxu0
    %v3977 = vpop.f32.mrb[0].mxu0
    %v3978 = vpop.f32.mrb[0].mxu0
    %3979 = vdwg.mxu0
    %3981 = vrot.lane.b32.xlu0 %v3704, 64
    %v3982 = vpop.permute.xlu0 %3981
    %v3984 = vsel %vm283, %v3704, 0
    %v3987 = vsel %vm283, %v3982, 0
    %3989 = vmatprep.subr.bf16.mxu0 0
    %3990 = vmatpush1.bf16.xpose.msra.mxu0 %v3987
    %3991 = vmatprep.subr.bf16.mxu0 0
    %3992 = vmatpush1.bf16.xpose.msra.mxu0 0
    %3993 = vmatprep.subr.bf16.mxu0 0
    %3994 = vmatpush1.bf16.xpose.msra.mxu0 0
    %3995 = vmatprep.subr.bf16.mxu0 0
    %3996 = vmatpush1.bf16.xpose.msra.mxu0 0
    %3997 = vmatprep.subr.bf16.mxu0 0
    %3998 = vmatpush1.bf16.xpose.msra.mxu0 0
    %3999 = vmatprep.subr.bf16.mxu0 0
    %4000 = vmatpush1.bf16.xpose.msra.mxu0 0
    %4001 = vmatprep.subr.bf16.mxu0 0
    %4002 = vmatpush1.bf16.xpose.msra.mxu0 0
    %4003 = vmatprep.subr.bf16.mxu0 0
    %4004 = vmatpush1.bf16.xpose.msra.mxu0 0
    %4005 = vmatprep.subr.bf16.mxu0 0
    %4006 = vmatpush1.bf16.xpose.msra.mxu0 0
    %4007 = vmatprep.subr.bf16.mxu0 0
    %4008 = vmatpush1.bf16.xpose.msra.mxu0 0
    %4009 = vmatprep.subr.bf16.mxu0 0
    %4010 = vmatpush1.bf16.xpose.msra.mxu0 0
    %4011 = vmatprep.subr.bf16.mxu0 0
    %4012 = vmatpush1.bf16.xpose.msra.mxu0 0
    %4013 = vmatprep.subr.bf16.mxu0 0
    %4014 = vmatpush1.bf16.xpose.msra.mxu0 0
    %4015 = vmatprep.subr.bf16.mxu0 0
    %4016 = vmatpush1.bf16.xpose.msra.mxu0 0
    %4017 = vmatprep.subr.bf16.mxu0 0
    %4018 = vmatpush1.bf16.xpose.msra.mxu0 0
    %4019 = vmatprep.subr.bf16.mxu0 0
    %4020 = vmatpush1.bf16.xpose.msra.mxu0 0
    %4021 = vmatprep.mubr.bf16.mxu0 0
    %4022 = vmatmul.mubr.bf16.gmra.mrb[0].mxu0 %v3984
    %v4023 = vpop.f32.mrb[0].mxu0
    %v4024 = vadd.f32 %v114, %v4023
    %v4025 = vpop.f32.mrb[0].mxu0
    %v4026 = vpop.f32.mrb[0].mxu0
    %v4027 = vpop.f32.mrb[0].mxu0
    %4028 = vdwg.mxu0
    %4030 = vrot.lane.b32.xlu0 %v3705, 64
    %v4031 = vpop.permute.xlu0 %4030
    %v4033 = vsel %vm283, %v3705, 0
    %v4036 = vsel %vm283, %v4031, 0
    %4038 = vmatprep.subr.bf16.mxu0 0
    %4039 = vmatpush1.bf16.xpose.msra.mxu0 %v4036
    %4040 = vmatprep.subr.bf16.mxu0 0
    %4041 = vmatpush1.bf16.xpose.msra.mxu0 0
    %4042 = vmatprep.subr.bf16.mxu0 0
    %4043 = vmatpush1.bf16.xpose.msra.mxu0 0
    %4044 = vmatprep.subr.bf16.mxu0 0
    %4045 = vmatpush1.bf16.xpose.msra.mxu0 0
    %4046 = vmatprep.subr.bf16.mxu0 0
    %4047 = vmatpush1.bf16.xpose.msra.mxu0 0
    %4048 = vmatprep.subr.bf16.mxu0 0
    %4049 = vmatpush1.bf16.xpose.msra.mxu0 0
    %4050 = vmatprep.subr.bf16.mxu0 0
    %4051 = vmatpush1.bf16.xpose.msra.mxu0 0
    %4052 = vmatprep.subr.bf16.mxu0 0
    %4053 = vmatpush1.bf16.xpose.msra.mxu0 0
    %4054 = vmatprep.subr.bf16.mxu0 0
    %4055 = vmatpush1.bf16.xpose.msra.mxu0 0
    %4056 = vmatprep.subr.bf16.mxu0 0
    %4057 = vmatpush1.bf16.xpose.msra.mxu0 0
    %4058 = vmatprep.subr.bf16.mxu0 0
    %4059 = vmatpush1.bf16.xpose.msra.mxu0 0
    %4060 = vmatprep.subr.bf16.mxu0 0
    %4061 = vmatpush1.bf16.xpose.msra.mxu0 0
    %4062 = vmatprep.subr.bf16.mxu0 0
    %4063 = vmatpush1.bf16.xpose.msra.mxu0 0
    %4064 = vmatprep.subr.bf16.mxu0 0
    %4065 = vmatpush1.bf16.xpose.msra.mxu0 0
    %4066 = vmatprep.subr.bf16.mxu0 0
    %4067 = vmatpush1.bf16.xpose.msra.mxu0 0
    %4068 = vmatprep.subr.bf16.mxu0 0
    %4069 = vmatpush1.bf16.xpose.msra.mxu0 0
    %4070 = vmatprep.mubr.bf16.mxu0 0
    %4071 = vmatmul.mubr.bf16.gmra.mrb[0].mxu0 %v4033
    %v4072 = vpop.f32.mrb[0].mxu0
    %v4073 = vadd.f32 %v110, %v4072
    %v4074 = vpop.f32.mrb[0].mxu0
    %v4075 = vpop.f32.mrb[0].mxu0
    %v4076 = vpop.f32.mrb[0].mxu0
    %4077 = vdwg.mxu0
    %4079 = vrot.lane.b32.xlu0 %v3706, 64
    %v4080 = vpop.permute.xlu0 %4079
    %v4082 = vsel %vm283, %v3706, 0
    %v4085 = vsel %vm283, %v4080, 0
    %4087 = vmatprep.subr.bf16.mxu0 0
    %4088 = vmatpush1.bf16.xpose.msra.mxu0 %v4085
    %4089 = vmatprep.subr.bf16.mxu0 0
    %4090 = vmatpush1.bf16.xpose.msra.mxu0 0
    %4091 = vmatprep.subr.bf16.mxu0 0
    %4092 = vmatpush1.bf16.xpose.msra.mxu0 0
    %4093 = vmatprep.subr.bf16.mxu0 0
    %4094 = vmatpush1.bf16.xpose.msra.mxu0 0
    %4095 = vmatprep.subr.bf16.mxu0 0
    %4096 = vmatpush1.bf16.xpose.msra.mxu0 0
    %4097 = vmatprep.subr.bf16.mxu0 0
    %4098 = vmatpush1.bf16.xpose.msra.mxu0 0
    %4099 = vmatprep.subr.bf16.mxu0 0
    %4100 = vmatpush1.bf16.xpose.msra.mxu0 0
    %4101 = vmatprep.subr.bf16.mxu0 0
    %4102 = vmatpush1.bf16.xpose.msra.mxu0 0
    %4103 = vmatprep.subr.bf16.mxu0 0
    %4104 = vmatpush1.bf16.xpose.msra.mxu0 0
    %4105 = vmatprep.subr.bf16.mxu0 0
    %4106 = vmatpush1.bf16.xpose.msra.mxu0 0
    %4107 = vmatprep.subr.bf16.mxu0 0
    %4108 = vmatpush1.bf16.xpose.msra.mxu0 0
    %4109 = vmatprep.subr.bf16.mxu0 0
    %4110 = vmatpush1.bf16.xpose.msra.mxu0 0
    %4111 = vmatprep.subr.bf16.mxu0 0
    %4112 = vmatpush1.bf16.xpose.msra.mxu0 0
    %4113 = vmatprep.subr.bf16.mxu0 0
    %4114 = vmatpush1.bf16.xpose.msra.mxu0 0
    %4115 = vmatprep.subr.bf16.mxu0 0
    %4116 = vmatpush1.bf16.xpose.msra.mxu0 0
    %4117 = vmatprep.subr.bf16.mxu0 0
    %4118 = vmatpush1.bf16.xpose.msra.mxu0 0
    %4119 = vmatprep.mubr.bf16.mxu0 0
    %4120 = vmatmul.mubr.bf16.gmra.mrb[0].mxu0 %v4082
    %v4121 = vpop.f32.mrb[0].mxu0
    %v4122 = vadd.f32 %v114, %v4121
    %v4123 = vpop.f32.mrb[0].mxu0
    %v4124 = vpop.f32.mrb[0].mxu0
    %v4125 = vpop.f32.mrb[0].mxu0
    %4126 = vdwg.mxu0
    %v4127 = vsel %vm673, %v3779, -inf
    %4128 = vmax.xlane.f32.xlu0 %v4127
    %v4129 = vpop.xlane.xlu0 %4128
    %v4130 = vsel %vm673, %v3828, -inf
    %4131 = vmax.xlane.f32.xlu0 %v4130
    %v4132 = vpop.xlane.xlu0 %4131
    %v4133 = vsel %vm673, %v3877, -inf
    %4134 = vmax.xlane.f32.xlu0 %v4133
    %v4135 = vpop.xlane.xlu0 %4134
    %v4136 = vsel %vm673, %v3926, -inf
    %4137 = vmax.xlane.f32.xlu0 %v4136
    %v4138 = vpop.xlane.xlu0 %4137
    %v4139 = vsel %vm673, %v3975, -inf
    %4140 = vmax.xlane.f32.xlu0 %v4139
    %v4141 = vpop.xlane.xlu0 %4140
    %v4142 = vsel %vm673, %v4024, -inf
    %4143 = vmax.xlane.f32.xlu0 %v4142
    %v4144 = vpop.xlane.xlu0 %4143
    %v4145 = vsel %vm673, %v4073, -inf
    %4146 = vmax.xlane.f32.xlu0 %v4145
    %v4147 = vpop.xlane.xlu0 %4146
    %v4148 = vsel %vm673, %v4122, -inf
    %4149 = vmax.xlane.f32.xlu0 %v4148
    %v4150 = vpop.xlane.xlu0 %4149
    %v4151 = vsub.f32 %v3779, %v4129
    %v4152 = vsub.f32 %v3828, %v4132
    %v4153 = vsub.f32 %v3877, %v4135
    %v4154 = vsub.f32 %v3926, %v4138
    %v4155 = vsub.f32 %v3975, %v4141
    %v4156 = vsub.f32 %v4024, %v4144
    %v4157 = vsub.f32 %v4073, %v4147
    %v4158 = vsub.f32 %v4122, %v4150
    %v4159 = vmul.f32 %v4151, 1.442695
    %v4160 = vpow.pop %v4159
    %v4161 = vmul.f32 %v4152, 1.442695
    %v4162 = vpow.pop %v4161
    %v4163 = vmul.f32 %v4153, 1.442695
    %v4164 = vpow.pop %v4163
    %v4165 = vmul.f32 %v4154, 1.442695
    %v4166 = vpow.pop %v4165
    %v4167 = vmul.f32 %v4155, 1.442695
    %v4168 = vpow.pop %v4167
    %v4169 = vmul.f32 %v4156, 1.442695
    %v4170 = vpow.pop %v4169
    %v4171 = vmul.f32 %v4157, 1.442695
    %v4172 = vpow.pop %v4171
    %v4173 = vmul.f32 %v4158, 1.442695
    %v4174 = vpow.pop %v4173
    %v4175 = vsel %vm673, %v4160, 0.0
    %4176 = vadd.xlane.f32.xlu0 %v4175
    %v4177 = vpop.xlane.xlu0 %4176
    %v4178 = vsel %vm673, %v4162, 0.0
    %4179 = vadd.xlane.f32.xlu0 %v4178
    %v4180 = vpop.xlane.xlu0 %4179
    %v4181 = vsel %vm673, %v4164, 0.0
    %4182 = vadd.xlane.f32.xlu0 %v4181
    %v4183 = vpop.xlane.xlu0 %4182
    %v4184 = vsel %vm673, %v4166, 0.0
    %4185 = vadd.xlane.f32.xlu0 %v4184
    %v4186 = vpop.xlane.xlu0 %4185
    %v4187 = vsel %vm673, %v4168, 0.0
    %4188 = vadd.xlane.f32.xlu0 %v4187
    %v4189 = vpop.xlane.xlu0 %4188
    %v4190 = vsel %vm673, %v4170, 0.0
    %4191 = vadd.xlane.f32.xlu0 %v4190
    %v4192 = vpop.xlane.xlu0 %4191
    %v4193 = vsel %vm673, %v4172, 0.0
    %4194 = vadd.xlane.f32.xlu0 %v4193
    %v4195 = vpop.xlane.xlu0 %4194
    %v4196 = vsel %vm673, %v4174, 0.0
    %4197 = vadd.xlane.f32.xlu0 %v4196
    %v4198 = vpop.xlane.xlu0 %4197
    %v4199 = vrcp.pop %v4177
    %v4200 = vmul.f32 %v4160, %v4199
    %v4201 = vrcp.pop %v4180
    %v4202 = vmul.f32 %v4162, %v4201
    %v4203 = vrcp.pop %v4183
    %v4204 = vmul.f32 %v4164, %v4203
    %v4205 = vrcp.pop %v4186
    %v4206 = vmul.f32 %v4166, %v4205
    %v4207 = vrcp.pop %v4189
    %v4208 = vmul.f32 %v4168, %v4207
    %v4209 = vrcp.pop %v4192
    %v4210 = vmul.f32 %v4170, %v4209
    %v4211 = vrcp.pop %v4195
    %v4212 = vmul.f32 %v4172, %v4211
    %v4213 = vrcp.pop %v4198
    %v4214 = vmul.f32 %v4174, %v4213
    %v4215 = vpack.c.bf16 %v4200, %v4200
    %v4216 = vpack.c.bf16 %v4202, %v4202
    %v4217 = vpack.c.bf16 %v4204, %v4204
    %v4218 = vpack.c.bf16 %v4206, %v4206
    %v4219 = vpack.c.bf16 %v4208, %v4208
    %v4220 = vpack.c.bf16 %v4210, %v4210
    %v4221 = vpack.c.bf16 %v4212, %v4212
    %v4222 = vpack.c.bf16 %v4214, %v4214
    %v4224 = vsel %vm673, %v4215, 0
    %v4227 = vsel %vm773, %v3727, 0
    %4229 = vmatprep.subr.bf16.mxu0 0
    %4230 = vmatpush1.bf16.msra.mxu0 %v4227
    %4231 = vmatprep.subr.bf16.mxu0 0
    %4232 = vmatpush1.bf16.msra.mxu0 0
    %4233 = vmatprep.subr.bf16.mxu0 0
    %4234 = vmatpush1.bf16.msra.mxu0 0
    %4235 = vmatprep.subr.bf16.mxu0 0
    %4236 = vmatpush1.bf16.msra.mxu0 0
    %4237 = vmatprep.subr.bf16.mxu0 0
    %4238 = vmatpush1.bf16.msra.mxu0 0
    %4239 = vmatprep.subr.bf16.mxu0 0
    %4240 = vmatpush1.bf16.msra.mxu0 0
    %4241 = vmatprep.subr.bf16.mxu0 0
    %4242 = vmatpush1.bf16.msra.mxu0 0
    %4243 = vmatprep.subr.bf16.mxu0 0
    %4244 = vmatpush1.bf16.msra.mxu0 0
    %4245 = vmatprep.subr.bf16.mxu0 0
    %4246 = vmatpush1.bf16.msra.mxu0 0
    %4247 = vmatprep.subr.bf16.mxu0 0
    %4248 = vmatpush1.bf16.msra.mxu0 0
    %4249 = vmatprep.subr.bf16.mxu0 0
    %4250 = vmatpush1.bf16.msra.mxu0 0
    %4251 = vmatprep.subr.bf16.mxu0 0
    %4252 = vmatpush1.bf16.msra.mxu0 0
    %4253 = vmatprep.subr.bf16.mxu0 0
    %4254 = vmatpush1.bf16.msra.mxu0 0
    %4255 = vmatprep.subr.bf16.mxu0 0
    %4256 = vmatpush1.bf16.msra.mxu0 0
    %4257 = vmatprep.subr.bf16.mxu0 0
    %4258 = vmatpush1.bf16.msra.mxu0 0
    %4259 = vmatprep.subr.bf16.mxu0 0
    %4260 = vmatpush1.bf16.msra.mxu0 0
    %4261 = vmatprep.mubr.bf16.mxu0 0
    %4262 = vmatmul.mubr.bf16.gmra.mrb[0].mxu0 %v4224
    %v4263 = vpop.f32.mrb[0].mxu0
    %v4264 = vadd.f32 0.0, %v4263
    %v4265 = vpop.f32.mrb[0].mxu0
    %v4266 = vpop.f32.mrb[0].mxu0
    %v4267 = vpop.f32.mrb[0].mxu0
    %4268 = vdwg.mxu0
    %v4270 = vsel %vm673, %v4216, 0
    %v4273 = vsel %vm773, %v3728, 0
    %4275 = vmatprep.subr.bf16.mxu0 0
    %4276 = vmatpush1.bf16.msra.mxu0 %v4273
    %4277 = vmatprep.subr.bf16.mxu0 0
    %4278 = vmatpush1.bf16.msra.mxu0 0
    %4279 = vmatprep.subr.bf16.mxu0 0
    %4280 = vmatpush1.bf16.msra.mxu0 0
    %4281 = vmatprep.subr.bf16.mxu0 0
    %4282 = vmatpush1.bf16.msra.mxu0 0
    %4283 = vmatprep.subr.bf16.mxu0 0
    %4284 = vmatpush1.bf16.msra.mxu0 0
    %4285 = vmatprep.subr.bf16.mxu0 0
    %4286 = vmatpush1.bf16.msra.mxu0 0
    %4287 = vmatprep.subr.bf16.mxu0 0
    %4288 = vmatpush1.bf16.msra.mxu0 0
    %4289 = vmatprep.subr.bf16.mxu0 0
    %4290 = vmatpush1.bf16.msra.mxu0 0
    %4291 = vmatprep.subr.bf16.mxu0 0
    %4292 = vmatpush1.bf16.msra.mxu0 0
    %4293 = vmatprep.subr.bf16.mxu0 0
    %4294 = vmatpush1.bf16.msra.mxu0 0
    %4295 = vmatprep.subr.bf16.mxu0 0
    %4296 = vmatpush1.bf16.msra.mxu0 0
    %4297 = vmatprep.subr.bf16.mxu0 0
    %4298 = vmatpush1.bf16.msra.mxu0 0
    %4299 = vmatprep.subr.bf16.mxu0 0
    %4300 = vmatpush1.bf16.msra.mxu0 0
    %4301 = vmatprep.subr.bf16.mxu0 0
    %4302 = vmatpush1.bf16.msra.mxu0 0
    %4303 = vmatprep.subr.bf16.mxu0 0
    %4304 = vmatpush1.bf16.msra.mxu0 0
    %4305 = vmatprep.subr.bf16.mxu0 0
    %4306 = vmatpush1.bf16.msra.mxu0 0
    %4307 = vmatprep.mubr.bf16.mxu0 0
    %4308 = vmatmul.mubr.bf16.gmra.mrb[0].mxu0 %v4270
    %v4309 = vpop.f32.mrb[0].mxu0
    %v4310 = vadd.f32 0.0, %v4309
    %v4311 = vpop.f32.mrb[0].mxu0
    %v4312 = vpop.f32.mrb[0].mxu0
    %v4313 = vpop.f32.mrb[0].mxu0
    %4314 = vdwg.mxu0
    %v4316 = vsel %vm673, %v4217, 0
    %v4319 = vsel %vm773, %v3729, 0
    %4321 = vmatprep.subr.bf16.mxu0 0
    %4322 = vmatpush1.bf16.msra.mxu0 %v4319
    %4323 = vmatprep.subr.bf16.mxu0 0
    %4324 = vmatpush1.bf16.msra.mxu0 0
    %4325 = vmatprep.subr.bf16.mxu0 0
    %4326 = vmatpush1.bf16.msra.mxu0 0
    %4327 = vmatprep.subr.bf16.mxu0 0
    %4328 = vmatpush1.bf16.msra.mxu0 0
    %4329 = vmatprep.subr.bf16.mxu0 0
    %4330 = vmatpush1.bf16.msra.mxu0 0
    %4331 = vmatprep.subr.bf16.mxu0 0
    %4332 = vmatpush1.bf16.msra.mxu0 0
    %4333 = vmatprep.subr.bf16.mxu0 0
    %4334 = vmatpush1.bf16.msra.mxu0 0
    %4335 = vmatprep.subr.bf16.mxu0 0
    %4336 = vmatpush1.bf16.msra.mxu0 0
    %4337 = vmatprep.subr.bf16.mxu0 0
    %4338 = vmatpush1.bf16.msra.mxu0 0
    %4339 = vmatprep.subr.bf16.mxu0 0
    %4340 = vmatpush1.bf16.msra.mxu0 0
    %4341 = vmatprep.subr.bf16.mxu0 0
    %4342 = vmatpush1.bf16.msra.mxu0 0
    %4343 = vmatprep.subr.bf16.mxu0 0
    %4344 = vmatpush1.bf16.msra.mxu0 0
    %4345 = vmatprep.subr.bf16.mxu0 0
    %4346 = vmatpush1.bf16.msra.mxu0 0
    %4347 = vmatprep.subr.bf16.mxu0 0
    %4348 = vmatpush1.bf16.msra.mxu0 0
    %4349 = vmatprep.subr.bf16.mxu0 0
    %4350 = vmatpush1.bf16.msra.mxu0 0
    %4351 = vmatprep.subr.bf16.mxu0 0
    %4352 = vmatpush1.bf16.msra.mxu0 0
    %4353 = vmatprep.mubr.bf16.mxu0 0
    %4354 = vmatmul.mubr.bf16.gmra.mrb[0].mxu0 %v4316
    %v4355 = vpop.f32.mrb[0].mxu0
    %v4356 = vadd.f32 0.0, %v4355
    %v4357 = vpop.f32.mrb[0].mxu0
    %v4358 = vpop.f32.mrb[0].mxu0
    %v4359 = vpop.f32.mrb[0].mxu0
    %4360 = vdwg.mxu0
    %v4362 = vsel %vm673, %v4218, 0
    %v4365 = vsel %vm773, %v3730, 0
    %4367 = vmatprep.subr.bf16.mxu0 0
    %4368 = vmatpush1.bf16.msra.mxu0 %v4365
    %4369 = vmatprep.subr.bf16.mxu0 0
    %4370 = vmatpush1.bf16.msra.mxu0 0
    %4371 = vmatprep.subr.bf16.mxu0 0
    %4372 = vmatpush1.bf16.msra.mxu0 0
    %4373 = vmatprep.subr.bf16.mxu0 0
    %4374 = vmatpush1.bf16.msra.mxu0 0
    %4375 = vmatprep.subr.bf16.mxu0 0
    %4376 = vmatpush1.bf16.msra.mxu0 0
    %4377 = vmatprep.subr.bf16.mxu0 0
    %4378 = vmatpush1.bf16.msra.mxu0 0
    %4379 = vmatprep.subr.bf16.mxu0 0
    %4380 = vmatpush1.bf16.msra.mxu0 0
    %4381 = vmatprep.subr.bf16.mxu0 0
    %4382 = vmatpush1.bf16.msra.mxu0 0
    %4383 = vmatprep.subr.bf16.mxu0 0
    %4384 = vmatpush1.bf16.msra.mxu0 0
    %4385 = vmatprep.subr.bf16.mxu0 0
    %4386 = vmatpush1.bf16.msra.mxu0 0
    %4387 = vmatprep.subr.bf16.mxu0 0
    %4388 = vmatpush1.bf16.msra.mxu0 0
    %4389 = vmatprep.subr.bf16.mxu0 0
    %4390 = vmatpush1.bf16.msra.mxu0 0
    %4391 = vmatprep.subr.bf16.mxu0 0
    %4392 = vmatpush1.bf16.msra.mxu0 0
    %4393 = vmatprep.subr.bf16.mxu0 0
    %4394 = vmatpush1.bf16.msra.mxu0 0
    %4395 = vmatprep.subr.bf16.mxu0 0
    %4396 = vmatpush1.bf16.msra.mxu0 0
    %4397 = vmatprep.subr.bf16.mxu0 0
    %4398 = vmatpush1.bf16.msra.mxu0 0
    %4399 = vmatprep.mubr.bf16.mxu0 0
    %4400 = vmatmul.mubr.bf16.gmra.mrb[0].mxu0 %v4362
    %v4401 = vpop.f32.mrb[0].mxu0
    %v4402 = vadd.f32 0.0, %v4401
    %v4403 = vpop.f32.mrb[0].mxu0
    %v4404 = vpop.f32.mrb[0].mxu0
    %v4405 = vpop.f32.mrb[0].mxu0
    %4406 = vdwg.mxu0
    %v4408 = vsel %vm673, %v4219, 0
    %v4411 = vsel %vm773, %v3731, 0
    %4413 = vmatprep.subr.bf16.mxu0 0
    %4414 = vmatpush1.bf16.msra.mxu0 %v4411
    %4415 = vmatprep.subr.bf16.mxu0 0
    %4416 = vmatpush1.bf16.msra.mxu0 0
    %4417 = vmatprep.subr.bf16.mxu0 0
    %4418 = vmatpush1.bf16.msra.mxu0 0
    %4419 = vmatprep.subr.bf16.mxu0 0
    %4420 = vmatpush1.bf16.msra.mxu0 0
    %4421 = vmatprep.subr.bf16.mxu0 0
    %4422 = vmatpush1.bf16.msra.mxu0 0
    %4423 = vmatprep.subr.bf16.mxu0 0
    %4424 = vmatpush1.bf16.msra.mxu0 0
    %4425 = vmatprep.subr.bf16.mxu0 0
    %4426 = vmatpush1.bf16.msra.mxu0 0
    %4427 = vmatprep.subr.bf16.mxu0 0
    %4428 = vmatpush1.bf16.msra.mxu0 0
    %4429 = vmatprep.subr.bf16.mxu0 0
    %4430 = vmatpush1.bf16.msra.mxu0 0
    %4431 = vmatprep.subr.bf16.mxu0 0
    %4432 = vmatpush1.bf16.msra.mxu0 0
    %4433 = vmatprep.subr.bf16.mxu0 0
    %4434 = vmatpush1.bf16.msra.mxu0 0
    %4435 = vmatprep.subr.bf16.mxu0 0
    %4436 = vmatpush1.bf16.msra.mxu0 0
    %4437 = vmatprep.subr.bf16.mxu0 0
    %4438 = vmatpush1.bf16.msra.mxu0 0
    %4439 = vmatprep.subr.bf16.mxu0 0
    %4440 = vmatpush1.bf16.msra.mxu0 0
    %4441 = vmatprep.subr.bf16.mxu0 0
    %4442 = vmatpush1.bf16.msra.mxu0 0
    %4443 = vmatprep.subr.bf16.mxu0 0
    %4444 = vmatpush1.bf16.msra.mxu0 0
    %4445 = vmatprep.mubr.bf16.mxu0 0
    %4446 = vmatmul.mubr.bf16.gmra.mrb[0].mxu0 %v4408
    %v4447 = vpop.f32.mrb[0].mxu0
    %v4448 = vadd.f32 0.0, %v4447
    %v4449 = vpop.f32.mrb[0].mxu0
    %v4450 = vpop.f32.mrb[0].mxu0
    %v4451 = vpop.f32.mrb[0].mxu0
    %4452 = vdwg.mxu0
    %v4454 = vsel %vm673, %v4220, 0
    %v4457 = vsel %vm773, %v3732, 0
    %4459 = vmatprep.subr.bf16.mxu0 0
    %4460 = vmatpush1.bf16.msra.mxu0 %v4457
    %4461 = vmatprep.subr.bf16.mxu0 0
    %4462 = vmatpush1.bf16.msra.mxu0 0
    %4463 = vmatprep.subr.bf16.mxu0 0
    %4464 = vmatpush1.bf16.msra.mxu0 0
    %4465 = vmatprep.subr.bf16.mxu0 0
    %4466 = vmatpush1.bf16.msra.mxu0 0
    %4467 = vmatprep.subr.bf16.mxu0 0
    %4468 = vmatpush1.bf16.msra.mxu0 0
    %4469 = vmatprep.subr.bf16.mxu0 0
    %4470 = vmatpush1.bf16.msra.mxu0 0
    %4471 = vmatprep.subr.bf16.mxu0 0
    %4472 = vmatpush1.bf16.msra.mxu0 0
    %4473 = vmatprep.subr.bf16.mxu0 0
    %4474 = vmatpush1.bf16.msra.mxu0 0
    %4475 = vmatprep.subr.bf16.mxu0 0
    %4476 = vmatpush1.bf16.msra.mxu0 0
    %4477 = vmatprep.subr.bf16.mxu0 0
    %4478 = vmatpush1.bf16.msra.mxu0 0
    %4479 = vmatprep.subr.bf16.mxu0 0
    %4480 = vmatpush1.bf16.msra.mxu0 0
    %4481 = vmatprep.subr.bf16.mxu0 0
    %4482 = vmatpush1.bf16.msra.mxu0 0
    %4483 = vmatprep.subr.bf16.mxu0 0
    %4484 = vmatpush1.bf16.msra.mxu0 0
    %4485 = vmatprep.subr.bf16.mxu0 0
    %4486 = vmatpush1.bf16.msra.mxu0 0
    %4487 = vmatprep.subr.bf16.mxu0 0
    %4488 = vmatpush1.bf16.msra.mxu0 0
    %4489 = vmatprep.subr.bf16.mxu0 0
    %4490 = vmatpush1.bf16.msra.mxu0 0
    %4491 = vmatprep.mubr.bf16.mxu0 0
    %4492 = vmatmul.mubr.bf16.gmra.mrb[0].mxu0 %v4454
    %v4493 = vpop.f32.mrb[0].mxu0
    %v4494 = vadd.f32 0.0, %v4493
    %v4495 = vpop.f32.mrb[0].mxu0
    %v4496 = vpop.f32.mrb[0].mxu0
    %v4497 = vpop.f32.mrb[0].mxu0
    %4498 = vdwg.mxu0
    %v4500 = vsel %vm673, %v4221, 0
    %v4503 = vsel %vm773, %v3733, 0
    %4505 = vmatprep.subr.bf16.mxu0 0
    %4506 = vmatpush1.bf16.msra.mxu0 %v4503
    %4507 = vmatprep.subr.bf16.mxu0 0
    %4508 = vmatpush1.bf16.msra.mxu0 0
    %4509 = vmatprep.subr.bf16.mxu0 0
    %4510 = vmatpush1.bf16.msra.mxu0 0
    %4511 = vmatprep.subr.bf16.mxu0 0
    %4512 = vmatpush1.bf16.msra.mxu0 0
    %4513 = vmatprep.subr.bf16.mxu0 0
    %4514 = vmatpush1.bf16.msra.mxu0 0
    %4515 = vmatprep.subr.bf16.mxu0 0
    %4516 = vmatpush1.bf16.msra.mxu0 0
    %4517 = vmatprep.subr.bf16.mxu0 0
    %4518 = vmatpush1.bf16.msra.mxu0 0
    %4519 = vmatprep.subr.bf16.mxu0 0
    %4520 = vmatpush1.bf16.msra.mxu0 0
    %4521 = vmatprep.subr.bf16.mxu0 0
    %4522 = vmatpush1.bf16.msra.mxu0 0
    %4523 = vmatprep.subr.bf16.mxu0 0
    %4524 = vmatpush1.bf16.msra.mxu0 0
    %4525 = vmatprep.subr.bf16.mxu0 0
    %4526 = vmatpush1.bf16.msra.mxu0 0
    %4527 = vmatprep.subr.bf16.mxu0 0
    %4528 = vmatpush1.bf16.msra.mxu0 0
    %4529 = vmatprep.subr.bf16.mxu0 0
    %4530 = vmatpush1.bf16.msra.mxu0 0
    %4531 = vmatprep.subr.bf16.mxu0 0
    %4532 = vmatpush1.bf16.msra.mxu0 0
    %4533 = vmatprep.subr.bf16.mxu0 0
    %4534 = vmatpush1.bf16.msra.mxu0 0
    %4535 = vmatprep.subr.bf16.mxu0 0
    %4536 = vmatpush1.bf16.msra.mxu0 0
    %4537 = vmatprep.mubr.bf16.mxu0 0
    %4538 = vmatmul.mubr.bf16.gmra.mrb[0].mxu0 %v4500
    %v4539 = vpop.f32.mrb[0].mxu0
    %v4540 = vadd.f32 0.0, %v4539
    %v4541 = vpop.f32.mrb[0].mxu0
    %v4542 = vpop.f32.mrb[0].mxu0
    %v4543 = vpop.f32.mrb[0].mxu0
    %4544 = vdwg.mxu0
    %v4546 = vsel %vm673, %v4222, 0
    %v4549 = vsel %vm773, %v3734, 0
    %4551 = vmatprep.subr.bf16.mxu0 0
    %4552 = vmatpush1.bf16.msra.mxu0 %v4549
    %4553 = vmatprep.subr.bf16.mxu0 0
    %4554 = vmatpush1.bf16.msra.mxu0 0
    %4555 = vmatprep.subr.bf16.mxu0 0
    %4556 = vmatpush1.bf16.msra.mxu0 0
    %4557 = vmatprep.subr.bf16.mxu0 0
    %4558 = vmatpush1.bf16.msra.mxu0 0
    %4559 = vmatprep.subr.bf16.mxu0 0
    %4560 = vmatpush1.bf16.msra.mxu0 0
    %4561 = vmatprep.subr.bf16.mxu0 0
    %4562 = vmatpush1.bf16.msra.mxu0 0
    %4563 = vmatprep.subr.bf16.mxu0 0
    %4564 = vmatpush1.bf16.msra.mxu0 0
    %4565 = vmatprep.subr.bf16.mxu0 0
    %4566 = vmatpush1.bf16.msra.mxu0 0
    %4567 = vmatprep.subr.bf16.mxu0 0
    %4568 = vmatpush1.bf16.msra.mxu0 0
    %4569 = vmatprep.subr.bf16.mxu0 0
    %4570 = vmatpush1.bf16.msra.mxu0 0
    %4571 = vmatprep.subr.bf16.mxu0 0
    %4572 = vmatpush1.bf16.msra.mxu0 0
    %4573 = vmatprep.subr.bf16.mxu0 0
    %4574 = vmatpush1.bf16.msra.mxu0 0
    %4575 = vmatprep.subr.bf16.mxu0 0
    %4576 = vmatpush1.bf16.msra.mxu0 0
    %4577 = vmatprep.subr.bf16.mxu0 0
    %4578 = vmatpush1.bf16.msra.mxu0 0
    %4579 = vmatprep.subr.bf16.mxu0 0
    %4580 = vmatpush1.bf16.msra.mxu0 0
    %4581 = vmatprep.subr.bf16.mxu0 0
    %4582 = vmatpush1.bf16.msra.mxu0 0
    %4583 = vmatprep.mubr.bf16.mxu0 0
    %4584 = vmatmul.mubr.bf16.gmra.mrb[0].mxu0 %v4546
    %v4585 = vpop.f32.mrb[0].mxu0
    %v4586 = vadd.f32 0.0, %v4585
    %v4587 = vpop.f32.mrb[0].mxu0
    %v4588 = vpop.f32.mrb[0].mxu0
    %v4589 = vpop.f32.mrb[0].mxu0
    %4590 = vdwg.mxu0
    %4593 = vrot.lane.b32.xlu0 %v4356, 16
    %v4594 = vpop.permute.xlu0 %4593
    %4595 = vrot.lane.b32.xlu0 %v4402, 16
    %v4596 = vpop.permute.xlu0 %4595
    %4601 = vrot.lane.b32.xlu0 %v4448, 32
    %v4602 = vpop.permute.xlu0 %4601
    %4603 = vrot.lane.b32.xlu0 %v4494, 32
    %v4604 = vpop.permute.xlu0 %4603
    %4609 = vrot.lane.b32.xlu0 %v4540, 48
    %v4610 = vpop.permute.xlu0 %4609
    %4611 = vrot.lane.b32.xlu0 %v4586, 48
    %v4612 = vpop.permute.xlu0 %4611
    %v4615 = vsel %vm283, %v4264, %v4594
    %v4616 = vsel %vm283, %v4310, %v4596
    %v4617 = vsel %vm1165, %v4615, %v4602
    %v4618 = vsel %vm1165, %v4616, %v4604
    %v4619 = vsel %vm1168, %v4617, %v4610
    %v4620 = vsel %vm1168, %v4618, %v4612
    %v4621 = vpack.c.bf16 %v4620, %v4619
    %s4622 = scalar_lea.vmem %s6, 32
    %v4623 = vld [vmem:[%s4622] sm:$0xf]
    %v4624 = vld [vmem:[%s4622 + $0x4] sm:$0xf]
    %v4625 = vld [vmem:[%s4622 + $0x8] sm:$0xf]
    %v4626 = vld [vmem:[%s4622 + $0xc] sm:$0xf]
    %v4627 = vld [vmem:[%s4622 + $0x10] sm:$0xf]
    %v4628 = vld [vmem:[%s4622 + $0x14] sm:$0xf]
    %v4629 = vld [vmem:[%s4622 + $0x18] sm:$0xf]
    %v4630 = vld [vmem:[%s4622 + $0x1c] sm:$0xf]
    %s4631 = scalar_lea.vmem %s7, 1
    %v4632 = vld [vmem:[%s4631] sm:$0x1]
    %v4634 = vlaneseq
    %v4635 = vshrl.u32 %v4634, 7
    %v4636 = vsub.s32 0, %v4635
    %v4637 = vrot.slane %v4632, %v4636
    %v4647 = vunpack.c.l.b16 %v4623
    %v4648 = vunpack.c.l.b16 %v4624
    %v4649 = vunpack.c.l.b16 %v4625
    %v4650 = vunpack.c.l.b16 %v4626
    %v4651 = vunpack.c.l.b16 %v4627
    %v4652 = vunpack.c.l.b16 %v4628
    %v4653 = vunpack.c.l.b16 %v4629
    %v4654 = vunpack.c.l.b16 %v4630
    %v4655 = vpack.c.b16 %v4648, %v4647
    %v4656 = vpack.c.b16 %v4650, %v4649
    %v4657 = vpack.c.b16 %v4652, %v4651
    %v4658 = vpack.c.b16 %v4654, %v4653
    %v4664 = vsel %vm59, %v4621, 0
    %4666 = vmatprep.subr.bf16.mxu0 0
    %4667 = vmatpush1.bf16.msra.mxu0 %v4655
    %4668 = vmatprep.subr.bf16.mxu0 0
    %4669 = vmatpush1.bf16.msra.mxu0 %v4656
    %4670 = vmatprep.subr.bf16.mxu0 0
    %4671 = vmatpush1.bf16.msra.mxu0 %v4657
    %4672 = vmatprep.subr.bf16.mxu0 0
    %4673 = vmatpush1.bf16.msra.mxu0 %v4658
    %4674 = vmatprep.subr.bf16.mxu0 0
    %4675 = vmatpush1.bf16.msra.mxu0 0
    %4676 = vmatprep.subr.bf16.mxu0 0
    %4677 = vmatpush1.bf16.msra.mxu0 0
    %4678 = vmatprep.subr.bf16.mxu0 0
    %4679 = vmatpush1.bf16.msra.mxu0 0
    %4680 = vmatprep.subr.bf16.mxu0 0
    %4681 = vmatpush1.bf16.msra.mxu0 0
    %4682 = vmatprep.subr.bf16.mxu0 0
    %4683 = vmatpush1.bf16.msra.mxu0 0
    %4684 = vmatprep.subr.bf16.mxu0 0
    %4685 = vmatpush1.bf16.msra.mxu0 0
    %4686 = vmatprep.subr.bf16.mxu0 0
    %4687 = vmatpush1.bf16.msra.mxu0 0
    %4688 = vmatprep.subr.bf16.mxu0 0
    %4689 = vmatpush1.bf16.msra.mxu0 0
    %4690 = vmatprep.subr.bf16.mxu0 0
    %4691 = vmatpush1.bf16.msra.mxu0 0
    %4692 = vmatprep.subr.bf16.mxu0 0
    %4693 = vmatpush1.bf16.msra.mxu0 0
    %4694 = vmatprep.subr.bf16.mxu0 0
    %4695 = vmatpush1.bf16.msra.mxu0 0
    %4696 = vmatprep.subr.bf16.mxu0 0
    %4697 = vmatpush1.bf16.msra.mxu0 0
    %4698 = vmatprep.mubr.bf16.mxu0 0
    %4699 = vmatmul.mubr.bf16.gmra.mrb[0].mxu0 %v4664
    %v4700 = vpop.f32.mrb[0].mxu0
    %v4701 = vadd.f32 %v4637, %v4700
    %v4702 = vpop.f32.mrb[0].mxu0
    %v4703 = vpop.f32.mrb[0].mxu0
    %v4704 = vadd.f32 %v4637, %v4703
    %v4705 = vpop.f32.mrb[0].mxu0
    %4706 = vdwg.mxu0
    %v4707 = vadd.f32 %v3568, %v4701
    %v4708 = vadd.f32 %v3569, %v4704
    %s4709 = scalar_lea.vmem %s8, 1
    %v4710 = vld [vmem:[%s4709] sm:$0x1]
    %s4711 = scalar_lea.vmem %s9, 1
    %v4712 = vld [vmem:[%s4711] sm:$0x1]
    %v4713 = vsel %vm59, %v4707, 0.0
    %4714 = vadd.xlane.f32.xlu0 %v4713
    %v4715 = vpop.xlane.xlu0 %4714
    %v4716 = vsel %vm59, %v4708, 0.0
    %4717 = vadd.xlane.f32.xlu0 %v4716
    %v4718 = vpop.xlane.xlu0 %4717
    %v4719 = vmul.f32 %v4715, %v66
    %v4720 = vmul.f32 %v4718, %v66
    %v4721 = vsub.f32 %v4707, %v4719
    %v4722 = vsub.f32 %v4708, %v4720
    %v4723 = vmul.f32 %v4721, %v4721
    %v4724 = vmul.f32 %v4722, %v4722
    %v4725 = vsel %vm59, %v4723, 0.0
    %4726 = vadd.xlane.f32.xlu0 %v4725
    %v4727 = vpop.xlane.xlu0 %4726
    %v4728 = vsel %vm59, %v4724, 0.0
    %4729 = vadd.xlane.f32.xlu0 %v4728
    %v4730 = vpop.xlane.xlu0 %4729
    %v4731 = vmul.f32 %v4727, %v66
    %v4732 = vmul.f32 %v4730, %v66
    %v4733 = vadd.f32 %v4731, 1e-05
    %v4734 = vadd.f32 %v4732, 1e-05
    %v4735 = vrsqrt.pop %v4733
    %v4736 = vrsqrt.pop %v4734
    %v4737 = vmul.f32 %v4721, %v4735
    %v4738 = vmul.f32 %v4722, %v4736
    %v4740 = vlaneseq
    %v4741 = vshrl.u32 %v4740, 7
    %v4742 = vsub.s32 0, %v4741
    %v4743 = vrot.slane %v4710, %v4742
    %v4745 = vmul.f32 %v4737, %v4743
    %v4746 = vmul.f32 %v4738, %v4743
    %v4748 = vlaneseq
    %v4749 = vshrl.u32 %v4748, 7
    %v4750 = vsub.s32 0, %v4749
    %v4751 = vrot.slane %v4712, %v4750
    %v4753 = vadd.f32 %v4745, %v4751
    %v4754 = vadd.f32 %v4746, %v4751
    %v4755 = vpack.c.bf16 %v4754, %v4753
    %s4756 = scalar_lea.vmem %s12, 512
    %v4757 = vld [vmem:[%s4756] sm:$0xff]
    %v4758 = vld [vmem:[%s4756 + $0x8] sm:$0xff]
    %v4759 = vld [vmem:[%s4756 + $0x10] sm:$0xff]
    %v4760 = vld [vmem:[%s4756 + $0x18] sm:$0xff]
    %v4761 = vld [vmem:[%s4756 + $0x20] sm:$0xff]
    %v4762 = vld [vmem:[%s4756 + $0x28] sm:$0xff]
    %v4763 = vld [vmem:[%s4756 + $0x30] sm:$0xff]
    %v4764 = vld [vmem:[%s4756 + $0x38] sm:$0xff]
    %v4765 = vld [vmem:[%s4756 + $0x40] sm:$0xff]
    %v4766 = vld [vmem:[%s4756 + $0x48] sm:$0xff]
    %v4767 = vld [vmem:[%s4756 + $0x50] sm:$0xff]
    %v4768 = vld [vmem:[%s4756 + $0x58] sm:$0xff]
    %v4769 = vld [vmem:[%s4756 + $0x60] sm:$0xff]
    %v4770 = vld [vmem:[%s4756 + $0x68] sm:$0xff]
    %v4771 = vld [vmem:[%s4756 + $0x70] sm:$0xff]
    %v4772 = vld [vmem:[%s4756 + $0x78] sm:$0xff]
    %v4773 = vld [vmem:[%s4756 + $0x80] sm:$0xff]
    %v4774 = vld [vmem:[%s4756 + $0x88] sm:$0xff]
    %v4775 = vld [vmem:[%s4756 + $0x90] sm:$0xff]
    %v4776 = vld [vmem:[%s4756 + $0x98] sm:$0xff]
    %v4777 = vld [vmem:[%s4756 + $0xa0] sm:$0xff]
    %v4778 = vld [vmem:[%s4756 + $0xa8] sm:$0xff]
    %v4779 = vld [vmem:[%s4756 + $0xb0] sm:$0xff]
    %v4780 = vld [vmem:[%s4756 + $0xb8] sm:$0xff]
    %v4781 = vld [vmem:[%s4756 + $0xc0] sm:$0xff]
    %v4782 = vld [vmem:[%s4756 + $0xc8] sm:$0xff]
    %v4783 = vld [vmem:[%s4756 + $0xd0] sm:$0xff]
    %v4784 = vld [vmem:[%s4756 + $0xd8] sm:$0xff]
    %v4785 = vld [vmem:[%s4756 + $0xe0] sm:$0xff]
    %v4786 = vld [vmem:[%s4756 + $0xe8] sm:$0xff]
    %v4787 = vld [vmem:[%s4756 + $0xf0] sm:$0xff]
    %v4788 = vld [vmem:[%s4756 + $0xf8] sm:$0xff]
    %v4789 = vld [vmem:[%s4756 + $0x100] sm:$0xff]
    %v4790 = vld [vmem:[%s4756 + $0x108] sm:$0xff]
    %v4791 = vld [vmem:[%s4756 + $0x110] sm:$0xff]
    %v4792 = vld [vmem:[%s4756 + $0x118] sm:$0xff]
    %v4793 = vld [vmem:[%s4756 + $0x120] sm:$0xff]
    %v4794 = vld [vmem:[%s4756 + $0x128] sm:$0xff]
    %v4795 = vld [vmem:[%s4756 + $0x130] sm:$0xff]
    %v4796 = vld [vmem:[%s4756 + $0x138] sm:$0xff]
    %v4797 = vld [vmem:[%s4756 + $0x140] sm:$0xff]
    %v4798 = vld [vmem:[%s4756 + $0x148] sm:$0xff]
    %v4799 = vld [vmem:[%s4756 + $0x150] sm:$0xff]
    %v4800 = vld [vmem:[%s4756 + $0x158] sm:$0xff]
    %v4801 = vld [vmem:[%s4756 + $0x160] sm:$0xff]
    %v4802 = vld [vmem:[%s4756 + $0x168] sm:$0xff]
    %v4803 = vld [vmem:[%s4756 + $0x170] sm:$0xff]
    %v4804 = vld [vmem:[%s4756 + $0x178] sm:$0xff]
    %v4805 = vld [vmem:[%s4756 + $0x180] sm:$0xff]
    %v4806 = vld [vmem:[%s4756 + $0x188] sm:$0xff]
    %v4807 = vld [vmem:[%s4756 + $0x190] sm:$0xff]
    %v4808 = vld [vmem:[%s4756 + $0x198] sm:$0xff]
    %v4809 = vld [vmem:[%s4756 + $0x1a0] sm:$0xff]
    %v4810 = vld [vmem:[%s4756 + $0x1a8] sm:$0xff]
    %v4811 = vld [vmem:[%s4756 + $0x1b0] sm:$0xff]
    %v4812 = vld [vmem:[%s4756 + $0x1b8] sm:$0xff]
    %v4813 = vld [vmem:[%s4756 + $0x1c0] sm:$0xff]
    %v4814 = vld [vmem:[%s4756 + $0x1c8] sm:$0xff]
    %v4815 = vld [vmem:[%s4756 + $0x1d0] sm:$0xff]
    %v4816 = vld [vmem:[%s4756 + $0x1d8] sm:$0xff]
    %v4817 = vld [vmem:[%s4756 + $0x1e0] sm:$0xff]
    %v4818 = vld [vmem:[%s4756 + $0x1e8] sm:$0xff]
    %v4819 = vld [vmem:[%s4756 + $0x1f0] sm:$0xff]
    %v4820 = vld [vmem:[%s4756 + $0x1f8] sm:$0xff]
    %s4821 = scalar_lea.vmem %s13, 16
    %v4822 = vld [vmem:[%s4821] sm:$0xff]
    %v4823 = vld [vmem:[%s4821 + $0x8] sm:$0xff]
    %v4826 = vlaneseq
    %v4827 = vshrl.u32 %v4826, 7
    %v4828 = vsub.s32 0, %v4827
    %v4829 = vrot.slane %v4822, %v4828
    %v4830 = vlaneseq
    %v4831 = vshrl.u32 %v4830, 7
    %v4832 = vsub.s32 1, %v4831
    %v4833 = vrot.slane %v4822, %v4832
    %v4834 = vlaneseq
    %v4835 = vshrl.u32 %v4834, 7
    %v4836 = vsub.s32 2, %v4835
    %v4837 = vrot.slane %v4822, %v4836
    %v4838 = vlaneseq
    %v4839 = vshrl.u32 %v4838, 7
    %v4840 = vsub.s32 3, %v4839
    %v4841 = vrot.slane %v4822, %v4840
    %v4842 = vlaneseq
    %v4843 = vshrl.u32 %v4842, 7
    %v4844 = vsub.s32 4, %v4843
    %v4845 = vrot.slane %v4822, %v4844
    %v4846 = vlaneseq
    %v4847 = vshrl.u32 %v4846, 7
    %v4848 = vsub.s32 5, %v4847
    %v4849 = vrot.slane %v4822, %v4848
    %v4850 = vlaneseq
    %v4851 = vshrl.u32 %v4850, 7
    %v4852 = vsub.s32 6, %v4851
    %v4853 = vrot.slane %v4822, %v4852
    %v4854 = vlaneseq
    %v4855 = vshrl.u32 %v4854, 7
    %v4856 = vsub.s32 7, %v4855
    %v4857 = vrot.slane %v4822, %v4856
    %v4858 = vlaneseq
    %v4859 = vshrl.u32 %v4858, 7
    %v4860 = vsub.s32 0, %v4859
    %v4861 = vrot.slane %v4823, %v4860
    %v4862 = vlaneseq
    %v4863 = vshrl.u32 %v4862, 7
    %v4864 = vsub.s32 1, %v4863
    %v4865 = vrot.slane %v4823, %v4864
    %v4866 = vlaneseq
    %v4867 = vshrl.u32 %v4866, 7
    %v4868 = vsub.s32 2, %v4867
    %v4869 = vrot.slane %v4823, %v4868
    %v4870 = vlaneseq
    %v4871 = vshrl.u32 %v4870, 7
    %v4872 = vsub.s32 3, %v4871
    %v4873 = vrot.slane %v4823, %v4872
    %v4874 = vlaneseq
    %v4875 = vshrl.u32 %v4874, 7
    %v4876 = vsub.s32 4, %v4875
    %v4877 = vrot.slane %v4823, %v4876
    %v4878 = vlaneseq
    %v4879 = vshrl.u32 %v4878, 7
    %v4880 = vsub.s32 5, %v4879
    %v4881 = vrot.slane %v4823, %v4880
    %v4882 = vlaneseq
    %v4883 = vshrl.u32 %v4882, 7
    %v4884 = vsub.s32 6, %v4883
    %v4885 = vrot.slane %v4823, %v4884
    %v4886 = vlaneseq
    %v4887 = vshrl.u32 %v4886, 7
    %v4888 = vsub.s32 7, %v4887
    %v4889 = vrot.slane %v4823, %v4888
    %v4970 = vunpack.c.l.b16 %v4757
    %v4971 = vunpack.c.h.b16 %v4757
    %v4972 = vunpack.c.l.b16 %v4758
    %v4973 = vunpack.c.h.b16 %v4758
    %v4974 = vunpack.c.l.b16 %v4759
    %v4975 = vunpack.c.h.b16 %v4759
    %v4976 = vunpack.c.l.b16 %v4760
    %v4977 = vunpack.c.h.b16 %v4760
    %v4978 = vunpack.c.l.b16 %v4761
    %v4979 = vunpack.c.h.b16 %v4761
    %v4980 = vunpack.c.l.b16 %v4762
    %v4981 = vunpack.c.h.b16 %v4762
    %v4982 = vunpack.c.l.b16 %v4763
    %v4983 = vunpack.c.h.b16 %v4763
    %v4984 = vunpack.c.l.b16 %v4764
    %v4985 = vunpack.c.h.b16 %v4764
    %v4986 = vunpack.c.l.b16 %v4765
    %v4987 = vunpack.c.h.b16 %v4765
    %v4988 = vunpack.c.l.b16 %v4766
    %v4989 = vunpack.c.h.b16 %v4766
    %v4990 = vunpack.c.l.b16 %v4767
    %v4991 = vunpack.c.h.b16 %v4767
    %v4992 = vunpack.c.l.b16 %v4768
    %v4993 = vunpack.c.h.b16 %v4768
    %v4994 = vunpack.c.l.b16 %v4769
    %v4995 = vunpack.c.h.b16 %v4769
    %v4996 = vunpack.c.l.b16 %v4770
    %v4997 = vunpack.c.h.b16 %v4770
    %v4998 = vunpack.c.l.b16 %v4771
    %v4999 = vunpack.c.h.b16 %v4771
    %v5000 = vunpack.c.l.b16 %v4772
    %v5001 = vunpack.c.h.b16 %v4772
    %v5002 = vunpack.c.l.b16 %v4773
    %v5003 = vunpack.c.h.b16 %v4773
    %v5004 = vunpack.c.l.b16 %v4774
    %v5005 = vunpack.c.h.b16 %v4774
    %v5006 = vunpack.c.l.b16 %v4775
    %v5007 = vunpack.c.h.b16 %v4775
    %v5008 = vunpack.c.l.b16 %v4776
    %v5009 = vunpack.c.h.b16 %v4776
    %v5010 = vunpack.c.l.b16 %v4777
    %v5011 = vunpack.c.h.b16 %v4777
    %v5012 = vunpack.c.l.b16 %v4778
    %v5013 = vunpack.c.h.b16 %v4778
    %v5014 = vunpack.c.l.b16 %v4779
    %v5015 = vunpack.c.h.b16 %v4779
    %v5016 = vunpack.c.l.b16 %v4780
    %v5017 = vunpack.c.h.b16 %v4780
    %v5018 = vunpack.c.l.b16 %v4781
    %v5019 = vunpack.c.h.b16 %v4781
    %v5020 = vunpack.c.l.b16 %v4782
    %v5021 = vunpack.c.h.b16 %v4782
    %v5022 = vunpack.c.l.b16 %v4783
    %v5023 = vunpack.c.h.b16 %v4783
    %v5024 = vunpack.c.l.b16 %v4784
    %v5025 = vunpack.c.h.b16 %v4784
    %v5026 = vunpack.c.l.b16 %v4785
    %v5027 = vunpack.c.h.b16 %v4785
    %v5028 = vunpack.c.l.b16 %v4786
    %v5029 = vunpack.c.h.b16 %v4786
    %v5030 = vunpack.c.l.b16 %v4787
    %v5031 = vunpack.c.h.b16 %v4787
    %v5032 = vunpack.c.l.b16 %v4788
    %v5033 = vunpack.c.h.b16 %v4788
    %v5034 = vunpack.c.l.b16 %v4789
    %v5035 = vunpack.c.h.b16 %v4789
    %v5036 = vunpack.c.l.b16 %v4790
    %v5037 = vunpack.c.h.b16 %v4790
    %v5038 = vunpack.c.l.b16 %v4791
    %v5039 = vunpack.c.h.b16 %v4791
    %v5040 = vunpack.c.l.b16 %v4792
    %v5041 = vunpack.c.h.b16 %v4792
    %v5042 = vunpack.c.l.b16 %v4793
    %v5043 = vunpack.c.h.b16 %v4793
    %v5044 = vunpack.c.l.b16 %v4794
    %v5045 = vunpack.c.h.b16 %v4794
    %v5046 = vunpack.c.l.b16 %v4795
    %v5047 = vunpack.c.h.b16 %v4795
    %v5048 = vunpack.c.l.b16 %v4796
    %v5049 = vunpack.c.h.b16 %v4796
    %v5050 = vunpack.c.l.b16 %v4797
    %v5051 = vunpack.c.h.b16 %v4797
    %v5052 = vunpack.c.l.b16 %v4798
    %v5053 = vunpack.c.h.b16 %v4798
    %v5054 = vunpack.c.l.b16 %v4799
    %v5055 = vunpack.c.h.b16 %v4799
    %v5056 = vunpack.c.l.b16 %v4800
    %v5057 = vunpack.c.h.b16 %v4800
    %v5058 = vunpack.c.l.b16 %v4801
    %v5059 = vunpack.c.h.b16 %v4801
    %v5060 = vunpack.c.l.b16 %v4802
    %v5061 = vunpack.c.h.b16 %v4802
    %v5062 = vunpack.c.l.b16 %v4803
    %v5063 = vunpack.c.h.b16 %v4803
    %v5064 = vunpack.c.l.b16 %v4804
    %v5065 = vunpack.c.h.b16 %v4804
    %v5066 = vunpack.c.l.b16 %v4805
    %v5067 = vunpack.c.h.b16 %v4805
    %v5068 = vunpack.c.l.b16 %v4806
    %v5069 = vunpack.c.h.b16 %v4806
    %v5070 = vunpack.c.l.b16 %v4807
    %v5071 = vunpack.c.h.b16 %v4807
    %v5072 = vunpack.c.l.b16 %v4808
    %v5073 = vunpack.c.h.b16 %v4808
    %v5074 = vunpack.c.l.b16 %v4809
    %v5075 = vunpack.c.h.b16 %v4809
    %v5076 = vunpack.c.l.b16 %v4810
    %v5077 = vunpack.c.h.b16 %v4810
    %v5078 = vunpack.c.l.b16 %v4811
    %v5079 = vunpack.c.h.b16 %v4811
    %v5080 = vunpack.c.l.b16 %v4812
    %v5081 = vunpack.c.h.b16 %v4812
    %v5082 = vunpack.c.l.b16 %v4813
    %v5083 = vunpack.c.h.b16 %v4813
    %v5084 = vunpack.c.l.b16 %v4814
    %v5085 = vunpack.c.h.b16 %v4814
    %v5086 = vunpack.c.l.b16 %v4815
    %v5087 = vunpack.c.h.b16 %v4815
    %v5088 = vunpack.c.l.b16 %v4816
    %v5089 = vunpack.c.h.b16 %v4816
    %v5090 = vunpack.c.l.b16 %v4817
    %v5091 = vunpack.c.h.b16 %v4817
    %v5092 = vunpack.c.l.b16 %v4818
    %v5093 = vunpack.c.h.b16 %v4818
    %v5094 = vunpack.c.l.b16 %v4819
    %v5095 = vunpack.c.h.b16 %v4819
    %v5096 = vunpack.c.l.b16 %v4820
    %v5097 = vunpack.c.h.b16 %v4820
    %v5098 = vpack.c.b16 %v4986, %v4970
    %v5099 = vpack.c.b16 %v4987, %v4971
    %v5100 = vpack.c.b16 %v4988, %v4972
    %v5101 = vpack.c.b16 %v4989, %v4973
    %v5102 = vpack.c.b16 %v4990, %v4974
    %v5103 = vpack.c.b16 %v4991, %v4975
    %v5104 = vpack.c.b16 %v4992, %v4976
    %v5105 = vpack.c.b16 %v4993, %v4977
    %v5106 = vpack.c.b16 %v4994, %v4978
    %v5107 = vpack.c.b16 %v4995, %v4979
    %v5108 = vpack.c.b16 %v4996, %v4980
    %v5109 = vpack.c.b16 %v4997, %v4981
    %v5110 = vpack.c.b16 %v4998, %v4982
    %v5111 = vpack.c.b16 %v4999, %v4983
    %v5112 = vpack.c.b16 %v5000, %v4984
    %v5113 = vpack.c.b16 %v5001, %v4985
    %v5114 = vpack.c.b16 %v5018, %v5002
    %v5115 = vpack.c.b16 %v5019, %v5003
    %v5116 = vpack.c.b16 %v5020, %v5004
    %v5117 = vpack.c.b16 %v5021, %v5005
    %v5118 = vpack.c.b16 %v5022, %v5006
    %v5119 = vpack.c.b16 %v5023, %v5007
    %v5120 = vpack.c.b16 %v5024, %v5008
    %v5121 = vpack.c.b16 %v5025, %v5009
    %v5122 = vpack.c.b16 %v5026, %v5010
    %v5123 = vpack.c.b16 %v5027, %v5011
    %v5124 = vpack.c.b16 %v5028, %v5012
    %v5125 = vpack.c.b16 %v5029, %v5013
    %v5126 = vpack.c.b16 %v5030, %v5014
    %v5127 = vpack.c.b16 %v5031, %v5015
    %v5128 = vpack.c.b16 %v5032, %v5016
    %v5129 = vpack.c.b16 %v5033, %v5017
    %v5130 = vpack.c.b16 %v5050, %v5034
    %v5131 = vpack.c.b16 %v5051, %v5035
    %v5132 = vpack.c.b16 %v5052, %v5036
    %v5133 = vpack.c.b16 %v5053, %v5037
    %v5134 = vpack.c.b16 %v5054, %v5038
    %v5135 = vpack.c.b16 %v5055, %v5039
    %v5136 = vpack.c.b16 %v5056, %v5040
    %v5137 = vpack.c.b16 %v5057, %v5041
    %v5138 = vpack.c.b16 %v5058, %v5042
    %v5139 = vpack.c.b16 %v5059, %v5043
    %v5140 = vpack.c.b16 %v5060, %v5044
    %v5141 = vpack.c.b16 %v5061, %v5045
    %v5142 = vpack.c.b16 %v5062, %v5046
    %v5143 = vpack.c.b16 %v5063, %v5047
    %v5144 = vpack.c.b16 %v5064, %v5048
    %v5145 = vpack.c.b16 %v5065, %v5049
    %v5146 = vpack.c.b16 %v5082, %v5066
    %v5147 = vpack.c.b16 %v5083, %v5067
    %v5148 = vpack.c.b16 %v5084, %v5068
    %v5149 = vpack.c.b16 %v5085, %v5069
    %v5150 = vpack.c.b16 %v5086, %v5070
    %v5151 = vpack.c.b16 %v5087, %v5071
    %v5152 = vpack.c.b16 %v5088, %v5072
    %v5153 = vpack.c.b16 %v5089, %v5073
    %v5154 = vpack.c.b16 %v5090, %v5074
    %v5155 = vpack.c.b16 %v5091, %v5075
    %v5156 = vpack.c.b16 %v5092, %v5076
    %v5157 = vpack.c.b16 %v5093, %v5077
    %v5158 = vpack.c.b16 %v5094, %v5078
    %v5159 = vpack.c.b16 %v5095, %v5079
    %v5160 = vpack.c.b16 %v5096, %v5080
    %v5161 = vpack.c.b16 %v5097, %v5081
    %v5227 = vsel %vm59, %v4755, 0
    %5229 = vmatprep.subr.bf16.mxu0 %v5099
    %5230 = vmatpush1.bf16.msra.mxu0 %v5098
    %5231 = vmatprep.subr.bf16.mxu0 %v5115
    %5232 = vmatpush1.bf16.msra.mxu0 %v5114
    %5233 = vmatprep.subr.bf16.mxu0 %v5131
    %5234 = vmatpush1.bf16.msra.mxu0 %v5130
    %5235 = vmatprep.subr.bf16.mxu0 %v5147
    %5236 = vmatpush1.bf16.msra.mxu0 %v5146
    %5237 = vmatprep.subr.bf16.mxu0 0
    %5238 = vmatpush1.bf16.msra.mxu0 0
    %5239 = vmatprep.subr.bf16.mxu0 0
    %5240 = vmatpush1.bf16.msra.mxu0 0
    %5241 = vmatprep.subr.bf16.mxu0 0
    %5242 = vmatpush1.bf16.msra.mxu0 0
    %5243 = vmatprep.subr.bf16.mxu0 0
    %5244 = vmatpush1.bf16.msra.mxu0 0
    %5245 = vmatprep.subr.bf16.mxu0 0
    %5246 = vmatpush1.bf16.msra.mxu0 0
    %5247 = vmatprep.subr.bf16.mxu0 0
    %5248 = vmatpush1.bf16.msra.mxu0 0
    %5249 = vmatprep.subr.bf16.mxu0 0
    %5250 = vmatpush1.bf16.msra.mxu0 0
    %5251 = vmatprep.subr.bf16.mxu0 0
    %5252 = vmatpush1.bf16.msra.mxu0 0
    %5253 = vmatprep.subr.bf16.mxu0 0
    %5254 = vmatpush1.bf16.msra.mxu0 0
    %5255 = vmatprep.subr.bf16.mxu0 0
    %5256 = vmatpush1.bf16.msra.mxu0 0
    %5257 = vmatprep.subr.bf16.mxu0 0
    %5258 = vmatpush1.bf16.msra.mxu0 0
    %5259 = vmatprep.subr.bf16.mxu0 0
    %5260 = vmatpush1.bf16.msra.mxu0 0
    %5261 = vmatprep.mubr.bf16.mxu0 0
    %5262 = vmatmul.mubr.bf16.gmra.mrb[0].mxu0 %v5227
    %v5263 = vpop.f32.mrb[0].mxu0
    %v5264 = vadd.f32 %v4829, %v5263
    %v5265 = vpop.f32.mrb[0].mxu0
    %v5266 = vadd.f32 %v4833, %v5265
    %v5267 = vpop.f32.mrb[0].mxu0
    %v5268 = vadd.f32 %v4829, %v5267
    %v5269 = vpop.f32.mrb[0].mxu0
    %v5270 = vadd.f32 %v4833, %v5269
    %5271 = vdwg.mxu0
    %5272 = vmatprep.subr.bf16.mxu0 %v5101
    %5273 = vmatpush1.bf16.msra.mxu0 %v5100
    %5274 = vmatprep.subr.bf16.mxu0 %v5117
    %5275 = vmatpush1.bf16.msra.mxu0 %v5116
    %5276 = vmatprep.subr.bf16.mxu0 %v5133
    %5277 = vmatpush1.bf16.msra.mxu0 %v5132
    %5278 = vmatprep.subr.bf16.mxu0 %v5149
    %5279 = vmatpush1.bf16.msra.mxu0 %v5148
    %5280 = vmatprep.subr.bf16.mxu0 0
    %5281 = vmatpush1.bf16.msra.mxu0 0
    %5282 = vmatprep.subr.bf16.mxu0 0
    %5283 = vmatpush1.bf16.msra.mxu0 0
    %5284 = vmatprep.subr.bf16.mxu0 0
    %5285 = vmatpush1.bf16.msra.mxu0 0
    %5286 = vmatprep.subr.bf16.mxu0 0
    %5287 = vmatpush1.bf16.msra.mxu0 0
    %5288 = vmatprep.subr.bf16.mxu0 0
    %5289 = vmatpush1.bf16.msra.mxu0 0
    %5290 = vmatprep.subr.bf16.mxu0 0
    %5291 = vmatpush1.bf16.msra.mxu0 0
    %5292 = vmatprep.subr.bf16.mxu0 0
    %5293 = vmatpush1.bf16.msra.mxu0 0
    %5294 = vmatprep.subr.bf16.mxu0 0
    %5295 = vmatpush1.bf16.msra.mxu0 0
    %5296 = vmatprep.subr.bf16.mxu0 0
    %5297 = vmatpush1.bf16.msra.mxu0 0
    %5298 = vmatprep.subr.bf16.mxu0 0
    %5299 = vmatpush1.bf16.msra.mxu0 0
    %5300 = vmatprep.subr.bf16.mxu0 0
    %5301 = vmatpush1.bf16.msra.mxu0 0
    %5302 = vmatprep.subr.bf16.mxu0 0
    %5303 = vmatpush1.bf16.msra.mxu0 0
    %5304 = vmatprep.mubr.bf16.mxu0 0
    %5305 = vmatmul.mubr.bf16.gmra.mrb[0].mxu0 %v5227
    %v5306 = vpop.f32.mrb[0].mxu0
    %v5307 = vadd.f32 %v4837, %v5306
    %v5308 = vpop.f32.mrb[0].mxu0
    %v5309 = vadd.f32 %v4841, %v5308
    %v5310 = vpop.f32.mrb[0].mxu0
    %v5311 = vadd.f32 %v4837, %v5310
    %v5312 = vpop.f32.mrb[0].mxu0
    %v5313 = vadd.f32 %v4841, %v5312
    %5314 = vdwg.mxu0
    %5315 = vmatprep.subr.bf16.mxu0 %v5103
    %5316 = vmatpush1.bf16.msra.mxu0 %v5102
    %5317 = vmatprep.subr.bf16.mxu0 %v5119
    %5318 = vmatpush1.bf16.msra.mxu0 %v5118
    %5319 = vmatprep.subr.bf16.mxu0 %v5135
    %5320 = vmatpush1.bf16.msra.mxu0 %v5134
    %5321 = vmatprep.subr.bf16.mxu0 %v5151
    %5322 = vmatpush1.bf16.msra.mxu0 %v5150
    %5323 = vmatprep.subr.bf16.mxu0 0
    %5324 = vmatpush1.bf16.msra.mxu0 0
    %5325 = vmatprep.subr.bf16.mxu0 0
    %5326 = vmatpush1.bf16.msra.mxu0 0
    %5327 = vmatprep.subr.bf16.mxu0 0
    %5328 = vmatpush1.bf16.msra.mxu0 0
    %5329 = vmatprep.subr.bf16.mxu0 0
    %5330 = vmatpush1.bf16.msra.mxu0 0
    %5331 = vmatprep.subr.bf16.mxu0 0
    %5332 = vmatpush1.bf16.msra.mxu0 0
    %5333 = vmatprep.subr.bf16.mxu0 0
    %5334 = vmatpush1.bf16.msra.mxu0 0
    %5335 = vmatprep.subr.bf16.mxu0 0
    %5336 = vmatpush1.bf16.msra.mxu0 0
    %5337 = vmatprep.subr.bf16.mxu0 0
    %5338 = vmatpush1.bf16.msra.mxu0 0
    %5339 = vmatprep.subr.bf16.mxu0 0
    %5340 = vmatpush1.bf16.msra.mxu0 0
    %5341 = vmatprep.subr.bf16.mxu0 0
    %5342 = vmatpush1.bf16.msra.mxu0 0
    %5343 = vmatprep.subr.bf16.mxu0 0
    %5344 = vmatpush1.bf16.msra.mxu0 0
    %5345 = vmatprep.subr.bf16.mxu0 0
    %5346 = vmatpush1.bf16.msra.mxu0 0
    %5347 = vmatprep.mubr.bf16.mxu0 0
    %5348 = vmatmul.mubr.bf16.gmra.mrb[0].mxu0 %v5227
    %v5349 = vpop.f32.mrb[0].mxu0
    %v5350 = vadd.f32 %v4845, %v5349
    %v5351 = vpop.f32.mrb[0].mxu0
    %v5352 = vadd.f32 %v4849, %v5351
    %v5353 = vpop.f32.mrb[0].mxu0
    %v5354 = vadd.f32 %v4845, %v5353
    %v5355 = vpop.f32.mrb[0].mxu0
    %v5356 = vadd.f32 %v4849, %v5355
    %5357 = vdwg.mxu0
    %5358 = vmatprep.subr.bf16.mxu0 %v5105
    %5359 = vmatpush1.bf16.msra.mxu0 %v5104
    %5360 = vmatprep.subr.bf16.mxu0 %v5121
    %5361 = vmatpush1.bf16.msra.mxu0 %v5120
    %5362 = vmatprep.subr.bf16.mxu0 %v5137
    %5363 = vmatpush1.bf16.msra.mxu0 %v5136
    %5364 = vmatprep.subr.bf16.mxu0 %v5153
    %5365 = vmatpush1.bf16.msra.mxu0 %v5152
    %5366 = vmatprep.subr.bf16.mxu0 0
    %5367 = vmatpush1.bf16.msra.mxu0 0
    %5368 = vmatprep.subr.bf16.mxu0 0
    %5369 = vmatpush1.bf16.msra.mxu0 0
    %5370 = vmatprep.subr.bf16.mxu0 0
    %5371 = vmatpush1.bf16.msra.mxu0 0
    %5372 = vmatprep.subr.bf16.mxu0 0
    %5373 = vmatpush1.bf16.msra.mxu0 0
    %5374 = vmatprep.subr.bf16.mxu0 0
    %5375 = vmatpush1.bf16.msra.mxu0 0
    %5376 = vmatprep.subr.bf16.mxu0 0
    %5377 = vmatpush1.bf16.msra.mxu0 0
    %5378 = vmatprep.subr.bf16.mxu0 0
    %5379 = vmatpush1.bf16.msra.mxu0 0
    %5380 = vmatprep.subr.bf16.mxu0 0
    %5381 = vmatpush1.bf16.msra.mxu0 0
    %5382 = vmatprep.subr.bf16.mxu0 0
    %5383 = vmatpush1.bf16.msra.mxu0 0
    %5384 = vmatprep.subr.bf16.mxu0 0
    %5385 = vmatpush1.bf16.msra.mxu0 0
    %5386 = vmatprep.subr.bf16.mxu0 0
    %5387 = vmatpush1.bf16.msra.mxu0 0
    %5388 = vmatprep.subr.bf16.mxu0 0
    %5389 = vmatpush1.bf16.msra.mxu0 0
    %5390 = vmatprep.mubr.bf16.mxu0 0
    %5391 = vmatmul.mubr.bf16.gmra.mrb[0].mxu0 %v5227
    %v5392 = vpop.f32.mrb[0].mxu0
    %v5393 = vadd.f32 %v4853, %v5392
    %v5394 = vpop.f32.mrb[0].mxu0
    %v5395 = vadd.f32 %v4857, %v5394
    %v5396 = vpop.f32.mrb[0].mxu0
    %v5397 = vadd.f32 %v4853, %v5396
    %v5398 = vpop.f32.mrb[0].mxu0
    %v5399 = vadd.f32 %v4857, %v5398
    %5400 = vdwg.mxu0
    %5401 = vmatprep.subr.bf16.mxu0 %v5107
    %5402 = vmatpush1.bf16.msra.mxu0 %v5106
    %5403 = vmatprep.subr.bf16.mxu0 %v5123
    %5404 = vmatpush1.bf16.msra.mxu0 %v5122
    %5405 = vmatprep.subr.bf16.mxu0 %v5139
    %5406 = vmatpush1.bf16.msra.mxu0 %v5138
    %5407 = vmatprep.subr.bf16.mxu0 %v5155
    %5408 = vmatpush1.bf16.msra.mxu0 %v5154
    %5409 = vmatprep.subr.bf16.mxu0 0
    %5410 = vmatpush1.bf16.msra.mxu0 0
    %5411 = vmatprep.subr.bf16.mxu0 0
    %5412 = vmatpush1.bf16.msra.mxu0 0
    %5413 = vmatprep.subr.bf16.mxu0 0
    %5414 = vmatpush1.bf16.msra.mxu0 0
    %5415 = vmatprep.subr.bf16.mxu0 0
    %5416 = vmatpush1.bf16.msra.mxu0 0
    %5417 = vmatprep.subr.bf16.mxu0 0
    %5418 = vmatpush1.bf16.msra.mxu0 0
    %5419 = vmatprep.subr.bf16.mxu0 0
    %5420 = vmatpush1.bf16.msra.mxu0 0
    %5421 = vmatprep.subr.bf16.mxu0 0
    %5422 = vmatpush1.bf16.msra.mxu0 0
    %5423 = vmatprep.subr.bf16.mxu0 0
    %5424 = vmatpush1.bf16.msra.mxu0 0
    %5425 = vmatprep.subr.bf16.mxu0 0
    %5426 = vmatpush1.bf16.msra.mxu0 0
    %5427 = vmatprep.subr.bf16.mxu0 0
    %5428 = vmatpush1.bf16.msra.mxu0 0
    %5429 = vmatprep.subr.bf16.mxu0 0
    %5430 = vmatpush1.bf16.msra.mxu0 0
    %5431 = vmatprep.subr.bf16.mxu0 0
    %5432 = vmatpush1.bf16.msra.mxu0 0
    %5433 = vmatprep.mubr.bf16.mxu0 0
    %5434 = vmatmul.mubr.bf16.gmra.mrb[0].mxu0 %v5227
    %v5435 = vpop.f32.mrb[0].mxu0
    %v5436 = vadd.f32 %v4861, %v5435
    %v5437 = vpop.f32.mrb[0].mxu0
    %v5438 = vadd.f32 %v4865, %v5437
    %v5439 = vpop.f32.mrb[0].mxu0
    %v5440 = vadd.f32 %v4861, %v5439
    %v5441 = vpop.f32.mrb[0].mxu0
    %v5442 = vadd.f32 %v4865, %v5441
    %5443 = vdwg.mxu0
    %5444 = vmatprep.subr.bf16.mxu0 %v5109
    %5445 = vmatpush1.bf16.msra.mxu0 %v5108
    %5446 = vmatprep.subr.bf16.mxu0 %v5125
    %5447 = vmatpush1.bf16.msra.mxu0 %v5124
    %5448 = vmatprep.subr.bf16.mxu0 %v5141
    %5449 = vmatpush1.bf16.msra.mxu0 %v5140
    %5450 = vmatprep.subr.bf16.mxu0 %v5157
    %5451 = vmatpush1.bf16.msra.mxu0 %v5156
    %5452 = vmatprep.subr.bf16.mxu0 0
    %5453 = vmatpush1.bf16.msra.mxu0 0
    %5454 = vmatprep.subr.bf16.mxu0 0
    %5455 = vmatpush1.bf16.msra.mxu0 0
    %5456 = vmatprep.subr.bf16.mxu0 0
    %5457 = vmatpush1.bf16.msra.mxu0 0
    %5458 = vmatprep.subr.bf16.mxu0 0
    %5459 = vmatpush1.bf16.msra.mxu0 0
    %5460 = vmatprep.subr.bf16.mxu0 0
    %5461 = vmatpush1.bf16.msra.mxu0 0
    %5462 = vmatprep.subr.bf16.mxu0 0
    %5463 = vmatpush1.bf16.msra.mxu0 0
    %5464 = vmatprep.subr.bf16.mxu0 0
    %5465 = vmatpush1.bf16.msra.mxu0 0
    %5466 = vmatprep.subr.bf16.mxu0 0
    %5467 = vmatpush1.bf16.msra.mxu0 0
    %5468 = vmatprep.subr.bf16.mxu0 0
    %5469 = vmatpush1.bf16.msra.mxu0 0
    %5470 = vmatprep.subr.bf16.mxu0 0
    %5471 = vmatpush1.bf16.msra.mxu0 0
    %5472 = vmatprep.subr.bf16.mxu0 0
    %5473 = vmatpush1.bf16.msra.mxu0 0
    %5474 = vmatprep.subr.bf16.mxu0 0
    %5475 = vmatpush1.bf16.msra.mxu0 0
    %5476 = vmatprep.mubr.bf16.mxu0 0
    %5477 = vmatmul.mubr.bf16.gmra.mrb[0].mxu0 %v5227
    %v5478 = vpop.f32.mrb[0].mxu0
    %v5479 = vadd.f32 %v4869, %v5478
    %v5480 = vpop.f32.mrb[0].mxu0
    %v5481 = vadd.f32 %v4873, %v5480
    %v5482 = vpop.f32.mrb[0].mxu0
    %v5483 = vadd.f32 %v4869, %v5482
    %v5484 = vpop.f32.mrb[0].mxu0
    %v5485 = vadd.f32 %v4873, %v5484
    %5486 = vdwg.mxu0
    %5487 = vmatprep.subr.bf16.mxu0 %v5111
    %5488 = vmatpush1.bf16.msra.mxu0 %v5110
    %5489 = vmatprep.subr.bf16.mxu0 %v5127
    %5490 = vmatpush1.bf16.msra.mxu0 %v5126
    %5491 = vmatprep.subr.bf16.mxu0 %v5143
    %5492 = vmatpush1.bf16.msra.mxu0 %v5142
    %5493 = vmatprep.subr.bf16.mxu0 %v5159
    %5494 = vmatpush1.bf16.msra.mxu0 %v5158
    %5495 = vmatprep.subr.bf16.mxu0 0
    %5496 = vmatpush1.bf16.msra.mxu0 0
    %5497 = vmatprep.subr.bf16.mxu0 0
    %5498 = vmatpush1.bf16.msra.mxu0 0
    %5499 = vmatprep.subr.bf16.mxu0 0
    %5500 = vmatpush1.bf16.msra.mxu0 0
    %5501 = vmatprep.subr.bf16.mxu0 0
    %5502 = vmatpush1.bf16.msra.mxu0 0
    %5503 = vmatprep.subr.bf16.mxu0 0
    %5504 = vmatpush1.bf16.msra.mxu0 0
    %5505 = vmatprep.subr.bf16.mxu0 0
    %5506 = vmatpush1.bf16.msra.mxu0 0
    %5507 = vmatprep.subr.bf16.mxu0 0
    %5508 = vmatpush1.bf16.msra.mxu0 0
    %5509 = vmatprep.subr.bf16.mxu0 0
    %5510 = vmatpush1.bf16.msra.mxu0 0
    %5511 = vmatprep.subr.bf16.mxu0 0
    %5512 = vmatpush1.bf16.msra.mxu0 0
    %5513 = vmatprep.subr.bf16.mxu0 0
    %5514 = vmatpush1.bf16.msra.mxu0 0
    %5515 = vmatprep.subr.bf16.mxu0 0
    %5516 = vmatpush1.bf16.msra.mxu0 0
    %5517 = vmatprep.subr.bf16.mxu0 0
    %5518 = vmatpush1.bf16.msra.mxu0 0
    %5519 = vmatprep.mubr.bf16.mxu0 0
    %5520 = vmatmul.mubr.bf16.gmra.mrb[0].mxu0 %v5227
    %v5521 = vpop.f32.mrb[0].mxu0
    %v5522 = vadd.f32 %v4877, %v5521
    %v5523 = vpop.f32.mrb[0].mxu0
    %v5524 = vadd.f32 %v4881, %v5523
    %v5525 = vpop.f32.mrb[0].mxu0
    %v5526 = vadd.f32 %v4877, %v5525
    %v5527 = vpop.f32.mrb[0].mxu0
    %v5528 = vadd.f32 %v4881, %v5527
    %5529 = vdwg.mxu0
    %5530 = vmatprep.subr.bf16.mxu0 %v5113
    %5531 = vmatpush1.bf16.msra.mxu0 %v5112
    %5532 = vmatprep.subr.bf16.mxu0 %v5129
    %5533 = vmatpush1.bf16.msra.mxu0 %v5128
    %5534 = vmatprep.subr.bf16.mxu0 %v5145
    %5535 = vmatpush1.bf16.msra.mxu0 %v5144
    %5536 = vmatprep.subr.bf16.mxu0 %v5161
    %5537 = vmatpush1.bf16.msra.mxu0 %v5160
    %5538 = vmatprep.subr.bf16.mxu0 0
    %5539 = vmatpush1.bf16.msra.mxu0 0
    %5540 = vmatprep.subr.bf16.mxu0 0
    %5541 = vmatpush1.bf16.msra.mxu0 0
    %5542 = vmatprep.subr.bf16.mxu0 0
    %5543 = vmatpush1.bf16.msra.mxu0 0
    %5544 = vmatprep.subr.bf16.mxu0 0
    %5545 = vmatpush1.bf16.msra.mxu0 0
    %5546 = vmatprep.subr.bf16.mxu0 0
    %5547 = vmatpush1.bf16.msra.mxu0 0
    %5548 = vmatprep.subr.bf16.mxu0 0
    %5549 = vmatpush1.bf16.msra.mxu0 0
    %5550 = vmatprep.subr.bf16.mxu0 0
    %5551 = vmatpush1.bf16.msra.mxu0 0
    %5552 = vmatprep.subr.bf16.mxu0 0
    %5553 = vmatpush1.bf16.msra.mxu0 0
    %5554 = vmatprep.subr.bf16.mxu0 0
    %5555 = vmatpush1.bf16.msra.mxu0 0
    %5556 = vmatprep.subr.bf16.mxu0 0
    %5557 = vmatpush1.bf16.msra.mxu0 0
    %5558 = vmatprep.subr.bf16.mxu0 0
    %5559 = vmatpush1.bf16.msra.mxu0 0
    %5560 = vmatprep.subr.bf16.mxu0 0
    %5561 = vmatpush1.bf16.msra.mxu0 0
    %5562 = vmatprep.mubr.bf16.mxu0 0
    %5563 = vmatmul.mubr.bf16.gmra.mrb[0].mxu0 %v5227
    %v5564 = vpop.f32.mrb[0].mxu0
    %v5565 = vadd.f32 %v4885, %v5564
    %v5566 = vpop.f32.mrb[0].mxu0
    %v5567 = vadd.f32 %v4889, %v5566
    %v5568 = vpop.f32.mrb[0].mxu0
    %v5569 = vadd.f32 %v4885, %v5568
    %v5570 = vpop.f32.mrb[0].mxu0
    %v5571 = vadd.f32 %v4889, %v5570
    %5572 = vdwg.mxu0
    %v5573 = vmax.f32 %v5264, 0.0
    %v5574 = vmax.f32 %v5266, 0.0
    %v5575 = vmax.f32 %v5307, 0.0
    %v5576 = vmax.f32 %v5309, 0.0
    %v5577 = vmax.f32 %v5350, 0.0
    %v5578 = vmax.f32 %v5352, 0.0
    %v5579 = vmax.f32 %v5393, 0.0
    %v5580 = vmax.f32 %v5395, 0.0
    %v5581 = vmax.f32 %v5436, 0.0
    %v5582 = vmax.f32 %v5438, 0.0
    %v5583 = vmax.f32 %v5479, 0.0
    %v5584 = vmax.f32 %v5481, 0.0
    %v5585 = vmax.f32 %v5522, 0.0
    %v5586 = vmax.f32 %v5524, 0.0
    %v5587 = vmax.f32 %v5565, 0.0
    %v5588 = vmax.f32 %v5567, 0.0
    %v5589 = vmax.f32 %v5268, 0.0
    %v5590 = vmax.f32 %v5270, 0.0
    %v5591 = vmax.f32 %v5311, 0.0
    %v5592 = vmax.f32 %v5313, 0.0
    %v5593 = vmax.f32 %v5354, 0.0
    %v5594 = vmax.f32 %v5356, 0.0
    %v5595 = vmax.f32 %v5397, 0.0
    %v5596 = vmax.f32 %v5399, 0.0
    %v5597 = vmax.f32 %v5440, 0.0
    %v5598 = vmax.f32 %v5442, 0.0
    %v5599 = vmax.f32 %v5483, 0.0
    %v5600 = vmax.f32 %v5485, 0.0
    %v5601 = vmax.f32 %v5526, 0.0
    %v5602 = vmax.f32 %v5528, 0.0
    %v5603 = vmax.f32 %v5569, 0.0
    %v5604 = vmax.f32 %v5571, 0.0
    %v5605 = vpack.c.bf16 %v5589, %v5573
    %v5606 = vpack.c.bf16 %v5590, %v5574
    %v5607 = vpack.c.bf16 %v5591, %v5575
    %v5608 = vpack.c.bf16 %v5592, %v5576
    %v5609 = vpack.c.bf16 %v5593, %v5577
    %v5610 = vpack.c.bf16 %v5594, %v5578
    %v5611 = vpack.c.bf16 %v5595, %v5579
    %v5612 = vpack.c.bf16 %v5596, %v5580
    %v5613 = vpack.c.bf16 %v5597, %v5581
    %v5614 = vpack.c.bf16 %v5598, %v5582
    %v5615 = vpack.c.bf16 %v5599, %v5583
    %v5616 = vpack.c.bf16 %v5600, %v5584
    %v5617 = vpack.c.bf16 %v5601, %v5585
    %v5618 = vpack.c.bf16 %v5602, %v5586
    %v5619 = vpack.c.bf16 %v5603, %v5587
    %v5620 = vpack.c.bf16 %v5604, %v5588
    %s5621 = scalar_lea.vmem %s14, 1024
    %v5622 = vld [vmem:[%s5621] sm:$0xf]
    %v5623 = vld [vmem:[%s5621 + $0x4] sm:$0xf]
    %v5624 = vld [vmem:[%s5621 + $0x8] sm:$0xf]
    %v5625 = vld [vmem:[%s5621 + $0xc] sm:$0xf]
    %v5626 = vld [vmem:[%s5621 + $0x10] sm:$0xf]
    %v5627 = vld [vmem:[%s5621 + $0x14] sm:$0xf]
    %v5628 = vld [vmem:[%s5621 + $0x18] sm:$0xf]
    %v5629 = vld [vmem:[%s5621 + $0x1c] sm:$0xf]
    %v5630 = vld [vmem:[%s5621 + $0x20] sm:$0xf]
    %v5631 = vld [vmem:[%s5621 + $0x24] sm:$0xf]
    %v5632 = vld [vmem:[%s5621 + $0x28] sm:$0xf]
    %v5633 = vld [vmem:[%s5621 + $0x2c] sm:$0xf]
    %v5634 = vld [vmem:[%s5621 + $0x30] sm:$0xf]
    %v5635 = vld [vmem:[%s5621 + $0x34] sm:$0xf]
    %v5636 = vld [vmem:[%s5621 + $0x38] sm:$0xf]
    %v5637 = vld [vmem:[%s5621 + $0x3c] sm:$0xf]
    %v5638 = vld [vmem:[%s5621 + $0x40] sm:$0xf]
    %v5639 = vld [vmem:[%s5621 + $0x44] sm:$0xf]
    %v5640 = vld [vmem:[%s5621 + $0x48] sm:$0xf]
    %v5641 = vld [vmem:[%s5621 + $0x4c] sm:$0xf]
    %v5642 = vld [vmem:[%s5621 + $0x50] sm:$0xf]
    %v5643 = vld [vmem:[%s5621 + $0x54] sm:$0xf]
    %v5644 = vld [vmem:[%s5621 + $0x58] sm:$0xf]
    %v5645 = vld [vmem:[%s5621 + $0x5c] sm:$0xf]
    %v5646 = vld [vmem:[%s5621 + $0x60] sm:$0xf]
    %v5647 = vld [vmem:[%s5621 + $0x64] sm:$0xf]
    %v5648 = vld [vmem:[%s5621 + $0x68] sm:$0xf]
    %v5649 = vld [vmem:[%s5621 + $0x6c] sm:$0xf]
    %v5650 = vld [vmem:[%s5621 + $0x70] sm:$0xf]
    %v5651 = vld [vmem:[%s5621 + $0x74] sm:$0xf]
    %v5652 = vld [vmem:[%s5621 + $0x78] sm:$0xf]
    %v5653 = vld [vmem:[%s5621 + $0x7c] sm:$0xf]
    %v5654 = vld [vmem:[%s5621 + $0x80] sm:$0xf]
    %v5655 = vld [vmem:[%s5621 + $0x84] sm:$0xf]
    %v5656 = vld [vmem:[%s5621 + $0x88] sm:$0xf]
    %v5657 = vld [vmem:[%s5621 + $0x8c] sm:$0xf]
    %v5658 = vld [vmem:[%s5621 + $0x90] sm:$0xf]
    %v5659 = vld [vmem:[%s5621 + $0x94] sm:$0xf]
    %v5660 = vld [vmem:[%s5621 + $0x98] sm:$0xf]
    %v5661 = vld [vmem:[%s5621 + $0x9c] sm:$0xf]
    %v5662 = vld [vmem:[%s5621 + $0xa0] sm:$0xf]
    %v5663 = vld [vmem:[%s5621 + $0xa4] sm:$0xf]
    %v5664 = vld [vmem:[%s5621 + $0xa8] sm:$0xf]
    %v5665 = vld [vmem:[%s5621 + $0xac] sm:$0xf]
    %v5666 = vld [vmem:[%s5621 + $0xb0] sm:$0xf]
    %v5667 = vld [vmem:[%s5621 + $0xb4] sm:$0xf]
    %v5668 = vld [vmem:[%s5621 + $0xb8] sm:$0xf]
    %v5669 = vld [vmem:[%s5621 + $0xbc] sm:$0xf]
    %v5670 = vld [vmem:[%s5621 + $0xc0] sm:$0xf]
    %v5671 = vld [vmem:[%s5621 + $0xc4] sm:$0xf]
    %v5672 = vld [vmem:[%s5621 + $0xc8] sm:$0xf]
    %v5673 = vld [vmem:[%s5621 + $0xcc] sm:$0xf]
    %v5674 = vld [vmem:[%s5621 + $0xd0] sm:$0xf]
    %v5675 = vld [vmem:[%s5621 + $0xd4] sm:$0xf]
    %v5676 = vld [vmem:[%s5621 + $0xd8] sm:$0xf]
    %v5677 = vld [vmem:[%s5621 + $0xdc] sm:$0xf]
    %v5678 = vld [vmem:[%s5621 + $0xe0] sm:$0xf]
    %v5679 = vld [vmem:[%s5621 + $0xe4] sm:$0xf]
    %v5680 = vld [vmem:[%s5621 + $0xe8] sm:$0xf]
    %v5681 = vld [vmem:[%s5621 + $0xec] sm:$0xf]
    %v5682 = vld [vmem:[%s5621 + $0xf0] sm:$0xf]
    %v5683 = vld [vmem:[%s5621 + $0xf4] sm:$0xf]
    %v5684 = vld [vmem:[%s5621 + $0xf8] sm:$0xf]
    %v5685 = vld [vmem:[%s5621 + $0xfc] sm:$0xf]
    %v5686 = vld [vmem:[%s5621 + $0x100] sm:$0xf]
    %v5687 = vld [vmem:[%s5621 + $0x104] sm:$0xf]
    %v5688 = vld [vmem:[%s5621 + $0x108] sm:$0xf]
    %v5689 = vld [vmem:[%s5621 + $0x10c] sm:$0xf]
    %v5690 = vld [vmem:[%s5621 + $0x110] sm:$0xf]
    %v5691 = vld [vmem:[%s5621 + $0x114] sm:$0xf]
    %v5692 = vld [vmem:[%s5621 + $0x118] sm:$0xf]
    %v5693 = vld [vmem:[%s5621 + $0x11c] sm:$0xf]
    %v5694 = vld [vmem:[%s5621 + $0x120] sm:$0xf]
    %v5695 = vld [vmem:[%s5621 + $0x124] sm:$0xf]
    %v5696 = vld [vmem:[%s5621 + $0x128] sm:$0xf]
    %v5697 = vld [vmem:[%s5621 + $0x12c] sm:$0xf]
    %v5698 = vld [vmem:[%s5621 + $0x130] sm:$0xf]
    %v5699 = vld [vmem:[%s5621 + $0x134] sm:$0xf]
    %v5700 = vld [vmem:[%s5621 + $0x138] sm:$0xf]
    %v5701 = vld [vmem:[%s5621 + $0x13c] sm:$0xf]
    %v5702 = vld [vmem:[%s5621 + $0x140] sm:$0xf]
    %v5703 = vld [vmem:[%s5621 + $0x144] sm:$0xf]
    %v5704 = vld [vmem:[%s5621 + $0x148] sm:$0xf]
    %v5705 = vld [vmem:[%s5621 + $0x14c] sm:$0xf]
    %v5706 = vld [vmem:[%s5621 + $0x150] sm:$0xf]
    %v5707 = vld [vmem:[%s5621 + $0x154] sm:$0xf]
    %v5708 = vld [vmem:[%s5621 + $0x158] sm:$0xf]
    %v5709 = vld [vmem:[%s5621 + $0x15c] sm:$0xf]
    %v5710 = vld [vmem:[%s5621 + $0x160] sm:$0xf]
    %v5711 = vld [vmem:[%s5621 + $0x164] sm:$0xf]
    %v5712 = vld [vmem:[%s5621 + $0x168] sm:$0xf]
    %v5713 = vld [vmem:[%s5621 + $0x16c] sm:$0xf]
    %v5714 = vld [vmem:[%s5621 + $0x170] sm:$0xf]
    %v5715 = vld [vmem:[%s5621 + $0x174] sm:$0xf]
    %v5716 = vld [vmem:[%s5621 + $0x178] sm:$0xf]
    %v5717 = vld [vmem:[%s5621 + $0x17c] sm:$0xf]
    %v5718 = vld [vmem:[%s5621 + $0x180] sm:$0xf]
    %v5719 = vld [vmem:[%s5621 + $0x184] sm:$0xf]
    %v5720 = vld [vmem:[%s5621 + $0x188] sm:$0xf]
    %v5721 = vld [vmem:[%s5621 + $0x18c] sm:$0xf]
    %v5722 = vld [vmem:[%s5621 + $0x190] sm:$0xf]
    %v5723 = vld [vmem:[%s5621 + $0x194] sm:$0xf]
    %v5724 = vld [vmem:[%s5621 + $0x198] sm:$0xf]
    %v5725 = vld [vmem:[%s5621 + $0x19c] sm:$0xf]
    %v5726 = vld [vmem:[%s5621 + $0x1a0] sm:$0xf]
    %v5727 = vld [vmem:[%s5621 + $0x1a4] sm:$0xf]
    %v5728 = vld [vmem:[%s5621 + $0x1a8] sm:$0xf]
    %v5729 = vld [vmem:[%s5621 + $0x1ac] sm:$0xf]
    %v5730 = vld [vmem:[%s5621 + $0x1b0] sm:$0xf]
    %v5731 = vld [vmem:[%s5621 + $0x1b4] sm:$0xf]
    %v5732 = vld [vmem:[%s5621 + $0x1b8] sm:$0xf]
    %v5733 = vld [vmem:[%s5621 + $0x1bc] sm:$0xf]
    %v5734 = vld [vmem:[%s5621 + $0x1c0] sm:$0xf]
    %v5735 = vld [vmem:[%s5621 + $0x1c4] sm:$0xf]
    %v5736 = vld [vmem:[%s5621 + $0x1c8] sm:$0xf]
    %v5737 = vld [vmem:[%s5621 + $0x1cc] sm:$0xf]
    %v5738 = vld [vmem:[%s5621 + $0x1d0] sm:$0xf]
    %v5739 = vld [vmem:[%s5621 + $0x1d4] sm:$0xf]
    %v5740 = vld [vmem:[%s5621 + $0x1d8] sm:$0xf]
    %v5741 = vld [vmem:[%s5621 + $0x1dc] sm:$0xf]
    %v5742 = vld [vmem:[%s5621 + $0x1e0] sm:$0xf]
    %v5743 = vld [vmem:[%s5621 + $0x1e4] sm:$0xf]
    %v5744 = vld [vmem:[%s5621 + $0x1e8] sm:$0xf]
    %v5745 = vld [vmem:[%s5621 + $0x1ec] sm:$0xf]
    %v5746 = vld [vmem:[%s5621 + $0x1f0] sm:$0xf]
    %v5747 = vld [vmem:[%s5621 + $0x1f4] sm:$0xf]
    %v5748 = vld [vmem:[%s5621 + $0x1f8] sm:$0xf]
    %v5749 = vld [vmem:[%s5621 + $0x1fc] sm:$0xf]
    %v5750 = vld [vmem:[%s5621 + $0x200] sm:$0xf]
    %v5751 = vld [vmem:[%s5621 + $0x204] sm:$0xf]
    %v5752 = vld [vmem:[%s5621 + $0x208] sm:$0xf]
    %v5753 = vld [vmem:[%s5621 + $0x20c] sm:$0xf]
    %v5754 = vld [vmem:[%s5621 + $0x210] sm:$0xf]
    %v5755 = vld [vmem:[%s5621 + $0x214] sm:$0xf]
    %v5756 = vld [vmem:[%s5621 + $0x218] sm:$0xf]
    %v5757 = vld [vmem:[%s5621 + $0x21c] sm:$0xf]
    %v5758 = vld [vmem:[%s5621 + $0x220] sm:$0xf]
    %v5759 = vld [vmem:[%s5621 + $0x224] sm:$0xf]
    %v5760 = vld [vmem:[%s5621 + $0x228] sm:$0xf]
    %v5761 = vld [vmem:[%s5621 + $0x22c] sm:$0xf]
    %v5762 = vld [vmem:[%s5621 + $0x230] sm:$0xf]
    %v5763 = vld [vmem:[%s5621 + $0x234] sm:$0xf]
    %v5764 = vld [vmem:[%s5621 + $0x238] sm:$0xf]
    %v5765 = vld [vmem:[%s5621 + $0x23c] sm:$0xf]
    %v5766 = vld [vmem:[%s5621 + $0x240] sm:$0xf]
    %v5767 = vld [vmem:[%s5621 + $0x244] sm:$0xf]
    %v5768 = vld [vmem:[%s5621 + $0x248] sm:$0xf]
    %v5769 = vld [vmem:[%s5621 + $0x24c] sm:$0xf]
    %v5770 = vld [vmem:[%s5621 + $0x250] sm:$0xf]
    %v5771 = vld [vmem:[%s5621 + $0x254] sm:$0xf]
    %v5772 = vld [vmem:[%s5621 + $0x258] sm:$0xf]
    %v5773 = vld [vmem:[%s5621 + $0x25c] sm:$0xf]
    %v5774 = vld [vmem:[%s5621 + $0x260] sm:$0xf]
    %v5775 = vld [vmem:[%s5621 + $0x264] sm:$0xf]
    %v5776 = vld [vmem:[%s5621 + $0x268] sm:$0xf]
    %v5777 = vld [vmem:[%s5621 + $0x26c] sm:$0xf]
    %v5778 = vld [vmem:[%s5621 + $0x270] sm:$0xf]
    %v5779 = vld [vmem:[%s5621 + $0x274] sm:$0xf]
    %v5780 = vld [vmem:[%s5621 + $0x278] sm:$0xf]
    %v5781 = vld [vmem:[%s5621 + $0x27c] sm:$0xf]
    %v5782 = vld [vmem:[%s5621 + $0x280] sm:$0xf]
    %v5783 = vld [vmem:[%s5621 + $0x284] sm:$0xf]
    %v5784 = vld [vmem:[%s5621 + $0x288] sm:$0xf]
    %v5785 = vld [vmem:[%s5621 + $0x28c] sm:$0xf]
    %v5786 = vld [vmem:[%s5621 + $0x290] sm:$0xf]
    %v5787 = vld [vmem:[%s5621 + $0x294] sm:$0xf]
    %v5788 = vld [vmem:[%s5621 + $0x298] sm:$0xf]
    %v5789 = vld [vmem:[%s5621 + $0x29c] sm:$0xf]
    %v5790 = vld [vmem:[%s5621 + $0x2a0] sm:$0xf]
    %v5791 = vld [vmem:[%s5621 + $0x2a4] sm:$0xf]
    %v5792 = vld [vmem:[%s5621 + $0x2a8] sm:$0xf]
    %v5793 = vld [vmem:[%s5621 + $0x2ac] sm:$0xf]
    %v5794 = vld [vmem:[%s5621 + $0x2b0] sm:$0xf]
    %v5795 = vld [vmem:[%s5621 + $0x2b4] sm:$0xf]
    %v5796 = vld [vmem:[%s5621 + $0x2b8] sm:$0xf]
    %v5797 = vld [vmem:[%s5621 + $0x2bc] sm:$0xf]
    %v5798 = vld [vmem:[%s5621 + $0x2c0] sm:$0xf]
    %v5799 = vld [vmem:[%s5621 + $0x2c4] sm:$0xf]
    %v5800 = vld [vmem:[%s5621 + $0x2c8] sm:$0xf]
    %v5801 = vld [vmem:[%s5621 + $0x2cc] sm:$0xf]
    %v5802 = vld [vmem:[%s5621 + $0x2d0] sm:$0xf]
    %v5803 = vld [vmem:[%s5621 + $0x2d4] sm:$0xf]
    %v5804 = vld [vmem:[%s5621 + $0x2d8] sm:$0xf]
    %v5805 = vld [vmem:[%s5621 + $0x2dc] sm:$0xf]
    %v5806 = vld [vmem:[%s5621 + $0x2e0] sm:$0xf]
    %v5807 = vld [vmem:[%s5621 + $0x2e4] sm:$0xf]
    %v5808 = vld [vmem:[%s5621 + $0x2e8] sm:$0xf]
    %v5809 = vld [vmem:[%s5621 + $0x2ec] sm:$0xf]
    %v5810 = vld [vmem:[%s5621 + $0x2f0] sm:$0xf]
    %v5811 = vld [vmem:[%s5621 + $0x2f4] sm:$0xf]
    %v5812 = vld [vmem:[%s5621 + $0x2f8] sm:$0xf]
    %v5813 = vld [vmem:[%s5621 + $0x2fc] sm:$0xf]
    %v5814 = vld [vmem:[%s5621 + $0x300] sm:$0xf]
    %v5815 = vld [vmem:[%s5621 + $0x304] sm:$0xf]
    %v5816 = vld [vmem:[%s5621 + $0x308] sm:$0xf]
    %v5817 = vld [vmem:[%s5621 + $0x30c] sm:$0xf]
    %v5818 = vld [vmem:[%s5621 + $0x310] sm:$0xf]
    %v5819 = vld [vmem:[%s5621 + $0x314] sm:$0xf]
    %v5820 = vld [vmem:[%s5621 + $0x318] sm:$0xf]
    %v5821 = vld [vmem:[%s5621 + $0x31c] sm:$0xf]
    %v5822 = vld [vmem:[%s5621 + $0x320] sm:$0xf]
    %v5823 = vld [vmem:[%s5621 + $0x324] sm:$0xf]
    %v5824 = vld [vmem:[%s5621 + $0x328] sm:$0xf]
    %v5825 = vld [vmem:[%s5621 + $0x32c] sm:$0xf]
    %v5826 = vld [vmem:[%s5621 + $0x330] sm:$0xf]
    %v5827 = vld [vmem:[%s5621 + $0x334] sm:$0xf]
    %v5828 = vld [vmem:[%s5621 + $0x338] sm:$0xf]
    %v5829 = vld [vmem:[%s5621 + $0x33c] sm:$0xf]
    %v5830 = vld [vmem:[%s5621 + $0x340] sm:$0xf]
    %v5831 = vld [vmem:[%s5621 + $0x344] sm:$0xf]
    %v5832 = vld [vmem:[%s5621 + $0x348] sm:$0xf]
    %v5833 = vld [vmem:[%s5621 + $0x34c] sm:$0xf]
    %v5834 = vld [vmem:[%s5621 + $0x350] sm:$0xf]
    %v5835 = vld [vmem:[%s5621 + $0x354] sm:$0xf]
    %v5836 = vld [vmem:[%s5621 + $0x358] sm:$0xf]
    %v5837 = vld [vmem:[%s5621 + $0x35c] sm:$0xf]
    %v5838 = vld [vmem:[%s5621 + $0x360] sm:$0xf]
    %v5839 = vld [vmem:[%s5621 + $0x364] sm:$0xf]
    %v5840 = vld [vmem:[%s5621 + $0x368] sm:$0xf]
    %v5841 = vld [vmem:[%s5621 + $0x36c] sm:$0xf]
    %v5842 = vld [vmem:[%s5621 + $0x370] sm:$0xf]
    %v5843 = vld [vmem:[%s5621 + $0x374] sm:$0xf]
    %v5844 = vld [vmem:[%s5621 + $0x378] sm:$0xf]
    %v5845 = vld [vmem:[%s5621 + $0x37c] sm:$0xf]
    %v5846 = vld [vmem:[%s5621 + $0x380] sm:$0xf]
    %v5847 = vld [vmem:[%s5621 + $0x384] sm:$0xf]
    %v5848 = vld [vmem:[%s5621 + $0x388] sm:$0xf]
    %v5849 = vld [vmem:[%s5621 + $0x38c] sm:$0xf]
    %v5850 = vld [vmem:[%s5621 + $0x390] sm:$0xf]
    %v5851 = vld [vmem:[%s5621 + $0x394] sm:$0xf]
    %v5852 = vld [vmem:[%s5621 + $0x398] sm:$0xf]
    %v5853 = vld [vmem:[%s5621 + $0x39c] sm:$0xf]
    %v5854 = vld [vmem:[%s5621 + $0x3a0] sm:$0xf]
    %v5855 = vld [vmem:[%s5621 + $0x3a4] sm:$0xf]
    %v5856 = vld [vmem:[%s5621 + $0x3a8] sm:$0xf]
    %v5857 = vld [vmem:[%s5621 + $0x3ac] sm:$0xf]
    %v5858 = vld [vmem:[%s5621 + $0x3b0] sm:$0xf]
    %v5859 = vld [vmem:[%s5621 + $0x3b4] sm:$0xf]
    %v5860 = vld [vmem:[%s5621 + $0x3b8] sm:$0xf]
    %v5861 = vld [vmem:[%s5621 + $0x3bc] sm:$0xf]
    %v5862 = vld [vmem:[%s5621 + $0x3c0] sm:$0xf]
    %v5863 = vld [vmem:[%s5621 + $0x3c4] sm:$0xf]
    %v5864 = vld [vmem:[%s5621 + $0x3c8] sm:$0xf]
    %v5865 = vld [vmem:[%s5621 + $0x3cc] sm:$0xf]
    %v5866 = vld [vmem:[%s5621 + $0x3d0] sm:$0xf]
    %v5867 = vld [vmem:[%s5621 + $0x3d4] sm:$0xf]
    %v5868 = vld [vmem:[%s5621 + $0x3d8] sm:$0xf]
    %v5869 = vld [vmem:[%s5621 + $0x3dc] sm:$0xf]
    %v5870 = vld [vmem:[%s5621 + $0x3e0] sm:$0xf]
    %v5871 = vld [vmem:[%s5621 + $0x3e4] sm:$0xf]
    %v5872 = vld [vmem:[%s5621 + $0x3e8] sm:$0xf]
    %v5873 = vld [vmem:[%s5621 + $0x3ec] sm:$0xf]
    %v5874 = vld [vmem:[%s5621 + $0x3f0] sm:$0xf]
    %v5875 = vld [vmem:[%s5621 + $0x3f4] sm:$0xf]
    %v5876 = vld [vmem:[%s5621 + $0x3f8] sm:$0xf]
    %v5877 = vld [vmem:[%s5621 + $0x3fc] sm:$0xf]
    %s5878 = scalar_lea.vmem %s15, 1
    %v5879 = vld [vmem:[%s5878] sm:$0x1]
    %v5881 = vlaneseq
    %v5882 = vshrl.u32 %v5881, 7
    %v5883 = vsub.s32 0, %v5882
    %v5884 = vrot.slane %v5879, %v5883
    %v6142 = vunpack.c.l.b16 %v5622
    %v6143 = vunpack.c.l.b16 %v5623
    %v6144 = vunpack.c.l.b16 %v5624
    %v6145 = vunpack.c.l.b16 %v5625
    %v6146 = vunpack.c.l.b16 %v5626
    %v6147 = vunpack.c.l.b16 %v5627
    %v6148 = vunpack.c.l.b16 %v5628
    %v6149 = vunpack.c.l.b16 %v5629
    %v6150 = vunpack.c.l.b16 %v5630
    %v6151 = vunpack.c.l.b16 %v5631
    %v6152 = vunpack.c.l.b16 %v5632
    %v6153 = vunpack.c.l.b16 %v5633
    %v6154 = vunpack.c.l.b16 %v5634
    %v6155 = vunpack.c.l.b16 %v5635
    %v6156 = vunpack.c.l.b16 %v5636
    %v6157 = vunpack.c.l.b16 %v5637
    %v6158 = vunpack.c.l.b16 %v5638
    %v6159 = vunpack.c.l.b16 %v5639
    %v6160 = vunpack.c.l.b16 %v5640
    %v6161 = vunpack.c.l.b16 %v5641
    %v6162 = vunpack.c.l.b16 %v5642
    %v6163 = vunpack.c.l.b16 %v5643
    %v6164 = vunpack.c.l.b16 %v5644
    %v6165 = vunpack.c.l.b16 %v5645
    %v6166 = vunpack.c.l.b16 %v5646
    %v6167 = vunpack.c.l.b16 %v5647
    %v6168 = vunpack.c.l.b16 %v5648
    %v6169 = vunpack.c.l.b16 %v5649
    %v6170 = vunpack.c.l.b16 %v5650
    %v6171 = vunpack.c.l.b16 %v5651
    %v6172 = vunpack.c.l.b16 %v5652
    %v6173 = vunpack.c.l.b16 %v5653
    %v6174 = vunpack.c.l.b16 %v5654
    %v6175 = vunpack.c.l.b16 %v5655
    %v6176 = vunpack.c.l.b16 %v5656
    %v6177 = vunpack.c.l.b16 %v5657
    %v6178 = vunpack.c.l.b16 %v5658
    %v6179 = vunpack.c.l.b16 %v5659
    %v6180 = vunpack.c.l.b16 %v5660
    %v6181 = vunpack.c.l.b16 %v5661
    %v6182 = vunpack.c.l.b16 %v5662
    %v6183 = vunpack.c.l.b16 %v5663
    %v6184 = vunpack.c.l.b16 %v5664
    %v6185 = vunpack.c.l.b16 %v5665
    %v6186 = vunpack.c.l.b16 %v5666
    %v6187 = vunpack.c.l.b16 %v5667
    %v6188 = vunpack.c.l.b16 %v5668
    %v6189 = vunpack.c.l.b16 %v5669
    %v6190 = vunpack.c.l.b16 %v5670
    %v6191 = vunpack.c.l.b16 %v5671
    %v6192 = vunpack.c.l.b16 %v5672
    %v6193 = vunpack.c.l.b16 %v5673
    %v6194 = vunpack.c.l.b16 %v5674
    %v6195 = vunpack.c.l.b16 %v5675
    %v6196 = vunpack.c.l.b16 %v5676
    %v6197 = vunpack.c.l.b16 %v5677
    %v6198 = vunpack.c.l.b16 %v5678
    %v6199 = vunpack.c.l.b16 %v5679
    %v6200 = vunpack.c.l.b16 %v5680
    %v6201 = vunpack.c.l.b16 %v5681
    %v6202 = vunpack.c.l.b16 %v5682
    %v6203 = vunpack.c.l.b16 %v5683
    %v6204 = vunpack.c.l.b16 %v5684
    %v6205 = vunpack.c.l.b16 %v5685
    %v6206 = vunpack.c.l.b16 %v5686
    %v6207 = vunpack.c.l.b16 %v5687
    %v6208 = vunpack.c.l.b16 %v5688
    %v6209 = vunpack.c.l.b16 %v5689
    %v6210 = vunpack.c.l.b16 %v5690
    %v6211 = vunpack.c.l.b16 %v5691
    %v6212 = vunpack.c.l.b16 %v5692
    %v6213 = vunpack.c.l.b16 %v5693
    %v6214 = vunpack.c.l.b16 %v5694
    %v6215 = vunpack.c.l.b16 %v5695
    %v6216 = vunpack.c.l.b16 %v5696
    %v6217 = vunpack.c.l.b16 %v5697
    %v6218 = vunpack.c.l.b16 %v5698
    %v6219 = vunpack.c.l.b16 %v5699
    %v6220 = vunpack.c.l.b16 %v5700
    %v6221 = vunpack.c.l.b16 %v5701
    %v6222 = vunpack.c.l.b16 %v5702
    %v6223 = vunpack.c.l.b16 %v5703
    %v6224 = vunpack.c.l.b16 %v5704
    %v6225 = vunpack.c.l.b16 %v5705
    %v6226 = vunpack.c.l.b16 %v5706
    %v6227 = vunpack.c.l.b16 %v5707
    %v6228 = vunpack.c.l.b16 %v5708
    %v6229 = vunpack.c.l.b16 %v5709
    %v6230 = vunpack.c.l.b16 %v5710
    %v6231 = vunpack.c.l.b16 %v5711
    %v6232 = vunpack.c.l.b16 %v5712
    %v6233 = vunpack.c.l.b16 %v5713
    %v6234 = vunpack.c.l.b16 %v5714
    %v6235 = vunpack.c.l.b16 %v5715
    %v6236 = vunpack.c.l.b16 %v5716
    %v6237 = vunpack.c.l.b16 %v5717
    %v6238 = vunpack.c.l.b16 %v5718
    %v6239 = vunpack.c.l.b16 %v5719
    %v6240 = vunpack.c.l.b16 %v5720
    %v6241 = vunpack.c.l.b16 %v5721
    %v6242 = vunpack.c.l.b16 %v5722
    %v6243 = vunpack.c.l.b16 %v5723
    %v6244 = vunpack.c.l.b16 %v5724
    %v6245 = vunpack.c.l.b16 %v5725
    %v6246 = vunpack.c.l.b16 %v5726
    %v6247 = vunpack.c.l.b16 %v5727
    %v6248 = vunpack.c.l.b16 %v5728
    %v6249 = vunpack.c.l.b16 %v5729
    %v6250 = vunpack.c.l.b16 %v5730
    %v6251 = vunpack.c.l.b16 %v5731
    %v6252 = vunpack.c.l.b16 %v5732
    %v6253 = vunpack.c.l.b16 %v5733
    %v6254 = vunpack.c.l.b16 %v5734
    %v6255 = vunpack.c.l.b16 %v5735
    %v6256 = vunpack.c.l.b16 %v5736
    %v6257 = vunpack.c.l.b16 %v5737
    %v6258 = vunpack.c.l.b16 %v5738
    %v6259 = vunpack.c.l.b16 %v5739
    %v6260 = vunpack.c.l.b16 %v5740
    %v6261 = vunpack.c.l.b16 %v5741
    %v6262 = vunpack.c.l.b16 %v5742
    %v6263 = vunpack.c.l.b16 %v5743
    %v6264 = vunpack.c.l.b16 %v5744
    %v6265 = vunpack.c.l.b16 %v5745
    %v6266 = vunpack.c.l.b16 %v5746
    %v6267 = vunpack.c.l.b16 %v5747
    %v6268 = vunpack.c.l.b16 %v5748
    %v6269 = vunpack.c.l.b16 %v5749
    %v6270 = vunpack.c.l.b16 %v5750
    %v6271 = vunpack.c.l.b16 %v5751
    %v6272 = vunpack.c.l.b16 %v5752
    %v6273 = vunpack.c.l.b16 %v5753
    %v6274 = vunpack.c.l.b16 %v5754
    %v6275 = vunpack.c.l.b16 %v5755
    %v6276 = vunpack.c.l.b16 %v5756
    %v6277 = vunpack.c.l.b16 %v5757
    %v6278 = vunpack.c.l.b16 %v5758
    %v6279 = vunpack.c.l.b16 %v5759
    %v6280 = vunpack.c.l.b16 %v5760
    %v6281 = vunpack.c.l.b16 %v5761
    %v6282 = vunpack.c.l.b16 %v5762
    %v6283 = vunpack.c.l.b16 %v5763
    %v6284 = vunpack.c.l.b16 %v5764
    %v6285 = vunpack.c.l.b16 %v5765
    %v6286 = vunpack.c.l.b16 %v5766
    %v6287 = vunpack.c.l.b16 %v5767
    %v6288 = vunpack.c.l.b16 %v5768
    %v6289 = vunpack.c.l.b16 %v5769
    %v6290 = vunpack.c.l.b16 %v5770
    %v6291 = vunpack.c.l.b16 %v5771
    %v6292 = vunpack.c.l.b16 %v5772
    %v6293 = vunpack.c.l.b16 %v5773
    %v6294 = vunpack.c.l.b16 %v5774
    %v6295 = vunpack.c.l.b16 %v5775
    %v6296 = vunpack.c.l.b16 %v5776
    %v6297 = vunpack.c.l.b16 %v5777
    %v6298 = vunpack.c.l.b16 %v5778
    %v6299 = vunpack.c.l.b16 %v5779
    %v6300 = vunpack.c.l.b16 %v5780
    %v6301 = vunpack.c.l.b16 %v5781
    %v6302 = vunpack.c.l.b16 %v5782
    %v6303 = vunpack.c.l.b16 %v5783
    %v6304 = vunpack.c.l.b16 %v5784
    %v6305 = vunpack.c.l.b16 %v5785
    %v6306 = vunpack.c.l.b16 %v5786
    %v6307 = vunpack.c.l.b16 %v5787
    %v6308 = vunpack.c.l.b16 %v5788
    %v6309 = vunpack.c.l.b16 %v5789
    %v6310 = vunpack.c.l.b16 %v5790
    %v6311 = vunpack.c.l.b16 %v5791
    %v6312 = vunpack.c.l.b16 %v5792
    %v6313 = vunpack.c.l.b16 %v5793
    %v6314 = vunpack.c.l.b16 %v5794
    %v6315 = vunpack.c.l.b16 %v5795
    %v6316 = vunpack.c.l.b16 %v5796
    %v6317 = vunpack.c.l.b16 %v5797
    %v6318 = vunpack.c.l.b16 %v5798
    %v6319 = vunpack.c.l.b16 %v5799
    %v6320 = vunpack.c.l.b16 %v5800
    %v6321 = vunpack.c.l.b16 %v5801
    %v6322 = vunpack.c.l.b16 %v5802
    %v6323 = vunpack.c.l.b16 %v5803
    %v6324 = vunpack.c.l.b16 %v5804
    %v6325 = vunpack.c.l.b16 %v5805
    %v6326 = vunpack.c.l.b16 %v5806
    %v6327 = vunpack.c.l.b16 %v5807
    %v6328 = vunpack.c.l.b16 %v5808
    %v6329 = vunpack.c.l.b16 %v5809
    %v6330 = vunpack.c.l.b16 %v5810
    %v6331 = vunpack.c.l.b16 %v5811
    %v6332 = vunpack.c.l.b16 %v5812
    %v6333 = vunpack.c.l.b16 %v5813
    %v6334 = vunpack.c.l.b16 %v5814
    %v6335 = vunpack.c.l.b16 %v5815
    %v6336 = vunpack.c.l.b16 %v5816
    %v6337 = vunpack.c.l.b16 %v5817
    %v6338 = vunpack.c.l.b16 %v5818
    %v6339 = vunpack.c.l.b16 %v5819
    %v6340 = vunpack.c.l.b16 %v5820
    %v6341 = vunpack.c.l.b16 %v5821
    %v6342 = vunpack.c.l.b16 %v5822
    %v6343 = vunpack.c.l.b16 %v5823
    %v6344 = vunpack.c.l.b16 %v5824
    %v6345 = vunpack.c.l.b16 %v5825
    %v6346 = vunpack.c.l.b16 %v5826
    %v6347 = vunpack.c.l.b16 %v5827
    %v6348 = vunpack.c.l.b16 %v5828
    %v6349 = vunpack.c.l.b16 %v5829
    %v6350 = vunpack.c.l.b16 %v5830
    %v6351 = vunpack.c.l.b16 %v5831
    %v6352 = vunpack.c.l.b16 %v5832
    %v6353 = vunpack.c.l.b16 %v5833
    %v6354 = vunpack.c.l.b16 %v5834
    %v6355 = vunpack.c.l.b16 %v5835
    %v6356 = vunpack.c.l.b16 %v5836
    %v6357 = vunpack.c.l.b16 %v5837
    %v6358 = vunpack.c.l.b16 %v5838
    %v6359 = vunpack.c.l.b16 %v5839
    %v6360 = vunpack.c.l.b16 %v5840
    %v6361 = vunpack.c.l.b16 %v5841
    %v6362 = vunpack.c.l.b16 %v5842
    %v6363 = vunpack.c.l.b16 %v5843
    %v6364 = vunpack.c.l.b16 %v5844
    %v6365 = vunpack.c.l.b16 %v5845
    %v6366 = vunpack.c.l.b16 %v5846
    %v6367 = vunpack.c.l.b16 %v5847
    %v6368 = vunpack.c.l.b16 %v5848
    %v6369 = vunpack.c.l.b16 %v5849
    %v6370 = vunpack.c.l.b16 %v5850
    %v6371 = vunpack.c.l.b16 %v5851
    %v6372 = vunpack.c.l.b16 %v5852
    %v6373 = vunpack.c.l.b16 %v5853
    %v6374 = vunpack.c.l.b16 %v5854
    %v6375 = vunpack.c.l.b16 %v5855
    %v6376 = vunpack.c.l.b16 %v5856
    %v6377 = vunpack.c.l.b16 %v5857
    %v6378 = vunpack.c.l.b16 %v5858
    %v6379 = vunpack.c.l.b16 %v5859
    %v6380 = vunpack.c.l.b16 %v5860
    %v6381 = vunpack.c.l.b16 %v5861
    %v6382 = vunpack.c.l.b16 %v5862
    %v6383 = vunpack.c.l.b16 %v5863
    %v6384 = vunpack.c.l.b16 %v5864
    %v6385 = vunpack.c.l.b16 %v5865
    %v6386 = vunpack.c.l.b16 %v5866
    %v6387 = vunpack.c.l.b16 %v5867
    %v6388 = vunpack.c.l.b16 %v5868
    %v6389 = vunpack.c.l.b16 %v5869
    %v6390 = vunpack.c.l.b16 %v5870
    %v6391 = vunpack.c.l.b16 %v5871
    %v6392 = vunpack.c.l.b16 %v5872
    %v6393 = vunpack.c.l.b16 %v5873
    %v6394 = vunpack.c.l.b16 %v5874
    %v6395 = vunpack.c.l.b16 %v5875
    %v6396 = vunpack.c.l.b16 %v5876
    %v6397 = vunpack.c.l.b16 %v5877
    %v6398 = vpack.c.b16 %v6143, %v6142
    %v6399 = vpack.c.b16 %v6145, %v6144
    %v6400 = vpack.c.b16 %v6147, %v6146
    %v6401 = vpack.c.b16 %v6149, %v6148
    %v6402 = vpack.c.b16 %v6151, %v6150
    %v6403 = vpack.c.b16 %v6153, %v6152
    %v6404 = vpack.c.b16 %v6155, %v6154
    %v6405 = vpack.c.b16 %v6157, %v6156
    %v6406 = vpack.c.b16 %v6159, %v6158
    %v6407 = vpack.c.b16 %v6161, %v6160
    %v6408 = vpack.c.b16 %v6163, %v6162
    %v6409 = vpack.c.b16 %v6165, %v6164
    %v6410 = vpack.c.b16 %v6167, %v6166
    %v6411 = vpack.c.b16 %v6169, %v6168
    %v6412 = vpack.c.b16 %v6171, %v6170
    %v6413 = vpack.c.b16 %v6173, %v6172
    %v6414 = vpack.c.b16 %v6175, %v6174
    %v6415 = vpack.c.b16 %v6177, %v6176
    %v6416 = vpack.c.b16 %v6179, %v6178
    %v6417 = vpack.c.b16 %v6181, %v6180
    %v6418 = vpack.c.b16 %v6183, %v6182
    %v6419 = vpack.c.b16 %v6185, %v6184
    %v6420 = vpack.c.b16 %v6187, %v6186
    %v6421 = vpack.c.b16 %v6189, %v6188
    %v6422 = vpack.c.b16 %v6191, %v6190
    %v6423 = vpack.c.b16 %v6193, %v6192
    %v6424 = vpack.c.b16 %v6195, %v6194
    %v6425 = vpack.c.b16 %v6197, %v6196
    %v6426 = vpack.c.b16 %v6199, %v6198
    %v6427 = vpack.c.b16 %v6201, %v6200
    %v6428 = vpack.c.b16 %v6203, %v6202
    %v6429 = vpack.c.b16 %v6205, %v6204
    %v6430 = vpack.c.b16 %v6207, %v6206
    %v6431 = vpack.c.b16 %v6209, %v6208
    %v6432 = vpack.c.b16 %v6211, %v6210
    %v6433 = vpack.c.b16 %v6213, %v6212
    %v6434 = vpack.c.b16 %v6215, %v6214
    %v6435 = vpack.c.b16 %v6217, %v6216
    %v6436 = vpack.c.b16 %v6219, %v6218
    %v6437 = vpack.c.b16 %v6221, %v6220
    %v6438 = vpack.c.b16 %v6223, %v6222
    %v6439 = vpack.c.b16 %v6225, %v6224
    %v6440 = vpack.c.b16 %v6227, %v6226
    %v6441 = vpack.c.b16 %v6229, %v6228
    %v6442 = vpack.c.b16 %v6231, %v6230
    %v6443 = vpack.c.b16 %v6233, %v6232
    %v6444 = vpack.c.b16 %v6235, %v6234
    %v6445 = vpack.c.b16 %v6237, %v6236
    %v6446 = vpack.c.b16 %v6239, %v6238
    %v6447 = vpack.c.b16 %v6241, %v6240
    %v6448 = vpack.c.b16 %v6243, %v6242
    %v6449 = vpack.c.b16 %v6245, %v6244
    %v6450 = vpack.c.b16 %v6247, %v6246
    %v6451 = vpack.c.b16 %v6249, %v6248
    %v6452 = vpack.c.b16 %v6251, %v6250
    %v6453 = vpack.c.b16 %v6253, %v6252
    %v6454 = vpack.c.b16 %v6255, %v6254
    %v6455 = vpack.c.b16 %v6257, %v6256
    %v6456 = vpack.c.b16 %v6259, %v6258
    %v6457 = vpack.c.b16 %v6261, %v6260
    %v6458 = vpack.c.b16 %v6263, %v6262
    %v6459 = vpack.c.b16 %v6265, %v6264
    %v6460 = vpack.c.b16 %v6267, %v6266
    %v6461 = vpack.c.b16 %v6269, %v6268
    %v6462 = vpack.c.b16 %v6271, %v6270
    %v6463 = vpack.c.b16 %v6273, %v6272
    %v6464 = vpack.c.b16 %v6275, %v6274
    %v6465 = vpack.c.b16 %v6277, %v6276
    %v6466 = vpack.c.b16 %v6279, %v6278
    %v6467 = vpack.c.b16 %v6281, %v6280
    %v6468 = vpack.c.b16 %v6283, %v6282
    %v6469 = vpack.c.b16 %v6285, %v6284
    %v6470 = vpack.c.b16 %v6287, %v6286
    %v6471 = vpack.c.b16 %v6289, %v6288
    %v6472 = vpack.c.b16 %v6291, %v6290
    %v6473 = vpack.c.b16 %v6293, %v6292
    %v6474 = vpack.c.b16 %v6295, %v6294
    %v6475 = vpack.c.b16 %v6297, %v6296
    %v6476 = vpack.c.b16 %v6299, %v6298
    %v6477 = vpack.c.b16 %v6301, %v6300
    %v6478 = vpack.c.b16 %v6303, %v6302
    %v6479 = vpack.c.b16 %v6305, %v6304
    %v6480 = vpack.c.b16 %v6307, %v6306
    %v6481 = vpack.c.b16 %v6309, %v6308
    %v6482 = vpack.c.b16 %v6311, %v6310
    %v6483 = vpack.c.b16 %v6313, %v6312
    %v6484 = vpack.c.b16 %v6315, %v6314
    %v6485 = vpack.c.b16 %v6317, %v6316
    %v6486 = vpack.c.b16 %v6319, %v6318
    %v6487 = vpack.c.b16 %v6321, %v6320
    %v6488 = vpack.c.b16 %v6323, %v6322
    %v6489 = vpack.c.b16 %v6325, %v6324
    %v6490 = vpack.c.b16 %v6327, %v6326
    %v6491 = vpack.c.b16 %v6329, %v6328
    %v6492 = vpack.c.b16 %v6331, %v6330
    %v6493 = vpack.c.b16 %v6333, %v6332
    %v6494 = vpack.c.b16 %v6335, %v6334
    %v6495 = vpack.c.b16 %v6337, %v6336
    %v6496 = vpack.c.b16 %v6339, %v6338
    %v6497 = vpack.c.b16 %v6341, %v6340
    %v6498 = vpack.c.b16 %v6343, %v6342
    %v6499 = vpack.c.b16 %v6345, %v6344
    %v6500 = vpack.c.b16 %v6347, %v6346
    %v6501 = vpack.c.b16 %v6349, %v6348
    %v6502 = vpack.c.b16 %v6351, %v6350
    %v6503 = vpack.c.b16 %v6353, %v6352
    %v6504 = vpack.c.b16 %v6355, %v6354
    %v6505 = vpack.c.b16 %v6357, %v6356
    %v6506 = vpack.c.b16 %v6359, %v6358
    %v6507 = vpack.c.b16 %v6361, %v6360
    %v6508 = vpack.c.b16 %v6363, %v6362
    %v6509 = vpack.c.b16 %v6365, %v6364
    %v6510 = vpack.c.b16 %v6367, %v6366
    %v6511 = vpack.c.b16 %v6369, %v6368
    %v6512 = vpack.c.b16 %v6371, %v6370
    %v6513 = vpack.c.b16 %v6373, %v6372
    %v6514 = vpack.c.b16 %v6375, %v6374
    %v6515 = vpack.c.b16 %v6377, %v6376
    %v6516 = vpack.c.b16 %v6379, %v6378
    %v6517 = vpack.c.b16 %v6381, %v6380
    %v6518 = vpack.c.b16 %v6383, %v6382
    %v6519 = vpack.c.b16 %v6385, %v6384
    %v6520 = vpack.c.b16 %v6387, %v6386
    %v6521 = vpack.c.b16 %v6389, %v6388
    %v6522 = vpack.c.b16 %v6391, %v6390
    %v6523 = vpack.c.b16 %v6393, %v6392
    %v6524 = vpack.c.b16 %v6395, %v6394
    %v6525 = vpack.c.b16 %v6397, %v6396
    %6654 = vmatprep.subr.bf16.mxu0 0
    %6655 = vmatpush1.bf16.msra.mxu0 %v6398
    %6656 = vmatprep.subr.bf16.mxu0 0
    %6657 = vmatpush1.bf16.msra.mxu0 %v6399
    %6658 = vmatprep.subr.bf16.mxu0 0
    %6659 = vmatpush1.bf16.msra.mxu0 %v6400
    %6660 = vmatprep.subr.bf16.mxu0 0
    %6661 = vmatpush1.bf16.msra.mxu0 %v6401
    %6662 = vmatprep.subr.bf16.mxu0 0
    %6663 = vmatpush1.bf16.msra.mxu0 %v6402
    %6664 = vmatprep.subr.bf16.mxu0 0
    %6665 = vmatpush1.bf16.msra.mxu0 %v6403
    %6666 = vmatprep.subr.bf16.mxu0 0
    %6667 = vmatpush1.bf16.msra.mxu0 %v6404
    %6668 = vmatprep.subr.bf16.mxu0 0
    %6669 = vmatpush1.bf16.msra.mxu0 %v6405
    %6670 = vmatprep.subr.bf16.mxu0 0
    %6671 = vmatpush1.bf16.msra.mxu0 %v6406
    %6672 = vmatprep.subr.bf16.mxu0 0
    %6673 = vmatpush1.bf16.msra.mxu0 %v6407
    %6674 = vmatprep.subr.bf16.mxu0 0
    %6675 = vmatpush1.bf16.msra.mxu0 %v6408
    %6676 = vmatprep.subr.bf16.mxu0 0
    %6677 = vmatpush1.bf16.msra.mxu0 %v6409
    %6678 = vmatprep.subr.bf16.mxu0 0
    %6679 = vmatpush1.bf16.msra.mxu0 %v6410
    %6680 = vmatprep.subr.bf16.mxu0 0
    %6681 = vmatpush1.bf16.msra.mxu0 %v6411
    %6682 = vmatprep.subr.bf16.mxu0 0
    %6683 = vmatpush1.bf16.msra.mxu0 %v6412
    %6684 = vmatprep.subr.bf16.mxu0 0
    %6685 = vmatpush1.bf16.msra.mxu0 %v6413
    %6686 = vmatprep.mubr.bf16.mxu0 %v5606
    %6687 = vmatmul.mubr.bf16.gmra.mrb[0].mxu0 %v5605
    %v6688 = vpop.f32.mrb[0].mxu0
    %v6689 = vadd.f32 %v5884, %v6688
    %v6690 = vpop.f32.mrb[0].mxu0
    %v6691 = vpop.f32.mrb[0].mxu0
    %v6692 = vadd.f32 %v5884, %v6691
    %v6693 = vpop.f32.mrb[0].mxu0
    %6694 = vdwg.mxu0
    %6695 = vmatprep.subr.bf16.mxu0 0
    %6696 = vmatpush1.bf16.msra.mxu0 %v6414
    %6697 = vmatprep.subr.bf16.mxu0 0
    %6698 = vmatpush1.bf16.msra.mxu0 %v6415
    %6699 = vmatprep.subr.bf16.mxu0 0
    %6700 = vmatpush1.bf16.msra.mxu0 %v6416
    %6701 = vmatprep.subr.bf16.mxu0 0
    %6702 = vmatpush1.bf16.msra.mxu0 %v6417
    %6703 = vmatprep.subr.bf16.mxu0 0
    %6704 = vmatpush1.bf16.msra.mxu0 %v6418
    %6705 = vmatprep.subr.bf16.mxu0 0
    %6706 = vmatpush1.bf16.msra.mxu0 %v6419
    %6707 = vmatprep.subr.bf16.mxu0 0
    %6708 = vmatpush1.bf16.msra.mxu0 %v6420
    %6709 = vmatprep.subr.bf16.mxu0 0
    %6710 = vmatpush1.bf16.msra.mxu0 %v6421
    %6711 = vmatprep.subr.bf16.mxu0 0
    %6712 = vmatpush1.bf16.msra.mxu0 %v6422
    %6713 = vmatprep.subr.bf16.mxu0 0
    %6714 = vmatpush1.bf16.msra.mxu0 %v6423
    %6715 = vmatprep.subr.bf16.mxu0 0
    %6716 = vmatpush1.bf16.msra.mxu0 %v6424
    %6717 = vmatprep.subr.bf16.mxu0 0
    %6718 = vmatpush1.bf16.msra.mxu0 %v6425
    %6719 = vmatprep.subr.bf16.mxu0 0
    %6720 = vmatpush1.bf16.msra.mxu0 %v6426
    %6721 = vmatprep.subr.bf16.mxu0 0
    %6722 = vmatpush1.bf16.msra.mxu0 %v6427
    %6723 = vmatprep.subr.bf16.mxu0 0
    %6724 = vmatpush1.bf16.msra.mxu0 %v6428
    %6725 = vmatprep.subr.bf16.mxu0 0
    %6726 = vmatpush1.bf16.msra.mxu0 %v6429
    %6727 = vmatprep.mubr.bf16.mxu0 %v5608
    %6728 = vmatmul.mubr.bf16.gmra.mrb[0].mxu0 %v5607
    %v6729 = vpop.f32.mrb[0].mxu0
    %v6730 = vadd.f32 %v6689, %v6729
    %v6731 = vpop.f32.mrb[0].mxu0
    %v6732 = vpop.f32.mrb[0].mxu0
    %v6733 = vadd.f32 %v6692, %v6732
    %v6734 = vpop.f32.mrb[0].mxu0
    %6735 = vdwg.mxu0
    %6736 = vmatprep.subr.bf16.mxu0 0
    %6737 = vmatpush1.bf16.msra.mxu0 %v6430
    %6738 = vmatprep.subr.bf16.mxu0 0
    %6739 = vmatpush1.bf16.msra.mxu0 %v6431
    %6740 = vmatprep.subr.bf16.mxu0 0
    %6741 = vmatpush1.bf16.msra.mxu0 %v6432
    %6742 = vmatprep.subr.bf16.mxu0 0
    %6743 = vmatpush1.bf16.msra.mxu0 %v6433
    %6744 = vmatprep.subr.bf16.mxu0 0
    %6745 = vmatpush1.bf16.msra.mxu0 %v6434
    %6746 = vmatprep.subr.bf16.mxu0 0
    %6747 = vmatpush1.bf16.msra.mxu0 %v6435
    %6748 = vmatprep.subr.bf16.mxu0 0
    %6749 = vmatpush1.bf16.msra.mxu0 %v6436
    %6750 = vmatprep.subr.bf16.mxu0 0
    %6751 = vmatpush1.bf16.msra.mxu0 %v6437
    %6752 = vmatprep.subr.bf16.mxu0 0
    %6753 = vmatpush1.bf16.msra.mxu0 %v6438
    %6754 = vmatprep.subr.bf16.mxu0 0
    %6755 = vmatpush1.bf16.msra.mxu0 %v6439
    %6756 = vmatprep.subr.bf16.mxu0 0
    %6757 = vmatpush1.bf16.msra.mxu0 %v6440
    %6758 = vmatprep.subr.bf16.mxu0 0
    %6759 = vmatpush1.bf16.msra.mxu0 %v6441
    %6760 = vmatprep.subr.bf16.mxu0 0
    %6761 = vmatpush1.bf16.msra.mxu0 %v6442
    %6762 = vmatprep.subr.bf16.mxu0 0
    %6763 = vmatpush1.bf16.msra.mxu0 %v6443
    %6764 = vmatprep.subr.bf16.mxu0 0
    %6765 = vmatpush1.bf16.msra.mxu0 %v6444
    %6766 = vmatprep.subr.bf16.mxu0 0
    %6767 = vmatpush1.bf16.msra.mxu0 %v6445
    %6768 = vmatprep.mubr.bf16.mxu0 %v5610
    %6769 = vmatmul.mubr.bf16.gmra.mrb[0].mxu0 %v5609
    %v6770 = vpop.f32.mrb[0].mxu0
    %v6771 = vadd.f32 %v6730, %v6770
    %v6772 = vpop.f32.mrb[0].mxu0
    %v6773 = vpop.f32.mrb[0].mxu0
    %v6774 = vadd.f32 %v6733, %v6773
    %v6775 = vpop.f32.mrb[0].mxu0
    %6776 = vdwg.mxu0
    %6777 = vmatprep.subr.bf16.mxu0 0
    %6778 = vmatpush1.bf16.msra.mxu0 %v6446
    %6779 = vmatprep.subr.bf16.mxu0 0
    %6780 = vmatpush1.bf16.msra.mxu0 %v6447
    %6781 = vmatprep.subr.bf16.mxu0 0
    %6782 = vmatpush1.bf16.msra.mxu0 %v6448
    %6783 = vmatprep.subr.bf16.mxu0 0
    %6784 = vmatpush1.bf16.msra.mxu0 %v6449
    %6785 = vmatprep.subr.bf16.mxu0 0
    %6786 = vmatpush1.bf16.msra.mxu0 %v6450
    %6787 = vmatprep.subr.bf16.mxu0 0
    %6788 = vmatpush1.bf16.msra.mxu0 %v6451
    %6789 = vmatprep.subr.bf16.mxu0 0
    %6790 = vmatpush1.bf16.msra.mxu0 %v6452
    %6791 = vmatprep.subr.bf16.mxu0 0
    %6792 = vmatpush1.bf16.msra.mxu0 %v6453
    %6793 = vmatprep.subr.bf16.mxu0 0
    %6794 = vmatpush1.bf16.msra.mxu0 %v6454
    %6795 = vmatprep.subr.bf16.mxu0 0
    %6796 = vmatpush1.bf16.msra.mxu0 %v6455
    %6797 = vmatprep.subr.bf16.mxu0 0
    %6798 = vmatpush1.bf16.msra.mxu0 %v6456
    %6799 = vmatprep.subr.bf16.mxu0 0
    %6800 = vmatpush1.bf16.msra.mxu0 %v6457
    %6801 = vmatprep.subr.bf16.mxu0 0
    %6802 = vmatpush1.bf16.msra.mxu0 %v6458
    %6803 = vmatprep.subr.bf16.mxu0 0
    %6804 = vmatpush1.bf16.msra.mxu0 %v6459
    %6805 = vmatprep.subr.bf16.mxu0 0
    %6806 = vmatpush1.bf16.msra.mxu0 %v6460
    %6807 = vmatprep.subr.bf16.mxu0 0
    %6808 = vmatpush1.bf16.msra.mxu0 %v6461
    %6809 = vmatprep.mubr.bf16.mxu0 %v5612
    %6810 = vmatmul.mubr.bf16.gmra.mrb[0].mxu0 %v5611
    %v6811 = vpop.f32.mrb[0].mxu0
    %v6812 = vadd.f32 %v6771, %v6811
    %v6813 = vpop.f32.mrb[0].mxu0
    %v6814 = vpop.f32.mrb[0].mxu0
    %v6815 = vadd.f32 %v6774, %v6814
    %v6816 = vpop.f32.mrb[0].mxu0
    %6817 = vdwg.mxu0
    %6818 = vmatprep.subr.bf16.mxu0 0
    %6819 = vmatpush1.bf16.msra.mxu0 %v6462
    %6820 = vmatprep.subr.bf16.mxu0 0
    %6821 = vmatpush1.bf16.msra.mxu0 %v6463
    %6822 = vmatprep.subr.bf16.mxu0 0
    %6823 = vmatpush1.bf16.msra.mxu0 %v6464
    %6824 = vmatprep.subr.bf16.mxu0 0
    %6825 = vmatpush1.bf16.msra.mxu0 %v6465
    %6826 = vmatprep.subr.bf16.mxu0 0
    %6827 = vmatpush1.bf16.msra.mxu0 %v6466
    %6828 = vmatprep.subr.bf16.mxu0 0
    %6829 = vmatpush1.bf16.msra.mxu0 %v6467
    %6830 = vmatprep.subr.bf16.mxu0 0
    %6831 = vmatpush1.bf16.msra.mxu0 %v6468
    %6832 = vmatprep.subr.bf16.mxu0 0
    %6833 = vmatpush1.bf16.msra.mxu0 %v6469
    %6834 = vmatprep.subr.bf16.mxu0 0
    %6835 = vmatpush1.bf16.msra.mxu0 %v6470
    %6836 = vmatprep.subr.bf16.mxu0 0
    %6837 = vmatpush1.bf16.msra.mxu0 %v6471
    %6838 = vmatprep.subr.bf16.mxu0 0
    %6839 = vmatpush1.bf16.msra.mxu0 %v6472
    %6840 = vmatprep.subr.bf16.mxu0 0
    %6841 = vmatpush1.bf16.msra.mxu0 %v6473
    %6842 = vmatprep.subr.bf16.mxu0 0
    %6843 = vmatpush1.bf16.msra.mxu0 %v6474
    %6844 = vmatprep.subr.bf16.mxu0 0
    %6845 = vmatpush1.bf16.msra.mxu0 %v6475
    %6846 = vmatprep.subr.bf16.mxu0 0
    %6847 = vmatpush1.bf16.msra.mxu0 %v6476
    %6848 = vmatprep.subr.bf16.mxu0 0
    %6849 = vmatpush1.bf16.msra.mxu0 %v6477
    %6850 = vmatprep.mubr.bf16.mxu0 %v5614
    %6851 = vmatmul.mubr.bf16.gmra.mrb[0].mxu0 %v5613
    %v6852 = vpop.f32.mrb[0].mxu0
    %v6853 = vadd.f32 %v6812, %v6852
    %v6854 = vpop.f32.mrb[0].mxu0
    %v6855 = vpop.f32.mrb[0].mxu0
    %v6856 = vadd.f32 %v6815, %v6855
    %v6857 = vpop.f32.mrb[0].mxu0
    %6858 = vdwg.mxu0
    %6859 = vmatprep.subr.bf16.mxu0 0
    %6860 = vmatpush1.bf16.msra.mxu0 %v6478
    %6861 = vmatprep.subr.bf16.mxu0 0
    %6862 = vmatpush1.bf16.msra.mxu0 %v6479
    %6863 = vmatprep.subr.bf16.mxu0 0
    %6864 = vmatpush1.bf16.msra.mxu0 %v6480
    %6865 = vmatprep.subr.bf16.mxu0 0
    %6866 = vmatpush1.bf16.msra.mxu0 %v6481
    %6867 = vmatprep.subr.bf16.mxu0 0
    %6868 = vmatpush1.bf16.msra.mxu0 %v6482
    %6869 = vmatprep.subr.bf16.mxu0 0
    %6870 = vmatpush1.bf16.msra.mxu0 %v6483
    %6871 = vmatprep.subr.bf16.mxu0 0
    %6872 = vmatpush1.bf16.msra.mxu0 %v6484
    %6873 = vmatprep.subr.bf16.mxu0 0
    %6874 = vmatpush1.bf16.msra.mxu0 %v6485
    %6875 = vmatprep.subr.bf16.mxu0 0
    %6876 = vmatpush1.bf16.msra.mxu0 %v6486
    %6877 = vmatprep.subr.bf16.mxu0 0
    %6878 = vmatpush1.bf16.msra.mxu0 %v6487
    %6879 = vmatprep.subr.bf16.mxu0 0
    %6880 = vmatpush1.bf16.msra.mxu0 %v6488
    %6881 = vmatprep.subr.bf16.mxu0 0
    %6882 = vmatpush1.bf16.msra.mxu0 %v6489
    %6883 = vmatprep.subr.bf16.mxu0 0
    %6884 = vmatpush1.bf16.msra.mxu0 %v6490
    %6885 = vmatprep.subr.bf16.mxu0 0
    %6886 = vmatpush1.bf16.msra.mxu0 %v6491
    %6887 = vmatprep.subr.bf16.mxu0 0
    %6888 = vmatpush1.bf16.msra.mxu0 %v6492
    %6889 = vmatprep.subr.bf16.mxu0 0
    %6890 = vmatpush1.bf16.msra.mxu0 %v6493
    %6891 = vmatprep.mubr.bf16.mxu0 %v5616
    %6892 = vmatmul.mubr.bf16.gmra.mrb[0].mxu0 %v5615
    %v6893 = vpop.f32.mrb[0].mxu0
    %v6894 = vadd.f32 %v6853, %v6893
    %v6895 = vpop.f32.mrb[0].mxu0
    %v6896 = vpop.f32.mrb[0].mxu0
    %v6897 = vadd.f32 %v6856, %v6896
    %v6898 = vpop.f32.mrb[0].mxu0
    %6899 = vdwg.mxu0
    %6900 = vmatprep.subr.bf16.mxu0 0
    %6901 = vmatpush1.bf16.msra.mxu0 %v6494
    %6902 = vmatprep.subr.bf16.mxu0 0
    %6903 = vmatpush1.bf16.msra.mxu0 %v6495
    %6904 = vmatprep.subr.bf16.mxu0 0
    %6905 = vmatpush1.bf16.msra.mxu0 %v6496
    %6906 = vmatprep.subr.bf16.mxu0 0
    %6907 = vmatpush1.bf16.msra.mxu0 %v6497
    %6908 = vmatprep.subr.bf16.mxu0 0
    %6909 = vmatpush1.bf16.msra.mxu0 %v6498
    %6910 = vmatprep.subr.bf16.mxu0 0
    %6911 = vmatpush1.bf16.msra.mxu0 %v6499
    %6912 = vmatprep.subr.bf16.mxu0 0
    %6913 = vmatpush1.bf16.msra.mxu0 %v6500
    %6914 = vmatprep.subr.bf16.mxu0 0
    %6915 = vmatpush1.bf16.msra.mxu0 %v6501
    %6916 = vmatprep.subr.bf16.mxu0 0
    %6917 = vmatpush1.bf16.msra.mxu0 %v6502
    %6918 = vmatprep.subr.bf16.mxu0 0
    %6919 = vmatpush1.bf16.msra.mxu0 %v6503
    %6920 = vmatprep.subr.bf16.mxu0 0
    %6921 = vmatpush1.bf16.msra.mxu0 %v6504
    %6922 = vmatprep.subr.bf16.mxu0 0
    %6923 = vmatpush1.bf16.msra.mxu0 %v6505
    %6924 = vmatprep.subr.bf16.mxu0 0
    %6925 = vmatpush1.bf16.msra.mxu0 %v6506
    %6926 = vmatprep.subr.bf16.mxu0 0
    %6927 = vmatpush1.bf16.msra.mxu0 %v6507
    %6928 = vmatprep.subr.bf16.mxu0 0
    %6929 = vmatpush1.bf16.msra.mxu0 %v6508
    %6930 = vmatprep.subr.bf16.mxu0 0
    %6931 = vmatpush1.bf16.msra.mxu0 %v6509
    %6932 = vmatprep.mubr.bf16.mxu0 %v5618
    %6933 = vmatmul.mubr.bf16.gmra.mrb[0].mxu0 %v5617
    %v6934 = vpop.f32.mrb[0].mxu0
    %v6935 = vadd.f32 %v6894, %v6934
    %v6936 = vpop.f32.mrb[0].mxu0
    %v6937 = vpop.f32.mrb[0].mxu0
    %v6938 = vadd.f32 %v6897, %v6937
    %v6939 = vpop.f32.mrb[0].mxu0
    %6940 = vdwg.mxu0
    %6941 = vmatprep.subr.bf16.mxu0 0
    %6942 = vmatpush1.bf16.msra.mxu0 %v6510
    %6943 = vmatprep.subr.bf16.mxu0 0
    %6944 = vmatpush1.bf16.msra.mxu0 %v6511
    %6945 = vmatprep.subr.bf16.mxu0 0
    %6946 = vmatpush1.bf16.msra.mxu0 %v6512
    %6947 = vmatprep.subr.bf16.mxu0 0
    %6948 = vmatpush1.bf16.msra.mxu0 %v6513
    %6949 = vmatprep.subr.bf16.mxu0 0
    %6950 = vmatpush1.bf16.msra.mxu0 %v6514
    %6951 = vmatprep.subr.bf16.mxu0 0
    %6952 = vmatpush1.bf16.msra.mxu0 %v6515
    %6953 = vmatprep.subr.bf16.mxu0 0
    %6954 = vmatpush1.bf16.msra.mxu0 %v6516
    %6955 = vmatprep.subr.bf16.mxu0 0
    %6956 = vmatpush1.bf16.msra.mxu0 %v6517
    %6957 = vmatprep.subr.bf16.mxu0 0
    %6958 = vmatpush1.bf16.msra.mxu0 %v6518
    %6959 = vmatprep.subr.bf16.mxu0 0
    %6960 = vmatpush1.bf16.msra.mxu0 %v6519
    %6961 = vmatprep.subr.bf16.mxu0 0
    %6962 = vmatpush1.bf16.msra.mxu0 %v6520
    %6963 = vmatprep.subr.bf16.mxu0 0
    %6964 = vmatpush1.bf16.msra.mxu0 %v6521
    %6965 = vmatprep.subr.bf16.mxu0 0
    %6966 = vmatpush1.bf16.msra.mxu0 %v6522
    %6967 = vmatprep.subr.bf16.mxu0 0
    %6968 = vmatpush1.bf16.msra.mxu0 %v6523
    %6969 = vmatprep.subr.bf16.mxu0 0
    %6970 = vmatpush1.bf16.msra.mxu0 %v6524
    %6971 = vmatprep.subr.bf16.mxu0 0
    %6972 = vmatpush1.bf16.msra.mxu0 %v6525
    %6973 = vmatprep.mubr.bf16.mxu0 %v5620
    %6974 = vmatmul.mubr.bf16.gmra.mrb[0].mxu0 %v5619
    %v6975 = vpop.f32.mrb[0].mxu0
    %v6976 = vadd.f32 %v6935, %v6975
    %v6977 = vpop.f32.mrb[0].mxu0
    %v6978 = vpop.f32.mrb[0].mxu0
    %v6979 = vadd.f32 %v6938, %v6978
    %v6980 = vpop.f32.mrb[0].mxu0
    %6981 = vdwg.mxu0
    %v6982 = vadd.f32 %v4753, %v6976
    %v6983 = vadd.f32 %v4754, %v6979
    %s6984 = scalar_lea.vmem %s10, 1
    %v6985 = vld [vmem:[%s6984] sm:$0x1]
    %s6986 = scalar_lea.vmem %s11, 1
    %v6987 = vld [vmem:[%s6986] sm:$0x1]
    %v6988 = vsel %vm59, %v6982, 0.0
    %6989 = vadd.xlane.f32.xlu0 %v6988
    %v6990 = vpop.xlane.xlu0 %6989
    %v6991 = vsel %vm59, %v6983, 0.0
    %6992 = vadd.xlane.f32.xlu0 %v6991
    %v6993 = vpop.xlane.xlu0 %6992
    %v6994 = vmul.f32 %v6990, %v66
    %v6995 = vmul.f32 %v6993, %v66
    %v6996 = vsub.f32 %v6982, %v6994
    %v6997 = vsub.f32 %v6983, %v6995
    %v6998 = vmul.f32 %v6996, %v6996
    %v6999 = vmul.f32 %v6997, %v6997
    %v7000 = vsel %vm59, %v6998, 0.0
    %7001 = vadd.xlane.f32.xlu0 %v7000
    %v7002 = vpop.xlane.xlu0 %7001
    %v7003 = vsel %vm59, %v6999, 0.0
    %7004 = vadd.xlane.f32.xlu0 %v7003
    %v7005 = vpop.xlane.xlu0 %7004
    %v7006 = vmul.f32 %v7002, %v66
    %v7007 = vmul.f32 %v7005, %v66
    %v7008 = vadd.f32 %v7006, 1e-05
    %v7009 = vadd.f32 %v7007, 1e-05
    %v7010 = vrsqrt.pop %v7008
    %v7011 = vrsqrt.pop %v7009
    %v7012 = vmul.f32 %v6996, %v7010
    %v7013 = vmul.f32 %v6997, %v7011
    %v7015 = vlaneseq
    %v7016 = vshrl.u32 %v7015, 7
    %v7017 = vsub.s32 0, %v7016
    %v7018 = vrot.slane %v6985, %v7017
    %v7020 = vmul.f32 %v7012, %v7018
    %v7021 = vmul.f32 %v7013, %v7018
    %v7023 = vlaneseq
    %v7024 = vshrl.u32 %v7023, 7
    %v7025 = vsub.s32 0, %v7024
    %v7026 = vrot.slane %v6987, %v7025
    %v7028 = vadd.f32 %v7020, %v7026
    %v7029 = vadd.f32 %v7021, %v7026
    %v7032 = vrot.slane %v7029, 7
    %vm7033 = vcmask 1041409
    %v7034 = vsel %vm7033, %v7032, %v7028
    %v7036 = vrot.slane %v7028, 1
    %v7037 = vsel %vm7033, %v7029, %v7036
    %7038 = vrot.lane.b32.xlu0 %v7037, 64
    %v7039 = vpop.permute.xlu0 %7038
    %v7041 = vrot.slane %v7028, 2
    %v7042 = vrot.slane %v7029, 1
    %v7043 = vsel %vm7033, %v7042, %v7041
    %v7045 = vrot.slane %v7028, 3
    %v7046 = vrot.slane %v7029, 2
    %v7047 = vsel %vm7033, %v7046, %v7045
    %7048 = vrot.lane.b32.xlu0 %v7047, 64
    %v7049 = vpop.permute.xlu0 %7048
    %v7051 = vrot.slane %v7028, 4
    %v7052 = vrot.slane %v7029, 3
    %v7053 = vsel %vm7033, %v7052, %v7051
    %v7055 = vrot.slane %v7028, 5
    %v7056 = vrot.slane %v7029, 4
    %v7057 = vsel %vm7033, %v7056, %v7055
    %7058 = vrot.lane.b32.xlu0 %v7057, 64
    %v7059 = vpop.permute.xlu0 %7058
    %v7061 = vrot.slane %v7028, 6
    %v7062 = vrot.slane %v7029, 5
    %v7063 = vsel %vm7033, %v7062, %v7061
    %v7065 = vrot.slane %v7028, 7
    %v7066 = vrot.slane %v7029, 6
    %v7067 = vsel %vm7033, %v7066, %v7065
    %7068 = vrot.lane.b32.xlu0 %v7067, 64
    %v7069 = vpop.permute.xlu0 %7068
    %v7071 = vsel %vm59, %v7034, %v7039
    %v7072 = vsel %vm59, %v7043, %v7049
    %v7073 = vsel %vm59, %v7053, %v7059
    %v7074 = vsel %vm59, %v7063, %v7069
    %v7079 = vcombine.low %v7071, %v7072
    %v7080 = vcombine.low %v7073, %v7074
    %v7082 = vunpack.c.l.s4 1983009808
    %v7083 = vunpack.c.0.s8 %v7082
    %v7084 = vlaneseq
    %v7085 = vshrl.u32 %v7084, 7
    %v7086 = vsub.s32 %v7083, %v7085
    %v7087 = vrot.slane %v7079, %v7086
    %v7089 = vunpack.c.l.s4 1983009808
    %v7090 = vunpack.c.0.s8 %v7089
    %v7091 = vlaneseq
    %v7092 = vshrl.u32 %v7091, 7
    %v7093 = vsub.s32 %v7090, %v7092
    %v7094 = vrot.slane %v7080, %v7093
    %v7095 = vcombine.low %v7087, %v7094
    %7097 = vst [vmem:[#allocation2] sm:$0xff] %v7095
    // Predicated region
    $region66: #{tpu_custom_call.1} parent=1 // pred_check
      _
    $region67: #{tpu_custom_call.1} parent=1 // pred_check_branch
      %7099 = sbr.rel (0) target = $region69
    $region68: #{tpu_custom_call.1} parent=1 // pred_region
      %s7101 = ssub.s32 128, 128
      %7102 = vsyncadd [#allocation3], %s7101
      %s7104 = sshll.u32 [#allocation2], 4
      %s7105 = int_to_ptr.vmem [resolvable:$true] %s7104
      %7107 = dma.vmem_to_hbm [thread:$0]  %s7105, 128, %s16, [#allocation3]
    $region69: #{tpu_custom_call.1} parent=1 // pred_fallthru
      _
    // Predicated region
    $region70: #{tpu_custom_call.1} parent=1 // pred_check
      _
    $region71: #{tpu_custom_call.1} parent=1 // pred_check_branch
      %7109 = sbr.rel (0) target = $region73
    $region72: #{tpu_custom_call.1} parent=1 // pred_region
      %7110 = dma.done [#allocation3], 128
    $region73: #{tpu_custom_call.1} parent=1 // pred_fallthru
      _
    %7111 = vsyncpa [#allocation3], 1

</llo_original>
